<compile_context>
chip_gen: v7x
topology: tpu7x:2x2x1
jax: 0.10.0
libtpu: 0.0.40
codegen_flags: <defaults>
</compile_context>

<pallas_src>
import jax
import jax.numpy as jnp
import numpy as np
from jax.experimental import pallas as pl
from jax.experimental.pallas import tpu as pltpu

FEAT = 2048          # per-backbone feature dim
BBOX_FEAT = 256      # nn.Linear(10, 256)
FC6_DIM = 4096
NUM_CLASSES = 3
CAT_DIM = BBOX_FEAT + 4 * FEAT   # 8448 (matches the forward's concat)


# ----------------------------------------------------------------------------
# Kernel 1: fused feature extraction + concat -> xcat (B, 8448).
# Layout matches torch.cat((x4, x0, x1, x2, x3), 1):
#   [bbox(256) | global(2048) | union(2048) | a(2048) | b(2048)]
# ----------------------------------------------------------------------------
def features_kernel(x1_ref, x2_ref, x3_ref, x4_ref,
                    wg_ref, bg_ref, wu_ref, bu_ref,
                    wa_ref, ba_ref, wb_ref, bb_ref, o_ref):
    # Pool each image once; p1 is reused for both global and union branches.
    p1 = jnp.mean(x1_ref[...], axis=-1)      # (B, C)
    p2 = jnp.mean(x2_ref[...], axis=-1)
    p3 = jnp.mean(x3_ref[...], axis=-1)

    o_ref[:, 0:BBOX_FEAT] = (
        jnp.dot(x4_ref[...], wb_ref[...], preferred_element_type=jnp.float32)
        + bb_ref[...])
    o_ref[:, BBOX_FEAT:BBOX_FEAT + FEAT] = (
        jnp.dot(p1, wg_ref[...], preferred_element_type=jnp.float32)
        + bg_ref[...])
    o_ref[:, BBOX_FEAT + FEAT:BBOX_FEAT + 2 * FEAT] = (
        jnp.dot(p1, wu_ref[...], preferred_element_type=jnp.float32)
        + bu_ref[...])
    o_ref[:, BBOX_FEAT + 2 * FEAT:BBOX_FEAT + 3 * FEAT] = (
        jnp.dot(p2, wa_ref[...], preferred_element_type=jnp.float32)
        + ba_ref[...])
    o_ref[:, BBOX_FEAT + 3 * FEAT:BBOX_FEAT + 4 * FEAT] = (
        jnp.dot(p3, wa_ref[...], preferred_element_type=jnp.float32)
        + ba_ref[...])


def features(x1, x2, x3, x4, params):
    B, C, H, W = x1.shape
    HW = H * W
    x1f = x1.reshape(B, C, HW)
    x2f = x2.reshape(B, C, HW)
    x3f = x3.reshape(B, C, HW)

    img_spec = pl.BlockSpec((B, C, HW), lambda i: (0, 0, 0))

    def mat(shape):
        return pl.BlockSpec(shape, lambda i: (0, 0))

    return pl.pallas_call(
        features_kernel,
        out_shape=jax.ShapeDtypeStruct((B, CAT_DIM), jnp.float32),
        grid=(1,),
        in_specs=[img_spec, img_spec, img_spec,
                  mat((B, 10)),
                  mat((C, FEAT)), mat((1, FEAT)),        # global
                  mat((C, FEAT)), mat((1, FEAT)),        # union
                  mat((C, FEAT)), mat((1, FEAT)),        # a (shared with b)
                  mat((10, BBOX_FEAT)), mat((1, BBOX_FEAT))],
        out_specs=pl.BlockSpec((B, CAT_DIM), lambda i: (0, 0)),
    )(x1f, x2f, x3f, x4,
      params["w_global"], params["b_global"],
      params["w_union"], params["b_union"],
      params["w_a"], params["b_a"],
      params["w_bbox"], params["b_bbox"])


# ----------------------------------------------------------------------------
# Kernel 2: head.
#   fc6 = xcat @ W6 + b6                      (HBM-bound stream of W6)
#   partial_logits[n] = relu(fc6_tile_n) @ W7_tile_n
# Grid = (nt, kt); n is "parallel" (megacore-shardable on v7x) because every
# output block (fc6 column tile, per-n partial logits) is indexed by n only.
# The final logits = sum_n(partials) + b7 is a trivial XLA add in the wrapper.
# ----------------------------------------------------------------------------
def head_kernel(x_ref, w6_ref, b6_ref, w7_ref, fc6_ref, part_ref, acc_ref):
    k = pl.program_id(1)
    tk = w6_ref.shape[0]

    @pl.when(k == 0)
    def _():
        acc_ref[...] = jnp.zeros_like(acc_ref)

    k_start = pl.multiple_of(k * tk, 128)
    acc_ref[...] += jnp.dot(x_ref[:, pl.ds(k_start, tk)], w6_ref[...],
                            preferred_element_type=jnp.float32)

    @pl.when(k == pl.num_programs(1) - 1)
    def _():
        fc6 = acc_ref[...] + b6_ref[...]        # bias for this column tile
        fc6_ref[...] = fc6                      # pre-ReLU fc6 (2nd output)
        relu = jnp.maximum(fc6, 0.0)
        part_ref[0] = jnp.dot(relu, w7_ref[...],
                              preferred_element_type=jnp.float32)


def head(xcat, w6, b6, w7, b7, *, tk=2816, tn=1024):
    B, K = xcat.shape
    N = w6.shape[1]
    C = w7.shape[1]
    assert K % tk == 0 and N % tn == 0
    kt, nt = K // tk, N // tn

    fc6, partials = pl.pallas_call(
        head_kernel,
        out_shape=(jax.ShapeDtypeStruct((B, N), jnp.float32),
                   jax.ShapeDtypeStruct((nt, B, C), jnp.float32)),
        grid_spec=pltpu.PrefetchScalarGridSpec(
            num_scalar_prefetch=0,
            grid=(nt, kt),
            in_specs=[
                # xcat stays fully resident in VMEM (DMA'd once).
                pl.BlockSpec((B, K), lambda n, k: (0, 0)),
                # w6 is the only streamed input: 11.5 MiB blocks.
                pl.BlockSpec((tk, tn), lambda n, k: (k, n)),
                pl.BlockSpec((1, tn), lambda n, k: (0, n)),
                pl.BlockSpec((tn, C), lambda n, k: (n, 0)),
            ],
            out_specs=[
                pl.BlockSpec((B, tn), lambda n, k: (0, n)),
                pl.BlockSpec((1, B, C), lambda n, k: (n, 0, 0)),
            ],
            scratch_shapes=[pltpu.VMEM((B, tn), jnp.float32)]),
        compiler_params=pltpu.CompilerParams(
            dimension_semantics=("parallel", "arbitrary"),
            # ~25 MiB live (23 MiB double-buffered w6 + small residents);
            # exceeds v5e's 16 MiB default scoped VMEM, so raise explicitly.
            # Stays well under v7x's 64 MiB physical VMEM.
            vmem_limit_bytes=40 * 1024 * 1024),
    )(xcat, w6, b6, w7)

    logits = jnp.sum(partials, axis=0) + b7   # trivial XLA reduce + bias
    return fc6, logits


# ----------------------------------------------------------------------------
# Full person_pair forward.
# ----------------------------------------------------------------------------
def person_pair_forward(params, x0, x1, x2, x3, x4):
    del x0  # overwritten in the PyTorch forward (x0 = resnet101_global(x1))
    # Fused: backbones + bbox linear + concat -> xcat.
    xcat = features(x1, x2, x3, x4, params)
    # Dropout -> identity (inference mode).
    fc6, logits = head(xcat, params["w6"], params["b6"],
                       params["w7"], params["b7"])
    return logits, fc6


def init_params(key, in_channels):
    ks = jax.random.split(key, 8)
    std = 0.01  # nn.Linear init in _initialize_weights: normal(0, 0.01), bias 0
    return dict(
        w_global=std * jax.random.normal(ks[0], (in_channels, FEAT), jnp.float32),
        b_global=jnp.zeros((1, FEAT), jnp.float32),
        w_union=std * jax.random.normal(ks[1], (in_channels, FEAT), jnp.float32),
        b_union=jnp.zeros((1, FEAT), jnp.float32),
        w_a=std * jax.random.normal(ks[2], (in_channels, FEAT), jnp.float32),
        b_a=jnp.zeros((1, FEAT), jnp.float32),
        w_bbox=std * jax.random.normal(ks[3], (10, BBOX_FEAT), jnp.float32),
        b_bbox=jnp.zeros((1, BBOX_FEAT), jnp.float32),
        w6=std * jax.random.normal(ks[4], (CAT_DIM, FC6_DIM), jnp.float32),
        b6=jnp.zeros((1, FC6_DIM), jnp.float32),
        w7=std * jax.random.normal(ks[5], (FC6_DIM, NUM_CLASSES), jnp.float32),
        b7=jnp.zeros((1, NUM_CLASSES), jnp.float32),
    )


def reference_forward(params, x0, x1, x2, x3, x4):
    del x0

    def bk(x, w, b):
        return jnp.mean(x.reshape(x.shape[0], x.shape[1], -1), -1) @ w + b

    f_global = bk(x1, params["w_global"], params["b_global"])
    f_union = bk(x1, params["w_union"], params["b_union"])
    f_a = bk(x2, params["w_a"], params["b_a"])
    f_b = bk(x3, params["w_a"], params["b_a"])
    f_bbox = x4 @ params["w_bbox"] + params["b_bbox"]
    xcat = jnp.concatenate((f_bbox, f_global, f_union, f_a, f_b), axis=1)
    fc6 = xcat @ params["w6"] + params["b6"]
    logits = jnp.maximum(fc6, 0.0) @ params["w7"] + params["b7"]
    return logits, fc6


if __name__ == "__main__":
    key = jax.random.PRNGKey(0)
    k_in, k_par = jax.random.split(key)
    ki = jax.random.split(k_in, 5)

    B, C, H, W = 2, 3, 16, 16
    x0 = jax.random.normal(ki[0], (B, C, H, W), jnp.float32)
    x1 = jax.random.normal(ki[1], (B, C, H, W), jnp.float32)
    x2 = jax.random.normal(ki[2], (B, C, H, W), jnp.float32)
    x3 = jax.random.normal(ki[3], (B, C, H, W), jnp.float32)
    x4 = jax.random.normal(ki[4], (B, 10), jnp.float32)

    params = init_params(k_par, C)

    fwd = jax.jit(person_pair_forward)
    logits, fc6 = fwd(params, x0, x1, x2, x3, x4)
    jax.block_until_ready((logits, fc6))

    assert logits.shape == (B, NUM_CLASSES)
    assert fc6.shape == (B, FC6_DIM)

    ref_logits, ref_fc6 = reference_forward(params, x0, x1, x2, x3, x4)
    scale6 = float(jnp.max(jnp.abs(ref_fc6))) + 1e-8
    scale7 = float(jnp.max(jnp.abs(ref_logits))) + 1e-8
    np.testing.assert_allclose(np.asarray(fc6), np.asarray(ref_fc6),
                               rtol=1e-2, atol=1e-2 * scale6)
    np.testing.assert_allclose(np.asarray(logits), np.asarray(ref_logits),
                               rtol=1e-2, atol=1e-2 * scale7)

    print("KERNEL_OK")
</pallas_src>

<mosaic_0001>
module attributes {stable_mosaic.version = 11 : i64} {
  func.func @features_kernel(%arg0: i32, %arg1: memref<2x3x256xf32, #tpu.memory_space<vmem>>, %arg2: memref<2x3x256xf32, #tpu.memory_space<vmem>>, %arg3: memref<2x3x256xf32, #tpu.memory_space<vmem>>, %arg4: memref<2x10xf32, #tpu.memory_space<vmem>>, %arg5: memref<3x2048xf32, #tpu.memory_space<vmem>>, %arg6: memref<1x2048xf32, #tpu.memory_space<vmem>>, %arg7: memref<3x2048xf32, #tpu.memory_space<vmem>>, %arg8: memref<1x2048xf32, #tpu.memory_space<vmem>>, %arg9: memref<3x2048xf32, #tpu.memory_space<vmem>>, %arg10: memref<1x2048xf32, #tpu.memory_space<vmem>>, %arg11: memref<10x256xf32, #tpu.memory_space<vmem>>, %arg12: memref<1x256xf32, #tpu.memory_space<vmem>>, %arg13: memref<2x8448xf32, #tpu.memory_space<vmem>>) attributes {dimension_semantics = [#tpu.dimension_semantics<arbitrary>], iteration_bounds = array<i64: 1>, scalar_prefetch = 0 : i64, scratch_operands = 0 : i64, tpu.core_type = #tpu.core_type<tc>, window_params = [{pipeline_mode = #tpu.pipeline_mode<synchronous>, transform_indices = @transform_0, window_bounds = array<i64: 2, 3, 256>}, {pipeline_mode = #tpu.pipeline_mode<synchronous>, transform_indices = @transform_1, window_bounds = array<i64: 2, 3, 256>}, {pipeline_mode = #tpu.pipeline_mode<synchronous>, transform_indices = @transform_2, window_bounds = array<i64: 2, 3, 256>}, {pipeline_mode = #tpu.pipeline_mode<synchronous>, transform_indices = @transform_3, window_bounds = array<i64: 2, 10>}, {pipeline_mode = #tpu.pipeline_mode<synchronous>, transform_indices = @transform_4, window_bounds = array<i64: 3, 2048>}, {pipeline_mode = #tpu.pipeline_mode<synchronous>, transform_indices = @transform_5, window_bounds = array<i64: 1, 2048>}, {pipeline_mode = #tpu.pipeline_mode<synchronous>, transform_indices = @transform_6, window_bounds = array<i64: 3, 2048>}, {pipeline_mode = #tpu.pipeline_mode<synchronous>, transform_indices = @transform_7, window_bounds = array<i64: 1, 2048>}, {pipeline_mode = #tpu.pipeline_mode<synchronous>, transform_indices = @transform_8, window_bounds = array<i64: 3, 2048>}, {pipeline_mode = #tpu.pipeline_mode<synchronous>, transform_indices = @transform_9, window_bounds = array<i64: 1, 2048>}, {pipeline_mode = #tpu.pipeline_mode<synchronous>, transform_indices = @transform_10, window_bounds = array<i64: 10, 256>}, {pipeline_mode = #tpu.pipeline_mode<synchronous>, transform_indices = @transform_11, window_bounds = array<i64: 1, 256>}, {pipeline_mode = #tpu.pipeline_mode<synchronous>, transform_indices = @transform_12, window_bounds = array<i64: 2, 8448>}]} {
    %c0 = arith.constant 0 : index
    %c0_0 = arith.constant 0 : index
    %c0_1 = arith.constant 0 : index
    %0 = vector.load %arg1[%c0, %c0_0, %c0_1] : memref<2x3x256xf32, #tpu.memory_space<vmem>>, vector<2x3x256xf32>
    %cst = arith.constant dense<0.000000e+00> : vector<2x3xf32>
    %1 = vector.multi_reduction <add>, %0, %cst [2] : vector<2x3x256xf32> to vector<2x3xf32>
    %cst_2 = arith.constant 2.560000e+02 : f32
    %2 = vector.broadcast %cst_2 : f32 to vector<2x3xf32>
    %3 = arith.divf %1, %2 : vector<2x3xf32>
    %c0_3 = arith.constant 0 : index
    %c0_4 = arith.constant 0 : index
    %c0_5 = arith.constant 0 : index
    %4 = vector.load %arg2[%c0_3, %c0_4, %c0_5] : memref<2x3x256xf32, #tpu.memory_space<vmem>>, vector<2x3x256xf32>
    %cst_6 = arith.constant dense<0.000000e+00> : vector<2x3xf32>
    %5 = vector.multi_reduction <add>, %4, %cst_6 [2] : vector<2x3x256xf32> to vector<2x3xf32>
    %cst_7 = arith.constant 2.560000e+02 : f32
    %6 = vector.broadcast %cst_7 : f32 to vector<2x3xf32>
    %7 = arith.divf %5, %6 : vector<2x3xf32>
    %c0_8 = arith.constant 0 : index
    %c0_9 = arith.constant 0 : index
    %c0_10 = arith.constant 0 : index
    %8 = vector.load %arg3[%c0_8, %c0_9, %c0_10] : memref<2x3x256xf32, #tpu.memory_space<vmem>>, vector<2x3x256xf32>
    %cst_11 = arith.constant dense<0.000000e+00> : vector<2x3xf32>
    %9 = vector.multi_reduction <add>, %8, %cst_11 [2] : vector<2x3x256xf32> to vector<2x3xf32>
    %cst_12 = arith.constant 2.560000e+02 : f32
    %10 = vector.broadcast %cst_12 : f32 to vector<2x3xf32>
    %11 = arith.divf %9, %10 : vector<2x3xf32>
    %c0_13 = arith.constant 0 : index
    %c0_14 = arith.constant 0 : index
    %12 = vector.load %arg4[%c0_13, %c0_14] : memref<2x10xf32, #tpu.memory_space<vmem>>, vector<2x10xf32>
    %c0_15 = arith.constant 0 : index
    %c0_16 = arith.constant 0 : index
    %13 = vector.load %arg11[%c0_15, %c0_16] : memref<10x256xf32, #tpu.memory_space<vmem>>, vector<10x256xf32>
    %cst_17 = arith.constant dense<0.000000e+00> : vector<2x256xf32>
    %14 = tpu.matmul %12, %13, %cst_17 {dimension_numbers = #tpu.dot_dimension_numbers<[1], [0], [0], [1], [0, 0, 1, 1], [], []>} : vector<2x10xf32>, vector<10x256xf32>, vector<2x256xf32> -> vector<2x256xf32>
    %c0_18 = arith.constant 0 : index
    %c0_19 = arith.constant 0 : index
    %15 = vector.load %arg12[%c0_18, %c0_19] : memref<1x256xf32, #tpu.memory_space<vmem>>, vector<1x256xf32>
    %16 = vector.broadcast %15 : vector<1x256xf32> to vector<2x256xf32>
    %17 = arith.addf %14, %16 : vector<2x256xf32>
    %c0_20 = arith.constant 0 : index
    %c0_21 = arith.constant 0 : index
    %18 = vector.load %arg13[%c0_20, %c0_21] : memref<2x8448xf32, #tpu.memory_space<vmem>>, vector<2x256xf32>
    tpu.vector_store %arg13[%c0_20, %c0_21], %17 {strides = array<i32>} : memref<2x8448xf32, #tpu.memory_space<vmem>>, vector<2x256xf32>,
    %c0_22 = arith.constant 0 : index
    %c0_23 = arith.constant 0 : index
    %19 = vector.load %arg5[%c0_22, %c0_23] : memref<3x2048xf32, #tpu.memory_space<vmem>>, vector<3x2048xf32>
    %cst_24 = arith.constant dense<0.000000e+00> : vector<2x2048xf32>
    %20 = tpu.matmul %3, %19, %cst_24 {dimension_numbers = #tpu.dot_dimension_numbers<[1], [0], [0], [1], [0, 0, 1, 1], [], []>} : vector<2x3xf32>, vector<3x2048xf32>, vector<2x2048xf32> -> vector<2x2048xf32>
    %c0_25 = arith.constant 0 : index
    %c0_26 = arith.constant 0 : index
    %21 = vector.load %arg6[%c0_25, %c0_26] : memref<1x2048xf32, #tpu.memory_space<vmem>>, vector<1x2048xf32>
    %22 = vector.broadcast %21 : vector<1x2048xf32> to vector<2x2048xf32>
    %23 = arith.addf %20, %22 : vector<2x2048xf32>
    %c0_27 = arith.constant 0 : index
    %c256 = arith.constant 256 : index
    %24 = vector.load %arg13[%c0_27, %c256] : memref<2x8448xf32, #tpu.memory_space<vmem>>, vector<2x2048xf32>
    tpu.vector_store %arg13[%c0_27, %c256], %23 {strides = array<i32>} : memref<2x8448xf32, #tpu.memory_space<vmem>>, vector<2x2048xf32>,
    %c0_28 = arith.constant 0 : index
    %c0_29 = arith.constant 0 : index
    %25 = vector.load %arg7[%c0_28, %c0_29] : memref<3x2048xf32, #tpu.memory_space<vmem>>, vector<3x2048xf32>
    %cst_30 = arith.constant dense<0.000000e+00> : vector<2x2048xf32>
    %26 = tpu.matmul %3, %25, %cst_30 {dimension_numbers = #tpu.dot_dimension_numbers<[1], [0], [0], [1], [0, 0, 1, 1], [], []>} : vector<2x3xf32>, vector<3x2048xf32>, vector<2x2048xf32> -> vector<2x2048xf32>
    %c0_31 = arith.constant 0 : index
    %c0_32 = arith.constant 0 : index
    %27 = vector.load %arg8[%c0_31, %c0_32] : memref<1x2048xf32, #tpu.memory_space<vmem>>, vector<1x2048xf32>
    %28 = vector.broadcast %27 : vector<1x2048xf32> to vector<2x2048xf32>
    %29 = arith.addf %26, %28 : vector<2x2048xf32>
    %c0_33 = arith.constant 0 : index
    %c2304 = arith.constant 2304 : index
    %30 = vector.load %arg13[%c0_33, %c2304] : memref<2x8448xf32, #tpu.memory_space<vmem>>, vector<2x2048xf32>
    tpu.vector_store %arg13[%c0_33, %c2304], %29 {strides = array<i32>} : memref<2x8448xf32, #tpu.memory_space<vmem>>, vector<2x2048xf32>,
    %c0_34 = arith.constant 0 : index
    %c0_35 = arith.constant 0 : index
    %31 = vector.load %arg9[%c0_34, %c0_35] : memref<3x2048xf32, #tpu.memory_space<vmem>>, vector<3x2048xf32>
    %cst_36 = arith.constant dense<0.000000e+00> : vector<2x2048xf32>
    %32 = tpu.matmul %7, %31, %cst_36 {dimension_numbers = #tpu.dot_dimension_numbers<[1], [0], [0], [1], [0, 0, 1, 1], [], []>} : vector<2x3xf32>, vector<3x2048xf32>, vector<2x2048xf32> -> vector<2x2048xf32>
    %c0_37 = arith.constant 0 : index
    %c0_38 = arith.constant 0 : index
    %33 = vector.load %arg10[%c0_37, %c0_38] : memref<1x2048xf32, #tpu.memory_space<vmem>>, vector<1x2048xf32>
    %34 = vector.broadcast %33 : vector<1x2048xf32> to vector<2x2048xf32>
    %35 = arith.addf %32, %34 : vector<2x2048xf32>
    %c0_39 = arith.constant 0 : index
    %c4352 = arith.constant 4352 : index
    %36 = vector.load %arg13[%c0_39, %c4352] : memref<2x8448xf32, #tpu.memory_space<vmem>>, vector<2x2048xf32>
    tpu.vector_store %arg13[%c0_39, %c4352], %35 {strides = array<i32>} : memref<2x8448xf32, #tpu.memory_space<vmem>>, vector<2x2048xf32>,
    %c0_40 = arith.constant 0 : index
    %c0_41 = arith.constant 0 : index
    %37 = vector.load %arg9[%c0_40, %c0_41] : memref<3x2048xf32, #tpu.memory_space<vmem>>, vector<3x2048xf32>
    %cst_42 = arith.constant dense<0.000000e+00> : vector<2x2048xf32>
    %38 = tpu.matmul %11, %37, %cst_42 {dimension_numbers = #tpu.dot_dimension_numbers<[1], [0], [0], [1], [0, 0, 1, 1], [], []>} : vector<2x3xf32>, vector<3x2048xf32>, vector<2x2048xf32> -> vector<2x2048xf32>
    %c0_43 = arith.constant 0 : index
    %c0_44 = arith.constant 0 : index
    %39 = vector.load %arg10[%c0_43, %c0_44] : memref<1x2048xf32, #tpu.memory_space<vmem>>, vector<1x2048xf32>
    %40 = vector.broadcast %39 : vector<1x2048xf32> to vector<2x2048xf32>
    %41 = arith.addf %38, %40 : vector<2x2048xf32>
    %c0_45 = arith.constant 0 : index
    %c6400 = arith.constant 6400 : index
    %42 = vector.load %arg13[%c0_45, %c6400] : memref<2x8448xf32, #tpu.memory_space<vmem>>, vector<2x2048xf32>
    tpu.vector_store %arg13[%c0_45, %c6400], %41 {strides = array<i32>} : memref<2x8448xf32, #tpu.memory_space<vmem>>, vector<2x2048xf32>,
    return
  }
  func.func @transform_0(%arg0: i32) -> (i32, i32, i32) {
    %c0_i32 = arith.constant 0 : i32
    %c0_i32_0 = arith.constant 0 : i32
    %c0_i32_1 = arith.constant 0 : i32
    %c0_i32_2 = arith.constant 0 : i32
    return %c0_i32, %c0_i32_0, %c0_i32_1 : i32, i32, i32
  }
  func.func @transform_1(%arg0: i32) -> (i32, i32, i32) {
    %c0_i32 = arith.constant 0 : i32
    %c0_i32_0 = arith.constant 0 : i32
    %c0_i32_1 = arith.constant 0 : i32
    %c0_i32_2 = arith.constant 0 : i32
    return %c0_i32, %c0_i32_0, %c0_i32_1 : i32, i32, i32
  }
  func.func @transform_2(%arg0: i32) -> (i32, i32, i32) {
    %c0_i32 = arith.constant 0 : i32
    %c0_i32_0 = arith.constant 0 : i32
    %c0_i32_1 = arith.constant 0 : i32
    %c0_i32_2 = arith.constant 0 : i32
    return %c0_i32, %c0_i32_0, %c0_i32_1 : i32, i32, i32
  }
  func.func @transform_3(%arg0: i32) -> (i32, i32) {
    %c0_i32 = arith.constant 0 : i32
    %c0_i32_0 = arith.constant 0 : i32
    %c0_i32_1 = arith.constant 0 : i32
    return %c0_i32, %c0_i32_0 : i32, i32
  }
  func.func @transform_4(%arg0: i32) -> (i32, i32) {
    %c0_i32 = arith.constant 0 : i32
    %c0_i32_0 = arith.constant 0 : i32
    %c0_i32_1 = arith.constant 0 : i32
    return %c0_i32, %c0_i32_0 : i32, i32
  }
  func.func @transform_5(%arg0: i32) -> (i32, i32) {
    %c0_i32 = arith.constant 0 : i32
    %c0_i32_0 = arith.constant 0 : i32
    %c0_i32_1 = arith.constant 0 : i32
    return %c0_i32, %c0_i32_0 : i32, i32
  }
  func.func @transform_6(%arg0: i32) -> (i32, i32) {
    %c0_i32 = arith.constant 0 : i32
    %c0_i32_0 = arith.constant 0 : i32
    %c0_i32_1 = arith.constant 0 : i32
    return %c0_i32, %c0_i32_0 : i32, i32
  }
  func.func @transform_7(%arg0: i32) -> (i32, i32) {
    %c0_i32 = arith.constant 0 : i32
    %c0_i32_0 = arith.constant 0 : i32
    %c0_i32_1 = arith.constant 0 : i32
    return %c0_i32, %c0_i32_0 : i32, i32
  }
  func.func @transform_8(%arg0: i32) -> (i32, i32) {
    %c0_i32 = arith.constant 0 : i32
    %c0_i32_0 = arith.constant 0 : i32
    %c0_i32_1 = arith.constant 0 : i32
    return %c0_i32, %c0_i32_0 : i32, i32
  }
  func.func @transform_9(%arg0: i32) -> (i32, i32) {
    %c0_i32 = arith.constant 0 : i32
    %c0_i32_0 = arith.constant 0 : i32
    %c0_i32_1 = arith.constant 0 : i32
    return %c0_i32, %c0_i32_0 : i32, i32
  }
  func.func @transform_10(%arg0: i32) -> (i32, i32) {
    %c0_i32 = arith.constant 0 : i32
    %c0_i32_0 = arith.constant 0 : i32
    %c0_i32_1 = arith.constant 0 : i32
    return %c0_i32, %c0_i32_0 : i32, i32
  }
  func.func @transform_11(%arg0: i32) -> (i32, i32) {
    %c0_i32 = arith.constant 0 : i32
    %c0_i32_0 = arith.constant 0 : i32
    %c0_i32_1 = arith.constant 0 : i32
    return %c0_i32, %c0_i32_0 : i32, i32
  }
  func.func @transform_12(%arg0: i32) -> (i32, i32) {
    %c0_i32 = arith.constant 0 : i32
    %c0_i32_0 = arith.constant 0 : i32
    %c0_i32_1 = arith.constant 0 : i32
    return %c0_i32, %c0_i32_0 : i32, i32
  }
}

module attributes {stable_mosaic.version = 11 : i64} {
  func.func @head_kernel(%arg0: i32, %arg1: i32, %arg2: memref<2x8448xf32, #tpu.memory_space<vmem>>, %arg3: memref<2816x1024xf32, #tpu.memory_space<vmem>>, %arg4: memref<1x1024xf32, #tpu.memory_space<vmem>>, %arg5: memref<1024x3xf32, #tpu.memory_space<vmem>>, %arg6: memref<2x1024xf32, #tpu.memory_space<vmem>>, %arg7: memref<1x2x3xf32, #tpu.memory_space<vmem>>, %arg8: memref<2x1024xf32, #tpu.memory_space<vmem>>) attributes {dimension_semantics = [#tpu.dimension_semantics<parallel>, #tpu.dimension_semantics<arbitrary>], iteration_bounds = array<i64: 4, 3>, scalar_prefetch = 0 : i64, scratch_operands = 1 : i64, tpu.core_type = #tpu.core_type<tc>, window_params = [{pipeline_mode = #tpu.pipeline_mode<synchronous>, transform_indices = @transform_0, window_bounds = array<i64: 2, 8448>}, {transform_indices = @transform_1, window_bounds = array<i64: 2816, 1024>}, {transform_indices = @transform_2, window_bounds = array<i64: 1, 1024>}, {transform_indices = @transform_3, window_bounds = array<i64: 1024, 3>}, {transform_indices = @transform_4, window_bounds = array<i64: 2, 1024>}, {transform_indices = @transform_5, window_bounds = array<i64: 1, 2, 3>}]} {
    %c0_i32 = arith.constant 0 : i32
    %0 = arith.cmpi eq, %arg1, %c0_i32 : i32
    %1 = arith.extui %0 : i1 to i32
    %c0_i32_0 = arith.constant 0 : i32
    %2 = arith.cmpi ne, %1, %c0_i32_0 : i32
    scf.if %2 {
      %cst_8 = arith.constant 0.000000e+00 : f32
      %15 = vector.broadcast %cst_8 : f32 to vector<2x1024xf32>
      %c0_9 = arith.constant 0 : index
      %c0_10 = arith.constant 0 : index
      %16 = vector.load %arg8[%c0_9, %c0_10] : memref<2x1024xf32, #tpu.memory_space<vmem>>, vector<2x1024xf32>
      tpu.vector_store %arg8[%c0_9, %c0_10], %15 {strides = array<i32>} : memref<2x1024xf32, #tpu.memory_space<vmem>>, vector<2x1024xf32>,
    } else {
    }
    %c2816_i32 = arith.constant 2816 : i32
    %3 = arith.muli %arg1, %c2816_i32 : i32
    %4 = tpu.assume_multiple %3, 128 : i32
    %c0 = arith.constant 0 : index
    %c0_1 = arith.constant 0 : index
    %5 = vector.load %arg8[%c0, %c0_1] : memref<2x1024xf32, #tpu.memory_space<vmem>>, vector<2x1024xf32>
    %c0_2 = arith.constant 0 : index
    %6 = arith.index_cast %4 : i32 to index
    %7 = vector.load %arg2[%c0_2, %6] : memref<2x8448xf32, #tpu.memory_space<vmem>>, vector<2x2816xf32>
    %c0_3 = arith.constant 0 : index
    %c0_4 = arith.constant 0 : index
    %8 = vector.load %arg3[%c0_3, %c0_4] : memref<2816x1024xf32, #tpu.memory_space<vmem>>, vector<2816x1024xf32>
    %cst = arith.constant dense<0.000000e+00> : vector<2x1024xf32>
    %9 = tpu.matmul %7, %8, %cst {dimension_numbers = #tpu.dot_dimension_numbers<[1], [0], [0], [1], [0, 0, 1, 1], [], []>} : vector<2x2816xf32>, vector<2816x1024xf32>, vector<2x1024xf32> -> vector<2x1024xf32>
    %10 = arith.addf %5, %9 : vector<2x1024xf32>
    %c0_5 = arith.constant 0 : index
    %c0_6 = arith.constant 0 : index
    %11 = vector.load %arg8[%c0_5, %c0_6] : memref<2x1024xf32, #tpu.memory_space<vmem>>, vector<2x1024xf32>
    tpu.vector_store %arg8[%c0_5, %c0_6], %10 {strides = array<i32>} : memref<2x1024xf32, #tpu.memory_space<vmem>>, vector<2x1024xf32>,
    %c2_i32 = arith.constant 2 : i32
    %12 = arith.cmpi eq, %arg1, %c2_i32 : i32
    %13 = arith.extui %12 : i1 to i32
    %c0_i32_7 = arith.constant 0 : i32
    %14 = arith.cmpi ne, %13, %c0_i32_7 : i32
    scf.if %14 {
      %c0_8 = arith.constant 0 : index
      %c0_9 = arith.constant 0 : index
      %15 = vector.load %arg8[%c0_8, %c0_9] : memref<2x1024xf32, #tpu.memory_space<vmem>>, vector<2x1024xf32>
      %c0_10 = arith.constant 0 : index
      %c0_11 = arith.constant 0 : index
      %16 = vector.load %arg4[%c0_10, %c0_11] : memref<1x1024xf32, #tpu.memory_space<vmem>>, vector<1x1024xf32>
      %17 = vector.broadcast %16 : vector<1x1024xf32> to vector<2x1024xf32>
      %18 = arith.addf %15, %17 : vector<2x1024xf32>
      %c0_12 = arith.constant 0 : index
      %c0_13 = arith.constant 0 : index
      %19 = vector.load %arg6[%c0_12, %c0_13] : memref<2x1024xf32, #tpu.memory_space<vmem>>, vector<2x1024xf32>
      tpu.vector_store %arg6[%c0_12, %c0_13], %18 {strides = array<i32>} : memref<2x1024xf32, #tpu.memory_space<vmem>>, vector<2x1024xf32>,
      %cst_14 = arith.constant 0.000000e+00 : f32
      %20 = vector.broadcast %cst_14 : f32 to vector<2x1024xf32>
      %21 = arith.maximumf %18, %20 : vector<2x1024xf32>
      %c0_15 = arith.constant 0 : index
      %c0_16 = arith.constant 0 : index
      %22 = vector.load %arg5[%c0_15, %c0_16] : memref<1024x3xf32, #tpu.memory_space<vmem>>, vector<1024x3xf32>
      %cst_17 = arith.constant dense<0.000000e+00> : vector<2x3xf32>
      %23 = tpu.matmul %21, %22, %cst_17 {dimension_numbers = #tpu.dot_dimension_numbers<[1], [0], [0], [1], [0, 0, 1, 1], [], []>} : vector<2x1024xf32>, vector<1024x3xf32>, vector<2x3xf32> -> vector<2x3xf32>
      %c0_18 = arith.constant 0 : index
      %c0_19 = arith.constant 0 : index
      %c0_20 = arith.constant 0 : index
      %24 = vector.load %arg7[%c0_18, %c0_19, %c0_20] : memref<1x2x3xf32, #tpu.memory_space<vmem>>, vector<1x2x3xf32>
      %25 = vector.shape_cast %24 : vector<1x2x3xf32> to vector<2x3xf32>
      %26 = vector.shape_cast %23 : vector<2x3xf32> to vector<1x2x3xf32>
      tpu.vector_store %arg7[%c0_18, %c0_19, %c0_20], %26 {strides = array<i32>} : memref<1x2x3xf32, #tpu.memory_space<vmem>>, vector<1x2x3xf32>,
    } else {
    }
    return
  }
  func.func @transform_0(%arg0: i32, %arg1: i32) -> (i32, i32) {
    %c0_i32 = arith.constant 0 : i32
    %c0_i32_0 = arith.constant 0 : i32
    %c0_i32_1 = arith.constant 0 : i32
    return %c0_i32, %c0_i32_0 : i32, i32
  }
  func.func @transform_1(%arg0: i32, %arg1: i32) -> (i32, i32) {
    %c0_i32 = arith.constant 0 : i32
    return %arg1, %arg0 : i32, i32
  }
  func.func @transform_2(%arg0: i32, %arg1: i32) -> (i32, i32) {
    %c0_i32 = arith.constant 0 : i32
    %c0_i32_0 = arith.constant 0 : i32
    return %c0_i32, %arg0 : i32, i32
  }
  func.func @transform_3(%arg0: i32, %arg1: i32) -> (i32, i32) {
    %c0_i32 = arith.constant 0 : i32
    %c0_i32_0 = arith.constant 0 : i32
    return %arg0, %c0_i32 : i32, i32
  }
  func.func @transform_4(%arg0: i32, %arg1: i32) -> (i32, i32) {
    %c0_i32 = arith.constant 0 : i32
    %c0_i32_0 = arith.constant 0 : i32
    return %c0_i32, %arg0 : i32, i32
  }
  func.func @transform_5(%arg0: i32, %arg1: i32) -> (i32, i32, i32) {
    %c0_i32 = arith.constant 0 : i32
    %c0_i32_0 = arith.constant 0 : i32
    %c0_i32_1 = arith.constant 0 : i32
    return %arg0, %c0_i32, %c0_i32_0 : i32, i32, i32
  }
}

</mosaic_0001>

<llo_original>
// kernel: person_pair_forward.2
$region0: #{person_pair_forward.2}
  #allocation0 [shape = 'u32[]', space=smem, size = 0x4, offset = 0x4, fixed_abs, tag = 'smem constant byte address 0x4 - core index']
  #allocation1 [shape = 'u32[144,128]{1,0:T(1,128)}', space=vmem, size = 0x12000, scoped, tag = 'internal scratch']
  %s0 = inlined_call_operand.vmem [shape: f32[2,3,256], index: 0, kind: input, shape index: {}]
  %s1 = inlined_call_operand.vmem [shape: f32[2,3,256], index: 1, kind: input, shape index: {}]
  %s2 = inlined_call_operand.vmem [shape: f32[2,3,256], index: 2, kind: input, shape index: {}]
  %s3 = inlined_call_operand.hbm [shape: f32[2,10], index: 3, kind: input, shape index: {}]
  %s4 = inlined_call_operand.hbm [shape: f32[3,2048], index: 4, kind: input, shape index: {}]
  %s5 = inlined_call_operand.hbm [shape: f32[1,2048], index: 5, kind: input, shape index: {}]
  %s6 = inlined_call_operand.hbm [shape: f32[3,2048], index: 6, kind: input, shape index: {}]
  %s7 = inlined_call_operand.hbm [shape: f32[1,2048], index: 7, kind: input, shape index: {}]
  %s8 = inlined_call_operand.hbm [shape: f32[3,2048], index: 8, kind: input, shape index: {}]
  %s9 = inlined_call_operand.hbm [shape: f32[1,2048], index: 9, kind: input, shape index: {}]
  %s10 = inlined_call_operand.hbm [shape: f32[10,256], index: 10, kind: input, shape index: {}]
  %s11 = inlined_call_operand.hbm [shape: f32[1,256], index: 11, kind: input, shape index: {}]
  %s12 = inlined_call_operand.vmem [shape: f32[2,8448], index: 12, kind: output, shape index: {}]
  %s13 = sld [smem:[#allocation0]]
  $region94: #{person_pair_forward.2} parent=0
    _
  %s15 = ssub.s32 1, %s13
  %s16 = scalar_select 0, %s15, %s13
  $region1: #{person_pair_forward.2} parent=0
    #allocation2 [shape = 'u8[1024]{0}', space=vmem, size = 0x400, scoped, tag = 'input window, operand 3, single buffered']
    #allocation3 [shape = 's32[1]{0}', space=sflag, size = 0x4, scoped, tag = 'scoped memory for person_pair_forward.2']
    #allocation4 [shape = 'u8[32768]{0}', space=vmem, size = 0x8000, scoped, tag = 'input window, operand 4, single buffered']
    #allocation5 [shape = 's32[1]{0}', space=sflag, size = 0x4, scoped, tag = 'scoped memory for person_pair_forward.2']
    #allocation6 [shape = 'u8[8192]{0}', space=vmem, size = 0x2000, scoped, tag = 'input window, operand 5, single buffered']
    #allocation7 [shape = 'u8[32768]{0}', space=vmem, size = 0x8000, scoped, tag = 'input window, operand 6, single buffered']
    #allocation8 [shape = 's32[1]{0}', space=sflag, size = 0x4, scoped, tag = 'scoped memory for person_pair_forward.2']
    #allocation9 [shape = 'u8[8192]{0}', space=vmem, size = 0x2000, scoped, tag = 'input window, operand 7, single buffered']
    #allocation10 [shape = 'u8[32768]{0}', space=vmem, size = 0x8000, scoped, tag = 'input window, operand 8, single buffered']
    #allocation11 [shape = 's32[1]{0}', space=sflag, size = 0x4, scoped, tag = 'scoped memory for person_pair_forward.2']
    #allocation12 [shape = 'u8[8192]{0}', space=vmem, size = 0x2000, scoped, tag = 'input window, operand 9, single buffered']
    #allocation13 [shape = 'u8[16384]{0}', space=vmem, size = 0x4000, scoped, tag = 'input window, operand 10, single buffered']
    #allocation14 [shape = 's32[1]{0}', space=sflag, size = 0x4, scoped, tag = 'scoped memory for person_pair_forward.2']
    #allocation15 [shape = 'u8[1024]{0}', space=vmem, size = 0x400, scoped, tag = 'input window, operand 11, single buffered']
    %17 = vsyncpa [#allocation3], 0
    %18 = vsyncpa [#allocation5], 0
    %19 = vsyncpa [#allocation8], 0
    %20 = vsyncpa [#allocation11], 0
    %21 = vsyncpa [#allocation14], 0
    // Predicated region
    $region2: #{person_pair_forward.2} parent=1 // pred_check
      _
    $region3: #{person_pair_forward.2} parent=1 // pred_check_branch
      %23 = sbr.rel (0) target = $region5
    $region4: #{person_pair_forward.2} parent=1 // pred_region
      _
    $region5: #{person_pair_forward.2} parent=1 // pred_fallthru
      _
    // Predicated region
    $region6: #{person_pair_forward.2} parent=1 // pred_check
      _
    $region7: #{person_pair_forward.2} parent=1 // pred_check_branch
      %25 = sbr.rel (0) target = $region9
    $region8: #{person_pair_forward.2} parent=1 // pred_region
      _
    $region9: #{person_pair_forward.2} parent=1 // pred_fallthru
      _
    // Predicated region
    $region10: #{person_pair_forward.2} parent=1 // pred_check
      _
    $region11: #{person_pair_forward.2} parent=1 // pred_check_branch
      %27 = sbr.rel (0) target = $region13
    $region12: #{person_pair_forward.2} parent=1 // pred_region
      _
    $region13: #{person_pair_forward.2} parent=1 // pred_fallthru
      _
    // Predicated region
    $region14: #{person_pair_forward.2} parent=1 // pred_check
      _
    $region15: #{person_pair_forward.2} parent=1 // pred_check_branch
      %29 = sbr.rel (0) target = $region17
    $region16: #{person_pair_forward.2} parent=1 // pred_region
      %s31 = ssub.s32 32, 32
      %32 = vsyncadd [#allocation3], %s31
      %s34 = sshll.u32 [#allocation2], 4
      %s35 = int_to_ptr.vmem [resolvable:$true] %s34
      %37 = dma.hbm_to_vmem [thread:$0]  %s3, 32, %s35, [#allocation3]
    $region17: #{person_pair_forward.2} parent=1 // pred_fallthru
      _
    // Predicated region
    $region18: #{person_pair_forward.2} parent=1 // pred_check
      _
    $region19: #{person_pair_forward.2} parent=1 // pred_check_branch
      %39 = sbr.rel (0) target = $region21
    $region20: #{person_pair_forward.2} parent=1 // pred_region
      %s41 = ssub.s32 1024, 1024
      %42 = vsyncadd [#allocation5], %s41
      %s44 = sshll.u32 [#allocation4], 4
      %s45 = int_to_ptr.vmem [resolvable:$true] %s44
      %47 = dma.hbm_to_vmem [thread:$0]  %s4, 1024, %s45, [#allocation5]
    $region21: #{person_pair_forward.2} parent=1 // pred_fallthru
      _
    // Predicated region
    $region22: #{person_pair_forward.2} parent=1 // pred_check
      _
    $region23: #{person_pair_forward.2} parent=1 // pred_check_branch
      %49 = sbr.rel (0) target = $region25
    $region24: #{person_pair_forward.2} parent=1 // pred_region
      %s51 = ssub.s32 256, 256
      %52 = vsyncadd [#allocation5], %s51
      %s54 = sshll.u32 [#allocation6], 4
      %s55 = int_to_ptr.vmem [resolvable:$true] %s54
      %57 = dma.hbm_to_vmem [thread:$0]  %s5, 256, %s55, [#allocation5]
    $region25: #{person_pair_forward.2} parent=1 // pred_fallthru
      _
    // Predicated region
    $region26: #{person_pair_forward.2} parent=1 // pred_check
      _
    $region27: #{person_pair_forward.2} parent=1 // pred_check_branch
      %59 = sbr.rel (0) target = $region29
    $region28: #{person_pair_forward.2} parent=1 // pred_region
      %s61 = ssub.s32 1024, 1024
      %62 = vsyncadd [#allocation8], %s61
      %s64 = sshll.u32 [#allocation7], 4
      %s65 = int_to_ptr.vmem [resolvable:$true] %s64
      %67 = dma.hbm_to_vmem [thread:$0]  %s6, 1024, %s65, [#allocation8]
    $region29: #{person_pair_forward.2} parent=1 // pred_fallthru
      _
    // Predicated region
    $region30: #{person_pair_forward.2} parent=1 // pred_check
      _
    $region31: #{person_pair_forward.2} parent=1 // pred_check_branch
      %69 = sbr.rel (0) target = $region33
    $region32: #{person_pair_forward.2} parent=1 // pred_region
      %s71 = ssub.s32 256, 256
      %72 = vsyncadd [#allocation8], %s71
      %s74 = sshll.u32 [#allocation9], 4
      %s75 = int_to_ptr.vmem [resolvable:$true] %s74
      %77 = dma.hbm_to_vmem [thread:$0]  %s7, 256, %s75, [#allocation8]
    $region33: #{person_pair_forward.2} parent=1 // pred_fallthru
      _
    // Predicated region
    $region34: #{person_pair_forward.2} parent=1 // pred_check
      _
    $region35: #{person_pair_forward.2} parent=1 // pred_check_branch
      %79 = sbr.rel (0) target = $region37
    $region36: #{person_pair_forward.2} parent=1 // pred_region
      %s81 = ssub.s32 1024, 1024
      %82 = vsyncadd [#allocation11], %s81
      %s84 = sshll.u32 [#allocation10], 4
      %s85 = int_to_ptr.vmem [resolvable:$true] %s84
      %87 = dma.hbm_to_vmem [thread:$0]  %s8, 1024, %s85, [#allocation11]
    $region37: #{person_pair_forward.2} parent=1 // pred_fallthru
      _
    // Predicated region
    $region38: #{person_pair_forward.2} parent=1 // pred_check
      _
    $region39: #{person_pair_forward.2} parent=1 // pred_check_branch
      %89 = sbr.rel (0) target = $region41
    $region40: #{person_pair_forward.2} parent=1 // pred_region
      %s91 = ssub.s32 256, 256
      %92 = vsyncadd [#allocation11], %s91
      %s94 = sshll.u32 [#allocation12], 4
      %s95 = int_to_ptr.vmem [resolvable:$true] %s94
      %97 = dma.hbm_to_vmem [thread:$0]  %s9, 256, %s95, [#allocation11]
    $region41: #{person_pair_forward.2} parent=1 // pred_fallthru
      _
    // Predicated region
    $region42: #{person_pair_forward.2} parent=1 // pred_check
      _
    $region43: #{person_pair_forward.2} parent=1 // pred_check_branch
      %99 = sbr.rel (0) target = $region45
    $region44: #{person_pair_forward.2} parent=1 // pred_region
      %s101 = ssub.s32 512, 512
      %102 = vsyncadd [#allocation14], %s101
      %s103 = sshll.u32 [#allocation13], 4
      %s104 = int_to_ptr.vmem [resolvable:$true] %s103
      %109 = dma.hbm_to_vmem [thread:$0]  %s10, 512, %s104, [#allocation14], 256, 256, 16
    $region45: #{person_pair_forward.2} parent=1 // pred_fallthru
      _
    // Predicated region
    $region46: #{person_pair_forward.2} parent=1 // pred_check
      _
    $region47: #{person_pair_forward.2} parent=1 // pred_check_branch
      %111 = sbr.rel (0) target = $region49
    $region48: #{person_pair_forward.2} parent=1 // pred_region
      %s113 = ssub.s32 32, 32
      %114 = vsyncadd [#allocation14], %s113
      %s116 = sshll.u32 [#allocation15], 4
      %s117 = int_to_ptr.vmem [resolvable:$true] %s116
      %119 = dma.hbm_to_vmem [thread:$0]  %s11, 32, %s117, [#allocation14]
    $region49: #{person_pair_forward.2} parent=1 // pred_fallthru
      _
    // Predicated region
    $region50: #{person_pair_forward.2} parent=1 // pred_check
      _
    $region51: #{person_pair_forward.2} parent=1 // pred_check_branch
      %121 = sbr.rel (0) target = $region53
    $region52: #{person_pair_forward.2} parent=1 // pred_region
      %122 = dma.done [#allocation3], 32
    $region53: #{person_pair_forward.2} parent=1 // pred_fallthru
      _
    // Predicated region
    $region54: #{person_pair_forward.2} parent=1 // pred_check
      _
    $region55: #{person_pair_forward.2} parent=1 // pred_check_branch
      %124 = sbr.rel (0) target = $region57
    $region56: #{person_pair_forward.2} parent=1 // pred_region
      %125 = dma.done [#allocation5], 1024
    $region57: #{person_pair_forward.2} parent=1 // pred_fallthru
      _
    // Predicated region
    $region58: #{person_pair_forward.2} parent=1 // pred_check
      _
    $region59: #{person_pair_forward.2} parent=1 // pred_check_branch
      %127 = sbr.rel (0) target = $region61
    $region60: #{person_pair_forward.2} parent=1 // pred_region
      %128 = dma.done [#allocation5], 256
    $region61: #{person_pair_forward.2} parent=1 // pred_fallthru
      _
    // Predicated region
    $region62: #{person_pair_forward.2} parent=1 // pred_check
      _
    $region63: #{person_pair_forward.2} parent=1 // pred_check_branch
      %130 = sbr.rel (0) target = $region65
    $region64: #{person_pair_forward.2} parent=1 // pred_region
      %131 = dma.done [#allocation8], 1024
    $region65: #{person_pair_forward.2} parent=1 // pred_fallthru
      _
    // Predicated region
    $region66: #{person_pair_forward.2} parent=1 // pred_check
      _
    $region67: #{person_pair_forward.2} parent=1 // pred_check_branch
      %133 = sbr.rel (0) target = $region69
    $region68: #{person_pair_forward.2} parent=1 // pred_region
      %134 = dma.done [#allocation8], 256
    $region69: #{person_pair_forward.2} parent=1 // pred_fallthru
      _
    // Predicated region
    $region70: #{person_pair_forward.2} parent=1 // pred_check
      _
    $region71: #{person_pair_forward.2} parent=1 // pred_check_branch
      %136 = sbr.rel (0) target = $region73
    $region72: #{person_pair_forward.2} parent=1 // pred_region
      %137 = dma.done [#allocation11], 1024
    $region73: #{person_pair_forward.2} parent=1 // pred_fallthru
      _
    // Predicated region
    $region74: #{person_pair_forward.2} parent=1 // pred_check
      _
    $region75: #{person_pair_forward.2} parent=1 // pred_check_branch
      %139 = sbr.rel (0) target = $region77
    $region76: #{person_pair_forward.2} parent=1 // pred_region
      %140 = dma.done [#allocation11], 256
    $region77: #{person_pair_forward.2} parent=1 // pred_fallthru
      _
    // Predicated region
    $region78: #{person_pair_forward.2} parent=1 // pred_check
      _
    $region79: #{person_pair_forward.2} parent=1 // pred_check_branch
      %142 = sbr.rel (0) target = $region81
    $region80: #{person_pair_forward.2} parent=1 // pred_region
      %143 = dma.done [#allocation14], 512
    $region81: #{person_pair_forward.2} parent=1 // pred_fallthru
      _
    // Predicated region
    $region82: #{person_pair_forward.2} parent=1 // pred_check
      _
    $region83: #{person_pair_forward.2} parent=1 // pred_check_branch
      %145 = sbr.rel (0) target = $region85
    $region84: #{person_pair_forward.2} parent=1 // pred_region
      %146 = dma.done [#allocation14], 32
    $region85: #{person_pair_forward.2} parent=1 // pred_fallthru
      _
    %v147 = vld [vmem:[%s0] sm:$0x77]
    %v148 = vld [vmem:[%s0 + $0x8] sm:$0x77]
    %v151 = vcombine.high %v147, %v147
    %v152 = vcombine.high %v148, %v148
    %vm155 = vcmask 1042432
    %v156 = vsel %vm155, %v147, 0.0
    %v157 = vsel %vm155, %v151, 0.0
    %v158 = vadd.f32 %v156, %v157
    %159 = vadd.xlane.f32.xlu0 %v158
    %v160 = vpop.xlane.xlu0 %159
    %v161 = vsel %vm155, %v148, 0.0
    %v162 = vsel %vm155, %v152, 0.0
    %v163 = vadd.f32 %v161, %v162
    %164 = vadd.xlane.f32.xlu0 %v163
    %v165 = vpop.xlane.xlu0 %164
    %v166 = vrcp.pop 256.0
    %v167 = vmul.f32 %v160, %v166
    %v168 = vmul.f32 %v165, %v166
    %v169 = vld [vmem:[%s1] sm:$0x77]
    %v170 = vld [vmem:[%s1 + $0x8] sm:$0x77]
    %v173 = vcombine.high %v169, %v169
    %v174 = vcombine.high %v170, %v170
    %v177 = vsel %vm155, %v169, 0.0
    %v178 = vsel %vm155, %v173, 0.0
    %v179 = vadd.f32 %v177, %v178
    %180 = vadd.xlane.f32.xlu0 %v179
    %v181 = vpop.xlane.xlu0 %180
    %v182 = vsel %vm155, %v170, 0.0
    %v183 = vsel %vm155, %v174, 0.0
    %v184 = vadd.f32 %v182, %v183
    %185 = vadd.xlane.f32.xlu0 %v184
    %v186 = vpop.xlane.xlu0 %185
    %v187 = vmul.f32 %v181, %v166
    %v188 = vmul.f32 %v186, %v166
    %v189 = vld [vmem:[%s2] sm:$0x77]
    %v190 = vld [vmem:[%s2 + $0x8] sm:$0x77]
    %v193 = vcombine.high %v189, %v189
    %v194 = vcombine.high %v190, %v190
    %v197 = vsel %vm155, %v189, 0.0
    %v198 = vsel %vm155, %v193, 0.0
    %v199 = vadd.f32 %v197, %v198
    %200 = vadd.xlane.f32.xlu0 %v199
    %v201 = vpop.xlane.xlu0 %200
    %v202 = vsel %vm155, %v190, 0.0
    %v203 = vsel %vm155, %v194, 0.0
    %v204 = vadd.f32 %v202, %v203
    %205 = vadd.xlane.f32.xlu0 %v204
    %v206 = vpop.xlane.xlu0 %205
    %v207 = vmul.f32 %v201, %v166
    %v208 = vmul.f32 %v206, %v166
    %v209 = vld [vmem:[#allocation2] sm:$0x3]
    %v210 = vld [vmem:[#allocation13] sm:$0xff]
    %v211 = vld [vmem:[#allocation13 + $0x8] sm:$0xff]
    %v212 = vld [vmem:[#allocation13 + $0x10] sm:$0x3]
    %v213 = vld [vmem:[#allocation13 + $0x18] sm:$0x3]
    %v214 = vld [vmem:[#allocation15] sm:$0x3]
    %v216 = vlaneseq
    %v217 = vshrl.u32 %v216, 7
    %v218 = vsub.s32 0, %v217
    %v219 = vrot.slane %v214, %v218
    %v220 = vlaneseq
    %v221 = vshrl.u32 %v220, 7
    %v222 = vsub.s32 1, %v221
    %v223 = vrot.slane %v214, %v222
    %vm226 = vcmask 80896
    %v228 = vsel %vm226, %v209, 0
    %vm230 = vcmask 1041408
    %v232 = vsel %vm230, %v212, 0
    %v235 = vsel %vm230, %v213, 0
    %237 = vmatprep.subr.mxu0 %v211
    %238 = vmatpush1.msra.mxu0 %v210
    %239 = vmatprep.subr.mxu0 %v235
    %240 = vmatpush1.msra.mxu0 %v232
    %241 = vmatprep.subr.mxu0 0.0
    %242 = vmatpush1.msra.mxu0 0.0
    %243 = vmatprep.subr.mxu0 0.0
    %244 = vmatpush1.msra.mxu0 0.0
    %245 = vmatprep.subr.mxu0 0.0
    %246 = vmatpush1.msra.mxu0 0.0
    %247 = vmatprep.subr.mxu0 0.0
    %248 = vmatpush1.msra.mxu0 0.0
    %249 = vmatprep.subr.mxu0 0.0
    %250 = vmatpush1.msra.mxu0 0.0
    %251 = vmatprep.subr.mxu0 0.0
    %252 = vmatpush1.msra.mxu0 0.0
    %253 = vmatprep.subr.mxu0 0.0
    %254 = vmatpush1.msra.mxu0 0.0
    %255 = vmatprep.subr.mxu0 0.0
    %256 = vmatpush1.msra.mxu0 0.0
    %257 = vmatprep.subr.mxu0 0.0
    %258 = vmatpush1.msra.mxu0 0.0
    %259 = vmatprep.subr.mxu0 0.0
    %260 = vmatpush1.msra.mxu0 0.0
    %261 = vmatprep.subr.mxu0 0.0
    %262 = vmatpush1.msra.mxu0 0.0
    %263 = vmatprep.subr.mxu0 0.0
    %264 = vmatpush1.msra.mxu0 0.0
    %265 = vmatprep.subr.mxu0 0.0
    %266 = vmatpush1.msra.mxu0 0.0
    %267 = vmatprep.subr.mxu0 0.0
    %268 = vmatpush1.msra.mxu0 0.0
    %269 = vmatprep.subr.mxu0 0.0
    %270 = vmatpush1.msra.mxu0 0.0
    %271 = vmatprep.subr.mxu0 0.0
    %272 = vmatpush1.msra.mxu0 0.0
    %273 = vmatprep.subr.mxu0 0.0
    %274 = vmatpush1.msra.mxu0 0.0
    %275 = vmatprep.subr.mxu0 0.0
    %276 = vmatpush1.msra.mxu0 0.0
    %277 = vmatprep.subr.mxu0 0.0
    %278 = vmatpush1.msra.mxu0 0.0
    %279 = vmatprep.subr.mxu0 0.0
    %280 = vmatpush1.msra.mxu0 0.0
    %281 = vmatprep.subr.mxu0 0.0
    %282 = vmatpush1.msra.mxu0 0.0
    %283 = vmatprep.subr.mxu0 0.0
    %284 = vmatpush1.msra.mxu0 0.0
    %285 = vmatprep.subr.mxu0 0.0
    %286 = vmatpush1.msra.mxu0 0.0
    %287 = vmatprep.subr.mxu0 0.0
    %288 = vmatpush1.msra.mxu0 0.0
    %289 = vmatprep.subr.mxu0 0.0
    %290 = vmatpush1.msra.mxu0 0.0
    %291 = vmatprep.subr.mxu0 0.0
    %292 = vmatpush1.msra.mxu0 0.0
    %293 = vmatprep.subr.mxu0 0.0
    %294 = vmatpush1.msra.mxu0 0.0
    %295 = vmatprep.subr.mxu0 0.0
    %296 = vmatpush1.msra.mxu0 0.0
    %297 = vmatprep.subr.mxu0 0.0
    %298 = vmatpush1.msra.mxu0 0.0
    %299 = vmatprep.subr.mxu0 0.0
    %300 = vmatpush1.msra.mxu0 0.0
    %301 = vmatprep.mubr.f32.mxu0 0.0
    %302 = vmatmul.mubr.f32.gmra.mrb[0].mxu0 %v228
    %v303 = vpop.f32.mrb[0].mxu0
    %v304 = vadd.f32 %v219, %v303
    %v305 = vpop.f32.mrb[0].mxu0
    %v306 = vadd.f32 %v223, %v305
    %307 = vdwg.mxu0
    %v310 = vcombine.low %v304, %v306
    %v312 = vunpack.c.l.s4 1983009808
    %v313 = vunpack.c.0.s8 %v312
    %v314 = vlaneseq
    %v315 = vshrl.u32 %v314, 7
    %v316 = vsub.s32 %v313, %v315
    %v317 = vrot.slane %v310, %v316
    %319 = vst [vmem:[%s12] sm:$0xf] %v317
    %v320 = vld [vmem:[#allocation4] sm:$0x77]
    %v321 = vld [vmem:[#allocation4 + $0x8] sm:$0x77]
    %v322 = vld [vmem:[#allocation4 + $0x10] sm:$0x77]
    %v323 = vld [vmem:[#allocation4 + $0x18] sm:$0x77]
    %v324 = vld [vmem:[#allocation4 + $0x20] sm:$0x77]
    %v325 = vld [vmem:[#allocation4 + $0x28] sm:$0x77]
    %v326 = vld [vmem:[#allocation4 + $0x30] sm:$0x77]
    %v327 = vld [vmem:[#allocation4 + $0x38] sm:$0x77]
    %v328 = vld [vmem:[#allocation6] sm:$0xff]
    %v329 = vld [vmem:[#allocation6 + $0x8] sm:$0xff]
    %v332 = vlaneseq
    %v333 = vshrl.u32 %v332, 7
    %v334 = vsub.s32 0, %v333
    %v335 = vrot.slane %v328, %v334
    %v336 = vlaneseq
    %v337 = vshrl.u32 %v336, 7
    %v338 = vsub.s32 1, %v337
    %v339 = vrot.slane %v328, %v338
    %v340 = vlaneseq
    %v341 = vshrl.u32 %v340, 7
    %v342 = vsub.s32 2, %v341
    %v343 = vrot.slane %v328, %v342
    %v344 = vlaneseq
    %v345 = vshrl.u32 %v344, 7
    %v346 = vsub.s32 3, %v345
    %v347 = vrot.slane %v328, %v346
    %v348 = vlaneseq
    %v349 = vshrl.u32 %v348, 7
    %v350 = vsub.s32 4, %v349
    %v351 = vrot.slane %v328, %v350
    %v352 = vlaneseq
    %v353 = vshrl.u32 %v352, 7
    %v354 = vsub.s32 5, %v353
    %v355 = vrot.slane %v328, %v354
    %v356 = vlaneseq
    %v357 = vshrl.u32 %v356, 7
    %v358 = vsub.s32 6, %v357
    %v359 = vrot.slane %v328, %v358
    %v360 = vlaneseq
    %v361 = vshrl.u32 %v360, 7
    %v362 = vsub.s32 7, %v361
    %v363 = vrot.slane %v328, %v362
    %v364 = vlaneseq
    %v365 = vshrl.u32 %v364, 7
    %v366 = vsub.s32 0, %v365
    %v367 = vrot.slane %v329, %v366
    %v368 = vlaneseq
    %v369 = vshrl.u32 %v368, 7
    %v370 = vsub.s32 1, %v369
    %v371 = vrot.slane %v329, %v370
    %v372 = vlaneseq
    %v373 = vshrl.u32 %v372, 7
    %v374 = vsub.s32 2, %v373
    %v375 = vrot.slane %v329, %v374
    %v376 = vlaneseq
    %v377 = vshrl.u32 %v376, 7
    %v378 = vsub.s32 3, %v377
    %v379 = vrot.slane %v329, %v378
    %v380 = vlaneseq
    %v381 = vshrl.u32 %v380, 7
    %v382 = vsub.s32 4, %v381
    %v383 = vrot.slane %v329, %v382
    %v384 = vlaneseq
    %v385 = vshrl.u32 %v384, 7
    %v386 = vsub.s32 5, %v385
    %v387 = vrot.slane %v329, %v386
    %v388 = vlaneseq
    %v389 = vshrl.u32 %v388, 7
    %v390 = vsub.s32 6, %v389
    %v391 = vrot.slane %v329, %v390
    %v392 = vlaneseq
    %v393 = vshrl.u32 %v392, 7
    %v394 = vsub.s32 7, %v393
    %v395 = vrot.slane %v329, %v394
    %v414 = vlaneseq
    %v415 = vand.u32 %v414, 127
    %v416 = vlaneseq
    %v417 = vshrl.u32 %v416, 7
    %v418 = vsub.s32 %v415, %v417
    %v419 = vrot.slane %v167, %v418
    %v420 = vlaneseq
    %v421 = vshrl.u32 %v420, 7
    %v422 = vsub.s32 %v415, %v421
    %v423 = vrot.slane %v168, %v422
    %vm424 = vcmask 1041409
    %v425 = vsel %vm424, %v423, %v419
    %v434 = vcombine.high %v320, %v320
    %v435 = vcombine.high %v321, %v321
    %v436 = vcombine.high %v322, %v322
    %v437 = vcombine.high %v323, %v323
    %v438 = vcombine.high %v324, %v324
    %v439 = vcombine.high %v325, %v325
    %v440 = vcombine.high %v326, %v326
    %v441 = vcombine.high %v327, %v327
    %vm442 = vcmask 23552
    %v443 = vsel %vm442, %v425, 0
    %v445 = vsel %vm155, %v320, 0
    %v447 = vsel %vm155, %v434, 0
    %v449 = vsel %vm155, %v321, 0
    %v451 = vsel %vm155, %v435, 0
    %v453 = vsel %vm155, %v322, 0
    %v455 = vsel %vm155, %v436, 0
    %v457 = vsel %vm155, %v323, 0
    %v459 = vsel %vm155, %v437, 0
    %v461 = vsel %vm155, %v324, 0
    %v463 = vsel %vm155, %v438, 0
    %v465 = vsel %vm155, %v325, 0
    %v467 = vsel %vm155, %v439, 0
    %v469 = vsel %vm155, %v326, 0
    %v471 = vsel %vm155, %v440, 0
    %v473 = vsel %vm155, %v327, 0
    %v475 = vsel %vm155, %v441, 0
    %477 = vmatprep.subr.mxu0 %v447
    %478 = vmatpush1.msra.mxu0 %v445
    %479 = vmatprep.subr.mxu0 0.0
    %480 = vmatpush1.msra.mxu0 0.0
    %481 = vmatprep.subr.mxu0 0.0
    %482 = vmatpush1.msra.mxu0 0.0
    %483 = vmatprep.subr.mxu0 0.0
    %484 = vmatpush1.msra.mxu0 0.0
    %485 = vmatprep.subr.mxu0 0.0
    %486 = vmatpush1.msra.mxu0 0.0
    %487 = vmatprep.subr.mxu0 0.0
    %488 = vmatpush1.msra.mxu0 0.0
    %489 = vmatprep.subr.mxu0 0.0
    %490 = vmatpush1.msra.mxu0 0.0
    %491 = vmatprep.subr.mxu0 0.0
    %492 = vmatpush1.msra.mxu0 0.0
    %493 = vmatprep.subr.mxu0 0.0
    %494 = vmatpush1.msra.mxu0 0.0
    %495 = vmatprep.subr.mxu0 0.0
    %496 = vmatpush1.msra.mxu0 0.0
    %497 = vmatprep.subr.mxu0 0.0
    %498 = vmatpush1.msra.mxu0 0.0
    %499 = vmatprep.subr.mxu0 0.0
    %500 = vmatpush1.msra.mxu0 0.0
    %501 = vmatprep.subr.mxu0 0.0
    %502 = vmatpush1.msra.mxu0 0.0
    %503 = vmatprep.subr.mxu0 0.0
    %504 = vmatpush1.msra.mxu0 0.0
    %505 = vmatprep.subr.mxu0 0.0
    %506 = vmatpush1.msra.mxu0 0.0
    %507 = vmatprep.subr.mxu0 0.0
    %508 = vmatpush1.msra.mxu0 0.0
    %509 = vmatprep.subr.mxu0 0.0
    %510 = vmatpush1.msra.mxu0 0.0
    %511 = vmatprep.subr.mxu0 0.0
    %512 = vmatpush1.msra.mxu0 0.0
    %513 = vmatprep.subr.mxu0 0.0
    %514 = vmatpush1.msra.mxu0 0.0
    %515 = vmatprep.subr.mxu0 0.0
    %516 = vmatpush1.msra.mxu0 0.0
    %517 = vmatprep.subr.mxu0 0.0
    %518 = vmatpush1.msra.mxu0 0.0
    %519 = vmatprep.subr.mxu0 0.0
    %520 = vmatpush1.msra.mxu0 0.0
    %521 = vmatprep.subr.mxu0 0.0
    %522 = vmatpush1.msra.mxu0 0.0
    %523 = vmatprep.subr.mxu0 0.0
    %524 = vmatpush1.msra.mxu0 0.0
    %525 = vmatprep.subr.mxu0 0.0
    %526 = vmatpush1.msra.mxu0 0.0
    %527 = vmatprep.subr.mxu0 0.0
    %528 = vmatpush1.msra.mxu0 0.0
    %529 = vmatprep.subr.mxu0 0.0
    %530 = vmatpush1.msra.mxu0 0.0
    %531 = vmatprep.subr.mxu0 0.0
    %532 = vmatpush1.msra.mxu0 0.0
    %533 = vmatprep.subr.mxu0 0.0
    %534 = vmatpush1.msra.mxu0 0.0
    %535 = vmatprep.subr.mxu0 0.0
    %536 = vmatpush1.msra.mxu0 0.0
    %537 = vmatprep.subr.mxu0 0.0
    %538 = vmatpush1.msra.mxu0 0.0
    %539 = vmatprep.subr.mxu0 0.0
    %540 = vmatpush1.msra.mxu0 0.0
    %541 = vmatprep.mubr.f32.mxu0 0.0
    %542 = vmatmul.mubr.f32.gmra.mrb[0].mxu0 %v443
    %v543 = vpop.f32.mrb[0].mxu0
    %v544 = vadd.f32 %v335, %v543
    %v545 = vpop.f32.mrb[0].mxu0
    %v546 = vadd.f32 %v339, %v545
    %547 = vdwg.mxu0
    %548 = vmatprep.subr.mxu0 %v451
    %549 = vmatpush1.msra.mxu0 %v449
    %550 = vmatprep.subr.mxu0 0.0
    %551 = vmatpush1.msra.mxu0 0.0
    %552 = vmatprep.subr.mxu0 0.0
    %553 = vmatpush1.msra.mxu0 0.0
    %554 = vmatprep.subr.mxu0 0.0
    %555 = vmatpush1.msra.mxu0 0.0
    %556 = vmatprep.subr.mxu0 0.0
    %557 = vmatpush1.msra.mxu0 0.0
    %558 = vmatprep.subr.mxu0 0.0
    %559 = vmatpush1.msra.mxu0 0.0
    %560 = vmatprep.subr.mxu0 0.0
    %561 = vmatpush1.msra.mxu0 0.0
    %562 = vmatprep.subr.mxu0 0.0
    %563 = vmatpush1.msra.mxu0 0.0
    %564 = vmatprep.subr.mxu0 0.0
    %565 = vmatpush1.msra.mxu0 0.0
    %566 = vmatprep.subr.mxu0 0.0
    %567 = vmatpush1.msra.mxu0 0.0
    %568 = vmatprep.subr.mxu0 0.0
    %569 = vmatpush1.msra.mxu0 0.0
    %570 = vmatprep.subr.mxu0 0.0
    %571 = vmatpush1.msra.mxu0 0.0
    %572 = vmatprep.subr.mxu0 0.0
    %573 = vmatpush1.msra.mxu0 0.0
    %574 = vmatprep.subr.mxu0 0.0
    %575 = vmatpush1.msra.mxu0 0.0
    %576 = vmatprep.subr.mxu0 0.0
    %577 = vmatpush1.msra.mxu0 0.0
    %578 = vmatprep.subr.mxu0 0.0
    %579 = vmatpush1.msra.mxu0 0.0
    %580 = vmatprep.subr.mxu0 0.0
    %581 = vmatpush1.msra.mxu0 0.0
    %582 = vmatprep.subr.mxu0 0.0
    %583 = vmatpush1.msra.mxu0 0.0
    %584 = vmatprep.subr.mxu0 0.0
    %585 = vmatpush1.msra.mxu0 0.0
    %586 = vmatprep.subr.mxu0 0.0
    %587 = vmatpush1.msra.mxu0 0.0
    %588 = vmatprep.subr.mxu0 0.0
    %589 = vmatpush1.msra.mxu0 0.0
    %590 = vmatprep.subr.mxu0 0.0
    %591 = vmatpush1.msra.mxu0 0.0
    %592 = vmatprep.subr.mxu0 0.0
    %593 = vmatpush1.msra.mxu0 0.0
    %594 = vmatprep.subr.mxu0 0.0
    %595 = vmatpush1.msra.mxu0 0.0
    %596 = vmatprep.subr.mxu0 0.0
    %597 = vmatpush1.msra.mxu0 0.0
    %598 = vmatprep.subr.mxu0 0.0
    %599 = vmatpush1.msra.mxu0 0.0
    %600 = vmatprep.subr.mxu0 0.0
    %601 = vmatpush1.msra.mxu0 0.0
    %602 = vmatprep.subr.mxu0 0.0
    %603 = vmatpush1.msra.mxu0 0.0
    %604 = vmatprep.subr.mxu0 0.0
    %605 = vmatpush1.msra.mxu0 0.0
    %606 = vmatprep.subr.mxu0 0.0
    %607 = vmatpush1.msra.mxu0 0.0
    %608 = vmatprep.subr.mxu0 0.0
    %609 = vmatpush1.msra.mxu0 0.0
    %610 = vmatprep.subr.mxu0 0.0
    %611 = vmatpush1.msra.mxu0 0.0
    %612 = vmatprep.mubr.f32.mxu0 0.0
    %613 = vmatmul.mubr.f32.gmra.mrb[0].mxu0 %v443
    %v614 = vpop.f32.mrb[0].mxu0
    %v615 = vadd.f32 %v343, %v614
    %v616 = vpop.f32.mrb[0].mxu0
    %v617 = vadd.f32 %v347, %v616
    %618 = vdwg.mxu0
    %619 = vmatprep.subr.mxu0 %v455
    %620 = vmatpush1.msra.mxu0 %v453
    %621 = vmatprep.subr.mxu0 0.0
    %622 = vmatpush1.msra.mxu0 0.0
    %623 = vmatprep.subr.mxu0 0.0
    %624 = vmatpush1.msra.mxu0 0.0
    %625 = vmatprep.subr.mxu0 0.0
    %626 = vmatpush1.msra.mxu0 0.0
    %627 = vmatprep.subr.mxu0 0.0
    %628 = vmatpush1.msra.mxu0 0.0
    %629 = vmatprep.subr.mxu0 0.0
    %630 = vmatpush1.msra.mxu0 0.0
    %631 = vmatprep.subr.mxu0 0.0
    %632 = vmatpush1.msra.mxu0 0.0
    %633 = vmatprep.subr.mxu0 0.0
    %634 = vmatpush1.msra.mxu0 0.0
    %635 = vmatprep.subr.mxu0 0.0
    %636 = vmatpush1.msra.mxu0 0.0
    %637 = vmatprep.subr.mxu0 0.0
    %638 = vmatpush1.msra.mxu0 0.0
    %639 = vmatprep.subr.mxu0 0.0
    %640 = vmatpush1.msra.mxu0 0.0
    %641 = vmatprep.subr.mxu0 0.0
    %642 = vmatpush1.msra.mxu0 0.0
    %643 = vmatprep.subr.mxu0 0.0
    %644 = vmatpush1.msra.mxu0 0.0
    %645 = vmatprep.subr.mxu0 0.0
    %646 = vmatpush1.msra.mxu0 0.0
    %647 = vmatprep.subr.mxu0 0.0
    %648 = vmatpush1.msra.mxu0 0.0
    %649 = vmatprep.subr.mxu0 0.0
    %650 = vmatpush1.msra.mxu0 0.0
    %651 = vmatprep.subr.mxu0 0.0
    %652 = vmatpush1.msra.mxu0 0.0
    %653 = vmatprep.subr.mxu0 0.0
    %654 = vmatpush1.msra.mxu0 0.0
    %655 = vmatprep.subr.mxu0 0.0
    %656 = vmatpush1.msra.mxu0 0.0
    %657 = vmatprep.subr.mxu0 0.0
    %658 = vmatpush1.msra.mxu0 0.0
    %659 = vmatprep.subr.mxu0 0.0
    %660 = vmatpush1.msra.mxu0 0.0
    %661 = vmatprep.subr.mxu0 0.0
    %662 = vmatpush1.msra.mxu0 0.0
    %663 = vmatprep.subr.mxu0 0.0
    %664 = vmatpush1.msra.mxu0 0.0
    %665 = vmatprep.subr.mxu0 0.0
    %666 = vmatpush1.msra.mxu0 0.0
    %667 = vmatprep.subr.mxu0 0.0
    %668 = vmatpush1.msra.mxu0 0.0
    %669 = vmatprep.subr.mxu0 0.0
    %670 = vmatpush1.msra.mxu0 0.0
    %671 = vmatprep.subr.mxu0 0.0
    %672 = vmatpush1.msra.mxu0 0.0
    %673 = vmatprep.subr.mxu0 0.0
    %674 = vmatpush1.msra.mxu0 0.0
    %675 = vmatprep.subr.mxu0 0.0
    %676 = vmatpush1.msra.mxu0 0.0
    %677 = vmatprep.subr.mxu0 0.0
    %678 = vmatpush1.msra.mxu0 0.0
    %679 = vmatprep.subr.mxu0 0.0
    %680 = vmatpush1.msra.mxu0 0.0
    %681 = vmatprep.subr.mxu0 0.0
    %682 = vmatpush1.msra.mxu0 0.0
    %683 = vmatprep.mubr.f32.mxu0 0.0
    %684 = vmatmul.mubr.f32.gmra.mrb[0].mxu0 %v443
    %v685 = vpop.f32.mrb[0].mxu0
    %v686 = vadd.f32 %v351, %v685
    %v687 = vpop.f32.mrb[0].mxu0
    %v688 = vadd.f32 %v355, %v687
    %689 = vdwg.mxu0
    %690 = vmatprep.subr.mxu0 %v459
    %691 = vmatpush1.msra.mxu0 %v457
    %692 = vmatprep.subr.mxu0 0.0
    %693 = vmatpush1.msra.mxu0 0.0
    %694 = vmatprep.subr.mxu0 0.0
    %695 = vmatpush1.msra.mxu0 0.0
    %696 = vmatprep.subr.mxu0 0.0
    %697 = vmatpush1.msra.mxu0 0.0
    %698 = vmatprep.subr.mxu0 0.0
    %699 = vmatpush1.msra.mxu0 0.0
    %700 = vmatprep.subr.mxu0 0.0
    %701 = vmatpush1.msra.mxu0 0.0
    %702 = vmatprep.subr.mxu0 0.0
    %703 = vmatpush1.msra.mxu0 0.0
    %704 = vmatprep.subr.mxu0 0.0
    %705 = vmatpush1.msra.mxu0 0.0
    %706 = vmatprep.subr.mxu0 0.0
    %707 = vmatpush1.msra.mxu0 0.0
    %708 = vmatprep.subr.mxu0 0.0
    %709 = vmatpush1.msra.mxu0 0.0
    %710 = vmatprep.subr.mxu0 0.0
    %711 = vmatpush1.msra.mxu0 0.0
    %712 = vmatprep.subr.mxu0 0.0
    %713 = vmatpush1.msra.mxu0 0.0
    %714 = vmatprep.subr.mxu0 0.0
    %715 = vmatpush1.msra.mxu0 0.0
    %716 = vmatprep.subr.mxu0 0.0
    %717 = vmatpush1.msra.mxu0 0.0
    %718 = vmatprep.subr.mxu0 0.0
    %719 = vmatpush1.msra.mxu0 0.0
    %720 = vmatprep.subr.mxu0 0.0
    %721 = vmatpush1.msra.mxu0 0.0
    %722 = vmatprep.subr.mxu0 0.0
    %723 = vmatpush1.msra.mxu0 0.0
    %724 = vmatprep.subr.mxu0 0.0
    %725 = vmatpush1.msra.mxu0 0.0
    %726 = vmatprep.subr.mxu0 0.0
    %727 = vmatpush1.msra.mxu0 0.0
    %728 = vmatprep.subr.mxu0 0.0
    %729 = vmatpush1.msra.mxu0 0.0
    %730 = vmatprep.subr.mxu0 0.0
    %731 = vmatpush1.msra.mxu0 0.0
    %732 = vmatprep.subr.mxu0 0.0
    %733 = vmatpush1.msra.mxu0 0.0
    %734 = vmatprep.subr.mxu0 0.0
    %735 = vmatpush1.msra.mxu0 0.0
    %736 = vmatprep.subr.mxu0 0.0
    %737 = vmatpush1.msra.mxu0 0.0
    %738 = vmatprep.subr.mxu0 0.0
    %739 = vmatpush1.msra.mxu0 0.0
    %740 = vmatprep.subr.mxu0 0.0
    %741 = vmatpush1.msra.mxu0 0.0
    %742 = vmatprep.subr.mxu0 0.0
    %743 = vmatpush1.msra.mxu0 0.0
    %744 = vmatprep.subr.mxu0 0.0
    %745 = vmatpush1.msra.mxu0 0.0
    %746 = vmatprep.subr.mxu0 0.0
    %747 = vmatpush1.msra.mxu0 0.0
    %748 = vmatprep.subr.mxu0 0.0
    %749 = vmatpush1.msra.mxu0 0.0
    %750 = vmatprep.subr.mxu0 0.0
    %751 = vmatpush1.msra.mxu0 0.0
    %752 = vmatprep.subr.mxu0 0.0
    %753 = vmatpush1.msra.mxu0 0.0
    %754 = vmatprep.mubr.f32.mxu0 0.0
    %755 = vmatmul.mubr.f32.gmra.mrb[0].mxu0 %v443
    %v756 = vpop.f32.mrb[0].mxu0
    %v757 = vadd.f32 %v359, %v756
    %v758 = vpop.f32.mrb[0].mxu0
    %v759 = vadd.f32 %v363, %v758
    %760 = vdwg.mxu0
    %761 = vmatprep.subr.mxu0 %v463
    %762 = vmatpush1.msra.mxu0 %v461
    %763 = vmatprep.subr.mxu0 0.0
    %764 = vmatpush1.msra.mxu0 0.0
    %765 = vmatprep.subr.mxu0 0.0
    %766 = vmatpush1.msra.mxu0 0.0
    %767 = vmatprep.subr.mxu0 0.0
    %768 = vmatpush1.msra.mxu0 0.0
    %769 = vmatprep.subr.mxu0 0.0
    %770 = vmatpush1.msra.mxu0 0.0
    %771 = vmatprep.subr.mxu0 0.0
    %772 = vmatpush1.msra.mxu0 0.0
    %773 = vmatprep.subr.mxu0 0.0
    %774 = vmatpush1.msra.mxu0 0.0
    %775 = vmatprep.subr.mxu0 0.0
    %776 = vmatpush1.msra.mxu0 0.0
    %777 = vmatprep.subr.mxu0 0.0
    %778 = vmatpush1.msra.mxu0 0.0
    %779 = vmatprep.subr.mxu0 0.0
    %780 = vmatpush1.msra.mxu0 0.0
    %781 = vmatprep.subr.mxu0 0.0
    %782 = vmatpush1.msra.mxu0 0.0
    %783 = vmatprep.subr.mxu0 0.0
    %784 = vmatpush1.msra.mxu0 0.0
    %785 = vmatprep.subr.mxu0 0.0
    %786 = vmatpush1.msra.mxu0 0.0
    %787 = vmatprep.subr.mxu0 0.0
    %788 = vmatpush1.msra.mxu0 0.0
    %789 = vmatprep.subr.mxu0 0.0
    %790 = vmatpush1.msra.mxu0 0.0
    %791 = vmatprep.subr.mxu0 0.0
    %792 = vmatpush1.msra.mxu0 0.0
    %793 = vmatprep.subr.mxu0 0.0
    %794 = vmatpush1.msra.mxu0 0.0
    %795 = vmatprep.subr.mxu0 0.0
    %796 = vmatpush1.msra.mxu0 0.0
    %797 = vmatprep.subr.mxu0 0.0
    %798 = vmatpush1.msra.mxu0 0.0
    %799 = vmatprep.subr.mxu0 0.0
    %800 = vmatpush1.msra.mxu0 0.0
    %801 = vmatprep.subr.mxu0 0.0
    %802 = vmatpush1.msra.mxu0 0.0
    %803 = vmatprep.subr.mxu0 0.0
    %804 = vmatpush1.msra.mxu0 0.0
    %805 = vmatprep.subr.mxu0 0.0
    %806 = vmatpush1.msra.mxu0 0.0
    %807 = vmatprep.subr.mxu0 0.0
    %808 = vmatpush1.msra.mxu0 0.0
    %809 = vmatprep.subr.mxu0 0.0
    %810 = vmatpush1.msra.mxu0 0.0
    %811 = vmatprep.subr.mxu0 0.0
    %812 = vmatpush1.msra.mxu0 0.0
    %813 = vmatprep.subr.mxu0 0.0
    %814 = vmatpush1.msra.mxu0 0.0
    %815 = vmatprep.subr.mxu0 0.0
    %816 = vmatpush1.msra.mxu0 0.0
    %817 = vmatprep.subr.mxu0 0.0
    %818 = vmatpush1.msra.mxu0 0.0
    %819 = vmatprep.subr.mxu0 0.0
    %820 = vmatpush1.msra.mxu0 0.0
    %821 = vmatprep.subr.mxu0 0.0
    %822 = vmatpush1.msra.mxu0 0.0
    %823 = vmatprep.subr.mxu0 0.0
    %824 = vmatpush1.msra.mxu0 0.0
    %825 = vmatprep.mubr.f32.mxu0 0.0
    %826 = vmatmul.mubr.f32.gmra.mrb[0].mxu0 %v443
    %v827 = vpop.f32.mrb[0].mxu0
    %v828 = vadd.f32 %v367, %v827
    %v829 = vpop.f32.mrb[0].mxu0
    %v830 = vadd.f32 %v371, %v829
    %831 = vdwg.mxu0
    %832 = vmatprep.subr.mxu0 %v467
    %833 = vmatpush1.msra.mxu0 %v465
    %834 = vmatprep.subr.mxu0 0.0
    %835 = vmatpush1.msra.mxu0 0.0
    %836 = vmatprep.subr.mxu0 0.0
    %837 = vmatpush1.msra.mxu0 0.0
    %838 = vmatprep.subr.mxu0 0.0
    %839 = vmatpush1.msra.mxu0 0.0
    %840 = vmatprep.subr.mxu0 0.0
    %841 = vmatpush1.msra.mxu0 0.0
    %842 = vmatprep.subr.mxu0 0.0
    %843 = vmatpush1.msra.mxu0 0.0
    %844 = vmatprep.subr.mxu0 0.0
    %845 = vmatpush1.msra.mxu0 0.0
    %846 = vmatprep.subr.mxu0 0.0
    %847 = vmatpush1.msra.mxu0 0.0
    %848 = vmatprep.subr.mxu0 0.0
    %849 = vmatpush1.msra.mxu0 0.0
    %850 = vmatprep.subr.mxu0 0.0
    %851 = vmatpush1.msra.mxu0 0.0
    %852 = vmatprep.subr.mxu0 0.0
    %853 = vmatpush1.msra.mxu0 0.0
    %854 = vmatprep.subr.mxu0 0.0
    %855 = vmatpush1.msra.mxu0 0.0
    %856 = vmatprep.subr.mxu0 0.0
    %857 = vmatpush1.msra.mxu0 0.0
    %858 = vmatprep.subr.mxu0 0.0
    %859 = vmatpush1.msra.mxu0 0.0
    %860 = vmatprep.subr.mxu0 0.0
    %861 = vmatpush1.msra.mxu0 0.0
    %862 = vmatprep.subr.mxu0 0.0
    %863 = vmatpush1.msra.mxu0 0.0
    %864 = vmatprep.subr.mxu0 0.0
    %865 = vmatpush1.msra.mxu0 0.0
    %866 = vmatprep.subr.mxu0 0.0
    %867 = vmatpush1.msra.mxu0 0.0
    %868 = vmatprep.subr.mxu0 0.0
    %869 = vmatpush1.msra.mxu0 0.0
    %870 = vmatprep.subr.mxu0 0.0
    %871 = vmatpush1.msra.mxu0 0.0
    %872 = vmatprep.subr.mxu0 0.0
    %873 = vmatpush1.msra.mxu0 0.0
    %874 = vmatprep.subr.mxu0 0.0
    %875 = vmatpush1.msra.mxu0 0.0
    %876 = vmatprep.subr.mxu0 0.0
    %877 = vmatpush1.msra.mxu0 0.0
    %878 = vmatprep.subr.mxu0 0.0
    %879 = vmatpush1.msra.mxu0 0.0
    %880 = vmatprep.subr.mxu0 0.0
    %881 = vmatpush1.msra.mxu0 0.0
    %882 = vmatprep.subr.mxu0 0.0
    %883 = vmatpush1.msra.mxu0 0.0
    %884 = vmatprep.subr.mxu0 0.0
    %885 = vmatpush1.msra.mxu0 0.0
    %886 = vmatprep.subr.mxu0 0.0
    %887 = vmatpush1.msra.mxu0 0.0
    %888 = vmatprep.subr.mxu0 0.0
    %889 = vmatpush1.msra.mxu0 0.0
    %890 = vmatprep.subr.mxu0 0.0
    %891 = vmatpush1.msra.mxu0 0.0
    %892 = vmatprep.subr.mxu0 0.0
    %893 = vmatpush1.msra.mxu0 0.0
    %894 = vmatprep.subr.mxu0 0.0
    %895 = vmatpush1.msra.mxu0 0.0
    %896 = vmatprep.mubr.f32.mxu0 0.0
    %897 = vmatmul.mubr.f32.gmra.mrb[0].mxu0 %v443
    %v898 = vpop.f32.mrb[0].mxu0
    %v899 = vadd.f32 %v375, %v898
    %v900 = vpop.f32.mrb[0].mxu0
    %v901 = vadd.f32 %v379, %v900
    %902 = vdwg.mxu0
    %903 = vmatprep.subr.mxu0 %v471
    %904 = vmatpush1.msra.mxu0 %v469
    %905 = vmatprep.subr.mxu0 0.0
    %906 = vmatpush1.msra.mxu0 0.0
    %907 = vmatprep.subr.mxu0 0.0
    %908 = vmatpush1.msra.mxu0 0.0
    %909 = vmatprep.subr.mxu0 0.0
    %910 = vmatpush1.msra.mxu0 0.0
    %911 = vmatprep.subr.mxu0 0.0
    %912 = vmatpush1.msra.mxu0 0.0
    %913 = vmatprep.subr.mxu0 0.0
    %914 = vmatpush1.msra.mxu0 0.0
    %915 = vmatprep.subr.mxu0 0.0
    %916 = vmatpush1.msra.mxu0 0.0
    %917 = vmatprep.subr.mxu0 0.0
    %918 = vmatpush1.msra.mxu0 0.0
    %919 = vmatprep.subr.mxu0 0.0
    %920 = vmatpush1.msra.mxu0 0.0
    %921 = vmatprep.subr.mxu0 0.0
    %922 = vmatpush1.msra.mxu0 0.0
    %923 = vmatprep.subr.mxu0 0.0
    %924 = vmatpush1.msra.mxu0 0.0
    %925 = vmatprep.subr.mxu0 0.0
    %926 = vmatpush1.msra.mxu0 0.0
    %927 = vmatprep.subr.mxu0 0.0
    %928 = vmatpush1.msra.mxu0 0.0
    %929 = vmatprep.subr.mxu0 0.0
    %930 = vmatpush1.msra.mxu0 0.0
    %931 = vmatprep.subr.mxu0 0.0
    %932 = vmatpush1.msra.mxu0 0.0
    %933 = vmatprep.subr.mxu0 0.0
    %934 = vmatpush1.msra.mxu0 0.0
    %935 = vmatprep.subr.mxu0 0.0
    %936 = vmatpush1.msra.mxu0 0.0
    %937 = vmatprep.subr.mxu0 0.0
    %938 = vmatpush1.msra.mxu0 0.0
    %939 = vmatprep.subr.mxu0 0.0
    %940 = vmatpush1.msra.mxu0 0.0
    %941 = vmatprep.subr.mxu0 0.0
    %942 = vmatpush1.msra.mxu0 0.0
    %943 = vmatprep.subr.mxu0 0.0
    %944 = vmatpush1.msra.mxu0 0.0
    %945 = vmatprep.subr.mxu0 0.0
    %946 = vmatpush1.msra.mxu0 0.0
    %947 = vmatprep.subr.mxu0 0.0
    %948 = vmatpush1.msra.mxu0 0.0
    %949 = vmatprep.subr.mxu0 0.0
    %950 = vmatpush1.msra.mxu0 0.0
    %951 = vmatprep.subr.mxu0 0.0
    %952 = vmatpush1.msra.mxu0 0.0
    %953 = vmatprep.subr.mxu0 0.0
    %954 = vmatpush1.msra.mxu0 0.0
    %955 = vmatprep.subr.mxu0 0.0
    %956 = vmatpush1.msra.mxu0 0.0
    %957 = vmatprep.subr.mxu0 0.0
    %958 = vmatpush1.msra.mxu0 0.0
    %959 = vmatprep.subr.mxu0 0.0
    %960 = vmatpush1.msra.mxu0 0.0
    %961 = vmatprep.subr.mxu0 0.0
    %962 = vmatpush1.msra.mxu0 0.0
    %963 = vmatprep.subr.mxu0 0.0
    %964 = vmatpush1.msra.mxu0 0.0
    %965 = vmatprep.subr.mxu0 0.0
    %966 = vmatpush1.msra.mxu0 0.0
    %967 = vmatprep.mubr.f32.mxu0 0.0
    %968 = vmatmul.mubr.f32.gmra.mrb[0].mxu0 %v443
    %v969 = vpop.f32.mrb[0].mxu0
    %v970 = vadd.f32 %v383, %v969
    %v971 = vpop.f32.mrb[0].mxu0
    %v972 = vadd.f32 %v387, %v971
    %973 = vdwg.mxu0
    %974 = vmatprep.subr.mxu0 %v475
    %975 = vmatpush1.msra.mxu0 %v473
    %976 = vmatprep.subr.mxu0 0.0
    %977 = vmatpush1.msra.mxu0 0.0
    %978 = vmatprep.subr.mxu0 0.0
    %979 = vmatpush1.msra.mxu0 0.0
    %980 = vmatprep.subr.mxu0 0.0
    %981 = vmatpush1.msra.mxu0 0.0
    %982 = vmatprep.subr.mxu0 0.0
    %983 = vmatpush1.msra.mxu0 0.0
    %984 = vmatprep.subr.mxu0 0.0
    %985 = vmatpush1.msra.mxu0 0.0
    %986 = vmatprep.subr.mxu0 0.0
    %987 = vmatpush1.msra.mxu0 0.0
    %988 = vmatprep.subr.mxu0 0.0
    %989 = vmatpush1.msra.mxu0 0.0
    %990 = vmatprep.subr.mxu0 0.0
    %991 = vmatpush1.msra.mxu0 0.0
    %992 = vmatprep.subr.mxu0 0.0
    %993 = vmatpush1.msra.mxu0 0.0
    %994 = vmatprep.subr.mxu0 0.0
    %995 = vmatpush1.msra.mxu0 0.0
    %996 = vmatprep.subr.mxu0 0.0
    %997 = vmatpush1.msra.mxu0 0.0
    %998 = vmatprep.subr.mxu0 0.0
    %999 = vmatpush1.msra.mxu0 0.0
    %1000 = vmatprep.subr.mxu0 0.0
    %1001 = vmatpush1.msra.mxu0 0.0
    %1002 = vmatprep.subr.mxu0 0.0
    %1003 = vmatpush1.msra.mxu0 0.0
    %1004 = vmatprep.subr.mxu0 0.0
    %1005 = vmatpush1.msra.mxu0 0.0
    %1006 = vmatprep.subr.mxu0 0.0
    %1007 = vmatpush1.msra.mxu0 0.0
    %1008 = vmatprep.subr.mxu0 0.0
    %1009 = vmatpush1.msra.mxu0 0.0
    %1010 = vmatprep.subr.mxu0 0.0
    %1011 = vmatpush1.msra.mxu0 0.0
    %1012 = vmatprep.subr.mxu0 0.0
    %1013 = vmatpush1.msra.mxu0 0.0
    %1014 = vmatprep.subr.mxu0 0.0
    %1015 = vmatpush1.msra.mxu0 0.0
    %1016 = vmatprep.subr.mxu0 0.0
    %1017 = vmatpush1.msra.mxu0 0.0
    %1018 = vmatprep.subr.mxu0 0.0
    %1019 = vmatpush1.msra.mxu0 0.0
    %1020 = vmatprep.subr.mxu0 0.0
    %1021 = vmatpush1.msra.mxu0 0.0
    %1022 = vmatprep.subr.mxu0 0.0
    %1023 = vmatpush1.msra.mxu0 0.0
    %1024 = vmatprep.subr.mxu0 0.0
    %1025 = vmatpush1.msra.mxu0 0.0
    %1026 = vmatprep.subr.mxu0 0.0
    %1027 = vmatpush1.msra.mxu0 0.0
    %1028 = vmatprep.subr.mxu0 0.0
    %1029 = vmatpush1.msra.mxu0 0.0
    %1030 = vmatprep.subr.mxu0 0.0
    %1031 = vmatpush1.msra.mxu0 0.0
    %1032 = vmatprep.subr.mxu0 0.0
    %1033 = vmatpush1.msra.mxu0 0.0
    %1034 = vmatprep.subr.mxu0 0.0
    %1035 = vmatpush1.msra.mxu0 0.0
    %1036 = vmatprep.subr.mxu0 0.0
    %1037 = vmatpush1.msra.mxu0 0.0
    %1038 = vmatprep.mubr.f32.mxu0 0.0
    %1039 = vmatmul.mubr.f32.gmra.mrb[0].mxu0 %v443
    %v1040 = vpop.f32.mrb[0].mxu0
    %v1041 = vadd.f32 %v391, %v1040
    %v1042 = vpop.f32.mrb[0].mxu0
    %v1043 = vadd.f32 %v395, %v1042
    %1044 = vdwg.mxu0
    %v1061 = vcombine.low %v544, %v546
    %v1062 = vcombine.low %v615, %v617
    %v1064 = vunpack.c.l.s4 1983009808
    %v1065 = vunpack.c.0.s8 %v1064
    %v1066 = vlaneseq
    %v1067 = vshrl.u32 %v1066, 7
    %v1068 = vsub.s32 %v1065, %v1067
    %v1069 = vrot.slane %v1061, %v1068
    %v1071 = vunpack.c.l.s4 1983009808
    %v1072 = vunpack.c.0.s8 %v1071
    %v1073 = vlaneseq
    %v1074 = vshrl.u32 %v1073, 7
    %v1075 = vsub.s32 %v1072, %v1074
    %v1076 = vrot.slane %v1062, %v1075
    %v1077 = vcombine.low %v1069, %v1076
    %v1078 = vcombine.low %v686, %v688
    %v1079 = vcombine.low %v757, %v759
    %v1081 = vunpack.c.l.s4 1983009808
    %v1082 = vunpack.c.0.s8 %v1081
    %v1083 = vlaneseq
    %v1084 = vshrl.u32 %v1083, 7
    %v1085 = vsub.s32 %v1082, %v1084
    %v1086 = vrot.slane %v1078, %v1085
    %v1088 = vunpack.c.l.s4 1983009808
    %v1089 = vunpack.c.0.s8 %v1088
    %v1090 = vlaneseq
    %v1091 = vshrl.u32 %v1090, 7
    %v1092 = vsub.s32 %v1089, %v1091
    %v1093 = vrot.slane %v1079, %v1092
    %v1094 = vcombine.low %v1086, %v1093
    %v1095 = vcombine.low %v828, %v830
    %v1096 = vcombine.low %v899, %v901
    %v1098 = vunpack.c.l.s4 1983009808
    %v1099 = vunpack.c.0.s8 %v1098
    %v1100 = vlaneseq
    %v1101 = vshrl.u32 %v1100, 7
    %v1102 = vsub.s32 %v1099, %v1101
    %v1103 = vrot.slane %v1095, %v1102
    %v1105 = vunpack.c.l.s4 1983009808
    %v1106 = vunpack.c.0.s8 %v1105
    %v1107 = vlaneseq
    %v1108 = vshrl.u32 %v1107, 7
    %v1109 = vsub.s32 %v1106, %v1108
    %v1110 = vrot.slane %v1096, %v1109
    %v1111 = vcombine.low %v1103, %v1110
    %v1112 = vcombine.low %v970, %v972
    %v1113 = vcombine.low %v1041, %v1043
    %v1115 = vunpack.c.l.s4 1983009808
    %v1116 = vunpack.c.0.s8 %v1115
    %v1117 = vlaneseq
    %v1118 = vshrl.u32 %v1117, 7
    %v1119 = vsub.s32 %v1116, %v1118
    %v1120 = vrot.slane %v1112, %v1119
    %v1122 = vunpack.c.l.s4 1983009808
    %v1123 = vunpack.c.0.s8 %v1122
    %v1124 = vlaneseq
    %v1125 = vshrl.u32 %v1124, 7
    %v1126 = vsub.s32 %v1123, %v1125
    %v1127 = vrot.slane %v1113, %v1126
    %v1128 = vcombine.low %v1120, %v1127
    %1133 = vst [vmem:[%s12 + $0x4] sm:$0xff] %v1077
    %1134 = vst [vmem:[%s12 + $0xc] sm:$0xff] %v1094
    %1135 = vst [vmem:[%s12 + $0x14] sm:$0xff] %v1111
    %1136 = vst [vmem:[%s12 + $0x1c] sm:$0xff] %v1128
    %v1137 = vld [vmem:[#allocation7] sm:$0x77]
    %v1138 = vld [vmem:[#allocation7 + $0x8] sm:$0x77]
    %v1139 = vld [vmem:[#allocation7 + $0x10] sm:$0x77]
    %v1140 = vld [vmem:[#allocation7 + $0x18] sm:$0x77]
    %v1141 = vld [vmem:[#allocation7 + $0x20] sm:$0x77]
    %v1142 = vld [vmem:[#allocation7 + $0x28] sm:$0x77]
    %v1143 = vld [vmem:[#allocation7 + $0x30] sm:$0x77]
    %v1144 = vld [vmem:[#allocation7 + $0x38] sm:$0x77]
    %v1145 = vld [vmem:[#allocation9] sm:$0xff]
    %v1146 = vld [vmem:[#allocation9 + $0x8] sm:$0xff]
    %v1149 = vlaneseq
    %v1150 = vshrl.u32 %v1149, 7
    %v1151 = vsub.s32 0, %v1150
    %v1152 = vrot.slane %v1145, %v1151
    %v1153 = vlaneseq
    %v1154 = vshrl.u32 %v1153, 7
    %v1155 = vsub.s32 1, %v1154
    %v1156 = vrot.slane %v1145, %v1155
    %v1157 = vlaneseq
    %v1158 = vshrl.u32 %v1157, 7
    %v1159 = vsub.s32 2, %v1158
    %v1160 = vrot.slane %v1145, %v1159
    %v1161 = vlaneseq
    %v1162 = vshrl.u32 %v1161, 7
    %v1163 = vsub.s32 3, %v1162
    %v1164 = vrot.slane %v1145, %v1163
    %v1165 = vlaneseq
    %v1166 = vshrl.u32 %v1165, 7
    %v1167 = vsub.s32 4, %v1166
    %v1168 = vrot.slane %v1145, %v1167
    %v1169 = vlaneseq
    %v1170 = vshrl.u32 %v1169, 7
    %v1171 = vsub.s32 5, %v1170
    %v1172 = vrot.slane %v1145, %v1171
    %v1173 = vlaneseq
    %v1174 = vshrl.u32 %v1173, 7
    %v1175 = vsub.s32 6, %v1174
    %v1176 = vrot.slane %v1145, %v1175
    %v1177 = vlaneseq
    %v1178 = vshrl.u32 %v1177, 7
    %v1179 = vsub.s32 7, %v1178
    %v1180 = vrot.slane %v1145, %v1179
    %v1181 = vlaneseq
    %v1182 = vshrl.u32 %v1181, 7
    %v1183 = vsub.s32 0, %v1182
    %v1184 = vrot.slane %v1146, %v1183
    %v1185 = vlaneseq
    %v1186 = vshrl.u32 %v1185, 7
    %v1187 = vsub.s32 1, %v1186
    %v1188 = vrot.slane %v1146, %v1187
    %v1189 = vlaneseq
    %v1190 = vshrl.u32 %v1189, 7
    %v1191 = vsub.s32 2, %v1190
    %v1192 = vrot.slane %v1146, %v1191
    %v1193 = vlaneseq
    %v1194 = vshrl.u32 %v1193, 7
    %v1195 = vsub.s32 3, %v1194
    %v1196 = vrot.slane %v1146, %v1195
    %v1197 = vlaneseq
    %v1198 = vshrl.u32 %v1197, 7
    %v1199 = vsub.s32 4, %v1198
    %v1200 = vrot.slane %v1146, %v1199
    %v1201 = vlaneseq
    %v1202 = vshrl.u32 %v1201, 7
    %v1203 = vsub.s32 5, %v1202
    %v1204 = vrot.slane %v1146, %v1203
    %v1205 = vlaneseq
    %v1206 = vshrl.u32 %v1205, 7
    %v1207 = vsub.s32 6, %v1206
    %v1208 = vrot.slane %v1146, %v1207
    %v1209 = vlaneseq
    %v1210 = vshrl.u32 %v1209, 7
    %v1211 = vsub.s32 7, %v1210
    %v1212 = vrot.slane %v1146, %v1211
    %v1237 = vcombine.high %v1137, %v1137
    %v1238 = vcombine.high %v1138, %v1138
    %v1239 = vcombine.high %v1139, %v1139
    %v1240 = vcombine.high %v1140, %v1140
    %v1241 = vcombine.high %v1141, %v1141
    %v1242 = vcombine.high %v1142, %v1142
    %v1243 = vcombine.high %v1143, %v1143
    %v1244 = vcombine.high %v1144, %v1144
    %v1245 = vsel %vm155, %v1137, 0
    %v1247 = vsel %vm155, %v1237, 0
    %v1249 = vsel %vm155, %v1138, 0
    %v1251 = vsel %vm155, %v1238, 0
    %v1253 = vsel %vm155, %v1139, 0
    %v1255 = vsel %vm155, %v1239, 0
    %v1257 = vsel %vm155, %v1140, 0
    %v1259 = vsel %vm155, %v1240, 0
    %v1261 = vsel %vm155, %v1141, 0
    %v1263 = vsel %vm155, %v1241, 0
    %v1265 = vsel %vm155, %v1142, 0
    %v1267 = vsel %vm155, %v1242, 0
    %v1269 = vsel %vm155, %v1143, 0
    %v1271 = vsel %vm155, %v1243, 0
    %v1273 = vsel %vm155, %v1144, 0
    %v1275 = vsel %vm155, %v1244, 0
    %1277 = vmatprep.subr.mxu0 %v1247
    %1278 = vmatpush1.msra.mxu0 %v1245
    %1279 = vmatprep.subr.mxu0 0.0
    %1280 = vmatpush1.msra.mxu0 0.0
    %1281 = vmatprep.subr.mxu0 0.0
    %1282 = vmatpush1.msra.mxu0 0.0
    %1283 = vmatprep.subr.mxu0 0.0
    %1284 = vmatpush1.msra.mxu0 0.0
    %1285 = vmatprep.subr.mxu0 0.0
    %1286 = vmatpush1.msra.mxu0 0.0
    %1287 = vmatprep.subr.mxu0 0.0
    %1288 = vmatpush1.msra.mxu0 0.0
    %1289 = vmatprep.subr.mxu0 0.0
    %1290 = vmatpush1.msra.mxu0 0.0
    %1291 = vmatprep.subr.mxu0 0.0
    %1292 = vmatpush1.msra.mxu0 0.0
    %1293 = vmatprep.subr.mxu0 0.0
    %1294 = vmatpush1.msra.mxu0 0.0
    %1295 = vmatprep.subr.mxu0 0.0
    %1296 = vmatpush1.msra.mxu0 0.0
    %1297 = vmatprep.subr.mxu0 0.0
    %1298 = vmatpush1.msra.mxu0 0.0
    %1299 = vmatprep.subr.mxu0 0.0
    %1300 = vmatpush1.msra.mxu0 0.0
    %1301 = vmatprep.subr.mxu0 0.0
    %1302 = vmatpush1.msra.mxu0 0.0
    %1303 = vmatprep.subr.mxu0 0.0
    %1304 = vmatpush1.msra.mxu0 0.0
    %1305 = vmatprep.subr.mxu0 0.0
    %1306 = vmatpush1.msra.mxu0 0.0
    %1307 = vmatprep.subr.mxu0 0.0
    %1308 = vmatpush1.msra.mxu0 0.0
    %1309 = vmatprep.subr.mxu0 0.0
    %1310 = vmatpush1.msra.mxu0 0.0
    %1311 = vmatprep.subr.mxu0 0.0
    %1312 = vmatpush1.msra.mxu0 0.0
    %1313 = vmatprep.subr.mxu0 0.0
    %1314 = vmatpush1.msra.mxu0 0.0
    %1315 = vmatprep.subr.mxu0 0.0
    %1316 = vmatpush1.msra.mxu0 0.0
    %1317 = vmatprep.subr.mxu0 0.0
    %1318 = vmatpush1.msra.mxu0 0.0
    %1319 = vmatprep.subr.mxu0 0.0
    %1320 = vmatpush1.msra.mxu0 0.0
    %1321 = vmatprep.subr.mxu0 0.0
    %1322 = vmatpush1.msra.mxu0 0.0
    %1323 = vmatprep.subr.mxu0 0.0
    %1324 = vmatpush1.msra.mxu0 0.0
    %1325 = vmatprep.subr.mxu0 0.0
    %1326 = vmatpush1.msra.mxu0 0.0
    %1327 = vmatprep.subr.mxu0 0.0
    %1328 = vmatpush1.msra.mxu0 0.0
    %1329 = vmatprep.subr.mxu0 0.0
    %1330 = vmatpush1.msra.mxu0 0.0
    %1331 = vmatprep.subr.mxu0 0.0
    %1332 = vmatpush1.msra.mxu0 0.0
    %1333 = vmatprep.subr.mxu0 0.0
    %1334 = vmatpush1.msra.mxu0 0.0
    %1335 = vmatprep.subr.mxu0 0.0
    %1336 = vmatpush1.msra.mxu0 0.0
    %1337 = vmatprep.subr.mxu0 0.0
    %1338 = vmatpush1.msra.mxu0 0.0
    %1339 = vmatprep.subr.mxu0 0.0
    %1340 = vmatpush1.msra.mxu0 0.0
    %1341 = vmatprep.mubr.f32.mxu0 0.0
    %1342 = vmatmul.mubr.f32.gmra.mrb[0].mxu0 %v443
    %v1343 = vpop.f32.mrb[0].mxu0
    %v1344 = vadd.f32 %v1152, %v1343
    %v1345 = vpop.f32.mrb[0].mxu0
    %v1346 = vadd.f32 %v1156, %v1345
    %1347 = vdwg.mxu0
    %1348 = vmatprep.subr.mxu0 %v1251
    %1349 = vmatpush1.msra.mxu0 %v1249
    %1350 = vmatprep.subr.mxu0 0.0
    %1351 = vmatpush1.msra.mxu0 0.0
    %1352 = vmatprep.subr.mxu0 0.0
    %1353 = vmatpush1.msra.mxu0 0.0
    %1354 = vmatprep.subr.mxu0 0.0
    %1355 = vmatpush1.msra.mxu0 0.0
    %1356 = vmatprep.subr.mxu0 0.0
    %1357 = vmatpush1.msra.mxu0 0.0
    %1358 = vmatprep.subr.mxu0 0.0
    %1359 = vmatpush1.msra.mxu0 0.0
    %1360 = vmatprep.subr.mxu0 0.0
    %1361 = vmatpush1.msra.mxu0 0.0
    %1362 = vmatprep.subr.mxu0 0.0
    %1363 = vmatpush1.msra.mxu0 0.0
    %1364 = vmatprep.subr.mxu0 0.0
    %1365 = vmatpush1.msra.mxu0 0.0
    %1366 = vmatprep.subr.mxu0 0.0
    %1367 = vmatpush1.msra.mxu0 0.0
    %1368 = vmatprep.subr.mxu0 0.0
    %1369 = vmatpush1.msra.mxu0 0.0
    %1370 = vmatprep.subr.mxu0 0.0
    %1371 = vmatpush1.msra.mxu0 0.0
    %1372 = vmatprep.subr.mxu0 0.0
    %1373 = vmatpush1.msra.mxu0 0.0
    %1374 = vmatprep.subr.mxu0 0.0
    %1375 = vmatpush1.msra.mxu0 0.0
    %1376 = vmatprep.subr.mxu0 0.0
    %1377 = vmatpush1.msra.mxu0 0.0
    %1378 = vmatprep.subr.mxu0 0.0
    %1379 = vmatpush1.msra.mxu0 0.0
    %1380 = vmatprep.subr.mxu0 0.0
    %1381 = vmatpush1.msra.mxu0 0.0
    %1382 = vmatprep.subr.mxu0 0.0
    %1383 = vmatpush1.msra.mxu0 0.0
    %1384 = vmatprep.subr.mxu0 0.0
    %1385 = vmatpush1.msra.mxu0 0.0
    %1386 = vmatprep.subr.mxu0 0.0
    %1387 = vmatpush1.msra.mxu0 0.0
    %1388 = vmatprep.subr.mxu0 0.0
    %1389 = vmatpush1.msra.mxu0 0.0
    %1390 = vmatprep.subr.mxu0 0.0
    %1391 = vmatpush1.msra.mxu0 0.0
    %1392 = vmatprep.subr.mxu0 0.0
    %1393 = vmatpush1.msra.mxu0 0.0
    %1394 = vmatprep.subr.mxu0 0.0
    %1395 = vmatpush1.msra.mxu0 0.0
    %1396 = vmatprep.subr.mxu0 0.0
    %1397 = vmatpush1.msra.mxu0 0.0
    %1398 = vmatprep.subr.mxu0 0.0
    %1399 = vmatpush1.msra.mxu0 0.0
    %1400 = vmatprep.subr.mxu0 0.0
    %1401 = vmatpush1.msra.mxu0 0.0
    %1402 = vmatprep.subr.mxu0 0.0
    %1403 = vmatpush1.msra.mxu0 0.0
    %1404 = vmatprep.subr.mxu0 0.0
    %1405 = vmatpush1.msra.mxu0 0.0
    %1406 = vmatprep.subr.mxu0 0.0
    %1407 = vmatpush1.msra.mxu0 0.0
    %1408 = vmatprep.subr.mxu0 0.0
    %1409 = vmatpush1.msra.mxu0 0.0
    %1410 = vmatprep.subr.mxu0 0.0
    %1411 = vmatpush1.msra.mxu0 0.0
    %1412 = vmatprep.mubr.f32.mxu0 0.0
    %1413 = vmatmul.mubr.f32.gmra.mrb[0].mxu0 %v443
    %v1414 = vpop.f32.mrb[0].mxu0
    %v1415 = vadd.f32 %v1160, %v1414
    %v1416 = vpop.f32.mrb[0].mxu0
    %v1417 = vadd.f32 %v1164, %v1416
    %1418 = vdwg.mxu0
    %1419 = vmatprep.subr.mxu0 %v1255
    %1420 = vmatpush1.msra.mxu0 %v1253
    %1421 = vmatprep.subr.mxu0 0.0
    %1422 = vmatpush1.msra.mxu0 0.0
    %1423 = vmatprep.subr.mxu0 0.0
    %1424 = vmatpush1.msra.mxu0 0.0
    %1425 = vmatprep.subr.mxu0 0.0
    %1426 = vmatpush1.msra.mxu0 0.0
    %1427 = vmatprep.subr.mxu0 0.0
    %1428 = vmatpush1.msra.mxu0 0.0
    %1429 = vmatprep.subr.mxu0 0.0
    %1430 = vmatpush1.msra.mxu0 0.0
    %1431 = vmatprep.subr.mxu0 0.0
    %1432 = vmatpush1.msra.mxu0 0.0
    %1433 = vmatprep.subr.mxu0 0.0
    %1434 = vmatpush1.msra.mxu0 0.0
    %1435 = vmatprep.subr.mxu0 0.0
    %1436 = vmatpush1.msra.mxu0 0.0
    %1437 = vmatprep.subr.mxu0 0.0
    %1438 = vmatpush1.msra.mxu0 0.0
    %1439 = vmatprep.subr.mxu0 0.0
    %1440 = vmatpush1.msra.mxu0 0.0
    %1441 = vmatprep.subr.mxu0 0.0
    %1442 = vmatpush1.msra.mxu0 0.0
    %1443 = vmatprep.subr.mxu0 0.0
    %1444 = vmatpush1.msra.mxu0 0.0
    %1445 = vmatprep.subr.mxu0 0.0
    %1446 = vmatpush1.msra.mxu0 0.0
    %1447 = vmatprep.subr.mxu0 0.0
    %1448 = vmatpush1.msra.mxu0 0.0
    %1449 = vmatprep.subr.mxu0 0.0
    %1450 = vmatpush1.msra.mxu0 0.0
    %1451 = vmatprep.subr.mxu0 0.0
    %1452 = vmatpush1.msra.mxu0 0.0
    %1453 = vmatprep.subr.mxu0 0.0
    %1454 = vmatpush1.msra.mxu0 0.0
    %1455 = vmatprep.subr.mxu0 0.0
    %1456 = vmatpush1.msra.mxu0 0.0
    %1457 = vmatprep.subr.mxu0 0.0
    %1458 = vmatpush1.msra.mxu0 0.0
    %1459 = vmatprep.subr.mxu0 0.0
    %1460 = vmatpush1.msra.mxu0 0.0
    %1461 = vmatprep.subr.mxu0 0.0
    %1462 = vmatpush1.msra.mxu0 0.0
    %1463 = vmatprep.subr.mxu0 0.0
    %1464 = vmatpush1.msra.mxu0 0.0
    %1465 = vmatprep.subr.mxu0 0.0
    %1466 = vmatpush1.msra.mxu0 0.0
    %1467 = vmatprep.subr.mxu0 0.0
    %1468 = vmatpush1.msra.mxu0 0.0
    %1469 = vmatprep.subr.mxu0 0.0
    %1470 = vmatpush1.msra.mxu0 0.0
    %1471 = vmatprep.subr.mxu0 0.0
    %1472 = vmatpush1.msra.mxu0 0.0
    %1473 = vmatprep.subr.mxu0 0.0
    %1474 = vmatpush1.msra.mxu0 0.0
    %1475 = vmatprep.subr.mxu0 0.0
    %1476 = vmatpush1.msra.mxu0 0.0
    %1477 = vmatprep.subr.mxu0 0.0
    %1478 = vmatpush1.msra.mxu0 0.0
    %1479 = vmatprep.subr.mxu0 0.0
    %1480 = vmatpush1.msra.mxu0 0.0
    %1481 = vmatprep.subr.mxu0 0.0
    %1482 = vmatpush1.msra.mxu0 0.0
    %1483 = vmatprep.mubr.f32.mxu0 0.0
    %1484 = vmatmul.mubr.f32.gmra.mrb[0].mxu0 %v443
    %v1485 = vpop.f32.mrb[0].mxu0
    %v1486 = vadd.f32 %v1168, %v1485
    %v1487 = vpop.f32.mrb[0].mxu0
    %v1488 = vadd.f32 %v1172, %v1487
    %1489 = vdwg.mxu0
    %1490 = vmatprep.subr.mxu0 %v1259
    %1491 = vmatpush1.msra.mxu0 %v1257
    %1492 = vmatprep.subr.mxu0 0.0
    %1493 = vmatpush1.msra.mxu0 0.0
    %1494 = vmatprep.subr.mxu0 0.0
    %1495 = vmatpush1.msra.mxu0 0.0
    %1496 = vmatprep.subr.mxu0 0.0
    %1497 = vmatpush1.msra.mxu0 0.0
    %1498 = vmatprep.subr.mxu0 0.0
    %1499 = vmatpush1.msra.mxu0 0.0
    %1500 = vmatprep.subr.mxu0 0.0
    %1501 = vmatpush1.msra.mxu0 0.0
    %1502 = vmatprep.subr.mxu0 0.0
    %1503 = vmatpush1.msra.mxu0 0.0
    %1504 = vmatprep.subr.mxu0 0.0
    %1505 = vmatpush1.msra.mxu0 0.0
    %1506 = vmatprep.subr.mxu0 0.0
    %1507 = vmatpush1.msra.mxu0 0.0
    %1508 = vmatprep.subr.mxu0 0.0
    %1509 = vmatpush1.msra.mxu0 0.0
    %1510 = vmatprep.subr.mxu0 0.0
    %1511 = vmatpush1.msra.mxu0 0.0
    %1512 = vmatprep.subr.mxu0 0.0
    %1513 = vmatpush1.msra.mxu0 0.0
    %1514 = vmatprep.subr.mxu0 0.0
    %1515 = vmatpush1.msra.mxu0 0.0
    %1516 = vmatprep.subr.mxu0 0.0
    %1517 = vmatpush1.msra.mxu0 0.0
    %1518 = vmatprep.subr.mxu0 0.0
    %1519 = vmatpush1.msra.mxu0 0.0
    %1520 = vmatprep.subr.mxu0 0.0
    %1521 = vmatpush1.msra.mxu0 0.0
    %1522 = vmatprep.subr.mxu0 0.0
    %1523 = vmatpush1.msra.mxu0 0.0
    %1524 = vmatprep.subr.mxu0 0.0
    %1525 = vmatpush1.msra.mxu0 0.0
    %1526 = vmatprep.subr.mxu0 0.0
    %1527 = vmatpush1.msra.mxu0 0.0
    %1528 = vmatprep.subr.mxu0 0.0
    %1529 = vmatpush1.msra.mxu0 0.0
    %1530 = vmatprep.subr.mxu0 0.0
    %1531 = vmatpush1.msra.mxu0 0.0
    %1532 = vmatprep.subr.mxu0 0.0
    %1533 = vmatpush1.msra.mxu0 0.0
    %1534 = vmatprep.subr.mxu0 0.0
    %1535 = vmatpush1.msra.mxu0 0.0
    %1536 = vmatprep.subr.mxu0 0.0
    %1537 = vmatpush1.msra.mxu0 0.0
    %1538 = vmatprep.subr.mxu0 0.0
    %1539 = vmatpush1.msra.mxu0 0.0
    %1540 = vmatprep.subr.mxu0 0.0
    %1541 = vmatpush1.msra.mxu0 0.0
    %1542 = vmatprep.subr.mxu0 0.0
    %1543 = vmatpush1.msra.mxu0 0.0
    %1544 = vmatprep.subr.mxu0 0.0
    %1545 = vmatpush1.msra.mxu0 0.0
    %1546 = vmatprep.subr.mxu0 0.0
    %1547 = vmatpush1.msra.mxu0 0.0
    %1548 = vmatprep.subr.mxu0 0.0
    %1549 = vmatpush1.msra.mxu0 0.0
    %1550 = vmatprep.subr.mxu0 0.0
    %1551 = vmatpush1.msra.mxu0 0.0
    %1552 = vmatprep.subr.mxu0 0.0
    %1553 = vmatpush1.msra.mxu0 0.0
    %1554 = vmatprep.mubr.f32.mxu0 0.0
    %1555 = vmatmul.mubr.f32.gmra.mrb[0].mxu0 %v443
    %v1556 = vpop.f32.mrb[0].mxu0
    %v1557 = vadd.f32 %v1176, %v1556
    %v1558 = vpop.f32.mrb[0].mxu0
    %v1559 = vadd.f32 %v1180, %v1558
    %1560 = vdwg.mxu0
    %1561 = vmatprep.subr.mxu0 %v1263
    %1562 = vmatpush1.msra.mxu0 %v1261
    %1563 = vmatprep.subr.mxu0 0.0
    %1564 = vmatpush1.msra.mxu0 0.0
    %1565 = vmatprep.subr.mxu0 0.0
    %1566 = vmatpush1.msra.mxu0 0.0
    %1567 = vmatprep.subr.mxu0 0.0
    %1568 = vmatpush1.msra.mxu0 0.0
    %1569 = vmatprep.subr.mxu0 0.0
    %1570 = vmatpush1.msra.mxu0 0.0
    %1571 = vmatprep.subr.mxu0 0.0
    %1572 = vmatpush1.msra.mxu0 0.0
    %1573 = vmatprep.subr.mxu0 0.0
    %1574 = vmatpush1.msra.mxu0 0.0
    %1575 = vmatprep.subr.mxu0 0.0
    %1576 = vmatpush1.msra.mxu0 0.0
    %1577 = vmatprep.subr.mxu0 0.0
    %1578 = vmatpush1.msra.mxu0 0.0
    %1579 = vmatprep.subr.mxu0 0.0
    %1580 = vmatpush1.msra.mxu0 0.0
    %1581 = vmatprep.subr.mxu0 0.0
    %1582 = vmatpush1.msra.mxu0 0.0
    %1583 = vmatprep.subr.mxu0 0.0
    %1584 = vmatpush1.msra.mxu0 0.0
    %1585 = vmatprep.subr.mxu0 0.0
    %1586 = vmatpush1.msra.mxu0 0.0
    %1587 = vmatprep.subr.mxu0 0.0
    %1588 = vmatpush1.msra.mxu0 0.0
    %1589 = vmatprep.subr.mxu0 0.0
    %1590 = vmatpush1.msra.mxu0 0.0
    %1591 = vmatprep.subr.mxu0 0.0
    %1592 = vmatpush1.msra.mxu0 0.0
    %1593 = vmatprep.subr.mxu0 0.0
    %1594 = vmatpush1.msra.mxu0 0.0
    %1595 = vmatprep.subr.mxu0 0.0
    %1596 = vmatpush1.msra.mxu0 0.0
    %1597 = vmatprep.subr.mxu0 0.0
    %1598 = vmatpush1.msra.mxu0 0.0
    %1599 = vmatprep.subr.mxu0 0.0
    %1600 = vmatpush1.msra.mxu0 0.0
    %1601 = vmatprep.subr.mxu0 0.0
    %1602 = vmatpush1.msra.mxu0 0.0
    %1603 = vmatprep.subr.mxu0 0.0
    %1604 = vmatpush1.msra.mxu0 0.0
    %1605 = vmatprep.subr.mxu0 0.0
    %1606 = vmatpush1.msra.mxu0 0.0
    %1607 = vmatprep.subr.mxu0 0.0
    %1608 = vmatpush1.msra.mxu0 0.0
    %1609 = vmatprep.subr.mxu0 0.0
    %1610 = vmatpush1.msra.mxu0 0.0
    %1611 = vmatprep.subr.mxu0 0.0
    %1612 = vmatpush1.msra.mxu0 0.0
    %1613 = vmatprep.subr.mxu0 0.0
    %1614 = vmatpush1.msra.mxu0 0.0
    %1615 = vmatprep.subr.mxu0 0.0
    %1616 = vmatpush1.msra.mxu0 0.0
    %1617 = vmatprep.subr.mxu0 0.0
    %1618 = vmatpush1.msra.mxu0 0.0
    %1619 = vmatprep.subr.mxu0 0.0
    %1620 = vmatpush1.msra.mxu0 0.0
    %1621 = vmatprep.subr.mxu0 0.0
    %1622 = vmatpush1.msra.mxu0 0.0
    %1623 = vmatprep.subr.mxu0 0.0
    %1624 = vmatpush1.msra.mxu0 0.0
    %1625 = vmatprep.mubr.f32.mxu0 0.0
    %1626 = vmatmul.mubr.f32.gmra.mrb[0].mxu0 %v443
    %v1627 = vpop.f32.mrb[0].mxu0
    %v1628 = vadd.f32 %v1184, %v1627
    %v1629 = vpop.f32.mrb[0].mxu0
    %v1630 = vadd.f32 %v1188, %v1629
    %1631 = vdwg.mxu0
    %1632 = vmatprep.subr.mxu0 %v1267
    %1633 = vmatpush1.msra.mxu0 %v1265
    %1634 = vmatprep.subr.mxu0 0.0
    %1635 = vmatpush1.msra.mxu0 0.0
    %1636 = vmatprep.subr.mxu0 0.0
    %1637 = vmatpush1.msra.mxu0 0.0
    %1638 = vmatprep.subr.mxu0 0.0
    %1639 = vmatpush1.msra.mxu0 0.0
    %1640 = vmatprep.subr.mxu0 0.0
    %1641 = vmatpush1.msra.mxu0 0.0
    %1642 = vmatprep.subr.mxu0 0.0
    %1643 = vmatpush1.msra.mxu0 0.0
    %1644 = vmatprep.subr.mxu0 0.0
    %1645 = vmatpush1.msra.mxu0 0.0
    %1646 = vmatprep.subr.mxu0 0.0
    %1647 = vmatpush1.msra.mxu0 0.0
    %1648 = vmatprep.subr.mxu0 0.0
    %1649 = vmatpush1.msra.mxu0 0.0
    %1650 = vmatprep.subr.mxu0 0.0
    %1651 = vmatpush1.msra.mxu0 0.0
    %1652 = vmatprep.subr.mxu0 0.0
    %1653 = vmatpush1.msra.mxu0 0.0
    %1654 = vmatprep.subr.mxu0 0.0
    %1655 = vmatpush1.msra.mxu0 0.0
    %1656 = vmatprep.subr.mxu0 0.0
    %1657 = vmatpush1.msra.mxu0 0.0
    %1658 = vmatprep.subr.mxu0 0.0
    %1659 = vmatpush1.msra.mxu0 0.0
    %1660 = vmatprep.subr.mxu0 0.0
    %1661 = vmatpush1.msra.mxu0 0.0
    %1662 = vmatprep.subr.mxu0 0.0
    %1663 = vmatpush1.msra.mxu0 0.0
    %1664 = vmatprep.subr.mxu0 0.0
    %1665 = vmatpush1.msra.mxu0 0.0
    %1666 = vmatprep.subr.mxu0 0.0
    %1667 = vmatpush1.msra.mxu0 0.0
    %1668 = vmatprep.subr.mxu0 0.0
    %1669 = vmatpush1.msra.mxu0 0.0
    %1670 = vmatprep.subr.mxu0 0.0
    %1671 = vmatpush1.msra.mxu0 0.0
    %1672 = vmatprep.subr.mxu0 0.0
    %1673 = vmatpush1.msra.mxu0 0.0
    %1674 = vmatprep.subr.mxu0 0.0
    %1675 = vmatpush1.msra.mxu0 0.0
    %1676 = vmatprep.subr.mxu0 0.0
    %1677 = vmatpush1.msra.mxu0 0.0
    %1678 = vmatprep.subr.mxu0 0.0
    %1679 = vmatpush1.msra.mxu0 0.0
    %1680 = vmatprep.subr.mxu0 0.0
    %1681 = vmatpush1.msra.mxu0 0.0
    %1682 = vmatprep.subr.mxu0 0.0
    %1683 = vmatpush1.msra.mxu0 0.0
    %1684 = vmatprep.subr.mxu0 0.0
    %1685 = vmatpush1.msra.mxu0 0.0
    %1686 = vmatprep.subr.mxu0 0.0
    %1687 = vmatpush1.msra.mxu0 0.0
    %1688 = vmatprep.subr.mxu0 0.0
    %1689 = vmatpush1.msra.mxu0 0.0
    %1690 = vmatprep.subr.mxu0 0.0
    %1691 = vmatpush1.msra.mxu0 0.0
    %1692 = vmatprep.subr.mxu0 0.0
    %1693 = vmatpush1.msra.mxu0 0.0
    %1694 = vmatprep.subr.mxu0 0.0
    %1695 = vmatpush1.msra.mxu0 0.0
    %1696 = vmatprep.mubr.f32.mxu0 0.0
    %1697 = vmatmul.mubr.f32.gmra.mrb[0].mxu0 %v443
    %v1698 = vpop.f32.mrb[0].mxu0
    %v1699 = vadd.f32 %v1192, %v1698
    %v1700 = vpop.f32.mrb[0].mxu0
    %v1701 = vadd.f32 %v1196, %v1700
    %1702 = vdwg.mxu0
    %1703 = vmatprep.subr.mxu0 %v1271
    %1704 = vmatpush1.msra.mxu0 %v1269
    %1705 = vmatprep.subr.mxu0 0.0
    %1706 = vmatpush1.msra.mxu0 0.0
    %1707 = vmatprep.subr.mxu0 0.0
    %1708 = vmatpush1.msra.mxu0 0.0
    %1709 = vmatprep.subr.mxu0 0.0
    %1710 = vmatpush1.msra.mxu0 0.0
    %1711 = vmatprep.subr.mxu0 0.0
    %1712 = vmatpush1.msra.mxu0 0.0
    %1713 = vmatprep.subr.mxu0 0.0
    %1714 = vmatpush1.msra.mxu0 0.0
    %1715 = vmatprep.subr.mxu0 0.0
    %1716 = vmatpush1.msra.mxu0 0.0
    %1717 = vmatprep.subr.mxu0 0.0
    %1718 = vmatpush1.msra.mxu0 0.0
    %1719 = vmatprep.subr.mxu0 0.0
    %1720 = vmatpush1.msra.mxu0 0.0
    %1721 = vmatprep.subr.mxu0 0.0
    %1722 = vmatpush1.msra.mxu0 0.0
    %1723 = vmatprep.subr.mxu0 0.0
    %1724 = vmatpush1.msra.mxu0 0.0
    %1725 = vmatprep.subr.mxu0 0.0
    %1726 = vmatpush1.msra.mxu0 0.0
    %1727 = vmatprep.subr.mxu0 0.0
    %1728 = vmatpush1.msra.mxu0 0.0
    %1729 = vmatprep.subr.mxu0 0.0
    %1730 = vmatpush1.msra.mxu0 0.0
    %1731 = vmatprep.subr.mxu0 0.0
    %1732 = vmatpush1.msra.mxu0 0.0
    %1733 = vmatprep.subr.mxu0 0.0
    %1734 = vmatpush1.msra.mxu0 0.0
    %1735 = vmatprep.subr.mxu0 0.0
    %1736 = vmatpush1.msra.mxu0 0.0
    %1737 = vmatprep.subr.mxu0 0.0
    %1738 = vmatpush1.msra.mxu0 0.0
    %1739 = vmatprep.subr.mxu0 0.0
    %1740 = vmatpush1.msra.mxu0 0.0
    %1741 = vmatprep.subr.mxu0 0.0
    %1742 = vmatpush1.msra.mxu0 0.0
    %1743 = vmatprep.subr.mxu0 0.0
    %1744 = vmatpush1.msra.mxu0 0.0
    %1745 = vmatprep.subr.mxu0 0.0
    %1746 = vmatpush1.msra.mxu0 0.0
    %1747 = vmatprep.subr.mxu0 0.0
    %1748 = vmatpush1.msra.mxu0 0.0
    %1749 = vmatprep.subr.mxu0 0.0
    %1750 = vmatpush1.msra.mxu0 0.0
    %1751 = vmatprep.subr.mxu0 0.0
    %1752 = vmatpush1.msra.mxu0 0.0
    %1753 = vmatprep.subr.mxu0 0.0
    %1754 = vmatpush1.msra.mxu0 0.0
    %1755 = vmatprep.subr.mxu0 0.0
    %1756 = vmatpush1.msra.mxu0 0.0
    %1757 = vmatprep.subr.mxu0 0.0
    %1758 = vmatpush1.msra.mxu0 0.0
    %1759 = vmatprep.subr.mxu0 0.0
    %1760 = vmatpush1.msra.mxu0 0.0
    %1761 = vmatprep.subr.mxu0 0.0
    %1762 = vmatpush1.msra.mxu0 0.0
    %1763 = vmatprep.subr.mxu0 0.0
    %1764 = vmatpush1.msra.mxu0 0.0
    %1765 = vmatprep.subr.mxu0 0.0
    %1766 = vmatpush1.msra.mxu0 0.0
    %1767 = vmatprep.mubr.f32.mxu0 0.0
    %1768 = vmatmul.mubr.f32.gmra.mrb[0].mxu0 %v443
    %v1769 = vpop.f32.mrb[0].mxu0
    %v1770 = vadd.f32 %v1200, %v1769
    %v1771 = vpop.f32.mrb[0].mxu0
    %v1772 = vadd.f32 %v1204, %v1771
    %1773 = vdwg.mxu0
    %1774 = vmatprep.subr.mxu0 %v1275
    %1775 = vmatpush1.msra.mxu0 %v1273
    %1776 = vmatprep.subr.mxu0 0.0
    %1777 = vmatpush1.msra.mxu0 0.0
    %1778 = vmatprep.subr.mxu0 0.0
    %1779 = vmatpush1.msra.mxu0 0.0
    %1780 = vmatprep.subr.mxu0 0.0
    %1781 = vmatpush1.msra.mxu0 0.0
    %1782 = vmatprep.subr.mxu0 0.0
    %1783 = vmatpush1.msra.mxu0 0.0
    %1784 = vmatprep.subr.mxu0 0.0
    %1785 = vmatpush1.msra.mxu0 0.0
    %1786 = vmatprep.subr.mxu0 0.0
    %1787 = vmatpush1.msra.mxu0 0.0
    %1788 = vmatprep.subr.mxu0 0.0
    %1789 = vmatpush1.msra.mxu0 0.0
    %1790 = vmatprep.subr.mxu0 0.0
    %1791 = vmatpush1.msra.mxu0 0.0
    %1792 = vmatprep.subr.mxu0 0.0
    %1793 = vmatpush1.msra.mxu0 0.0
    %1794 = vmatprep.subr.mxu0 0.0
    %1795 = vmatpush1.msra.mxu0 0.0
    %1796 = vmatprep.subr.mxu0 0.0
    %1797 = vmatpush1.msra.mxu0 0.0
    %1798 = vmatprep.subr.mxu0 0.0
    %1799 = vmatpush1.msra.mxu0 0.0
    %1800 = vmatprep.subr.mxu0 0.0
    %1801 = vmatpush1.msra.mxu0 0.0
    %1802 = vmatprep.subr.mxu0 0.0
    %1803 = vmatpush1.msra.mxu0 0.0
    %1804 = vmatprep.subr.mxu0 0.0
    %1805 = vmatpush1.msra.mxu0 0.0
    %1806 = vmatprep.subr.mxu0 0.0
    %1807 = vmatpush1.msra.mxu0 0.0
    %1808 = vmatprep.subr.mxu0 0.0
    %1809 = vmatpush1.msra.mxu0 0.0
    %1810 = vmatprep.subr.mxu0 0.0
    %1811 = vmatpush1.msra.mxu0 0.0
    %1812 = vmatprep.subr.mxu0 0.0
    %1813 = vmatpush1.msra.mxu0 0.0
    %1814 = vmatprep.subr.mxu0 0.0
    %1815 = vmatpush1.msra.mxu0 0.0
    %1816 = vmatprep.subr.mxu0 0.0
    %1817 = vmatpush1.msra.mxu0 0.0
    %1818 = vmatprep.subr.mxu0 0.0
    %1819 = vmatpush1.msra.mxu0 0.0
    %1820 = vmatprep.subr.mxu0 0.0
    %1821 = vmatpush1.msra.mxu0 0.0
    %1822 = vmatprep.subr.mxu0 0.0
    %1823 = vmatpush1.msra.mxu0 0.0
    %1824 = vmatprep.subr.mxu0 0.0
    %1825 = vmatpush1.msra.mxu0 0.0
    %1826 = vmatprep.subr.mxu0 0.0
    %1827 = vmatpush1.msra.mxu0 0.0
    %1828 = vmatprep.subr.mxu0 0.0
    %1829 = vmatpush1.msra.mxu0 0.0
    %1830 = vmatprep.subr.mxu0 0.0
    %1831 = vmatpush1.msra.mxu0 0.0
    %1832 = vmatprep.subr.mxu0 0.0
    %1833 = vmatpush1.msra.mxu0 0.0
    %1834 = vmatprep.subr.mxu0 0.0
    %1835 = vmatpush1.msra.mxu0 0.0
    %1836 = vmatprep.subr.mxu0 0.0
    %1837 = vmatpush1.msra.mxu0 0.0
    %1838 = vmatprep.mubr.f32.mxu0 0.0
    %1839 = vmatmul.mubr.f32.gmra.mrb[0].mxu0 %v443
    %v1840 = vpop.f32.mrb[0].mxu0
    %v1841 = vadd.f32 %v1208, %v1840
    %v1842 = vpop.f32.mrb[0].mxu0
    %v1843 = vadd.f32 %v1212, %v1842
    %1844 = vdwg.mxu0
    %v1861 = vcombine.low %v1344, %v1346
    %v1862 = vcombine.low %v1415, %v1417
    %v1864 = vunpack.c.l.s4 1983009808
    %v1865 = vunpack.c.0.s8 %v1864
    %v1866 = vlaneseq
    %v1867 = vshrl.u32 %v1866, 7
    %v1868 = vsub.s32 %v1865, %v1867
    %v1869 = vrot.slane %v1861, %v1868
    %v1871 = vunpack.c.l.s4 1983009808
    %v1872 = vunpack.c.0.s8 %v1871
    %v1873 = vlaneseq
    %v1874 = vshrl.u32 %v1873, 7
    %v1875 = vsub.s32 %v1872, %v1874
    %v1876 = vrot.slane %v1862, %v1875
    %v1877 = vcombine.low %v1869, %v1876
    %v1878 = vcombine.low %v1486, %v1488
    %v1879 = vcombine.low %v1557, %v1559
    %v1881 = vunpack.c.l.s4 1983009808
    %v1882 = vunpack.c.0.s8 %v1881
    %v1883 = vlaneseq
    %v1884 = vshrl.u32 %v1883, 7
    %v1885 = vsub.s32 %v1882, %v1884
    %v1886 = vrot.slane %v1878, %v1885
    %v1888 = vunpack.c.l.s4 1983009808
    %v1889 = vunpack.c.0.s8 %v1888
    %v1890 = vlaneseq
    %v1891 = vshrl.u32 %v1890, 7
    %v1892 = vsub.s32 %v1889, %v1891
    %v1893 = vrot.slane %v1879, %v1892
    %v1894 = vcombine.low %v1886, %v1893
    %v1895 = vcombine.low %v1628, %v1630
    %v1896 = vcombine.low %v1699, %v1701
    %v1898 = vunpack.c.l.s4 1983009808
    %v1899 = vunpack.c.0.s8 %v1898
    %v1900 = vlaneseq
    %v1901 = vshrl.u32 %v1900, 7
    %v1902 = vsub.s32 %v1899, %v1901
    %v1903 = vrot.slane %v1895, %v1902
    %v1905 = vunpack.c.l.s4 1983009808
    %v1906 = vunpack.c.0.s8 %v1905
    %v1907 = vlaneseq
    %v1908 = vshrl.u32 %v1907, 7
    %v1909 = vsub.s32 %v1906, %v1908
    %v1910 = vrot.slane %v1896, %v1909
    %v1911 = vcombine.low %v1903, %v1910
    %v1912 = vcombine.low %v1770, %v1772
    %v1913 = vcombine.low %v1841, %v1843
    %v1915 = vunpack.c.l.s4 1983009808
    %v1916 = vunpack.c.0.s8 %v1915
    %v1917 = vlaneseq
    %v1918 = vshrl.u32 %v1917, 7
    %v1919 = vsub.s32 %v1916, %v1918
    %v1920 = vrot.slane %v1912, %v1919
    %v1922 = vunpack.c.l.s4 1983009808
    %v1923 = vunpack.c.0.s8 %v1922
    %v1924 = vlaneseq
    %v1925 = vshrl.u32 %v1924, 7
    %v1926 = vsub.s32 %v1923, %v1925
    %v1927 = vrot.slane %v1913, %v1926
    %v1928 = vcombine.low %v1920, %v1927
    %1933 = vst [vmem:[%s12 + $0x24] sm:$0xff] %v1877
    %1934 = vst [vmem:[%s12 + $0x2c] sm:$0xff] %v1894
    %1935 = vst [vmem:[%s12 + $0x34] sm:$0xff] %v1911
    %1936 = vst [vmem:[%s12 + $0x3c] sm:$0xff] %v1928
    %v1937 = vld [vmem:[#allocation10] sm:$0x77]
    %v1938 = vld [vmem:[#allocation10 + $0x8] sm:$0x77]
    %v1939 = vld [vmem:[#allocation10 + $0x10] sm:$0x77]
    %v1940 = vld [vmem:[#allocation10 + $0x18] sm:$0x77]
    %v1941 = vld [vmem:[#allocation10 + $0x20] sm:$0x77]
    %v1942 = vld [vmem:[#allocation10 + $0x28] sm:$0x77]
    %v1943 = vld [vmem:[#allocation10 + $0x30] sm:$0x77]
    %v1944 = vld [vmem:[#allocation10 + $0x38] sm:$0x77]
    %v1945 = vld [vmem:[#allocation12] sm:$0xff]
    %v1946 = vld [vmem:[#allocation12 + $0x8] sm:$0xff]
    %v1949 = vlaneseq
    %v1950 = vshrl.u32 %v1949, 7
    %v1951 = vsub.s32 0, %v1950
    %v1952 = vrot.slane %v1945, %v1951
    %v1953 = vlaneseq
    %v1954 = vshrl.u32 %v1953, 7
    %v1955 = vsub.s32 1, %v1954
    %v1956 = vrot.slane %v1945, %v1955
    %v1957 = vlaneseq
    %v1958 = vshrl.u32 %v1957, 7
    %v1959 = vsub.s32 2, %v1958
    %v1960 = vrot.slane %v1945, %v1959
    %v1961 = vlaneseq
    %v1962 = vshrl.u32 %v1961, 7
    %v1963 = vsub.s32 3, %v1962
    %v1964 = vrot.slane %v1945, %v1963
    %v1965 = vlaneseq
    %v1966 = vshrl.u32 %v1965, 7
    %v1967 = vsub.s32 4, %v1966
    %v1968 = vrot.slane %v1945, %v1967
    %v1969 = vlaneseq
    %v1970 = vshrl.u32 %v1969, 7
    %v1971 = vsub.s32 5, %v1970
    %v1972 = vrot.slane %v1945, %v1971
    %v1973 = vlaneseq
    %v1974 = vshrl.u32 %v1973, 7
    %v1975 = vsub.s32 6, %v1974
    %v1976 = vrot.slane %v1945, %v1975
    %v1977 = vlaneseq
    %v1978 = vshrl.u32 %v1977, 7
    %v1979 = vsub.s32 7, %v1978
    %v1980 = vrot.slane %v1945, %v1979
    %v1981 = vlaneseq
    %v1982 = vshrl.u32 %v1981, 7
    %v1983 = vsub.s32 0, %v1982
    %v1984 = vrot.slane %v1946, %v1983
    %v1985 = vlaneseq
    %v1986 = vshrl.u32 %v1985, 7
    %v1987 = vsub.s32 1, %v1986
    %v1988 = vrot.slane %v1946, %v1987
    %v1989 = vlaneseq
    %v1990 = vshrl.u32 %v1989, 7
    %v1991 = vsub.s32 2, %v1990
    %v1992 = vrot.slane %v1946, %v1991
    %v1993 = vlaneseq
    %v1994 = vshrl.u32 %v1993, 7
    %v1995 = vsub.s32 3, %v1994
    %v1996 = vrot.slane %v1946, %v1995
    %v1997 = vlaneseq
    %v1998 = vshrl.u32 %v1997, 7
    %v1999 = vsub.s32 4, %v1998
    %v2000 = vrot.slane %v1946, %v1999
    %v2001 = vlaneseq
    %v2002 = vshrl.u32 %v2001, 7
    %v2003 = vsub.s32 5, %v2002
    %v2004 = vrot.slane %v1946, %v2003
    %v2005 = vlaneseq
    %v2006 = vshrl.u32 %v2005, 7
    %v2007 = vsub.s32 6, %v2006
    %v2008 = vrot.slane %v1946, %v2007
    %v2009 = vlaneseq
    %v2010 = vshrl.u32 %v2009, 7
    %v2011 = vsub.s32 7, %v2010
    %v2012 = vrot.slane %v1946, %v2011
    %v2031 = vlaneseq
    %v2032 = vshrl.u32 %v2031, 7
    %v2033 = vsub.s32 %v415, %v2032
    %v2034 = vrot.slane %v187, %v2033
    %v2035 = vlaneseq
    %v2036 = vshrl.u32 %v2035, 7
    %v2037 = vsub.s32 %v415, %v2036
    %v2038 = vrot.slane %v188, %v2037
    %v2039 = vsel %vm424, %v2038, %v2034
    %v2048 = vcombine.high %v1937, %v1937
    %v2049 = vcombine.high %v1938, %v1938
    %v2050 = vcombine.high %v1939, %v1939
    %v2051 = vcombine.high %v1940, %v1940
    %v2052 = vcombine.high %v1941, %v1941
    %v2053 = vcombine.high %v1942, %v1942
    %v2054 = vcombine.high %v1943, %v1943
    %v2055 = vcombine.high %v1944, %v1944
    %v2056 = vsel %vm442, %v2039, 0
    %v2058 = vsel %vm155, %v1937, 0
    %v2060 = vsel %vm155, %v2048, 0
    %v2062 = vsel %vm155, %v1938, 0
    %v2064 = vsel %vm155, %v2049, 0
    %v2066 = vsel %vm155, %v1939, 0
    %v2068 = vsel %vm155, %v2050, 0
    %v2070 = vsel %vm155, %v1940, 0
    %v2072 = vsel %vm155, %v2051, 0
    %v2074 = vsel %vm155, %v1941, 0
    %v2076 = vsel %vm155, %v2052, 0
    %v2078 = vsel %vm155, %v1942, 0
    %v2080 = vsel %vm155, %v2053, 0
    %v2082 = vsel %vm155, %v1943, 0
    %v2084 = vsel %vm155, %v2054, 0
    %v2086 = vsel %vm155, %v1944, 0
    %v2088 = vsel %vm155, %v2055, 0
    %2090 = vmatprep.subr.mxu0 %v2060
    %2091 = vmatpush1.msra.mxu0 %v2058
    %2092 = vmatprep.subr.mxu0 0.0
    %2093 = vmatpush1.msra.mxu0 0.0
    %2094 = vmatprep.subr.mxu0 0.0
    %2095 = vmatpush1.msra.mxu0 0.0
    %2096 = vmatprep.subr.mxu0 0.0
    %2097 = vmatpush1.msra.mxu0 0.0
    %2098 = vmatprep.subr.mxu0 0.0
    %2099 = vmatpush1.msra.mxu0 0.0
    %2100 = vmatprep.subr.mxu0 0.0
    %2101 = vmatpush1.msra.mxu0 0.0
    %2102 = vmatprep.subr.mxu0 0.0
    %2103 = vmatpush1.msra.mxu0 0.0
    %2104 = vmatprep.subr.mxu0 0.0
    %2105 = vmatpush1.msra.mxu0 0.0
    %2106 = vmatprep.subr.mxu0 0.0
    %2107 = vmatpush1.msra.mxu0 0.0
    %2108 = vmatprep.subr.mxu0 0.0
    %2109 = vmatpush1.msra.mxu0 0.0
    %2110 = vmatprep.subr.mxu0 0.0
    %2111 = vmatpush1.msra.mxu0 0.0
    %2112 = vmatprep.subr.mxu0 0.0
    %2113 = vmatpush1.msra.mxu0 0.0
    %2114 = vmatprep.subr.mxu0 0.0
    %2115 = vmatpush1.msra.mxu0 0.0
    %2116 = vmatprep.subr.mxu0 0.0
    %2117 = vmatpush1.msra.mxu0 0.0
    %2118 = vmatprep.subr.mxu0 0.0
    %2119 = vmatpush1.msra.mxu0 0.0
    %2120 = vmatprep.subr.mxu0 0.0
    %2121 = vmatpush1.msra.mxu0 0.0
    %2122 = vmatprep.subr.mxu0 0.0
    %2123 = vmatpush1.msra.mxu0 0.0
    %2124 = vmatprep.subr.mxu0 0.0
    %2125 = vmatpush1.msra.mxu0 0.0
    %2126 = vmatprep.subr.mxu0 0.0
    %2127 = vmatpush1.msra.mxu0 0.0
    %2128 = vmatprep.subr.mxu0 0.0
    %2129 = vmatpush1.msra.mxu0 0.0
    %2130 = vmatprep.subr.mxu0 0.0
    %2131 = vmatpush1.msra.mxu0 0.0
    %2132 = vmatprep.subr.mxu0 0.0
    %2133 = vmatpush1.msra.mxu0 0.0
    %2134 = vmatprep.subr.mxu0 0.0
    %2135 = vmatpush1.msra.mxu0 0.0
    %2136 = vmatprep.subr.mxu0 0.0
    %2137 = vmatpush1.msra.mxu0 0.0
    %2138 = vmatprep.subr.mxu0 0.0
    %2139 = vmatpush1.msra.mxu0 0.0
    %2140 = vmatprep.subr.mxu0 0.0
    %2141 = vmatpush1.msra.mxu0 0.0
    %2142 = vmatprep.subr.mxu0 0.0
    %2143 = vmatpush1.msra.mxu0 0.0
    %2144 = vmatprep.subr.mxu0 0.0
    %2145 = vmatpush1.msra.mxu0 0.0
    %2146 = vmatprep.subr.mxu0 0.0
    %2147 = vmatpush1.msra.mxu0 0.0
    %2148 = vmatprep.subr.mxu0 0.0
    %2149 = vmatpush1.msra.mxu0 0.0
    %2150 = vmatprep.subr.mxu0 0.0
    %2151 = vmatpush1.msra.mxu0 0.0
    %2152 = vmatprep.subr.mxu0 0.0
    %2153 = vmatpush1.msra.mxu0 0.0
    %2154 = vmatprep.mubr.f32.mxu0 0.0
    %2155 = vmatmul.mubr.f32.gmra.mrb[0].mxu0 %v2056
    %v2156 = vpop.f32.mrb[0].mxu0
    %v2157 = vadd.f32 %v1952, %v2156
    %v2158 = vpop.f32.mrb[0].mxu0
    %v2159 = vadd.f32 %v1956, %v2158
    %2160 = vdwg.mxu0
    %2161 = vmatprep.subr.mxu0 %v2064
    %2162 = vmatpush1.msra.mxu0 %v2062
    %2163 = vmatprep.subr.mxu0 0.0
    %2164 = vmatpush1.msra.mxu0 0.0
    %2165 = vmatprep.subr.mxu0 0.0
    %2166 = vmatpush1.msra.mxu0 0.0
    %2167 = vmatprep.subr.mxu0 0.0
    %2168 = vmatpush1.msra.mxu0 0.0
    %2169 = vmatprep.subr.mxu0 0.0
    %2170 = vmatpush1.msra.mxu0 0.0
    %2171 = vmatprep.subr.mxu0 0.0
    %2172 = vmatpush1.msra.mxu0 0.0
    %2173 = vmatprep.subr.mxu0 0.0
    %2174 = vmatpush1.msra.mxu0 0.0
    %2175 = vmatprep.subr.mxu0 0.0
    %2176 = vmatpush1.msra.mxu0 0.0
    %2177 = vmatprep.subr.mxu0 0.0
    %2178 = vmatpush1.msra.mxu0 0.0
    %2179 = vmatprep.subr.mxu0 0.0
    %2180 = vmatpush1.msra.mxu0 0.0
    %2181 = vmatprep.subr.mxu0 0.0
    %2182 = vmatpush1.msra.mxu0 0.0
    %2183 = vmatprep.subr.mxu0 0.0
    %2184 = vmatpush1.msra.mxu0 0.0
    %2185 = vmatprep.subr.mxu0 0.0
    %2186 = vmatpush1.msra.mxu0 0.0
    %2187 = vmatprep.subr.mxu0 0.0
    %2188 = vmatpush1.msra.mxu0 0.0
    %2189 = vmatprep.subr.mxu0 0.0
    %2190 = vmatpush1.msra.mxu0 0.0
    %2191 = vmatprep.subr.mxu0 0.0
    %2192 = vmatpush1.msra.mxu0 0.0
    %2193 = vmatprep.subr.mxu0 0.0
    %2194 = vmatpush1.msra.mxu0 0.0
    %2195 = vmatprep.subr.mxu0 0.0
    %2196 = vmatpush1.msra.mxu0 0.0
    %2197 = vmatprep.subr.mxu0 0.0
    %2198 = vmatpush1.msra.mxu0 0.0
    %2199 = vmatprep.subr.mxu0 0.0
    %2200 = vmatpush1.msra.mxu0 0.0
    %2201 = vmatprep.subr.mxu0 0.0
    %2202 = vmatpush1.msra.mxu0 0.0
    %2203 = vmatprep.subr.mxu0 0.0
    %2204 = vmatpush1.msra.mxu0 0.0
    %2205 = vmatprep.subr.mxu0 0.0
    %2206 = vmatpush1.msra.mxu0 0.0
    %2207 = vmatprep.subr.mxu0 0.0
    %2208 = vmatpush1.msra.mxu0 0.0
    %2209 = vmatprep.subr.mxu0 0.0
    %2210 = vmatpush1.msra.mxu0 0.0
    %2211 = vmatprep.subr.mxu0 0.0
    %2212 = vmatpush1.msra.mxu0 0.0
    %2213 = vmatprep.subr.mxu0 0.0
    %2214 = vmatpush1.msra.mxu0 0.0
    %2215 = vmatprep.subr.mxu0 0.0
    %2216 = vmatpush1.msra.mxu0 0.0
    %2217 = vmatprep.subr.mxu0 0.0
    %2218 = vmatpush1.msra.mxu0 0.0
    %2219 = vmatprep.subr.mxu0 0.0
    %2220 = vmatpush1.msra.mxu0 0.0
    %2221 = vmatprep.subr.mxu0 0.0
    %2222 = vmatpush1.msra.mxu0 0.0
    %2223 = vmatprep.subr.mxu0 0.0
    %2224 = vmatpush1.msra.mxu0 0.0
    %2225 = vmatprep.mubr.f32.mxu0 0.0
    %2226 = vmatmul.mubr.f32.gmra.mrb[0].mxu0 %v2056
    %v2227 = vpop.f32.mrb[0].mxu0
    %v2228 = vadd.f32 %v1960, %v2227
    %v2229 = vpop.f32.mrb[0].mxu0
    %v2230 = vadd.f32 %v1964, %v2229
    %2231 = vdwg.mxu0
    %2232 = vmatprep.subr.mxu0 %v2068
    %2233 = vmatpush1.msra.mxu0 %v2066
    %2234 = vmatprep.subr.mxu0 0.0
    %2235 = vmatpush1.msra.mxu0 0.0
    %2236 = vmatprep.subr.mxu0 0.0
    %2237 = vmatpush1.msra.mxu0 0.0
    %2238 = vmatprep.subr.mxu0 0.0
    %2239 = vmatpush1.msra.mxu0 0.0
    %2240 = vmatprep.subr.mxu0 0.0
    %2241 = vmatpush1.msra.mxu0 0.0
    %2242 = vmatprep.subr.mxu0 0.0
    %2243 = vmatpush1.msra.mxu0 0.0
    %2244 = vmatprep.subr.mxu0 0.0
    %2245 = vmatpush1.msra.mxu0 0.0
    %2246 = vmatprep.subr.mxu0 0.0
    %2247 = vmatpush1.msra.mxu0 0.0
    %2248 = vmatprep.subr.mxu0 0.0
    %2249 = vmatpush1.msra.mxu0 0.0
    %2250 = vmatprep.subr.mxu0 0.0
    %2251 = vmatpush1.msra.mxu0 0.0
    %2252 = vmatprep.subr.mxu0 0.0
    %2253 = vmatpush1.msra.mxu0 0.0
    %2254 = vmatprep.subr.mxu0 0.0
    %2255 = vmatpush1.msra.mxu0 0.0
    %2256 = vmatprep.subr.mxu0 0.0
    %2257 = vmatpush1.msra.mxu0 0.0
    %2258 = vmatprep.subr.mxu0 0.0
    %2259 = vmatpush1.msra.mxu0 0.0
    %2260 = vmatprep.subr.mxu0 0.0
    %2261 = vmatpush1.msra.mxu0 0.0
    %2262 = vmatprep.subr.mxu0 0.0
    %2263 = vmatpush1.msra.mxu0 0.0
    %2264 = vmatprep.subr.mxu0 0.0
    %2265 = vmatpush1.msra.mxu0 0.0
    %2266 = vmatprep.subr.mxu0 0.0
    %2267 = vmatpush1.msra.mxu0 0.0
    %2268 = vmatprep.subr.mxu0 0.0
    %2269 = vmatpush1.msra.mxu0 0.0
    %2270 = vmatprep.subr.mxu0 0.0
    %2271 = vmatpush1.msra.mxu0 0.0
    %2272 = vmatprep.subr.mxu0 0.0
    %2273 = vmatpush1.msra.mxu0 0.0
    %2274 = vmatprep.subr.mxu0 0.0
    %2275 = vmatpush1.msra.mxu0 0.0
    %2276 = vmatprep.subr.mxu0 0.0
    %2277 = vmatpush1.msra.mxu0 0.0
    %2278 = vmatprep.subr.mxu0 0.0
    %2279 = vmatpush1.msra.mxu0 0.0
    %2280 = vmatprep.subr.mxu0 0.0
    %2281 = vmatpush1.msra.mxu0 0.0
    %2282 = vmatprep.subr.mxu0 0.0
    %2283 = vmatpush1.msra.mxu0 0.0
    %2284 = vmatprep.subr.mxu0 0.0
    %2285 = vmatpush1.msra.mxu0 0.0
    %2286 = vmatprep.subr.mxu0 0.0
    %2287 = vmatpush1.msra.mxu0 0.0
    %2288 = vmatprep.subr.mxu0 0.0
    %2289 = vmatpush1.msra.mxu0 0.0
    %2290 = vmatprep.subr.mxu0 0.0
    %2291 = vmatpush1.msra.mxu0 0.0
    %2292 = vmatprep.subr.mxu0 0.0
    %2293 = vmatpush1.msra.mxu0 0.0
    %2294 = vmatprep.subr.mxu0 0.0
    %2295 = vmatpush1.msra.mxu0 0.0
    %2296 = vmatprep.mubr.f32.mxu0 0.0
    %2297 = vmatmul.mubr.f32.gmra.mrb[0].mxu0 %v2056
    %v2298 = vpop.f32.mrb[0].mxu0
    %v2299 = vadd.f32 %v1968, %v2298
    %v2300 = vpop.f32.mrb[0].mxu0
    %v2301 = vadd.f32 %v1972, %v2300
    %2302 = vdwg.mxu0
    %2303 = vmatprep.subr.mxu0 %v2072
    %2304 = vmatpush1.msra.mxu0 %v2070
    %2305 = vmatprep.subr.mxu0 0.0
    %2306 = vmatpush1.msra.mxu0 0.0
    %2307 = vmatprep.subr.mxu0 0.0
    %2308 = vmatpush1.msra.mxu0 0.0
    %2309 = vmatprep.subr.mxu0 0.0
    %2310 = vmatpush1.msra.mxu0 0.0
    %2311 = vmatprep.subr.mxu0 0.0
    %2312 = vmatpush1.msra.mxu0 0.0
    %2313 = vmatprep.subr.mxu0 0.0
    %2314 = vmatpush1.msra.mxu0 0.0
    %2315 = vmatprep.subr.mxu0 0.0
    %2316 = vmatpush1.msra.mxu0 0.0
    %2317 = vmatprep.subr.mxu0 0.0
    %2318 = vmatpush1.msra.mxu0 0.0
    %2319 = vmatprep.subr.mxu0 0.0
    %2320 = vmatpush1.msra.mxu0 0.0
    %2321 = vmatprep.subr.mxu0 0.0
    %2322 = vmatpush1.msra.mxu0 0.0
    %2323 = vmatprep.subr.mxu0 0.0
    %2324 = vmatpush1.msra.mxu0 0.0
    %2325 = vmatprep.subr.mxu0 0.0
    %2326 = vmatpush1.msra.mxu0 0.0
    %2327 = vmatprep.subr.mxu0 0.0
    %2328 = vmatpush1.msra.mxu0 0.0
    %2329 = vmatprep.subr.mxu0 0.0
    %2330 = vmatpush1.msra.mxu0 0.0
    %2331 = vmatprep.subr.mxu0 0.0
    %2332 = vmatpush1.msra.mxu0 0.0
    %2333 = vmatprep.subr.mxu0 0.0
    %2334 = vmatpush1.msra.mxu0 0.0
    %2335 = vmatprep.subr.mxu0 0.0
    %2336 = vmatpush1.msra.mxu0 0.0
    %2337 = vmatprep.subr.mxu0 0.0
    %2338 = vmatpush1.msra.mxu0 0.0
    %2339 = vmatprep.subr.mxu0 0.0
    %2340 = vmatpush1.msra.mxu0 0.0
    %2341 = vmatprep.subr.mxu0 0.0
    %2342 = vmatpush1.msra.mxu0 0.0
    %2343 = vmatprep.subr.mxu0 0.0
    %2344 = vmatpush1.msra.mxu0 0.0
    %2345 = vmatprep.subr.mxu0 0.0
    %2346 = vmatpush1.msra.mxu0 0.0
    %2347 = vmatprep.subr.mxu0 0.0
    %2348 = vmatpush1.msra.mxu0 0.0
    %2349 = vmatprep.subr.mxu0 0.0
    %2350 = vmatpush1.msra.mxu0 0.0
    %2351 = vmatprep.subr.mxu0 0.0
    %2352 = vmatpush1.msra.mxu0 0.0
    %2353 = vmatprep.subr.mxu0 0.0
    %2354 = vmatpush1.msra.mxu0 0.0
    %2355 = vmatprep.subr.mxu0 0.0
    %2356 = vmatpush1.msra.mxu0 0.0
    %2357 = vmatprep.subr.mxu0 0.0
    %2358 = vmatpush1.msra.mxu0 0.0
    %2359 = vmatprep.subr.mxu0 0.0
    %2360 = vmatpush1.msra.mxu0 0.0
    %2361 = vmatprep.subr.mxu0 0.0
    %2362 = vmatpush1.msra.mxu0 0.0
    %2363 = vmatprep.subr.mxu0 0.0
    %2364 = vmatpush1.msra.mxu0 0.0
    %2365 = vmatprep.subr.mxu0 0.0
    %2366 = vmatpush1.msra.mxu0 0.0
    %2367 = vmatprep.mubr.f32.mxu0 0.0
    %2368 = vmatmul.mubr.f32.gmra.mrb[0].mxu0 %v2056
    %v2369 = vpop.f32.mrb[0].mxu0
    %v2370 = vadd.f32 %v1976, %v2369
    %v2371 = vpop.f32.mrb[0].mxu0
    %v2372 = vadd.f32 %v1980, %v2371
    %2373 = vdwg.mxu0
    %2374 = vmatprep.subr.mxu0 %v2076
    %2375 = vmatpush1.msra.mxu0 %v2074
    %2376 = vmatprep.subr.mxu0 0.0
    %2377 = vmatpush1.msra.mxu0 0.0
    %2378 = vmatprep.subr.mxu0 0.0
    %2379 = vmatpush1.msra.mxu0 0.0
    %2380 = vmatprep.subr.mxu0 0.0
    %2381 = vmatpush1.msra.mxu0 0.0
    %2382 = vmatprep.subr.mxu0 0.0
    %2383 = vmatpush1.msra.mxu0 0.0
    %2384 = vmatprep.subr.mxu0 0.0
    %2385 = vmatpush1.msra.mxu0 0.0
    %2386 = vmatprep.subr.mxu0 0.0
    %2387 = vmatpush1.msra.mxu0 0.0
    %2388 = vmatprep.subr.mxu0 0.0
    %2389 = vmatpush1.msra.mxu0 0.0
    %2390 = vmatprep.subr.mxu0 0.0
    %2391 = vmatpush1.msra.mxu0 0.0
    %2392 = vmatprep.subr.mxu0 0.0
    %2393 = vmatpush1.msra.mxu0 0.0
    %2394 = vmatprep.subr.mxu0 0.0
    %2395 = vmatpush1.msra.mxu0 0.0
    %2396 = vmatprep.subr.mxu0 0.0
    %2397 = vmatpush1.msra.mxu0 0.0
    %2398 = vmatprep.subr.mxu0 0.0
    %2399 = vmatpush1.msra.mxu0 0.0
    %2400 = vmatprep.subr.mxu0 0.0
    %2401 = vmatpush1.msra.mxu0 0.0
    %2402 = vmatprep.subr.mxu0 0.0
    %2403 = vmatpush1.msra.mxu0 0.0
    %2404 = vmatprep.subr.mxu0 0.0
    %2405 = vmatpush1.msra.mxu0 0.0
    %2406 = vmatprep.subr.mxu0 0.0
    %2407 = vmatpush1.msra.mxu0 0.0
    %2408 = vmatprep.subr.mxu0 0.0
    %2409 = vmatpush1.msra.mxu0 0.0
    %2410 = vmatprep.subr.mxu0 0.0
    %2411 = vmatpush1.msra.mxu0 0.0
    %2412 = vmatprep.subr.mxu0 0.0
    %2413 = vmatpush1.msra.mxu0 0.0
    %2414 = vmatprep.subr.mxu0 0.0
    %2415 = vmatpush1.msra.mxu0 0.0
    %2416 = vmatprep.subr.mxu0 0.0
    %2417 = vmatpush1.msra.mxu0 0.0
    %2418 = vmatprep.subr.mxu0 0.0
    %2419 = vmatpush1.msra.mxu0 0.0
    %2420 = vmatprep.subr.mxu0 0.0
    %2421 = vmatpush1.msra.mxu0 0.0
    %2422 = vmatprep.subr.mxu0 0.0
    %2423 = vmatpush1.msra.mxu0 0.0
    %2424 = vmatprep.subr.mxu0 0.0
    %2425 = vmatpush1.msra.mxu0 0.0
    %2426 = vmatprep.subr.mxu0 0.0
    %2427 = vmatpush1.msra.mxu0 0.0
    %2428 = vmatprep.subr.mxu0 0.0
    %2429 = vmatpush1.msra.mxu0 0.0
    %2430 = vmatprep.subr.mxu0 0.0
    %2431 = vmatpush1.msra.mxu0 0.0
    %2432 = vmatprep.subr.mxu0 0.0
    %2433 = vmatpush1.msra.mxu0 0.0
    %2434 = vmatprep.subr.mxu0 0.0
    %2435 = vmatpush1.msra.mxu0 0.0
    %2436 = vmatprep.subr.mxu0 0.0
    %2437 = vmatpush1.msra.mxu0 0.0
    %2438 = vmatprep.mubr.f32.mxu0 0.0
    %2439 = vmatmul.mubr.f32.gmra.mrb[0].mxu0 %v2056
    %v2440 = vpop.f32.mrb[0].mxu0
    %v2441 = vadd.f32 %v1984, %v2440
    %v2442 = vpop.f32.mrb[0].mxu0
    %v2443 = vadd.f32 %v1988, %v2442
    %2444 = vdwg.mxu0
    %2445 = vmatprep.subr.mxu0 %v2080
    %2446 = vmatpush1.msra.mxu0 %v2078
    %2447 = vmatprep.subr.mxu0 0.0
    %2448 = vmatpush1.msra.mxu0 0.0
    %2449 = vmatprep.subr.mxu0 0.0
    %2450 = vmatpush1.msra.mxu0 0.0
    %2451 = vmatprep.subr.mxu0 0.0
    %2452 = vmatpush1.msra.mxu0 0.0
    %2453 = vmatprep.subr.mxu0 0.0
    %2454 = vmatpush1.msra.mxu0 0.0
    %2455 = vmatprep.subr.mxu0 0.0
    %2456 = vmatpush1.msra.mxu0 0.0
    %2457 = vmatprep.subr.mxu0 0.0
    %2458 = vmatpush1.msra.mxu0 0.0
    %2459 = vmatprep.subr.mxu0 0.0
    %2460 = vmatpush1.msra.mxu0 0.0
    %2461 = vmatprep.subr.mxu0 0.0
    %2462 = vmatpush1.msra.mxu0 0.0
    %2463 = vmatprep.subr.mxu0 0.0
    %2464 = vmatpush1.msra.mxu0 0.0
    %2465 = vmatprep.subr.mxu0 0.0
    %2466 = vmatpush1.msra.mxu0 0.0
    %2467 = vmatprep.subr.mxu0 0.0
    %2468 = vmatpush1.msra.mxu0 0.0
    %2469 = vmatprep.subr.mxu0 0.0
    %2470 = vmatpush1.msra.mxu0 0.0
    %2471 = vmatprep.subr.mxu0 0.0
    %2472 = vmatpush1.msra.mxu0 0.0
    %2473 = vmatprep.subr.mxu0 0.0
    %2474 = vmatpush1.msra.mxu0 0.0
    %2475 = vmatprep.subr.mxu0 0.0
    %2476 = vmatpush1.msra.mxu0 0.0
    %2477 = vmatprep.subr.mxu0 0.0
    %2478 = vmatpush1.msra.mxu0 0.0
    %2479 = vmatprep.subr.mxu0 0.0
    %2480 = vmatpush1.msra.mxu0 0.0
    %2481 = vmatprep.subr.mxu0 0.0
    %2482 = vmatpush1.msra.mxu0 0.0
    %2483 = vmatprep.subr.mxu0 0.0
    %2484 = vmatpush1.msra.mxu0 0.0
    %2485 = vmatprep.subr.mxu0 0.0
    %2486 = vmatpush1.msra.mxu0 0.0
    %2487 = vmatprep.subr.mxu0 0.0
    %2488 = vmatpush1.msra.mxu0 0.0
    %2489 = vmatprep.subr.mxu0 0.0
    %2490 = vmatpush1.msra.mxu0 0.0
    %2491 = vmatprep.subr.mxu0 0.0
    %2492 = vmatpush1.msra.mxu0 0.0
    %2493 = vmatprep.subr.mxu0 0.0
    %2494 = vmatpush1.msra.mxu0 0.0
    %2495 = vmatprep.subr.mxu0 0.0
    %2496 = vmatpush1.msra.mxu0 0.0
    %2497 = vmatprep.subr.mxu0 0.0
    %2498 = vmatpush1.msra.mxu0 0.0
    %2499 = vmatprep.subr.mxu0 0.0
    %2500 = vmatpush1.msra.mxu0 0.0
    %2501 = vmatprep.subr.mxu0 0.0
    %2502 = vmatpush1.msra.mxu0 0.0
    %2503 = vmatprep.subr.mxu0 0.0
    %2504 = vmatpush1.msra.mxu0 0.0
    %2505 = vmatprep.subr.mxu0 0.0
    %2506 = vmatpush1.msra.mxu0 0.0
    %2507 = vmatprep.subr.mxu0 0.0
    %2508 = vmatpush1.msra.mxu0 0.0
    %2509 = vmatprep.mubr.f32.mxu0 0.0
    %2510 = vmatmul.mubr.f32.gmra.mrb[0].mxu0 %v2056
    %v2511 = vpop.f32.mrb[0].mxu0
    %v2512 = vadd.f32 %v1992, %v2511
    %v2513 = vpop.f32.mrb[0].mxu0
    %v2514 = vadd.f32 %v1996, %v2513
    %2515 = vdwg.mxu0
    %2516 = vmatprep.subr.mxu0 %v2084
    %2517 = vmatpush1.msra.mxu0 %v2082
    %2518 = vmatprep.subr.mxu0 0.0
    %2519 = vmatpush1.msra.mxu0 0.0
    %2520 = vmatprep.subr.mxu0 0.0
    %2521 = vmatpush1.msra.mxu0 0.0
    %2522 = vmatprep.subr.mxu0 0.0
    %2523 = vmatpush1.msra.mxu0 0.0
    %2524 = vmatprep.subr.mxu0 0.0
    %2525 = vmatpush1.msra.mxu0 0.0
    %2526 = vmatprep.subr.mxu0 0.0
    %2527 = vmatpush1.msra.mxu0 0.0
    %2528 = vmatprep.subr.mxu0 0.0
    %2529 = vmatpush1.msra.mxu0 0.0
    %2530 = vmatprep.subr.mxu0 0.0
    %2531 = vmatpush1.msra.mxu0 0.0
    %2532 = vmatprep.subr.mxu0 0.0
    %2533 = vmatpush1.msra.mxu0 0.0
    %2534 = vmatprep.subr.mxu0 0.0
    %2535 = vmatpush1.msra.mxu0 0.0
    %2536 = vmatprep.subr.mxu0 0.0
    %2537 = vmatpush1.msra.mxu0 0.0
    %2538 = vmatprep.subr.mxu0 0.0
    %2539 = vmatpush1.msra.mxu0 0.0
    %2540 = vmatprep.subr.mxu0 0.0
    %2541 = vmatpush1.msra.mxu0 0.0
    %2542 = vmatprep.subr.mxu0 0.0
    %2543 = vmatpush1.msra.mxu0 0.0
    %2544 = vmatprep.subr.mxu0 0.0
    %2545 = vmatpush1.msra.mxu0 0.0
    %2546 = vmatprep.subr.mxu0 0.0
    %2547 = vmatpush1.msra.mxu0 0.0
    %2548 = vmatprep.subr.mxu0 0.0
    %2549 = vmatpush1.msra.mxu0 0.0
    %2550 = vmatprep.subr.mxu0 0.0
    %2551 = vmatpush1.msra.mxu0 0.0
    %2552 = vmatprep.subr.mxu0 0.0
    %2553 = vmatpush1.msra.mxu0 0.0
    %2554 = vmatprep.subr.mxu0 0.0
    %2555 = vmatpush1.msra.mxu0 0.0
    %2556 = vmatprep.subr.mxu0 0.0
    %2557 = vmatpush1.msra.mxu0 0.0
    %2558 = vmatprep.subr.mxu0 0.0
    %2559 = vmatpush1.msra.mxu0 0.0
    %2560 = vmatprep.subr.mxu0 0.0
    %2561 = vmatpush1.msra.mxu0 0.0
    %2562 = vmatprep.subr.mxu0 0.0
    %2563 = vmatpush1.msra.mxu0 0.0
    %2564 = vmatprep.subr.mxu0 0.0
    %2565 = vmatpush1.msra.mxu0 0.0
    %2566 = vmatprep.subr.mxu0 0.0
    %2567 = vmatpush1.msra.mxu0 0.0
    %2568 = vmatprep.subr.mxu0 0.0
    %2569 = vmatpush1.msra.mxu0 0.0
    %2570 = vmatprep.subr.mxu0 0.0
    %2571 = vmatpush1.msra.mxu0 0.0
    %2572 = vmatprep.subr.mxu0 0.0
    %2573 = vmatpush1.msra.mxu0 0.0
    %2574 = vmatprep.subr.mxu0 0.0
    %2575 = vmatpush1.msra.mxu0 0.0
    %2576 = vmatprep.subr.mxu0 0.0
    %2577 = vmatpush1.msra.mxu0 0.0
    %2578 = vmatprep.subr.mxu0 0.0
    %2579 = vmatpush1.msra.mxu0 0.0
    %2580 = vmatprep.mubr.f32.mxu0 0.0
    %2581 = vmatmul.mubr.f32.gmra.mrb[0].mxu0 %v2056
    %v2582 = vpop.f32.mrb[0].mxu0
    %v2583 = vadd.f32 %v2000, %v2582
    %v2584 = vpop.f32.mrb[0].mxu0
    %v2585 = vadd.f32 %v2004, %v2584
    %2586 = vdwg.mxu0
    %2587 = vmatprep.subr.mxu0 %v2088
    %2588 = vmatpush1.msra.mxu0 %v2086
    %2589 = vmatprep.subr.mxu0 0.0
    %2590 = vmatpush1.msra.mxu0 0.0
    %2591 = vmatprep.subr.mxu0 0.0
    %2592 = vmatpush1.msra.mxu0 0.0
    %2593 = vmatprep.subr.mxu0 0.0
    %2594 = vmatpush1.msra.mxu0 0.0
    %2595 = vmatprep.subr.mxu0 0.0
    %2596 = vmatpush1.msra.mxu0 0.0
    %2597 = vmatprep.subr.mxu0 0.0
    %2598 = vmatpush1.msra.mxu0 0.0
    %2599 = vmatprep.subr.mxu0 0.0
    %2600 = vmatpush1.msra.mxu0 0.0
    %2601 = vmatprep.subr.mxu0 0.0
    %2602 = vmatpush1.msra.mxu0 0.0
    %2603 = vmatprep.subr.mxu0 0.0
    %2604 = vmatpush1.msra.mxu0 0.0
    %2605 = vmatprep.subr.mxu0 0.0
    %2606 = vmatpush1.msra.mxu0 0.0
    %2607 = vmatprep.subr.mxu0 0.0
    %2608 = vmatpush1.msra.mxu0 0.0
    %2609 = vmatprep.subr.mxu0 0.0
    %2610 = vmatpush1.msra.mxu0 0.0
    %2611 = vmatprep.subr.mxu0 0.0
    %2612 = vmatpush1.msra.mxu0 0.0
    %2613 = vmatprep.subr.mxu0 0.0
    %2614 = vmatpush1.msra.mxu0 0.0
    %2615 = vmatprep.subr.mxu0 0.0
    %2616 = vmatpush1.msra.mxu0 0.0
    %2617 = vmatprep.subr.mxu0 0.0
    %2618 = vmatpush1.msra.mxu0 0.0
    %2619 = vmatprep.subr.mxu0 0.0
    %2620 = vmatpush1.msra.mxu0 0.0
    %2621 = vmatprep.subr.mxu0 0.0
    %2622 = vmatpush1.msra.mxu0 0.0
    %2623 = vmatprep.subr.mxu0 0.0
    %2624 = vmatpush1.msra.mxu0 0.0
    %2625 = vmatprep.subr.mxu0 0.0
    %2626 = vmatpush1.msra.mxu0 0.0
    %2627 = vmatprep.subr.mxu0 0.0
    %2628 = vmatpush1.msra.mxu0 0.0
    %2629 = vmatprep.subr.mxu0 0.0
    %2630 = vmatpush1.msra.mxu0 0.0
    %2631 = vmatprep.subr.mxu0 0.0
    %2632 = vmatpush1.msra.mxu0 0.0
    %2633 = vmatprep.subr.mxu0 0.0
    %2634 = vmatpush1.msra.mxu0 0.0
    %2635 = vmatprep.subr.mxu0 0.0
    %2636 = vmatpush1.msra.mxu0 0.0
    %2637 = vmatprep.subr.mxu0 0.0
    %2638 = vmatpush1.msra.mxu0 0.0
    %2639 = vmatprep.subr.mxu0 0.0
    %2640 = vmatpush1.msra.mxu0 0.0
    %2641 = vmatprep.subr.mxu0 0.0
    %2642 = vmatpush1.msra.mxu0 0.0
    %2643 = vmatprep.subr.mxu0 0.0
    %2644 = vmatpush1.msra.mxu0 0.0
    %2645 = vmatprep.subr.mxu0 0.0
    %2646 = vmatpush1.msra.mxu0 0.0
    %2647 = vmatprep.subr.mxu0 0.0
    %2648 = vmatpush1.msra.mxu0 0.0
    %2649 = vmatprep.subr.mxu0 0.0
    %2650 = vmatpush1.msra.mxu0 0.0
    %2651 = vmatprep.mubr.f32.mxu0 0.0
    %2652 = vmatmul.mubr.f32.gmra.mrb[0].mxu0 %v2056
    %v2653 = vpop.f32.mrb[0].mxu0
    %v2654 = vadd.f32 %v2008, %v2653
    %v2655 = vpop.f32.mrb[0].mxu0
    %v2656 = vadd.f32 %v2012, %v2655
    %2657 = vdwg.mxu0
    %v2674 = vcombine.low %v2157, %v2159
    %v2675 = vcombine.low %v2228, %v2230
    %v2677 = vunpack.c.l.s4 1983009808
    %v2678 = vunpack.c.0.s8 %v2677
    %v2679 = vlaneseq
    %v2680 = vshrl.u32 %v2679, 7
    %v2681 = vsub.s32 %v2678, %v2680
    %v2682 = vrot.slane %v2674, %v2681
    %v2684 = vunpack.c.l.s4 1983009808
    %v2685 = vunpack.c.0.s8 %v2684
    %v2686 = vlaneseq
    %v2687 = vshrl.u32 %v2686, 7
    %v2688 = vsub.s32 %v2685, %v2687
    %v2689 = vrot.slane %v2675, %v2688
    %v2690 = vcombine.low %v2682, %v2689
    %v2691 = vcombine.low %v2299, %v2301
    %v2692 = vcombine.low %v2370, %v2372
    %v2694 = vunpack.c.l.s4 1983009808
    %v2695 = vunpack.c.0.s8 %v2694
    %v2696 = vlaneseq
    %v2697 = vshrl.u32 %v2696, 7
    %v2698 = vsub.s32 %v2695, %v2697
    %v2699 = vrot.slane %v2691, %v2698
    %v2701 = vunpack.c.l.s4 1983009808
    %v2702 = vunpack.c.0.s8 %v2701
    %v2703 = vlaneseq
    %v2704 = vshrl.u32 %v2703, 7
    %v2705 = vsub.s32 %v2702, %v2704
    %v2706 = vrot.slane %v2692, %v2705
    %v2707 = vcombine.low %v2699, %v2706
    %v2708 = vcombine.low %v2441, %v2443
    %v2709 = vcombine.low %v2512, %v2514
    %v2711 = vunpack.c.l.s4 1983009808
    %v2712 = vunpack.c.0.s8 %v2711
    %v2713 = vlaneseq
    %v2714 = vshrl.u32 %v2713, 7
    %v2715 = vsub.s32 %v2712, %v2714
    %v2716 = vrot.slane %v2708, %v2715
    %v2718 = vunpack.c.l.s4 1983009808
    %v2719 = vunpack.c.0.s8 %v2718
    %v2720 = vlaneseq
    %v2721 = vshrl.u32 %v2720, 7
    %v2722 = vsub.s32 %v2719, %v2721
    %v2723 = vrot.slane %v2709, %v2722
    %v2724 = vcombine.low %v2716, %v2723
    %v2725 = vcombine.low %v2583, %v2585
    %v2726 = vcombine.low %v2654, %v2656
    %v2728 = vunpack.c.l.s4 1983009808
    %v2729 = vunpack.c.0.s8 %v2728
    %v2730 = vlaneseq
    %v2731 = vshrl.u32 %v2730, 7
    %v2732 = vsub.s32 %v2729, %v2731
    %v2733 = vrot.slane %v2725, %v2732
    %v2735 = vunpack.c.l.s4 1983009808
    %v2736 = vunpack.c.0.s8 %v2735
    %v2737 = vlaneseq
    %v2738 = vshrl.u32 %v2737, 7
    %v2739 = vsub.s32 %v2736, %v2738
    %v2740 = vrot.slane %v2726, %v2739
    %v2741 = vcombine.low %v2733, %v2740
    %2746 = vst [vmem:[%s12 + $0x44] sm:$0xff] %v2690
    %2747 = vst [vmem:[%s12 + $0x4c] sm:$0xff] %v2707
    %2748 = vst [vmem:[%s12 + $0x54] sm:$0xff] %v2724
    %2749 = vst [vmem:[%s12 + $0x5c] sm:$0xff] %v2741
    %v2750 = vld [vmem:[#allocation10] sm:$0x77]
    %v2751 = vld [vmem:[#allocation10 + $0x8] sm:$0x77]
    %v2752 = vld [vmem:[#allocation10 + $0x10] sm:$0x77]
    %v2753 = vld [vmem:[#allocation10 + $0x18] sm:$0x77]
    %v2754 = vld [vmem:[#allocation10 + $0x20] sm:$0x77]
    %v2755 = vld [vmem:[#allocation10 + $0x28] sm:$0x77]
    %v2756 = vld [vmem:[#allocation10 + $0x30] sm:$0x77]
    %v2757 = vld [vmem:[#allocation10 + $0x38] sm:$0x77]
    %v2758 = vld [vmem:[#allocation12] sm:$0xff]
    %v2759 = vld [vmem:[#allocation12 + $0x8] sm:$0xff]
    %v2762 = vlaneseq
    %v2763 = vshrl.u32 %v2762, 7
    %v2764 = vsub.s32 0, %v2763
    %v2765 = vrot.slane %v2758, %v2764
    %v2766 = vlaneseq
    %v2767 = vshrl.u32 %v2766, 7
    %v2768 = vsub.s32 1, %v2767
    %v2769 = vrot.slane %v2758, %v2768
    %v2770 = vlaneseq
    %v2771 = vshrl.u32 %v2770, 7
    %v2772 = vsub.s32 2, %v2771
    %v2773 = vrot.slane %v2758, %v2772
    %v2774 = vlaneseq
    %v2775 = vshrl.u32 %v2774, 7
    %v2776 = vsub.s32 3, %v2775
    %v2777 = vrot.slane %v2758, %v2776
    %v2778 = vlaneseq
    %v2779 = vshrl.u32 %v2778, 7
    %v2780 = vsub.s32 4, %v2779
    %v2781 = vrot.slane %v2758, %v2780
    %v2782 = vlaneseq
    %v2783 = vshrl.u32 %v2782, 7
    %v2784 = vsub.s32 5, %v2783
    %v2785 = vrot.slane %v2758, %v2784
    %v2786 = vlaneseq
    %v2787 = vshrl.u32 %v2786, 7
    %v2788 = vsub.s32 6, %v2787
    %v2789 = vrot.slane %v2758, %v2788
    %v2790 = vlaneseq
    %v2791 = vshrl.u32 %v2790, 7
    %v2792 = vsub.s32 7, %v2791
    %v2793 = vrot.slane %v2758, %v2792
    %v2794 = vlaneseq
    %v2795 = vshrl.u32 %v2794, 7
    %v2796 = vsub.s32 0, %v2795
    %v2797 = vrot.slane %v2759, %v2796
    %v2798 = vlaneseq
    %v2799 = vshrl.u32 %v2798, 7
    %v2800 = vsub.s32 1, %v2799
    %v2801 = vrot.slane %v2759, %v2800
    %v2802 = vlaneseq
    %v2803 = vshrl.u32 %v2802, 7
    %v2804 = vsub.s32 2, %v2803
    %v2805 = vrot.slane %v2759, %v2804
    %v2806 = vlaneseq
    %v2807 = vshrl.u32 %v2806, 7
    %v2808 = vsub.s32 3, %v2807
    %v2809 = vrot.slane %v2759, %v2808
    %v2810 = vlaneseq
    %v2811 = vshrl.u32 %v2810, 7
    %v2812 = vsub.s32 4, %v2811
    %v2813 = vrot.slane %v2759, %v2812
    %v2814 = vlaneseq
    %v2815 = vshrl.u32 %v2814, 7
    %v2816 = vsub.s32 5, %v2815
    %v2817 = vrot.slane %v2759, %v2816
    %v2818 = vlaneseq
    %v2819 = vshrl.u32 %v2818, 7
    %v2820 = vsub.s32 6, %v2819
    %v2821 = vrot.slane %v2759, %v2820
    %v2822 = vlaneseq
    %v2823 = vshrl.u32 %v2822, 7
    %v2824 = vsub.s32 7, %v2823
    %v2825 = vrot.slane %v2759, %v2824
    %v2844 = vlaneseq
    %v2845 = vshrl.u32 %v2844, 7
    %v2846 = vsub.s32 %v415, %v2845
    %v2847 = vrot.slane %v207, %v2846
    %v2848 = vlaneseq
    %v2849 = vshrl.u32 %v2848, 7
    %v2850 = vsub.s32 %v415, %v2849
    %v2851 = vrot.slane %v208, %v2850
    %v2852 = vsel %vm424, %v2851, %v2847
    %v2861 = vcombine.high %v2750, %v2750
    %v2862 = vcombine.high %v2751, %v2751
    %v2863 = vcombine.high %v2752, %v2752
    %v2864 = vcombine.high %v2753, %v2753
    %v2865 = vcombine.high %v2754, %v2754
    %v2866 = vcombine.high %v2755, %v2755
    %v2867 = vcombine.high %v2756, %v2756
    %v2868 = vcombine.high %v2757, %v2757
    %v2869 = vsel %vm442, %v2852, 0
    %v2871 = vsel %vm155, %v2750, 0
    %v2873 = vsel %vm155, %v2861, 0
    %v2875 = vsel %vm155, %v2751, 0
    %v2877 = vsel %vm155, %v2862, 0
    %v2879 = vsel %vm155, %v2752, 0
    %v2881 = vsel %vm155, %v2863, 0
    %v2883 = vsel %vm155, %v2753, 0
    %v2885 = vsel %vm155, %v2864, 0
    %v2887 = vsel %vm155, %v2754, 0
    %v2889 = vsel %vm155, %v2865, 0
    %v2891 = vsel %vm155, %v2755, 0
    %v2893 = vsel %vm155, %v2866, 0
    %v2895 = vsel %vm155, %v2756, 0
    %v2897 = vsel %vm155, %v2867, 0
    %v2899 = vsel %vm155, %v2757, 0
    %v2901 = vsel %vm155, %v2868, 0
    %2903 = vmatprep.subr.mxu0 %v2873
    %2904 = vmatpush1.msra.mxu0 %v2871
    %2905 = vmatprep.subr.mxu0 0.0
    %2906 = vmatpush1.msra.mxu0 0.0
    %2907 = vmatprep.subr.mxu0 0.0
    %2908 = vmatpush1.msra.mxu0 0.0
    %2909 = vmatprep.subr.mxu0 0.0
    %2910 = vmatpush1.msra.mxu0 0.0
    %2911 = vmatprep.subr.mxu0 0.0
    %2912 = vmatpush1.msra.mxu0 0.0
    %2913 = vmatprep.subr.mxu0 0.0
    %2914 = vmatpush1.msra.mxu0 0.0
    %2915 = vmatprep.subr.mxu0 0.0
    %2916 = vmatpush1.msra.mxu0 0.0
    %2917 = vmatprep.subr.mxu0 0.0
    %2918 = vmatpush1.msra.mxu0 0.0
    %2919 = vmatprep.subr.mxu0 0.0
    %2920 = vmatpush1.msra.mxu0 0.0
    %2921 = vmatprep.subr.mxu0 0.0
    %2922 = vmatpush1.msra.mxu0 0.0
    %2923 = vmatprep.subr.mxu0 0.0
    %2924 = vmatpush1.msra.mxu0 0.0
    %2925 = vmatprep.subr.mxu0 0.0
    %2926 = vmatpush1.msra.mxu0 0.0
    %2927 = vmatprep.subr.mxu0 0.0
    %2928 = vmatpush1.msra.mxu0 0.0
    %2929 = vmatprep.subr.mxu0 0.0
    %2930 = vmatpush1.msra.mxu0 0.0
    %2931 = vmatprep.subr.mxu0 0.0
    %2932 = vmatpush1.msra.mxu0 0.0
    %2933 = vmatprep.subr.mxu0 0.0
    %2934 = vmatpush1.msra.mxu0 0.0
    %2935 = vmatprep.subr.mxu0 0.0
    %2936 = vmatpush1.msra.mxu0 0.0
    %2937 = vmatprep.subr.mxu0 0.0
    %2938 = vmatpush1.msra.mxu0 0.0
    %2939 = vmatprep.subr.mxu0 0.0
    %2940 = vmatpush1.msra.mxu0 0.0
    %2941 = vmatprep.subr.mxu0 0.0
    %2942 = vmatpush1.msra.mxu0 0.0
    %2943 = vmatprep.subr.mxu0 0.0
    %2944 = vmatpush1.msra.mxu0 0.0
    %2945 = vmatprep.subr.mxu0 0.0
    %2946 = vmatpush1.msra.mxu0 0.0
    %2947 = vmatprep.subr.mxu0 0.0
    %2948 = vmatpush1.msra.mxu0 0.0
    %2949 = vmatprep.subr.mxu0 0.0
    %2950 = vmatpush1.msra.mxu0 0.0
    %2951 = vmatprep.subr.mxu0 0.0
    %2952 = vmatpush1.msra.mxu0 0.0
    %2953 = vmatprep.subr.mxu0 0.0
    %2954 = vmatpush1.msra.mxu0 0.0
    %2955 = vmatprep.subr.mxu0 0.0
    %2956 = vmatpush1.msra.mxu0 0.0
    %2957 = vmatprep.subr.mxu0 0.0
    %2958 = vmatpush1.msra.mxu0 0.0
    %2959 = vmatprep.subr.mxu0 0.0
    %2960 = vmatpush1.msra.mxu0 0.0
    %2961 = vmatprep.subr.mxu0 0.0
    %2962 = vmatpush1.msra.mxu0 0.0
    %2963 = vmatprep.subr.mxu0 0.0
    %2964 = vmatpush1.msra.mxu0 0.0
    %2965 = vmatprep.subr.mxu0 0.0
    %2966 = vmatpush1.msra.mxu0 0.0
    %2967 = vmatprep.mubr.f32.mxu0 0.0
    %2968 = vmatmul.mubr.f32.gmra.mrb[0].mxu0 %v2869
    %v2969 = vpop.f32.mrb[0].mxu0
    %v2970 = vadd.f32 %v2765, %v2969
    %v2971 = vpop.f32.mrb[0].mxu0
    %v2972 = vadd.f32 %v2769, %v2971
    %2973 = vdwg.mxu0
    %2974 = vmatprep.subr.mxu0 %v2877
    %2975 = vmatpush1.msra.mxu0 %v2875
    %2976 = vmatprep.subr.mxu0 0.0
    %2977 = vmatpush1.msra.mxu0 0.0
    %2978 = vmatprep.subr.mxu0 0.0
    %2979 = vmatpush1.msra.mxu0 0.0
    %2980 = vmatprep.subr.mxu0 0.0
    %2981 = vmatpush1.msra.mxu0 0.0
    %2982 = vmatprep.subr.mxu0 0.0
    %2983 = vmatpush1.msra.mxu0 0.0
    %2984 = vmatprep.subr.mxu0 0.0
    %2985 = vmatpush1.msra.mxu0 0.0
    %2986 = vmatprep.subr.mxu0 0.0
    %2987 = vmatpush1.msra.mxu0 0.0
    %2988 = vmatprep.subr.mxu0 0.0
    %2989 = vmatpush1.msra.mxu0 0.0
    %2990 = vmatprep.subr.mxu0 0.0
    %2991 = vmatpush1.msra.mxu0 0.0
    %2992 = vmatprep.subr.mxu0 0.0
    %2993 = vmatpush1.msra.mxu0 0.0
    %2994 = vmatprep.subr.mxu0 0.0
    %2995 = vmatpush1.msra.mxu0 0.0
    %2996 = vmatprep.subr.mxu0 0.0
    %2997 = vmatpush1.msra.mxu0 0.0
    %2998 = vmatprep.subr.mxu0 0.0
    %2999 = vmatpush1.msra.mxu0 0.0
    %3000 = vmatprep.subr.mxu0 0.0
    %3001 = vmatpush1.msra.mxu0 0.0
    %3002 = vmatprep.subr.mxu0 0.0
    %3003 = vmatpush1.msra.mxu0 0.0
    %3004 = vmatprep.subr.mxu0 0.0
    %3005 = vmatpush1.msra.mxu0 0.0
    %3006 = vmatprep.subr.mxu0 0.0
    %3007 = vmatpush1.msra.mxu0 0.0
    %3008 = vmatprep.subr.mxu0 0.0
    %3009 = vmatpush1.msra.mxu0 0.0
    %3010 = vmatprep.subr.mxu0 0.0
    %3011 = vmatpush1.msra.mxu0 0.0
    %3012 = vmatprep.subr.mxu0 0.0
    %3013 = vmatpush1.msra.mxu0 0.0
    %3014 = vmatprep.subr.mxu0 0.0
    %3015 = vmatpush1.msra.mxu0 0.0
    %3016 = vmatprep.subr.mxu0 0.0
    %3017 = vmatpush1.msra.mxu0 0.0
    %3018 = vmatprep.subr.mxu0 0.0
    %3019 = vmatpush1.msra.mxu0 0.0
    %3020 = vmatprep.subr.mxu0 0.0
    %3021 = vmatpush1.msra.mxu0 0.0
    %3022 = vmatprep.subr.mxu0 0.0
    %3023 = vmatpush1.msra.mxu0 0.0
    %3024 = vmatprep.subr.mxu0 0.0
    %3025 = vmatpush1.msra.mxu0 0.0
    %3026 = vmatprep.subr.mxu0 0.0
    %3027 = vmatpush1.msra.mxu0 0.0
    %3028 = vmatprep.subr.mxu0 0.0
    %3029 = vmatpush1.msra.mxu0 0.0
    %3030 = vmatprep.subr.mxu0 0.0
    %3031 = vmatpush1.msra.mxu0 0.0
    %3032 = vmatprep.subr.mxu0 0.0
    %3033 = vmatpush1.msra.mxu0 0.0
    %3034 = vmatprep.subr.mxu0 0.0
    %3035 = vmatpush1.msra.mxu0 0.0
    %3036 = vmatprep.subr.mxu0 0.0
    %3037 = vmatpush1.msra.mxu0 0.0
    %3038 = vmatprep.mubr.f32.mxu0 0.0
    %3039 = vmatmul.mubr.f32.gmra.mrb[0].mxu0 %v2869
    %v3040 = vpop.f32.mrb[0].mxu0
    %v3041 = vadd.f32 %v2773, %v3040
    %v3042 = vpop.f32.mrb[0].mxu0
    %v3043 = vadd.f32 %v2777, %v3042
    %3044 = vdwg.mxu0
    %3045 = vmatprep.subr.mxu0 %v2881
    %3046 = vmatpush1.msra.mxu0 %v2879
    %3047 = vmatprep.subr.mxu0 0.0
    %3048 = vmatpush1.msra.mxu0 0.0
    %3049 = vmatprep.subr.mxu0 0.0
    %3050 = vmatpush1.msra.mxu0 0.0
    %3051 = vmatprep.subr.mxu0 0.0
    %3052 = vmatpush1.msra.mxu0 0.0
    %3053 = vmatprep.subr.mxu0 0.0
    %3054 = vmatpush1.msra.mxu0 0.0
    %3055 = vmatprep.subr.mxu0 0.0
    %3056 = vmatpush1.msra.mxu0 0.0
    %3057 = vmatprep.subr.mxu0 0.0
    %3058 = vmatpush1.msra.mxu0 0.0
    %3059 = vmatprep.subr.mxu0 0.0
    %3060 = vmatpush1.msra.mxu0 0.0
    %3061 = vmatprep.subr.mxu0 0.0
    %3062 = vmatpush1.msra.mxu0 0.0
    %3063 = vmatprep.subr.mxu0 0.0
    %3064 = vmatpush1.msra.mxu0 0.0
    %3065 = vmatprep.subr.mxu0 0.0
    %3066 = vmatpush1.msra.mxu0 0.0
    %3067 = vmatprep.subr.mxu0 0.0
    %3068 = vmatpush1.msra.mxu0 0.0
    %3069 = vmatprep.subr.mxu0 0.0
    %3070 = vmatpush1.msra.mxu0 0.0
    %3071 = vmatprep.subr.mxu0 0.0
    %3072 = vmatpush1.msra.mxu0 0.0
    %3073 = vmatprep.subr.mxu0 0.0
    %3074 = vmatpush1.msra.mxu0 0.0
    %3075 = vmatprep.subr.mxu0 0.0
    %3076 = vmatpush1.msra.mxu0 0.0
    %3077 = vmatprep.subr.mxu0 0.0
    %3078 = vmatpush1.msra.mxu0 0.0
    %3079 = vmatprep.subr.mxu0 0.0
    %3080 = vmatpush1.msra.mxu0 0.0
    %3081 = vmatprep.subr.mxu0 0.0
    %3082 = vmatpush1.msra.mxu0 0.0
    %3083 = vmatprep.subr.mxu0 0.0
    %3084 = vmatpush1.msra.mxu0 0.0
    %3085 = vmatprep.subr.mxu0 0.0
    %3086 = vmatpush1.msra.mxu0 0.0
    %3087 = vmatprep.subr.mxu0 0.0
    %3088 = vmatpush1.msra.mxu0 0.0
    %3089 = vmatprep.subr.mxu0 0.0
    %3090 = vmatpush1.msra.mxu0 0.0
    %3091 = vmatprep.subr.mxu0 0.0
    %3092 = vmatpush1.msra.mxu0 0.0
    %3093 = vmatprep.subr.mxu0 0.0
    %3094 = vmatpush1.msra.mxu0 0.0
    %3095 = vmatprep.subr.mxu0 0.0
    %3096 = vmatpush1.msra.mxu0 0.0
    %3097 = vmatprep.subr.mxu0 0.0
    %3098 = vmatpush1.msra.mxu0 0.0
    %3099 = vmatprep.subr.mxu0 0.0
    %3100 = vmatpush1.msra.mxu0 0.0
    %3101 = vmatprep.subr.mxu0 0.0
    %3102 = vmatpush1.msra.mxu0 0.0
    %3103 = vmatprep.subr.mxu0 0.0
    %3104 = vmatpush1.msra.mxu0 0.0
    %3105 = vmatprep.subr.mxu0 0.0
    %3106 = vmatpush1.msra.mxu0 0.0
    %3107 = vmatprep.subr.mxu0 0.0
    %3108 = vmatpush1.msra.mxu0 0.0
    %3109 = vmatprep.mubr.f32.mxu0 0.0
    %3110 = vmatmul.mubr.f32.gmra.mrb[0].mxu0 %v2869
    %v3111 = vpop.f32.mrb[0].mxu0
    %v3112 = vadd.f32 %v2781, %v3111
    %v3113 = vpop.f32.mrb[0].mxu0
    %v3114 = vadd.f32 %v2785, %v3113
    %3115 = vdwg.mxu0
    %3116 = vmatprep.subr.mxu0 %v2885
    %3117 = vmatpush1.msra.mxu0 %v2883
    %3118 = vmatprep.subr.mxu0 0.0
    %3119 = vmatpush1.msra.mxu0 0.0
    %3120 = vmatprep.subr.mxu0 0.0
    %3121 = vmatpush1.msra.mxu0 0.0
    %3122 = vmatprep.subr.mxu0 0.0
    %3123 = vmatpush1.msra.mxu0 0.0
    %3124 = vmatprep.subr.mxu0 0.0
    %3125 = vmatpush1.msra.mxu0 0.0
    %3126 = vmatprep.subr.mxu0 0.0
    %3127 = vmatpush1.msra.mxu0 0.0
    %3128 = vmatprep.subr.mxu0 0.0
    %3129 = vmatpush1.msra.mxu0 0.0
    %3130 = vmatprep.subr.mxu0 0.0
    %3131 = vmatpush1.msra.mxu0 0.0
    %3132 = vmatprep.subr.mxu0 0.0
    %3133 = vmatpush1.msra.mxu0 0.0
    %3134 = vmatprep.subr.mxu0 0.0
    %3135 = vmatpush1.msra.mxu0 0.0
    %3136 = vmatprep.subr.mxu0 0.0
    %3137 = vmatpush1.msra.mxu0 0.0
    %3138 = vmatprep.subr.mxu0 0.0
    %3139 = vmatpush1.msra.mxu0 0.0
    %3140 = vmatprep.subr.mxu0 0.0
    %3141 = vmatpush1.msra.mxu0 0.0
    %3142 = vmatprep.subr.mxu0 0.0
    %3143 = vmatpush1.msra.mxu0 0.0
    %3144 = vmatprep.subr.mxu0 0.0
    %3145 = vmatpush1.msra.mxu0 0.0
    %3146 = vmatprep.subr.mxu0 0.0
    %3147 = vmatpush1.msra.mxu0 0.0
    %3148 = vmatprep.subr.mxu0 0.0
    %3149 = vmatpush1.msra.mxu0 0.0
    %3150 = vmatprep.subr.mxu0 0.0
    %3151 = vmatpush1.msra.mxu0 0.0
    %3152 = vmatprep.subr.mxu0 0.0
    %3153 = vmatpush1.msra.mxu0 0.0
    %3154 = vmatprep.subr.mxu0 0.0
    %3155 = vmatpush1.msra.mxu0 0.0
    %3156 = vmatprep.subr.mxu0 0.0
    %3157 = vmatpush1.msra.mxu0 0.0
    %3158 = vmatprep.subr.mxu0 0.0
    %3159 = vmatpush1.msra.mxu0 0.0
    %3160 = vmatprep.subr.mxu0 0.0
    %3161 = vmatpush1.msra.mxu0 0.0
    %3162 = vmatprep.subr.mxu0 0.0
    %3163 = vmatpush1.msra.mxu0 0.0
    %3164 = vmatprep.subr.mxu0 0.0
    %3165 = vmatpush1.msra.mxu0 0.0
    %3166 = vmatprep.subr.mxu0 0.0
    %3167 = vmatpush1.msra.mxu0 0.0
    %3168 = vmatprep.subr.mxu0 0.0
    %3169 = vmatpush1.msra.mxu0 0.0
    %3170 = vmatprep.subr.mxu0 0.0
    %3171 = vmatpush1.msra.mxu0 0.0
    %3172 = vmatprep.subr.mxu0 0.0
    %3173 = vmatpush1.msra.mxu0 0.0
    %3174 = vmatprep.subr.mxu0 0.0
    %3175 = vmatpush1.msra.mxu0 0.0
    %3176 = vmatprep.subr.mxu0 0.0
    %3177 = vmatpush1.msra.mxu0 0.0
    %3178 = vmatprep.subr.mxu0 0.0
    %3179 = vmatpush1.msra.mxu0 0.0
    %3180 = vmatprep.mubr.f32.mxu0 0.0
    %3181 = vmatmul.mubr.f32.gmra.mrb[0].mxu0 %v2869
    %v3182 = vpop.f32.mrb[0].mxu0
    %v3183 = vadd.f32 %v2789, %v3182
    %v3184 = vpop.f32.mrb[0].mxu0
    %v3185 = vadd.f32 %v2793, %v3184
    %3186 = vdwg.mxu0
    %3187 = vmatprep.subr.mxu0 %v2889
    %3188 = vmatpush1.msra.mxu0 %v2887
    %3189 = vmatprep.subr.mxu0 0.0
    %3190 = vmatpush1.msra.mxu0 0.0
    %3191 = vmatprep.subr.mxu0 0.0
    %3192 = vmatpush1.msra.mxu0 0.0
    %3193 = vmatprep.subr.mxu0 0.0
    %3194 = vmatpush1.msra.mxu0 0.0
    %3195 = vmatprep.subr.mxu0 0.0
    %3196 = vmatpush1.msra.mxu0 0.0
    %3197 = vmatprep.subr.mxu0 0.0
    %3198 = vmatpush1.msra.mxu0 0.0
    %3199 = vmatprep.subr.mxu0 0.0
    %3200 = vmatpush1.msra.mxu0 0.0
    %3201 = vmatprep.subr.mxu0 0.0
    %3202 = vmatpush1.msra.mxu0 0.0
    %3203 = vmatprep.subr.mxu0 0.0
    %3204 = vmatpush1.msra.mxu0 0.0
    %3205 = vmatprep.subr.mxu0 0.0
    %3206 = vmatpush1.msra.mxu0 0.0
    %3207 = vmatprep.subr.mxu0 0.0
    %3208 = vmatpush1.msra.mxu0 0.0
    %3209 = vmatprep.subr.mxu0 0.0
    %3210 = vmatpush1.msra.mxu0 0.0
    %3211 = vmatprep.subr.mxu0 0.0
    %3212 = vmatpush1.msra.mxu0 0.0
    %3213 = vmatprep.subr.mxu0 0.0
    %3214 = vmatpush1.msra.mxu0 0.0
    %3215 = vmatprep.subr.mxu0 0.0
    %3216 = vmatpush1.msra.mxu0 0.0
    %3217 = vmatprep.subr.mxu0 0.0
    %3218 = vmatpush1.msra.mxu0 0.0
    %3219 = vmatprep.subr.mxu0 0.0
    %3220 = vmatpush1.msra.mxu0 0.0
    %3221 = vmatprep.subr.mxu0 0.0
    %3222 = vmatpush1.msra.mxu0 0.0
    %3223 = vmatprep.subr.mxu0 0.0
    %3224 = vmatpush1.msra.mxu0 0.0
    %3225 = vmatprep.subr.mxu0 0.0
    %3226 = vmatpush1.msra.mxu0 0.0
    %3227 = vmatprep.subr.mxu0 0.0
    %3228 = vmatpush1.msra.mxu0 0.0
    %3229 = vmatprep.subr.mxu0 0.0
    %3230 = vmatpush1.msra.mxu0 0.0
    %3231 = vmatprep.subr.mxu0 0.0
    %3232 = vmatpush1.msra.mxu0 0.0
    %3233 = vmatprep.subr.mxu0 0.0
    %3234 = vmatpush1.msra.mxu0 0.0
    %3235 = vmatprep.subr.mxu0 0.0
    %3236 = vmatpush1.msra.mxu0 0.0
    %3237 = vmatprep.subr.mxu0 0.0
    %3238 = vmatpush1.msra.mxu0 0.0
    %3239 = vmatprep.subr.mxu0 0.0
    %3240 = vmatpush1.msra.mxu0 0.0
    %3241 = vmatprep.subr.mxu0 0.0
    %3242 = vmatpush1.msra.mxu0 0.0
    %3243 = vmatprep.subr.mxu0 0.0
    %3244 = vmatpush1.msra.mxu0 0.0
    %3245 = vmatprep.subr.mxu0 0.0
    %3246 = vmatpush1.msra.mxu0 0.0
    %3247 = vmatprep.subr.mxu0 0.0
    %3248 = vmatpush1.msra.mxu0 0.0
    %3249 = vmatprep.subr.mxu0 0.0
    %3250 = vmatpush1.msra.mxu0 0.0
    %3251 = vmatprep.mubr.f32.mxu0 0.0
    %3252 = vmatmul.mubr.f32.gmra.mrb[0].mxu0 %v2869
    %v3253 = vpop.f32.mrb[0].mxu0
    %v3254 = vadd.f32 %v2797, %v3253
    %v3255 = vpop.f32.mrb[0].mxu0
    %v3256 = vadd.f32 %v2801, %v3255
    %3257 = vdwg.mxu0
    %3258 = vmatprep.subr.mxu0 %v2893
    %3259 = vmatpush1.msra.mxu0 %v2891
    %3260 = vmatprep.subr.mxu0 0.0
    %3261 = vmatpush1.msra.mxu0 0.0
    %3262 = vmatprep.subr.mxu0 0.0
    %3263 = vmatpush1.msra.mxu0 0.0
    %3264 = vmatprep.subr.mxu0 0.0
    %3265 = vmatpush1.msra.mxu0 0.0
    %3266 = vmatprep.subr.mxu0 0.0
    %3267 = vmatpush1.msra.mxu0 0.0
    %3268 = vmatprep.subr.mxu0 0.0
    %3269 = vmatpush1.msra.mxu0 0.0
    %3270 = vmatprep.subr.mxu0 0.0
    %3271 = vmatpush1.msra.mxu0 0.0
    %3272 = vmatprep.subr.mxu0 0.0
    %3273 = vmatpush1.msra.mxu0 0.0
    %3274 = vmatprep.subr.mxu0 0.0
    %3275 = vmatpush1.msra.mxu0 0.0
    %3276 = vmatprep.subr.mxu0 0.0
    %3277 = vmatpush1.msra.mxu0 0.0
    %3278 = vmatprep.subr.mxu0 0.0
    %3279 = vmatpush1.msra.mxu0 0.0
    %3280 = vmatprep.subr.mxu0 0.0
    %3281 = vmatpush1.msra.mxu0 0.0
    %3282 = vmatprep.subr.mxu0 0.0
    %3283 = vmatpush1.msra.mxu0 0.0
    %3284 = vmatprep.subr.mxu0 0.0
    %3285 = vmatpush1.msra.mxu0 0.0
    %3286 = vmatprep.subr.mxu0 0.0
    %3287 = vmatpush1.msra.mxu0 0.0
    %3288 = vmatprep.subr.mxu0 0.0
    %3289 = vmatpush1.msra.mxu0 0.0
    %3290 = vmatprep.subr.mxu0 0.0
    %3291 = vmatpush1.msra.mxu0 0.0
    %3292 = vmatprep.subr.mxu0 0.0
    %3293 = vmatpush1.msra.mxu0 0.0
    %3294 = vmatprep.subr.mxu0 0.0
    %3295 = vmatpush1.msra.mxu0 0.0
    %3296 = vmatprep.subr.mxu0 0.0
    %3297 = vmatpush1.msra.mxu0 0.0
    %3298 = vmatprep.subr.mxu0 0.0
    %3299 = vmatpush1.msra.mxu0 0.0
    %3300 = vmatprep.subr.mxu0 0.0
    %3301 = vmatpush1.msra.mxu0 0.0
    %3302 = vmatprep.subr.mxu0 0.0
    %3303 = vmatpush1.msra.mxu0 0.0
    %3304 = vmatprep.subr.mxu0 0.0
    %3305 = vmatpush1.msra.mxu0 0.0
    %3306 = vmatprep.subr.mxu0 0.0
    %3307 = vmatpush1.msra.mxu0 0.0
    %3308 = vmatprep.subr.mxu0 0.0
    %3309 = vmatpush1.msra.mxu0 0.0
    %3310 = vmatprep.subr.mxu0 0.0
    %3311 = vmatpush1.msra.mxu0 0.0
    %3312 = vmatprep.subr.mxu0 0.0
    %3313 = vmatpush1.msra.mxu0 0.0
    %3314 = vmatprep.subr.mxu0 0.0
    %3315 = vmatpush1.msra.mxu0 0.0
    %3316 = vmatprep.subr.mxu0 0.0
    %3317 = vmatpush1.msra.mxu0 0.0
    %3318 = vmatprep.subr.mxu0 0.0
    %3319 = vmatpush1.msra.mxu0 0.0
    %3320 = vmatprep.subr.mxu0 0.0
    %3321 = vmatpush1.msra.mxu0 0.0
    %3322 = vmatprep.mubr.f32.mxu0 0.0
    %3323 = vmatmul.mubr.f32.gmra.mrb[0].mxu0 %v2869
    %v3324 = vpop.f32.mrb[0].mxu0
    %v3325 = vadd.f32 %v2805, %v3324
    %v3326 = vpop.f32.mrb[0].mxu0
    %v3327 = vadd.f32 %v2809, %v3326
    %3328 = vdwg.mxu0
    %3329 = vmatprep.subr.mxu0 %v2897
    %3330 = vmatpush1.msra.mxu0 %v2895
    %3331 = vmatprep.subr.mxu0 0.0
    %3332 = vmatpush1.msra.mxu0 0.0
    %3333 = vmatprep.subr.mxu0 0.0
    %3334 = vmatpush1.msra.mxu0 0.0
    %3335 = vmatprep.subr.mxu0 0.0
    %3336 = vmatpush1.msra.mxu0 0.0
    %3337 = vmatprep.subr.mxu0 0.0
    %3338 = vmatpush1.msra.mxu0 0.0
    %3339 = vmatprep.subr.mxu0 0.0
    %3340 = vmatpush1.msra.mxu0 0.0
    %3341 = vmatprep.subr.mxu0 0.0
    %3342 = vmatpush1.msra.mxu0 0.0
    %3343 = vmatprep.subr.mxu0 0.0
    %3344 = vmatpush1.msra.mxu0 0.0
    %3345 = vmatprep.subr.mxu0 0.0
    %3346 = vmatpush1.msra.mxu0 0.0
    %3347 = vmatprep.subr.mxu0 0.0
    %3348 = vmatpush1.msra.mxu0 0.0
    %3349 = vmatprep.subr.mxu0 0.0
    %3350 = vmatpush1.msra.mxu0 0.0
    %3351 = vmatprep.subr.mxu0 0.0
    %3352 = vmatpush1.msra.mxu0 0.0
    %3353 = vmatprep.subr.mxu0 0.0
    %3354 = vmatpush1.msra.mxu0 0.0
    %3355 = vmatprep.subr.mxu0 0.0
    %3356 = vmatpush1.msra.mxu0 0.0
    %3357 = vmatprep.subr.mxu0 0.0
    %3358 = vmatpush1.msra.mxu0 0.0
    %3359 = vmatprep.subr.mxu0 0.0
    %3360 = vmatpush1.msra.mxu0 0.0
    %3361 = vmatprep.subr.mxu0 0.0
    %3362 = vmatpush1.msra.mxu0 0.0
    %3363 = vmatprep.subr.mxu0 0.0
    %3364 = vmatpush1.msra.mxu0 0.0
    %3365 = vmatprep.subr.mxu0 0.0
    %3366 = vmatpush1.msra.mxu0 0.0
    %3367 = vmatprep.subr.mxu0 0.0
    %3368 = vmatpush1.msra.mxu0 0.0
    %3369 = vmatprep.subr.mxu0 0.0
    %3370 = vmatpush1.msra.mxu0 0.0
    %3371 = vmatprep.subr.mxu0 0.0
    %3372 = vmatpush1.msra.mxu0 0.0
    %3373 = vmatprep.subr.mxu0 0.0
    %3374 = vmatpush1.msra.mxu0 0.0
    %3375 = vmatprep.subr.mxu0 0.0
    %3376 = vmatpush1.msra.mxu0 0.0
    %3377 = vmatprep.subr.mxu0 0.0
    %3378 = vmatpush1.msra.mxu0 0.0
    %3379 = vmatprep.subr.mxu0 0.0
    %3380 = vmatpush1.msra.mxu0 0.0
    %3381 = vmatprep.subr.mxu0 0.0
    %3382 = vmatpush1.msra.mxu0 0.0
    %3383 = vmatprep.subr.mxu0 0.0
    %3384 = vmatpush1.msra.mxu0 0.0
    %3385 = vmatprep.subr.mxu0 0.0
    %3386 = vmatpush1.msra.mxu0 0.0
    %3387 = vmatprep.subr.mxu0 0.0
    %3388 = vmatpush1.msra.mxu0 0.0
    %3389 = vmatprep.subr.mxu0 0.0
    %3390 = vmatpush1.msra.mxu0 0.0
    %3391 = vmatprep.subr.mxu0 0.0
    %3392 = vmatpush1.msra.mxu0 0.0
    %3393 = vmatprep.mubr.f32.mxu0 0.0
    %3394 = vmatmul.mubr.f32.gmra.mrb[0].mxu0 %v2869
    %v3395 = vpop.f32.mrb[0].mxu0
    %v3396 = vadd.f32 %v2813, %v3395
    %v3397 = vpop.f32.mrb[0].mxu0
    %v3398 = vadd.f32 %v2817, %v3397
    %3399 = vdwg.mxu0
    %3400 = vmatprep.subr.mxu0 %v2901
    %3401 = vmatpush1.msra.mxu0 %v2899
    %3402 = vmatprep.subr.mxu0 0.0
    %3403 = vmatpush1.msra.mxu0 0.0
    %3404 = vmatprep.subr.mxu0 0.0
    %3405 = vmatpush1.msra.mxu0 0.0
    %3406 = vmatprep.subr.mxu0 0.0
    %3407 = vmatpush1.msra.mxu0 0.0
    %3408 = vmatprep.subr.mxu0 0.0
    %3409 = vmatpush1.msra.mxu0 0.0
    %3410 = vmatprep.subr.mxu0 0.0
    %3411 = vmatpush1.msra.mxu0 0.0
    %3412 = vmatprep.subr.mxu0 0.0
    %3413 = vmatpush1.msra.mxu0 0.0
    %3414 = vmatprep.subr.mxu0 0.0
    %3415 = vmatpush1.msra.mxu0 0.0
    %3416 = vmatprep.subr.mxu0 0.0
    %3417 = vmatpush1.msra.mxu0 0.0
    %3418 = vmatprep.subr.mxu0 0.0
    %3419 = vmatpush1.msra.mxu0 0.0
    %3420 = vmatprep.subr.mxu0 0.0
    %3421 = vmatpush1.msra.mxu0 0.0
    %3422 = vmatprep.subr.mxu0 0.0
    %3423 = vmatpush1.msra.mxu0 0.0
    %3424 = vmatprep.subr.mxu0 0.0
    %3425 = vmatpush1.msra.mxu0 0.0
    %3426 = vmatprep.subr.mxu0 0.0
    %3427 = vmatpush1.msra.mxu0 0.0
    %3428 = vmatprep.subr.mxu0 0.0
    %3429 = vmatpush1.msra.mxu0 0.0
    %3430 = vmatprep.subr.mxu0 0.0
    %3431 = vmatpush1.msra.mxu0 0.0
    %3432 = vmatprep.subr.mxu0 0.0
    %3433 = vmatpush1.msra.mxu0 0.0
    %3434 = vmatprep.subr.mxu0 0.0
    %3435 = vmatpush1.msra.mxu0 0.0
    %3436 = vmatprep.subr.mxu0 0.0
    %3437 = vmatpush1.msra.mxu0 0.0
    %3438 = vmatprep.subr.mxu0 0.0
    %3439 = vmatpush1.msra.mxu0 0.0
    %3440 = vmatprep.subr.mxu0 0.0
    %3441 = vmatpush1.msra.mxu0 0.0
    %3442 = vmatprep.subr.mxu0 0.0
    %3443 = vmatpush1.msra.mxu0 0.0
    %3444 = vmatprep.subr.mxu0 0.0
    %3445 = vmatpush1.msra.mxu0 0.0
    %3446 = vmatprep.subr.mxu0 0.0
    %3447 = vmatpush1.msra.mxu0 0.0
    %3448 = vmatprep.subr.mxu0 0.0
    %3449 = vmatpush1.msra.mxu0 0.0
    %3450 = vmatprep.subr.mxu0 0.0
    %3451 = vmatpush1.msra.mxu0 0.0
    %3452 = vmatprep.subr.mxu0 0.0
    %3453 = vmatpush1.msra.mxu0 0.0
    %3454 = vmatprep.subr.mxu0 0.0
    %3455 = vmatpush1.msra.mxu0 0.0
    %3456 = vmatprep.subr.mxu0 0.0
    %3457 = vmatpush1.msra.mxu0 0.0
    %3458 = vmatprep.subr.mxu0 0.0
    %3459 = vmatpush1.msra.mxu0 0.0
    %3460 = vmatprep.subr.mxu0 0.0
    %3461 = vmatpush1.msra.mxu0 0.0
    %3462 = vmatprep.subr.mxu0 0.0
    %3463 = vmatpush1.msra.mxu0 0.0
    %3464 = vmatprep.mubr.f32.mxu0 0.0
    %3465 = vmatmul.mubr.f32.gmra.mrb[0].mxu0 %v2869
    %v3466 = vpop.f32.mrb[0].mxu0
    %v3467 = vadd.f32 %v2821, %v3466
    %v3468 = vpop.f32.mrb[0].mxu0
    %v3469 = vadd.f32 %v2825, %v3468
    %3470 = vdwg.mxu0
    %v3487 = vcombine.low %v2970, %v2972
    %v3488 = vcombine.low %v3041, %v3043
    %v3490 = vunpack.c.l.s4 1983009808
    %v3491 = vunpack.c.0.s8 %v3490
    %v3492 = vlaneseq
    %v3493 = vshrl.u32 %v3492, 7
    %v3494 = vsub.s32 %v3491, %v3493
    %v3495 = vrot.slane %v3487, %v3494
    %v3497 = vunpack.c.l.s4 1983009808
    %v3498 = vunpack.c.0.s8 %v3497
    %v3499 = vlaneseq
    %v3500 = vshrl.u32 %v3499, 7
    %v3501 = vsub.s32 %v3498, %v3500
    %v3502 = vrot.slane %v3488, %v3501
    %v3503 = vcombine.low %v3495, %v3502
    %v3504 = vcombine.low %v3112, %v3114
    %v3505 = vcombine.low %v3183, %v3185
    %v3507 = vunpack.c.l.s4 1983009808
    %v3508 = vunpack.c.0.s8 %v3507
    %v3509 = vlaneseq
    %v3510 = vshrl.u32 %v3509, 7
    %v3511 = vsub.s32 %v3508, %v3510
    %v3512 = vrot.slane %v3504, %v3511
    %v3514 = vunpack.c.l.s4 1983009808
    %v3515 = vunpack.c.0.s8 %v3514
    %v3516 = vlaneseq
    %v3517 = vshrl.u32 %v3516, 7
    %v3518 = vsub.s32 %v3515, %v3517
    %v3519 = vrot.slane %v3505, %v3518
    %v3520 = vcombine.low %v3512, %v3519
    %v3521 = vcombine.low %v3254, %v3256
    %v3522 = vcombine.low %v3325, %v3327
    %v3524 = vunpack.c.l.s4 1983009808
    %v3525 = vunpack.c.0.s8 %v3524
    %v3526 = vlaneseq
    %v3527 = vshrl.u32 %v3526, 7
    %v3528 = vsub.s32 %v3525, %v3527
    %v3529 = vrot.slane %v3521, %v3528
    %v3531 = vunpack.c.l.s4 1983009808
    %v3532 = vunpack.c.0.s8 %v3531
    %v3533 = vlaneseq
    %v3534 = vshrl.u32 %v3533, 7
    %v3535 = vsub.s32 %v3532, %v3534
    %v3536 = vrot.slane %v3522, %v3535
    %v3537 = vcombine.low %v3529, %v3536
    %v3538 = vcombine.low %v3396, %v3398
    %v3539 = vcombine.low %v3467, %v3469
    %v3541 = vunpack.c.l.s4 1983009808
    %v3542 = vunpack.c.0.s8 %v3541
    %v3543 = vlaneseq
    %v3544 = vshrl.u32 %v3543, 7
    %v3545 = vsub.s32 %v3542, %v3544
    %v3546 = vrot.slane %v3538, %v3545
    %v3548 = vunpack.c.l.s4 1983009808
    %v3549 = vunpack.c.0.s8 %v3548
    %v3550 = vlaneseq
    %v3551 = vshrl.u32 %v3550, 7
    %v3552 = vsub.s32 %v3549, %v3551
    %v3553 = vrot.slane %v3539, %v3552
    %v3554 = vcombine.low %v3546, %v3553
    %3559 = vst [vmem:[%s12 + $0x64] sm:$0xff] %v3503
    %3560 = vst [vmem:[%s12 + $0x6c] sm:$0xff] %v3520
    %3561 = vst [vmem:[%s12 + $0x74] sm:$0xff] %v3537
    %3562 = vst [vmem:[%s12 + $0x7c] sm:$0xff] %v3554
    // Predicated region
    $region86: #{person_pair_forward.2} parent=1 // pred_check
      _
    $region87: #{person_pair_forward.2} parent=1 // pred_check_branch
      %3564 = sbr.rel (0) target = $region89
    $region88: #{person_pair_forward.2} parent=1 // pred_region
      _
    $region89: #{person_pair_forward.2} parent=1 // pred_fallthru
      _
    // Predicated region
    $region90: #{person_pair_forward.2} parent=1 // pred_check
      _
    $region91: #{person_pair_forward.2} parent=1 // pred_check_branch
      %3566 = sbr.rel (0) target = $region93
    $region92: #{person_pair_forward.2} parent=1 // pred_region
      _
    $region93: #{person_pair_forward.2} parent=1 // pred_fallthru
      _
    %3567 = vsyncpa [#allocation3], 1
    %3568 = vsyncpa [#allocation5], 1
    %3569 = vsyncpa [#allocation8], 1
    %3570 = vsyncpa [#allocation11], 1
    %3571 = vsyncpa [#allocation14], 1

// kernel: person_pair_forward.3
$region0: #{person_pair_forward.3}
  #allocation0 [shape = 'u32[]', space=smem, size = 0x4, offset = 0x4, fixed_abs, tag = 'smem constant byte address 0x4 - core index']
  #allocation1 [shape = 'u32[144,128]{1,0:T(1,128)}', space=vmem, size = 0x12000, scoped, tag = 'internal scratch']
  #allocation2 [shape = 'f32[2,1024]{1,0:T(2,128)}', space=vmem, size = 0x2000, scoped, tag = 'scratch operand']
  %s0 = inlined_call_operand.vmem [shape: f32[2,8448], index: 0, kind: input, shape index: {}]
  %s1 = inlined_call_operand.hbm [shape: f32[8448,4096], index: 1, kind: input, shape index: {}]
  %s2 = inlined_call_operand.hbm [shape: f32[1,4096], index: 2, kind: input, shape index: {}]
  %s3 = inlined_call_operand.vmem [shape: f32[4096,3], index: 3, kind: input, shape index: {}]
  %s4 = inlined_call_operand.hbm [shape: f32[2,4096], index: 4, kind: output, shape index: {0}]
  %s5 = inlined_call_operand.vmem [shape: f32[4,2,3], index: 5, kind: output, shape index: {1}]
  %6 = xla_tuple %s4, %s5
  %s7 = sld [smem:[#allocation0]]
  $region73: #{person_pair_forward.3} parent=0
    _
  %s9 = ssub.s32 1, %s7
  %s10 = scalar_select 0, %s9, %s7
  $region1: #{person_pair_forward.3} parent=0
    #allocation3 [shape = 'u8[23068672]{0}', space=vmem, size = 0x1600000, scoped, tag = 'input window, operand 1']
    #allocation4 [shape = 's32[2]{0}', space=sflag, size = 0x8, scoped, tag = 'scoped memory for person_pair_forward.3']
    #allocation5 [shape = 's32[2]{0}', space=sflag, size = 0x8, scoped, tag = 'scoped memory for person_pair_forward.3']
    #allocation6 [shape = 'u8[8192]{0}', space=vmem, size = 0x2000, scoped, tag = 'input window, operand 2']
    #allocation7 [shape = 's32[2]{0}', space=sflag, size = 0x8, scoped, tag = 'scoped memory for person_pair_forward.3']
    #allocation8 [shape = 'u8[16384]{0}', space=vmem, size = 0x4000, scoped, tag = 'output window, operand 0']
    %11 = vsyncpa [#allocation4], 0
    %s12 = scalar_lea.sflag [#allocation4], 1
    %13 = vsyncpa %s12, 0
    %14 = vsyncpa [#allocation7], 0
    %s15 = scalar_lea.sflag [#allocation7], 1
    %16 = vsyncpa %s15, 0
    %17 = vsyncpa [#allocation5], 0
    %s18 = scalar_lea.sflag [#allocation5], 1
    %19 = vsyncpa %s18, 0
    loop: start=0, step=1, limit=14
    $region2: #{person_pair_forward.3} parent=1 // loop_pre_header
      _
    $region3: #{person_pair_forward.3} parent=1 // loop_header
      %s21 = sphi 0, %s25
      %p22 = scmp.ge.s32.totalorder %s21, 14
      %s28 = sphi 0, %s40
      %s29 = sphi 0, %s36
      %s30 = sphi 0, %s28
      %s31 = sphi 0, %s29
      %s32 = sphi 0, %s30
      %s33 = sphi 0, %s31
      %s41 = sphi 0, %s41
      %s43 = sphi 0, %s41
      %s44 = sphi 0, %s43
      %s58 = sphi 0, %s44
      %s66 = sphi 0, %s68
      %s69 = sphi 0, %s66
      %s70 = sphi 0, %s69
      %s86 = sphi 0, %s70
      %s92 = sphi 0, %s94
      %s95 = sphi 0, %s92
      %s96 = sphi 0, %s95
      %s112 = sphi 0, %s96
      %s118 = sphi 0, %s120
      %s121 = sphi 0, %s118
      %s122 = sphi 0, %s121
      %s138 = sphi 0, %s122
      %s144 = sphi 0, %s146
      %s147 = sphi 0, %s144
      %s148 = sphi 0, %s147
      %s164 = sphi 0, %s148
      %s170 = sphi 0, %s172
      %s173 = sphi 0, %s170
      %s174 = sphi 0, %s173
      %s190 = sphi 0, %s174
    $region4: #{person_pair_forward.3} parent=1 // loop_header_branch
      %24 = sbr.rel (%p22) target = $region8
    $region5: #{person_pair_forward.3} parent=1 // loop_body
      %s26 = ssub.s32 %s21, 1
      %s27 = ssub.s32 %s21, 2
      %s34 = sadd.s32 1, %s29
      %p35 = scmp.ge.s32.totalorder %s34, 3
      %s36 = scalar_select %p35, 0, %s34
      %s37 = sadd.s32 1, %s28
      %s38 = scalar_select %p35, %s37, %s28
      %p39 = scmp.ge.s32.totalorder %s38, 4
      %s40 = scalar_select %p39, 0, %s38
      %s42 = sadd.s32 %s41, 1
      %p45 = scmp.eq.s32.totalorder %s21, 11
      %p46 = scmp.ne.s32.totalorder %s41, %s43
      %p47 = scmp.eq.s32.totalorder %s21, 0
      %p48 = por %p46, %p47
      %p49 = scmp.ne.s32.totalorder %s41, %s43
      %p50 = scmp.eq.s32.totalorder %s26, 11
      %p51 = por %p49, %p50
      %p52 = scmp.ne.s32.totalorder %s43, %s44
      %p53 = scmp.eq.s32.totalorder %s26, 0
      %p54 = por %p52, %p53
      %p55 = scmp.ne.s32.totalorder %s43, %s44
      %p56 = scmp.eq.s32.totalorder %s27, 11
      %p57 = por %p55, %p56
      %p59 = scmp.ne.s32.totalorder %s44, %s58
      %p60 = scmp.eq.s32.totalorder %s27, 0
      %p61 = por %p59, %p60
      %s62 = ssub.s32 %s29, %s36
      %s63 = ssub.s32 %s28, %s40
      %s64 = sor.u32 %s62, %s63
      %p65 = scmp.eq.s32.totalorder %s64, 0
      %s67 = sadd.s32 %s66, 1
      %s68 = scalar_select %p65, %s66, %s67
      %p71 = pneg %p65
      %p72 = scmp.eq.s32.totalorder %s21, 11
      %p73 = por %p71, %p72
      %p74 = scmp.ne.s32.totalorder %s66, %s69
      %p75 = scmp.eq.s32.totalorder %s21, 0
      %p76 = por %p74, %p75
      %p77 = scmp.ne.s32.totalorder %s66, %s69
      %p78 = scmp.eq.s32.totalorder %s26, 11
      %p79 = por %p77, %p78
      %p80 = scmp.ne.s32.totalorder %s69, %s70
      %p81 = scmp.eq.s32.totalorder %s26, 0
      %p82 = por %p80, %p81
      %p83 = scmp.ne.s32.totalorder %s69, %s70
      %p84 = scmp.eq.s32.totalorder %s27, 11
      %p85 = por %p83, %p84
      %p87 = scmp.ne.s32.totalorder %s70, %s86
      %p88 = scmp.eq.s32.totalorder %s27, 0
      %p89 = por %p87, %p88
      %s90 = ssub.s32 %s28, %s40
      %p91 = scmp.eq.s32.totalorder %s90, 0
      %s93 = sadd.s32 %s92, 1
      %s94 = scalar_select %p91, %s92, %s93
      %p97 = pneg %p91
      %p98 = scmp.eq.s32.totalorder %s21, 11
      %p99 = por %p97, %p98
      %p100 = scmp.ne.s32.totalorder %s92, %s95
      %p101 = scmp.eq.s32.totalorder %s21, 0
      %p102 = por %p100, %p101
      %p103 = scmp.ne.s32.totalorder %s92, %s95
      %p104 = scmp.eq.s32.totalorder %s26, 11
      %p105 = por %p103, %p104
      %p106 = scmp.ne.s32.totalorder %s95, %s96
      %p107 = scmp.eq.s32.totalorder %s26, 0
      %p108 = por %p106, %p107
      %p109 = scmp.ne.s32.totalorder %s95, %s96
      %p110 = scmp.eq.s32.totalorder %s27, 11
      %p111 = por %p109, %p110
      %p113 = scmp.ne.s32.totalorder %s96, %s112
      %p114 = scmp.eq.s32.totalorder %s27, 0
      %p115 = por %p113, %p114
      %s116 = ssub.s32 %s28, %s40
      %p117 = scmp.eq.s32.totalorder %s116, 0
      %s119 = sadd.s32 %s118, 1
      %s120 = scalar_select %p117, %s118, %s119
      %p123 = pneg %p117
      %p124 = scmp.eq.s32.totalorder %s21, 11
      %p125 = por %p123, %p124
      %p126 = scmp.ne.s32.totalorder %s118, %s121
      %p127 = scmp.eq.s32.totalorder %s21, 0
      %p128 = por %p126, %p127
      %p129 = scmp.ne.s32.totalorder %s118, %s121
      %p130 = scmp.eq.s32.totalorder %s26, 11
      %p131 = por %p129, %p130
      %p132 = scmp.ne.s32.totalorder %s121, %s122
      %p133 = scmp.eq.s32.totalorder %s26, 0
      %p134 = por %p132, %p133
      %p135 = scmp.ne.s32.totalorder %s121, %s122
      %p136 = scmp.eq.s32.totalorder %s27, 11
      %p137 = por %p135, %p136
      %p139 = scmp.ne.s32.totalorder %s122, %s138
      %p140 = scmp.eq.s32.totalorder %s27, 0
      %p141 = por %p139, %p140
      %s142 = ssub.s32 %s28, %s40
      %p143 = scmp.eq.s32.totalorder %s142, 0
      %s145 = sadd.s32 %s144, 1
      %s146 = scalar_select %p143, %s144, %s145
      %p149 = pneg %p143
      %p150 = scmp.eq.s32.totalorder %s21, 11
      %p151 = por %p149, %p150
      %p152 = scmp.ne.s32.totalorder %s144, %s147
      %p153 = scmp.eq.s32.totalorder %s21, 0
      %p154 = por %p152, %p153
      %p155 = scmp.ne.s32.totalorder %s144, %s147
      %p156 = scmp.eq.s32.totalorder %s26, 11
      %p157 = por %p155, %p156
      %p158 = scmp.ne.s32.totalorder %s147, %s148
      %p159 = scmp.eq.s32.totalorder %s26, 0
      %p160 = por %p158, %p159
      %p161 = scmp.ne.s32.totalorder %s147, %s148
      %p162 = scmp.eq.s32.totalorder %s27, 11
      %p163 = por %p161, %p162
      %p165 = scmp.ne.s32.totalorder %s148, %s164
      %p166 = scmp.eq.s32.totalorder %s27, 0
      %p167 = por %p165, %p166
      %s168 = ssub.s32 %s28, %s40
      %p169 = scmp.eq.s32.totalorder %s168, 0
      %s171 = sadd.s32 %s170, 1
      %s172 = scalar_select %p169, %s170, %s171
      %p175 = pneg %p169
      %p176 = scmp.eq.s32.totalorder %s21, 11
      %p177 = por %p175, %p176
      %p178 = scmp.ne.s32.totalorder %s170, %s173
      %p179 = scmp.eq.s32.totalorder %s21, 0
      %p180 = por %p178, %p179
      %p181 = scmp.ne.s32.totalorder %s170, %s173
      %p182 = scmp.eq.s32.totalorder %s26, 11
      %p183 = por %p181, %p182
      %p184 = scmp.ne.s32.totalorder %s173, %s174
      %p185 = scmp.eq.s32.totalorder %s26, 0
      %p186 = por %p184, %p185
      %p187 = scmp.ne.s32.totalorder %s173, %s174
      %p188 = scmp.eq.s32.totalorder %s27, 11
      %p189 = por %p187, %p188
      %p191 = scmp.ne.s32.totalorder %s174, %s190
      %p192 = scmp.eq.s32.totalorder %s27, 0
      %p193 = por %p191, %p192
      %p194 = scmp.le.s32.totalorder 1, %s21
      %p195 = scmp.lt.s32.totalorder %s21, 13
      %p196 = pnand %p194, %p195
      %p197 = pneg %p196
      // Predicated region
      $region9: #{person_pair_forward.3} parent=5 // pred_check
        _
      $region10: #{person_pair_forward.3} parent=5 // pred_check_branch
        %199 = sbr.rel (%p196) target = $region12
      $region11: #{person_pair_forward.3} parent=5 // pred_region
        %s200 = ssub.s32 %s21, 1
        // Predicated region
        $region13: #{person_pair_forward.3} parent=11 // pred_check
          %p201 = pneg %p54
        $region14: #{person_pair_forward.3} parent=11 // pred_check_branch
          %203 = sbr.rel (%p201) target = $region16
        $region15: #{person_pair_forward.3} parent=11 // pred_region
          _
        $region16: #{person_pair_forward.3} parent=11 // pred_fallthru
          _
      $region12: #{person_pair_forward.3} parent=5 // pred_fallthru
        _
      %p204 = scmp.lt.s32.totalorder %s21, 12
      // Predicated region
      $region17: #{person_pair_forward.3} parent=5 // pred_check
        %p205 = pneg %p204
      $region18: #{person_pair_forward.3} parent=5 // pred_check_branch
        %207 = sbr.rel (%p205) target = $region20
      $region19: #{person_pair_forward.3} parent=5 // pred_region
        // Predicated region
        $region21: #{person_pair_forward.3} parent=19 // pred_check
          %p208 = pneg %p76
        $region22: #{person_pair_forward.3} parent=19 // pred_check_branch
          %210 = sbr.rel (%p208) target = $region24
        $region23: #{person_pair_forward.3} parent=19 // pred_region
          %s211 = sand.u32 %s66, 1
          %s212 = scalar_lea.sflag [#allocation4], %s211
          %s213 = sand.u32 %s66, 1
          %s214 = smul.addr %s213, 22528
          %s215 = scalar_lea.vmem [#allocation3], %s214
          %s216 = smul.u32 352, %s29
          %s217 = smul.u32 8, %s28
          %s219 = ssub.s32 360448, 360448
          %220 = vsyncadd %s212, %s219
          %s221 = smul.addr %s216, 32
          %s222 = sadd.s32 %s217, %s221
          %s223 = smul.addr %s222, 128
          %s224 = scalar_lea.hbm %s1, %s223
          %s225 = sshll.u32 %s215, 4
          %s226 = int_to_ptr.vmem [resolvable:$true] %s225
          %231 = dma.hbm_to_vmem [thread:$0]  %s224, 360448, %s226, %s212, 4096, 1024, 64
        $region24: #{person_pair_forward.3} parent=19 // pred_fallthru
          _
        // Predicated region
        $region25: #{person_pair_forward.3} parent=19 // pred_check
          %p232 = pneg %p102
        $region26: #{person_pair_forward.3} parent=19 // pred_check_branch
          %234 = sbr.rel (%p232) target = $region28
        $region27: #{person_pair_forward.3} parent=19 // pred_region
          %s235 = sand.u32 %s92, 1
          %s236 = scalar_lea.sflag [#allocation7], %s235
          %s237 = sand.u32 %s92, 1
          %s238 = smul.addr %s237, 8
          %s239 = scalar_lea.vmem [#allocation6], %s238
          %s240 = smul.u32 8, %s28
          %s242 = ssub.s32 128, 128
          %243 = vsyncadd %s236, %s242
          %s244 = smul.addr %s240, 16
          %s245 = scalar_lea.hbm %s2, %s244
          %s247 = sshll.u32 %s239, 4
          %s248 = int_to_ptr.vmem [resolvable:$true] %s247
          %250 = dma.hbm_to_vmem [thread:$0]  %s245, 128, %s248, %s236
        $region28: #{person_pair_forward.3} parent=19 // pred_fallthru
          _
        // Predicated region
        $region29: #{person_pair_forward.3} parent=19 // pred_check
          %p251 = pneg %p128
        $region30: #{person_pair_forward.3} parent=19 // pred_check_branch
          %253 = sbr.rel (%p251) target = $region32
        $region31: #{person_pair_forward.3} parent=19 // pred_region
          %s254 = smul.u32 128, %s28
          %p255 = scmp.lt.s32.totalorder %s254, 511
          %s256 = scalar_select %p255, %s254, 511
          %s257 = smul.addr %s256, 8
          %s258 = scalar_lea.vmem %s3, %s257
          %s259 = smul.u32 128, %s28
        $region32: #{person_pair_forward.3} parent=19 // pred_fallthru
          _
      $region20: #{person_pair_forward.3} parent=5 // pred_fallthru
        _
      %p260 = scmp.le.s32.totalorder 1, %s21
      %p261 = scmp.lt.s32.totalorder %s21, 13
      %p262 = pnand %p260, %p261
      %p263 = pneg %p262
      // Predicated region
      $region33: #{person_pair_forward.3} parent=5 // pred_check
        _
      $region34: #{person_pair_forward.3} parent=5 // pred_check_branch
        %265 = sbr.rel (%p262) target = $region36
      $region35: #{person_pair_forward.3} parent=5 // pred_region
        %s266 = ssub.s32 %s21, 1
        %s267 = sand.u32 %s69, 1
        %s268 = scalar_lea.sflag [#allocation4], %s267
        %s269 = sand.u32 %s69, 1
        %s270 = smul.addr %s269, 22528
        %s271 = scalar_lea.vmem [#allocation3], %s270
        // Predicated region
        $region37: #{person_pair_forward.3} parent=35 // pred_check
          %p272 = pneg %p82
        $region38: #{person_pair_forward.3} parent=35 // pred_check_branch
          %274 = sbr.rel (%p272) target = $region40
        $region39: #{person_pair_forward.3} parent=35 // pred_region
          %275 = dma.done %s268, 360448
        $region40: #{person_pair_forward.3} parent=35 // pred_fallthru
          _
        %s276 = sand.u32 %s95, 1
        %s277 = scalar_lea.sflag [#allocation7], %s276
        %s278 = sand.u32 %s95, 1
        %s279 = smul.addr %s278, 8
        %s280 = scalar_lea.vmem [#allocation6], %s279
        // Predicated region
        $region41: #{person_pair_forward.3} parent=35 // pred_check
          %p281 = pneg %p108
        $region42: #{person_pair_forward.3} parent=35 // pred_check_branch
          %283 = sbr.rel (%p281) target = $region44
        $region43: #{person_pair_forward.3} parent=35 // pred_region
          %284 = dma.done %s277, 128
        $region44: #{person_pair_forward.3} parent=35 // pred_fallthru
          _
        %p285 = pneg %p54
        %p286 = pneg %p51
        %s287 = sand.u32 %s69, 1
        %s288 = scalar_lea.sflag [#allocation4], %s287
        %s289 = sand.u32 %s69, 1
        %s290 = smul.addr %s289, 22528
        %s291 = scalar_lea.vmem [#allocation3], %s290
        %p292 = pneg %p82
        %p293 = pneg %p79
        %s294 = sand.u32 %s95, 1
        %s295 = scalar_lea.sflag [#allocation7], %s294
        %s296 = sand.u32 %s95, 1
        %s297 = smul.addr %s296, 8
        %s298 = scalar_lea.vmem [#allocation6], %s297
        %p299 = pneg %p108
        %p300 = pneg %p105
        %s301 = smul.u32 128, %s30
        %p302 = scmp.lt.s32.totalorder %s301, 511
        %s303 = scalar_select %p302, %s301, 511
        %s304 = smul.addr %s303, 8
        %s305 = scalar_lea.vmem %s3, %s304
        %p306 = pneg %p134
        %p307 = pneg %p131
        %p308 = pneg %p160
        %p309 = pneg %p157
        %s310 = sand.u32 %s147, 1
        %s311 = scalar_lea.sflag [#allocation5], %s310
        %s312 = sand.u32 %s147, 1
        %s313 = smul.addr %s312, 16
        %s314 = scalar_lea.vmem [#allocation8], %s313
        %p315 = pneg %p186
        %p316 = pneg %p183
        %p317 = scmp.lt.s32.totalorder %s30, 3
        %s318 = scalar_select %p317, %s30, 3
        %s319 = smul.addr %s318, 2
        %s320 = scalar_lea.vmem %s5, %s319
        %s321 = smul.u32 352, %s31
        %s322 = smul.u32 8, %s30
        %s323 = smul.u32 8, %s30
        %s324 = smul.u32 128, %s30
        %p325 = scmp.lt.s32.totalorder %s324, 511
        %s326 = scalar_select %p325, %s324, 511
        %s327 = smul.addr %s326, 8
        %s328 = scalar_lea.vmem %s3, %s327
        %s329 = smul.u32 128, %s30
        %s330 = smul.u32 8, %s30
        %p331 = scmp.lt.s32.totalorder %s30, 3
        %s332 = scalar_select %p331, %s30, 3
        %s333 = smul.addr %s332, 2
        %s334 = scalar_lea.vmem %s5, %s333
        %p335 = scmp.eq.s32.totalorder %s31, 0
        // Predicated region
        $region45: #{person_pair_forward.3} parent=35 // pred_check
          %p336 = pneg %p335
        $region46: #{person_pair_forward.3} parent=35 // pred_check_branch
          %338 = sbr.rel (%p336) target = $region48
        $region47: #{person_pair_forward.3} parent=35 // pred_region
          %339 = vst [vmem:[#allocation2] sm:$0xff] 0.0
          %340 = vst [vmem:[#allocation2 + $0x8] sm:$0xff] 0.0
        $region48: #{person_pair_forward.3} parent=35 // pred_fallthru
          _
        %s341 = smul.u32 %s31, 2816
        %v342 = vld [vmem:[#allocation2] sm:$0xff]
        %v343 = vld [vmem:[#allocation2 + $0x8] sm:$0xff]
        %s344 = sshra.s32 %s341, 7
        %s345 = sand.u32 %s341, 127
        %s346 = smul.addr %s344, 2
        %s347 = scalar_lea.vmem %s0, %s346
        %v348 = vld [vmem:[%s347] sm:$0xff]
        %v349 = vld [vmem:[%s347 + $0x8] sm:$0xff]
        %v350 = vld [vmem:[%s347 + $0x10] sm:$0xff]
        %v351 = vld [vmem:[%s347 + $0x18] sm:$0xff]
        %v352 = vld [vmem:[%s347 + $0x20] sm:$0xff]
        %v353 = vld [vmem:[%s347 + $0x28] sm:$0xf]
        %v354 = vld [vmem:[%s271] sm:$0xff]
        %v355 = vld [vmem:[%s271 + $0x8] sm:$0xff]
        %v356 = vld [vmem:[%s271 + $0x10] sm:$0xff]
        %v357 = vld [vmem:[%s271 + $0x18] sm:$0xff]
        %v358 = vld [vmem:[%s271 + $0x20] sm:$0xff]
        %v359 = vld [vmem:[%s271 + $0x28] sm:$0xff]
        %v360 = vld [vmem:[%s271 + $0x30] sm:$0xff]
        %v361 = vld [vmem:[%s271 + $0x38] sm:$0xff]
        %v362 = vld [vmem:[%s271 + $0x40] sm:$0xff]
        %v363 = vld [vmem:[%s271 + $0x48] sm:$0xff]
        %v364 = vld [vmem:[%s271 + $0x50] sm:$0xff]
        %v365 = vld [vmem:[%s271 + $0x58] sm:$0xff]
        %v366 = vld [vmem:[%s271 + $0x60] sm:$0xff]
        %v367 = vld [vmem:[%s271 + $0x68] sm:$0xff]
        %v368 = vld [vmem:[%s271 + $0x70] sm:$0xff]
        %v369 = vld [vmem:[%s271 + $0x78] sm:$0xff]
        %v370 = vld [vmem:[%s271 + $0x80] sm:$0xff]
        %v371 = vld [vmem:[%s271 + $0x88] sm:$0xff]
        %v372 = vld [vmem:[%s271 + $0x90] sm:$0xff]
        %v373 = vld [vmem:[%s271 + $0x98] sm:$0xff]
        %v374 = vld [vmem:[%s271 + $0xa0] sm:$0xff]
        %v375 = vld [vmem:[%s271 + $0xa8] sm:$0xff]
        %v376 = vld [vmem:[%s271 + $0xb0] sm:$0xff]
        %v377 = vld [vmem:[%s271 + $0xb8] sm:$0xff]
        %v378 = vld [vmem:[%s271 + $0xc0] sm:$0xff]
        %v379 = vld [vmem:[%s271 + $0xc8] sm:$0xff]
        %v380 = vld [vmem:[%s271 + $0xd0] sm:$0xff]
        %v381 = vld [vmem:[%s271 + $0xd8] sm:$0xff]
        %v382 = vld [vmem:[%s271 + $0xe0] sm:$0xff]
        %v383 = vld [vmem:[%s271 + $0xe8] sm:$0xff]
        %v384 = vld [vmem:[%s271 + $0xf0] sm:$0xff]
        %v385 = vld [vmem:[%s271 + $0xf8] sm:$0xff]
        %v386 = vld [vmem:[%s271 + $0x100] sm:$0xff]
        %v387 = vld [vmem:[%s271 + $0x108] sm:$0xff]
        %v388 = vld [vmem:[%s271 + $0x110] sm:$0xff]
        %v389 = vld [vmem:[%s271 + $0x118] sm:$0xff]
        %v390 = vld [vmem:[%s271 + $0x120] sm:$0xff]
        %v391 = vld [vmem:[%s271 + $0x128] sm:$0xff]
        %v392 = vld [vmem:[%s271 + $0x130] sm:$0xff]
        %v393 = vld [vmem:[%s271 + $0x138] sm:$0xff]
        %v394 = vld [vmem:[%s271 + $0x140] sm:$0xff]
        %v395 = vld [vmem:[%s271 + $0x148] sm:$0xff]
        %v396 = vld [vmem:[%s271 + $0x150] sm:$0xff]
        %v397 = vld [vmem:[%s271 + $0x158] sm:$0xff]
        %v398 = vld [vmem:[%s271 + $0x160] sm:$0xff]
        %v399 = vld [vmem:[%s271 + $0x168] sm:$0xff]
        %v400 = vld [vmem:[%s271 + $0x170] sm:$0xff]
        %v401 = vld [vmem:[%s271 + $0x178] sm:$0xff]
        %v402 = vld [vmem:[%s271 + $0x180] sm:$0xff]
        %v403 = vld [vmem:[%s271 + $0x188] sm:$0xff]
        %v404 = vld [vmem:[%s271 + $0x190] sm:$0xff]
        %v405 = vld [vmem:[%s271 + $0x198] sm:$0xff]
        %v406 = vld [vmem:[%s271 + $0x1a0] sm:$0xff]
        %v407 = vld [vmem:[%s271 + $0x1a8] sm:$0xff]
        %v408 = vld [vmem:[%s271 + $0x1b0] sm:$0xff]
        %v409 = vld [vmem:[%s271 + $0x1b8] sm:$0xff]
        %v410 = vld [vmem:[%s271 + $0x1c0] sm:$0xff]
        %v411 = vld [vmem:[%s271 + $0x1c8] sm:$0xff]
        %v412 = vld [vmem:[%s271 + $0x1d0] sm:$0xff]
        %v413 = vld [vmem:[%s271 + $0x1d8] sm:$0xff]
        %v414 = vld [vmem:[%s271 + $0x1e0] sm:$0xff]
        %v415 = vld [vmem:[%s271 + $0x1e8] sm:$0xff]
        %v416 = vld [vmem:[%s271 + $0x1f0] sm:$0xff]
        %v417 = vld [vmem:[%s271 + $0x1f8] sm:$0xff]
        %v418 = vld [vmem:[%s271 + $0x200] sm:$0xff]
        %v419 = vld [vmem:[%s271 + $0x208] sm:$0xff]
        %v420 = vld [vmem:[%s271 + $0x210] sm:$0xff]
        %v421 = vld [vmem:[%s271 + $0x218] sm:$0xff]
        %v422 = vld [vmem:[%s271 + $0x220] sm:$0xff]
        %v423 = vld [vmem:[%s271 + $0x228] sm:$0xff]
        %v424 = vld [vmem:[%s271 + $0x230] sm:$0xff]
        %v425 = vld [vmem:[%s271 + $0x238] sm:$0xff]
        %v426 = vld [vmem:[%s271 + $0x240] sm:$0xff]
        %v427 = vld [vmem:[%s271 + $0x248] sm:$0xff]
        %v428 = vld [vmem:[%s271 + $0x250] sm:$0xff]
        %v429 = vld [vmem:[%s271 + $0x258] sm:$0xff]
        %v430 = vld [vmem:[%s271 + $0x260] sm:$0xff]
        %v431 = vld [vmem:[%s271 + $0x268] sm:$0xff]
        %v432 = vld [vmem:[%s271 + $0x270] sm:$0xff]
        %v433 = vld [vmem:[%s271 + $0x278] sm:$0xff]
        %v434 = vld [vmem:[%s271 + $0x280] sm:$0xff]
        %v435 = vld [vmem:[%s271 + $0x288] sm:$0xff]
        %v436 = vld [vmem:[%s271 + $0x290] sm:$0xff]
        %v437 = vld [vmem:[%s271 + $0x298] sm:$0xff]
        %v438 = vld [vmem:[%s271 + $0x2a0] sm:$0xff]
        %v439 = vld [vmem:[%s271 + $0x2a8] sm:$0xff]
        %v440 = vld [vmem:[%s271 + $0x2b0] sm:$0xff]
        %v441 = vld [vmem:[%s271 + $0x2b8] sm:$0xff]
        %v442 = vld [vmem:[%s271 + $0x2c0] sm:$0xff]
        %v443 = vld [vmem:[%s271 + $0x2c8] sm:$0xff]
        %v444 = vld [vmem:[%s271 + $0x2d0] sm:$0xff]
        %v445 = vld [vmem:[%s271 + $0x2d8] sm:$0xff]
        %v446 = vld [vmem:[%s271 + $0x2e0] sm:$0xff]
        %v447 = vld [vmem:[%s271 + $0x2e8] sm:$0xff]
        %v448 = vld [vmem:[%s271 + $0x2f0] sm:$0xff]
        %v449 = vld [vmem:[%s271 + $0x2f8] sm:$0xff]
        %v450 = vld [vmem:[%s271 + $0x300] sm:$0xff]
        %v451 = vld [vmem:[%s271 + $0x308] sm:$0xff]
        %v452 = vld [vmem:[%s271 + $0x310] sm:$0xff]
        %v453 = vld [vmem:[%s271 + $0x318] sm:$0xff]
        %v454 = vld [vmem:[%s271 + $0x320] sm:$0xff]
        %v455 = vld [vmem:[%s271 + $0x328] sm:$0xff]
        %v456 = vld [vmem:[%s271 + $0x330] sm:$0xff]
        %v457 = vld [vmem:[%s271 + $0x338] sm:$0xff]
        %v458 = vld [vmem:[%s271 + $0x340] sm:$0xff]
        %v459 = vld [vmem:[%s271 + $0x348] sm:$0xff]
        %v460 = vld [vmem:[%s271 + $0x350] sm:$0xff]
        %v461 = vld [vmem:[%s271 + $0x358] sm:$0xff]
        %v462 = vld [vmem:[%s271 + $0x360] sm:$0xff]
        %v463 = vld [vmem:[%s271 + $0x368] sm:$0xff]
        %v464 = vld [vmem:[%s271 + $0x370] sm:$0xff]
        %v465 = vld [vmem:[%s271 + $0x378] sm:$0xff]
        %v466 = vld [vmem:[%s271 + $0x380] sm:$0xff]
        %v467 = vld [vmem:[%s271 + $0x388] sm:$0xff]
        %v468 = vld [vmem:[%s271 + $0x390] sm:$0xff]
        %v469 = vld [vmem:[%s271 + $0x398] sm:$0xff]
        %v470 = vld [vmem:[%s271 + $0x3a0] sm:$0xff]
        %v471 = vld [vmem:[%s271 + $0x3a8] sm:$0xff]
        %v472 = vld [vmem:[%s271 + $0x3b0] sm:$0xff]
        %v473 = vld [vmem:[%s271 + $0x3b8] sm:$0xff]
        %v474 = vld [vmem:[%s271 + $0x3c0] sm:$0xff]
        %v475 = vld [vmem:[%s271 + $0x3c8] sm:$0xff]
        %v476 = vld [vmem:[%s271 + $0x3d0] sm:$0xff]
        %v477 = vld [vmem:[%s271 + $0x3d8] sm:$0xff]
        %v478 = vld [vmem:[%s271 + $0x3e0] sm:$0xff]
        %v479 = vld [vmem:[%s271 + $0x3e8] sm:$0xff]
        %v480 = vld [vmem:[%s271 + $0x3f0] sm:$0xff]
        %v481 = vld [vmem:[%s271 + $0x3f8] sm:$0xff]
        %v482 = vld [vmem:[%s271 + $0x400] sm:$0xff]
        %v483 = vld [vmem:[%s271 + $0x408] sm:$0xff]
        %v484 = vld [vmem:[%s271 + $0x410] sm:$0xff]
        %v485 = vld [vmem:[%s271 + $0x418] sm:$0xff]
        %v486 = vld [vmem:[%s271 + $0x420] sm:$0xff]
        %v487 = vld [vmem:[%s271 + $0x428] sm:$0xff]
        %v488 = vld [vmem:[%s271 + $0x430] sm:$0xff]
        %v489 = vld [vmem:[%s271 + $0x438] sm:$0xff]
        %v490 = vld [vmem:[%s271 + $0x440] sm:$0xff]
        %v491 = vld [vmem:[%s271 + $0x448] sm:$0xff]
        %v492 = vld [vmem:[%s271 + $0x450] sm:$0xff]
        %v493 = vld [vmem:[%s271 + $0x458] sm:$0xff]
        %v494 = vld [vmem:[%s271 + $0x460] sm:$0xff]
        %v495 = vld [vmem:[%s271 + $0x468] sm:$0xff]
        %v496 = vld [vmem:[%s271 + $0x470] sm:$0xff]
        %v497 = vld [vmem:[%s271 + $0x478] sm:$0xff]
        %v498 = vld [vmem:[%s271 + $0x480] sm:$0xff]
        %v499 = vld [vmem:[%s271 + $0x488] sm:$0xff]
        %v500 = vld [vmem:[%s271 + $0x490] sm:$0xff]
        %v501 = vld [vmem:[%s271 + $0x498] sm:$0xff]
        %v502 = vld [vmem:[%s271 + $0x4a0] sm:$0xff]
        %v503 = vld [vmem:[%s271 + $0x4a8] sm:$0xff]
        %v504 = vld [vmem:[%s271 + $0x4b0] sm:$0xff]
        %v505 = vld [vmem:[%s271 + $0x4b8] sm:$0xff]
        %v506 = vld [vmem:[%s271 + $0x4c0] sm:$0xff]
        %v507 = vld [vmem:[%s271 + $0x4c8] sm:$0xff]
        %v508 = vld [vmem:[%s271 + $0x4d0] sm:$0xff]
        %v509 = vld [vmem:[%s271 + $0x4d8] sm:$0xff]
        %v510 = vld [vmem:[%s271 + $0x4e0] sm:$0xff]
        %v511 = vld [vmem:[%s271 + $0x4e8] sm:$0xff]
        %v512 = vld [vmem:[%s271 + $0x4f0] sm:$0xff]
        %v513 = vld [vmem:[%s271 + $0x4f8] sm:$0xff]
        %v514 = vld [vmem:[%s271 + $0x500] sm:$0xff]
        %v515 = vld [vmem:[%s271 + $0x508] sm:$0xff]
        %v516 = vld [vmem:[%s271 + $0x510] sm:$0xff]
        %v517 = vld [vmem:[%s271 + $0x518] sm:$0xff]
        %v518 = vld [vmem:[%s271 + $0x520] sm:$0xff]
        %v519 = vld [vmem:[%s271 + $0x528] sm:$0xff]
        %v520 = vld [vmem:[%s271 + $0x530] sm:$0xff]
        %v521 = vld [vmem:[%s271 + $0x538] sm:$0xff]
        %v522 = vld [vmem:[%s271 + $0x540] sm:$0xff]
        %v523 = vld [vmem:[%s271 + $0x548] sm:$0xff]
        %v524 = vld [vmem:[%s271 + $0x550] sm:$0xff]
        %v525 = vld [vmem:[%s271 + $0x558] sm:$0xff]
        %v526 = vld [vmem:[%s271 + $0x560] sm:$0xff]
        %v527 = vld [vmem:[%s271 + $0x568] sm:$0xff]
        %v528 = vld [vmem:[%s271 + $0x570] sm:$0xff]
        %v529 = vld [vmem:[%s271 + $0x578] sm:$0xff]
        %v530 = vld [vmem:[%s271 + $0x580] sm:$0xff]
        %v531 = vld [vmem:[%s271 + $0x588] sm:$0xff]
        %v532 = vld [vmem:[%s271 + $0x590] sm:$0xff]
        %v533 = vld [vmem:[%s271 + $0x598] sm:$0xff]
        %v534 = vld [vmem:[%s271 + $0x5a0] sm:$0xff]
        %v535 = vld [vmem:[%s271 + $0x5a8] sm:$0xff]
        %v536 = vld [vmem:[%s271 + $0x5b0] sm:$0xff]
        %v537 = vld [vmem:[%s271 + $0x5b8] sm:$0xff]
        %v538 = vld [vmem:[%s271 + $0x5c0] sm:$0xff]
        %v539 = vld [vmem:[%s271 + $0x5c8] sm:$0xff]
        %v540 = vld [vmem:[%s271 + $0x5d0] sm:$0xff]
        %v541 = vld [vmem:[%s271 + $0x5d8] sm:$0xff]
        %v542 = vld [vmem:[%s271 + $0x5e0] sm:$0xff]
        %v543 = vld [vmem:[%s271 + $0x5e8] sm:$0xff]
        %v544 = vld [vmem:[%s271 + $0x5f0] sm:$0xff]
        %v545 = vld [vmem:[%s271 + $0x5f8] sm:$0xff]
        %v546 = vld [vmem:[%s271 + $0x600] sm:$0xff]
        %v547 = vld [vmem:[%s271 + $0x608] sm:$0xff]
        %v548 = vld [vmem:[%s271 + $0x610] sm:$0xff]
        %v549 = vld [vmem:[%s271 + $0x618] sm:$0xff]
        %v550 = vld [vmem:[%s271 + $0x620] sm:$0xff]
        %v551 = vld [vmem:[%s271 + $0x628] sm:$0xff]
        %v552 = vld [vmem:[%s271 + $0x630] sm:$0xff]
        %v553 = vld [vmem:[%s271 + $0x638] sm:$0xff]
        %v554 = vld [vmem:[%s271 + $0x640] sm:$0xff]
        %v555 = vld [vmem:[%s271 + $0x648] sm:$0xff]
        %v556 = vld [vmem:[%s271 + $0x650] sm:$0xff]
        %v557 = vld [vmem:[%s271 + $0x658] sm:$0xff]
        %v558 = vld [vmem:[%s271 + $0x660] sm:$0xff]
        %v559 = vld [vmem:[%s271 + $0x668] sm:$0xff]
        %v560 = vld [vmem:[%s271 + $0x670] sm:$0xff]
        %v561 = vld [vmem:[%s271 + $0x678] sm:$0xff]
        %v562 = vld [vmem:[%s271 + $0x680] sm:$0xff]
        %v563 = vld [vmem:[%s271 + $0x688] sm:$0xff]
        %v564 = vld [vmem:[%s271 + $0x690] sm:$0xff]
        %v565 = vld [vmem:[%s271 + $0x698] sm:$0xff]
        %v566 = vld [vmem:[%s271 + $0x6a0] sm:$0xff]
        %v567 = vld [vmem:[%s271 + $0x6a8] sm:$0xff]
        %v568 = vld [vmem:[%s271 + $0x6b0] sm:$0xff]
        %v569 = vld [vmem:[%s271 + $0x6b8] sm:$0xff]
        %v570 = vld [vmem:[%s271 + $0x6c0] sm:$0xff]
        %v571 = vld [vmem:[%s271 + $0x6c8] sm:$0xff]
        %v572 = vld [vmem:[%s271 + $0x6d0] sm:$0xff]
        %v573 = vld [vmem:[%s271 + $0x6d8] sm:$0xff]
        %v574 = vld [vmem:[%s271 + $0x6e0] sm:$0xff]
        %v575 = vld [vmem:[%s271 + $0x6e8] sm:$0xff]
        %v576 = vld [vmem:[%s271 + $0x6f0] sm:$0xff]
        %v577 = vld [vmem:[%s271 + $0x6f8] sm:$0xff]
        %v578 = vld [vmem:[%s271 + $0x700] sm:$0xff]
        %v579 = vld [vmem:[%s271 + $0x708] sm:$0xff]
        %v580 = vld [vmem:[%s271 + $0x710] sm:$0xff]
        %v581 = vld [vmem:[%s271 + $0x718] sm:$0xff]
        %v582 = vld [vmem:[%s271 + $0x720] sm:$0xff]
        %v583 = vld [vmem:[%s271 + $0x728] sm:$0xff]
        %v584 = vld [vmem:[%s271 + $0x730] sm:$0xff]
        %v585 = vld [vmem:[%s271 + $0x738] sm:$0xff]
        %v586 = vld [vmem:[%s271 + $0x740] sm:$0xff]
        %v587 = vld [vmem:[%s271 + $0x748] sm:$0xff]
        %v588 = vld [vmem:[%s271 + $0x750] sm:$0xff]
        %v589 = vld [vmem:[%s271 + $0x758] sm:$0xff]
        %v590 = vld [vmem:[%s271 + $0x760] sm:$0xff]
        %v591 = vld [vmem:[%s271 + $0x768] sm:$0xff]
        %v592 = vld [vmem:[%s271 + $0x770] sm:$0xff]
        %v593 = vld [vmem:[%s271 + $0x778] sm:$0xff]
        %v594 = vld [vmem:[%s271 + $0x780] sm:$0xff]
        %v595 = vld [vmem:[%s271 + $0x788] sm:$0xff]
        %v596 = vld [vmem:[%s271 + $0x790] sm:$0xff]
        %v597 = vld [vmem:[%s271 + $0x798] sm:$0xff]
        %v598 = vld [vmem:[%s271 + $0x7a0] sm:$0xff]
        %v599 = vld [vmem:[%s271 + $0x7a8] sm:$0xff]
        %v600 = vld [vmem:[%s271 + $0x7b0] sm:$0xff]
        %v601 = vld [vmem:[%s271 + $0x7b8] sm:$0xff]
        %v602 = vld [vmem:[%s271 + $0x7c0] sm:$0xff]
        %v603 = vld [vmem:[%s271 + $0x7c8] sm:$0xff]
        %v604 = vld [vmem:[%s271 + $0x7d0] sm:$0xff]
        %v605 = vld [vmem:[%s271 + $0x7d8] sm:$0xff]
        %v606 = vld [vmem:[%s271 + $0x7e0] sm:$0xff]
        %v607 = vld [vmem:[%s271 + $0x7e8] sm:$0xff]
        %v608 = vld [vmem:[%s271 + $0x7f0] sm:$0xff]
        %v609 = vld [vmem:[%s271 + $0x7f8] sm:$0xff]
        %v610 = vld [vmem:[%s271 + $0x800] sm:$0xff]
        %v611 = vld [vmem:[%s271 + $0x808] sm:$0xff]
        %v612 = vld [vmem:[%s271 + $0x810] sm:$0xff]
        %v613 = vld [vmem:[%s271 + $0x818] sm:$0xff]
        %v614 = vld [vmem:[%s271 + $0x820] sm:$0xff]
        %v615 = vld [vmem:[%s271 + $0x828] sm:$0xff]
        %v616 = vld [vmem:[%s271 + $0x830] sm:$0xff]
        %v617 = vld [vmem:[%s271 + $0x838] sm:$0xff]
        %v618 = vld [vmem:[%s271 + $0x840] sm:$0xff]
        %v619 = vld [vmem:[%s271 + $0x848] sm:$0xff]
        %v620 = vld [vmem:[%s271 + $0x850] sm:$0xff]
        %v621 = vld [vmem:[%s271 + $0x858] sm:$0xff]
        %v622 = vld [vmem:[%s271 + $0x860] sm:$0xff]
        %v623 = vld [vmem:[%s271 + $0x868] sm:$0xff]
        %v624 = vld [vmem:[%s271 + $0x870] sm:$0xff]
        %v625 = vld [vmem:[%s271 + $0x878] sm:$0xff]
        %v626 = vld [vmem:[%s271 + $0x880] sm:$0xff]
        %v627 = vld [vmem:[%s271 + $0x888] sm:$0xff]
        %v628 = vld [vmem:[%s271 + $0x890] sm:$0xff]
        %v629 = vld [vmem:[%s271 + $0x898] sm:$0xff]
        %v630 = vld [vmem:[%s271 + $0x8a0] sm:$0xff]
        %v631 = vld [vmem:[%s271 + $0x8a8] sm:$0xff]
        %v632 = vld [vmem:[%s271 + $0x8b0] sm:$0xff]
        %v633 = vld [vmem:[%s271 + $0x8b8] sm:$0xff]
        %v634 = vld [vmem:[%s271 + $0x8c0] sm:$0xff]
        %v635 = vld [vmem:[%s271 + $0x8c8] sm:$0xff]
        %v636 = vld [vmem:[%s271 + $0x8d0] sm:$0xff]
        %v637 = vld [vmem:[%s271 + $0x8d8] sm:$0xff]
        %v638 = vld [vmem:[%s271 + $0x8e0] sm:$0xff]
        %v639 = vld [vmem:[%s271 + $0x8e8] sm:$0xff]
        %v640 = vld [vmem:[%s271 + $0x8f0] sm:$0xff]
        %v641 = vld [vmem:[%s271 + $0x8f8] sm:$0xff]
        %v642 = vld [vmem:[%s271 + $0x900] sm:$0xff]
        %v643 = vld [vmem:[%s271 + $0x908] sm:$0xff]
        %v644 = vld [vmem:[%s271 + $0x910] sm:$0xff]
        %v645 = vld [vmem:[%s271 + $0x918] sm:$0xff]
        %v646 = vld [vmem:[%s271 + $0x920] sm:$0xff]
        %v647 = vld [vmem:[%s271 + $0x928] sm:$0xff]
        %v648 = vld [vmem:[%s271 + $0x930] sm:$0xff]
        %v649 = vld [vmem:[%s271 + $0x938] sm:$0xff]
        %v650 = vld [vmem:[%s271 + $0x940] sm:$0xff]
        %v651 = vld [vmem:[%s271 + $0x948] sm:$0xff]
        %v652 = vld [vmem:[%s271 + $0x950] sm:$0xff]
        %v653 = vld [vmem:[%s271 + $0x958] sm:$0xff]
        %v654 = vld [vmem:[%s271 + $0x960] sm:$0xff]
        %v655 = vld [vmem:[%s271 + $0x968] sm:$0xff]
        %v656 = vld [vmem:[%s271 + $0x970] sm:$0xff]
        %v657 = vld [vmem:[%s271 + $0x978] sm:$0xff]
        %v658 = vld [vmem:[%s271 + $0x980] sm:$0xff]
        %v659 = vld [vmem:[%s271 + $0x988] sm:$0xff]
        %v660 = vld [vmem:[%s271 + $0x990] sm:$0xff]
        %v661 = vld [vmem:[%s271 + $0x998] sm:$0xff]
        %v662 = vld [vmem:[%s271 + $0x9a0] sm:$0xff]
        %v663 = vld [vmem:[%s271 + $0x9a8] sm:$0xff]
        %v664 = vld [vmem:[%s271 + $0x9b0] sm:$0xff]
        %v665 = vld [vmem:[%s271 + $0x9b8] sm:$0xff]
        %v666 = vld [vmem:[%s271 + $0x9c0] sm:$0xff]
        %v667 = vld [vmem:[%s271 + $0x9c8] sm:$0xff]
        %v668 = vld [vmem:[%s271 + $0x9d0] sm:$0xff]
        %v669 = vld [vmem:[%s271 + $0x9d8] sm:$0xff]
        %v670 = vld [vmem:[%s271 + $0x9e0] sm:$0xff]
        %v671 = vld [vmem:[%s271 + $0x9e8] sm:$0xff]
        %v672 = vld [vmem:[%s271 + $0x9f0] sm:$0xff]
        %v673 = vld [vmem:[%s271 + $0x9f8] sm:$0xff]
        %v674 = vld [vmem:[%s271 + $0xa00] sm:$0xff]
        %v675 = vld [vmem:[%s271 + $0xa08] sm:$0xff]
        %v676 = vld [vmem:[%s271 + $0xa10] sm:$0xff]
        %v677 = vld [vmem:[%s271 + $0xa18] sm:$0xff]
        %v678 = vld [vmem:[%s271 + $0xa20] sm:$0xff]
        %v679 = vld [vmem:[%s271 + $0xa28] sm:$0xff]
        %v680 = vld [vmem:[%s271 + $0xa30] sm:$0xff]
        %v681 = vld [vmem:[%s271 + $0xa38] sm:$0xff]
        %v682 = vld [vmem:[%s271 + $0xa40] sm:$0xff]
        %v683 = vld [vmem:[%s271 + $0xa48] sm:$0xff]
        %v684 = vld [vmem:[%s271 + $0xa50] sm:$0xff]
        %v685 = vld [vmem:[%s271 + $0xa58] sm:$0xff]
        %v686 = vld [vmem:[%s271 + $0xa60] sm:$0xff]
        %v687 = vld [vmem:[%s271 + $0xa68] sm:$0xff]
        %v688 = vld [vmem:[%s271 + $0xa70] sm:$0xff]
        %v689 = vld [vmem:[%s271 + $0xa78] sm:$0xff]
        %v690 = vld [vmem:[%s271 + $0xa80] sm:$0xff]
        %v691 = vld [vmem:[%s271 + $0xa88] sm:$0xff]
        %v692 = vld [vmem:[%s271 + $0xa90] sm:$0xff]
        %v693 = vld [vmem:[%s271 + $0xa98] sm:$0xff]
        %v694 = vld [vmem:[%s271 + $0xaa0] sm:$0xff]
        %v695 = vld [vmem:[%s271 + $0xaa8] sm:$0xff]
        %v696 = vld [vmem:[%s271 + $0xab0] sm:$0xff]
        %v697 = vld [vmem:[%s271 + $0xab8] sm:$0xff]
        %v698 = vld [vmem:[%s271 + $0xac0] sm:$0xff]
        %v699 = vld [vmem:[%s271 + $0xac8] sm:$0xff]
        %v700 = vld [vmem:[%s271 + $0xad0] sm:$0xff]
        %v701 = vld [vmem:[%s271 + $0xad8] sm:$0xff]
        %v702 = vld [vmem:[%s271 + $0xae0] sm:$0xff]
        %v703 = vld [vmem:[%s271 + $0xae8] sm:$0xff]
        %v704 = vld [vmem:[%s271 + $0xaf0] sm:$0xff]
        %v705 = vld [vmem:[%s271 + $0xaf8] sm:$0xff]
        %v706 = vld [vmem:[%s271 + $0xb00] sm:$0xff]
        %v707 = vld [vmem:[%s271 + $0xb08] sm:$0xff]
        %v708 = vld [vmem:[%s271 + $0xb10] sm:$0xff]
        %v709 = vld [vmem:[%s271 + $0xb18] sm:$0xff]
        %v710 = vld [vmem:[%s271 + $0xb20] sm:$0xff]
        %v711 = vld [vmem:[%s271 + $0xb28] sm:$0xff]
        %v712 = vld [vmem:[%s271 + $0xb30] sm:$0xff]
        %v713 = vld [vmem:[%s271 + $0xb38] sm:$0xff]
        %v714 = vld [vmem:[%s271 + $0xb40] sm:$0xff]
        %v715 = vld [vmem:[%s271 + $0xb48] sm:$0xff]
        %v716 = vld [vmem:[%s271 + $0xb50] sm:$0xff]
        %v717 = vld [vmem:[%s271 + $0xb58] sm:$0xff]
        %v718 = vld [vmem:[%s271 + $0xb60] sm:$0xff]
        %v719 = vld [vmem:[%s271 + $0xb68] sm:$0xff]
        %v720 = vld [vmem:[%s271 + $0xb70] sm:$0xff]
        %v721 = vld [vmem:[%s271 + $0xb78] sm:$0xff]
        %v722 = vld [vmem:[%s271 + $0xb80] sm:$0xff]
        %v723 = vld [vmem:[%s271 + $0xb88] sm:$0xff]
        %v724 = vld [vmem:[%s271 + $0xb90] sm:$0xff]
        %v725 = vld [vmem:[%s271 + $0xb98] sm:$0xff]
        %v726 = vld [vmem:[%s271 + $0xba0] sm:$0xff]
        %v727 = vld [vmem:[%s271 + $0xba8] sm:$0xff]
        %v728 = vld [vmem:[%s271 + $0xbb0] sm:$0xff]
        %v729 = vld [vmem:[%s271 + $0xbb8] sm:$0xff]
        %v730 = vld [vmem:[%s271 + $0xbc0] sm:$0xff]
        %v731 = vld [vmem:[%s271 + $0xbc8] sm:$0xff]
        %v732 = vld [vmem:[%s271 + $0xbd0] sm:$0xff]
        %v733 = vld [vmem:[%s271 + $0xbd8] sm:$0xff]
        %v734 = vld [vmem:[%s271 + $0xbe0] sm:$0xff]
        %v735 = vld [vmem:[%s271 + $0xbe8] sm:$0xff]
        %v736 = vld [vmem:[%s271 + $0xbf0] sm:$0xff]
        %v737 = vld [vmem:[%s271 + $0xbf8] sm:$0xff]
        %v738 = vld [vmem:[%s271 + $0xc00] sm:$0xff]
        %v739 = vld [vmem:[%s271 + $0xc08] sm:$0xff]
        %v740 = vld [vmem:[%s271 + $0xc10] sm:$0xff]
        %v741 = vld [vmem:[%s271 + $0xc18] sm:$0xff]
        %v742 = vld [vmem:[%s271 + $0xc20] sm:$0xff]
        %v743 = vld [vmem:[%s271 + $0xc28] sm:$0xff]
        %v744 = vld [vmem:[%s271 + $0xc30] sm:$0xff]
        %v745 = vld [vmem:[%s271 + $0xc38] sm:$0xff]
        %v746 = vld [vmem:[%s271 + $0xc40] sm:$0xff]
        %v747 = vld [vmem:[%s271 + $0xc48] sm:$0xff]
        %v748 = vld [vmem:[%s271 + $0xc50] sm:$0xff]
        %v749 = vld [vmem:[%s271 + $0xc58] sm:$0xff]
        %v750 = vld [vmem:[%s271 + $0xc60] sm:$0xff]
        %v751 = vld [vmem:[%s271 + $0xc68] sm:$0xff]
        %v752 = vld [vmem:[%s271 + $0xc70] sm:$0xff]
        %v753 = vld [vmem:[%s271 + $0xc78] sm:$0xff]
        %v754 = vld [vmem:[%s271 + $0xc80] sm:$0xff]
        %v755 = vld [vmem:[%s271 + $0xc88] sm:$0xff]
        %v756 = vld [vmem:[%s271 + $0xc90] sm:$0xff]
        %v757 = vld [vmem:[%s271 + $0xc98] sm:$0xff]
        %v758 = vld [vmem:[%s271 + $0xca0] sm:$0xff]
        %v759 = vld [vmem:[%s271 + $0xca8] sm:$0xff]
        %v760 = vld [vmem:[%s271 + $0xcb0] sm:$0xff]
        %v761 = vld [vmem:[%s271 + $0xcb8] sm:$0xff]
        %v762 = vld [vmem:[%s271 + $0xcc0] sm:$0xff]
        %v763 = vld [vmem:[%s271 + $0xcc8] sm:$0xff]
        %v764 = vld [vmem:[%s271 + $0xcd0] sm:$0xff]
        %v765 = vld [vmem:[%s271 + $0xcd8] sm:$0xff]
        %v766 = vld [vmem:[%s271 + $0xce0] sm:$0xff]
        %v767 = vld [vmem:[%s271 + $0xce8] sm:$0xff]
        %v768 = vld [vmem:[%s271 + $0xcf0] sm:$0xff]
        %v769 = vld [vmem:[%s271 + $0xcf8] sm:$0xff]
        %v770 = vld [vmem:[%s271 + $0xd00] sm:$0xff]
        %v771 = vld [vmem:[%s271 + $0xd08] sm:$0xff]
        %v772 = vld [vmem:[%s271 + $0xd10] sm:$0xff]
        %v773 = vld [vmem:[%s271 + $0xd18] sm:$0xff]
        %v774 = vld [vmem:[%s271 + $0xd20] sm:$0xff]
        %v775 = vld [vmem:[%s271 + $0xd28] sm:$0xff]
        %v776 = vld [vmem:[%s271 + $0xd30] sm:$0xff]
        %v777 = vld [vmem:[%s271 + $0xd38] sm:$0xff]
        %v778 = vld [vmem:[%s271 + $0xd40] sm:$0xff]
        %v779 = vld [vmem:[%s271 + $0xd48] sm:$0xff]
        %v780 = vld [vmem:[%s271 + $0xd50] sm:$0xff]
        %v781 = vld [vmem:[%s271 + $0xd58] sm:$0xff]
        %v782 = vld [vmem:[%s271 + $0xd60] sm:$0xff]
        %v783 = vld [vmem:[%s271 + $0xd68] sm:$0xff]
        %v784 = vld [vmem:[%s271 + $0xd70] sm:$0xff]
        %v785 = vld [vmem:[%s271 + $0xd78] sm:$0xff]
        %v786 = vld [vmem:[%s271 + $0xd80] sm:$0xff]
        %v787 = vld [vmem:[%s271 + $0xd88] sm:$0xff]
        %v788 = vld [vmem:[%s271 + $0xd90] sm:$0xff]
        %v789 = vld [vmem:[%s271 + $0xd98] sm:$0xff]
        %v790 = vld [vmem:[%s271 + $0xda0] sm:$0xff]
        %v791 = vld [vmem:[%s271 + $0xda8] sm:$0xff]
        %v792 = vld [vmem:[%s271 + $0xdb0] sm:$0xff]
        %v793 = vld [vmem:[%s271 + $0xdb8] sm:$0xff]
        %v794 = vld [vmem:[%s271 + $0xdc0] sm:$0xff]
        %v795 = vld [vmem:[%s271 + $0xdc8] sm:$0xff]
        %v796 = vld [vmem:[%s271 + $0xdd0] sm:$0xff]
        %v797 = vld [vmem:[%s271 + $0xdd8] sm:$0xff]
        %v798 = vld [vmem:[%s271 + $0xde0] sm:$0xff]
        %v799 = vld [vmem:[%s271 + $0xde8] sm:$0xff]
        %v800 = vld [vmem:[%s271 + $0xdf0] sm:$0xff]
        %v801 = vld [vmem:[%s271 + $0xdf8] sm:$0xff]
        %v802 = vld [vmem:[%s271 + $0xe00] sm:$0xff]
        %v803 = vld [vmem:[%s271 + $0xe08] sm:$0xff]
        %v804 = vld [vmem:[%s271 + $0xe10] sm:$0xff]
        %v805 = vld [vmem:[%s271 + $0xe18] sm:$0xff]
        %v806 = vld [vmem:[%s271 + $0xe20] sm:$0xff]
        %v807 = vld [vmem:[%s271 + $0xe28] sm:$0xff]
        %v808 = vld [vmem:[%s271 + $0xe30] sm:$0xff]
        %v809 = vld [vmem:[%s271 + $0xe38] sm:$0xff]
        %v810 = vld [vmem:[%s271 + $0xe40] sm:$0xff]
        %v811 = vld [vmem:[%s271 + $0xe48] sm:$0xff]
        %v812 = vld [vmem:[%s271 + $0xe50] sm:$0xff]
        %v813 = vld [vmem:[%s271 + $0xe58] sm:$0xff]
        %v814 = vld [vmem:[%s271 + $0xe60] sm:$0xff]
        %v815 = vld [vmem:[%s271 + $0xe68] sm:$0xff]
        %v816 = vld [vmem:[%s271 + $0xe70] sm:$0xff]
        %v817 = vld [vmem:[%s271 + $0xe78] sm:$0xff]
        %v818 = vld [vmem:[%s271 + $0xe80] sm:$0xff]
        %v819 = vld [vmem:[%s271 + $0xe88] sm:$0xff]
        %v820 = vld [vmem:[%s271 + $0xe90] sm:$0xff]
        %v821 = vld [vmem:[%s271 + $0xe98] sm:$0xff]
        %v822 = vld [vmem:[%s271 + $0xea0] sm:$0xff]
        %v823 = vld [vmem:[%s271 + $0xea8] sm:$0xff]
        %v824 = vld [vmem:[%s271 + $0xeb0] sm:$0xff]
        %v825 = vld [vmem:[%s271 + $0xeb8] sm:$0xff]
        %v826 = vld [vmem:[%s271 + $0xec0] sm:$0xff]
        %v827 = vld [vmem:[%s271 + $0xec8] sm:$0xff]
        %v828 = vld [vmem:[%s271 + $0xed0] sm:$0xff]
        %v829 = vld [vmem:[%s271 + $0xed8] sm:$0xff]
        %v830 = vld [vmem:[%s271 + $0xee0] sm:$0xff]
        %v831 = vld [vmem:[%s271 + $0xee8] sm:$0xff]
        %v832 = vld [vmem:[%s271 + $0xef0] sm:$0xff]
        %v833 = vld [vmem:[%s271 + $0xef8] sm:$0xff]
        %v834 = vld [vmem:[%s271 + $0xf00] sm:$0xff]
        %v835 = vld [vmem:[%s271 + $0xf08] sm:$0xff]
        %v836 = vld [vmem:[%s271 + $0xf10] sm:$0xff]
        %v837 = vld [vmem:[%s271 + $0xf18] sm:$0xff]
        %v838 = vld [vmem:[%s271 + $0xf20] sm:$0xff]
        %v839 = vld [vmem:[%s271 + $0xf28] sm:$0xff]
        %v840 = vld [vmem:[%s271 + $0xf30] sm:$0xff]
        %v841 = vld [vmem:[%s271 + $0xf38] sm:$0xff]
        %v842 = vld [vmem:[%s271 + $0xf40] sm:$0xff]
        %v843 = vld [vmem:[%s271 + $0xf48] sm:$0xff]
        %v844 = vld [vmem:[%s271 + $0xf50] sm:$0xff]
        %v845 = vld [vmem:[%s271 + $0xf58] sm:$0xff]
        %v846 = vld [vmem:[%s271 + $0xf60] sm:$0xff]
        %v847 = vld [vmem:[%s271 + $0xf68] sm:$0xff]
        %v848 = vld [vmem:[%s271 + $0xf70] sm:$0xff]
        %v849 = vld [vmem:[%s271 + $0xf78] sm:$0xff]
        %v850 = vld [vmem:[%s271 + $0xf80] sm:$0xff]
        %v851 = vld [vmem:[%s271 + $0xf88] sm:$0xff]
        %v852 = vld [vmem:[%s271 + $0xf90] sm:$0xff]
        %v853 = vld [vmem:[%s271 + $0xf98] sm:$0xff]
        %v854 = vld [vmem:[%s271 + $0xfa0] sm:$0xff]
        %v855 = vld [vmem:[%s271 + $0xfa8] sm:$0xff]
        %v856 = vld [vmem:[%s271 + $0xfb0] sm:$0xff]
        %v857 = vld [vmem:[%s271 + $0xfb8] sm:$0xff]
        %v858 = vld [vmem:[%s271 + $0xfc0] sm:$0xff]
        %v859 = vld [vmem:[%s271 + $0xfc8] sm:$0xff]
        %v860 = vld [vmem:[%s271 + $0xfd0] sm:$0xff]
        %v861 = vld [vmem:[%s271 + $0xfd8] sm:$0xff]
        %v862 = vld [vmem:[%s271 + $0xfe0] sm:$0xff]
        %v863 = vld [vmem:[%s271 + $0xfe8] sm:$0xff]
        %v864 = vld [vmem:[%s271 + $0xff0] sm:$0xff]
        %v865 = vld [vmem:[%s271 + $0xff8] sm:$0xff]
        %v866 = vld [vmem:[%s271 + $0x1000] sm:$0xff]
        %v867 = vld [vmem:[%s271 + $0x1008] sm:$0xff]
        %v868 = vld [vmem:[%s271 + $0x1010] sm:$0xff]
        %v869 = vld [vmem:[%s271 + $0x1018] sm:$0xff]
        %v870 = vld [vmem:[%s271 + $0x1020] sm:$0xff]
        %v871 = vld [vmem:[%s271 + $0x1028] sm:$0xff]
        %v872 = vld [vmem:[%s271 + $0x1030] sm:$0xff]
        %v873 = vld [vmem:[%s271 + $0x1038] sm:$0xff]
        %v874 = vld [vmem:[%s271 + $0x1040] sm:$0xff]
        %v875 = vld [vmem:[%s271 + $0x1048] sm:$0xff]
        %v876 = vld [vmem:[%s271 + $0x1050] sm:$0xff]
        %v877 = vld [vmem:[%s271 + $0x1058] sm:$0xff]
        %v878 = vld [vmem:[%s271 + $0x1060] sm:$0xff]
        %v879 = vld [vmem:[%s271 + $0x1068] sm:$0xff]
        %v880 = vld [vmem:[%s271 + $0x1070] sm:$0xff]
        %v881 = vld [vmem:[%s271 + $0x1078] sm:$0xff]
        %v882 = vld [vmem:[%s271 + $0x1080] sm:$0xff]
        %v883 = vld [vmem:[%s271 + $0x1088] sm:$0xff]
        %v884 = vld [vmem:[%s271 + $0x1090] sm:$0xff]
        %v885 = vld [vmem:[%s271 + $0x1098] sm:$0xff]
        %v886 = vld [vmem:[%s271 + $0x10a0] sm:$0xff]
        %v887 = vld [vmem:[%s271 + $0x10a8] sm:$0xff]
        %v888 = vld [vmem:[%s271 + $0x10b0] sm:$0xff]
        %v889 = vld [vmem:[%s271 + $0x10b8] sm:$0xff]
        %v890 = vld [vmem:[%s271 + $0x10c0] sm:$0xff]
        %v891 = vld [vmem:[%s271 + $0x10c8] sm:$0xff]
        %v892 = vld [vmem:[%s271 + $0x10d0] sm:$0xff]
        %v893 = vld [vmem:[%s271 + $0x10d8] sm:$0xff]
        %v894 = vld [vmem:[%s271 + $0x10e0] sm:$0xff]
        %v895 = vld [vmem:[%s271 + $0x10e8] sm:$0xff]
        %v896 = vld [vmem:[%s271 + $0x10f0] sm:$0xff]
        %v897 = vld [vmem:[%s271 + $0x10f8] sm:$0xff]
        %v898 = vld [vmem:[%s271 + $0x1100] sm:$0xff]
        %v899 = vld [vmem:[%s271 + $0x1108] sm:$0xff]
        %v900 = vld [vmem:[%s271 + $0x1110] sm:$0xff]
        %v901 = vld [vmem:[%s271 + $0x1118] sm:$0xff]
        %v902 = vld [vmem:[%s271 + $0x1120] sm:$0xff]
        %v903 = vld [vmem:[%s271 + $0x1128] sm:$0xff]
        %v904 = vld [vmem:[%s271 + $0x1130] sm:$0xff]
        %v905 = vld [vmem:[%s271 + $0x1138] sm:$0xff]
        %v906 = vld [vmem:[%s271 + $0x1140] sm:$0xff]
        %v907 = vld [vmem:[%s271 + $0x1148] sm:$0xff]
        %v908 = vld [vmem:[%s271 + $0x1150] sm:$0xff]
        %v909 = vld [vmem:[%s271 + $0x1158] sm:$0xff]
        %v910 = vld [vmem:[%s271 + $0x1160] sm:$0xff]
        %v911 = vld [vmem:[%s271 + $0x1168] sm:$0xff]
        %v912 = vld [vmem:[%s271 + $0x1170] sm:$0xff]
        %v913 = vld [vmem:[%s271 + $0x1178] sm:$0xff]
        %v914 = vld [vmem:[%s271 + $0x1180] sm:$0xff]
        %v915 = vld [vmem:[%s271 + $0x1188] sm:$0xff]
        %v916 = vld [vmem:[%s271 + $0x1190] sm:$0xff]
        %v917 = vld [vmem:[%s271 + $0x1198] sm:$0xff]
        %v918 = vld [vmem:[%s271 + $0x11a0] sm:$0xff]
        %v919 = vld [vmem:[%s271 + $0x11a8] sm:$0xff]
        %v920 = vld [vmem:[%s271 + $0x11b0] sm:$0xff]
        %v921 = vld [vmem:[%s271 + $0x11b8] sm:$0xff]
        %v922 = vld [vmem:[%s271 + $0x11c0] sm:$0xff]
        %v923 = vld [vmem:[%s271 + $0x11c8] sm:$0xff]
        %v924 = vld [vmem:[%s271 + $0x11d0] sm:$0xff]
        %v925 = vld [vmem:[%s271 + $0x11d8] sm:$0xff]
        %v926 = vld [vmem:[%s271 + $0x11e0] sm:$0xff]
        %v927 = vld [vmem:[%s271 + $0x11e8] sm:$0xff]
        %v928 = vld [vmem:[%s271 + $0x11f0] sm:$0xff]
        %v929 = vld [vmem:[%s271 + $0x11f8] sm:$0xff]
        %v930 = vld [vmem:[%s271 + $0x1200] sm:$0xff]
        %v931 = vld [vmem:[%s271 + $0x1208] sm:$0xff]
        %v932 = vld [vmem:[%s271 + $0x1210] sm:$0xff]
        %v933 = vld [vmem:[%s271 + $0x1218] sm:$0xff]
        %v934 = vld [vmem:[%s271 + $0x1220] sm:$0xff]
        %v935 = vld [vmem:[%s271 + $0x1228] sm:$0xff]
        %v936 = vld [vmem:[%s271 + $0x1230] sm:$0xff]
        %v937 = vld [vmem:[%s271 + $0x1238] sm:$0xff]
        %v938 = vld [vmem:[%s271 + $0x1240] sm:$0xff]
        %v939 = vld [vmem:[%s271 + $0x1248] sm:$0xff]
        %v940 = vld [vmem:[%s271 + $0x1250] sm:$0xff]
        %v941 = vld [vmem:[%s271 + $0x1258] sm:$0xff]
        %v942 = vld [vmem:[%s271 + $0x1260] sm:$0xff]
        %v943 = vld [vmem:[%s271 + $0x1268] sm:$0xff]
        %v944 = vld [vmem:[%s271 + $0x1270] sm:$0xff]
        %v945 = vld [vmem:[%s271 + $0x1278] sm:$0xff]
        %v946 = vld [vmem:[%s271 + $0x1280] sm:$0xff]
        %v947 = vld [vmem:[%s271 + $0x1288] sm:$0xff]
        %v948 = vld [vmem:[%s271 + $0x1290] sm:$0xff]
        %v949 = vld [vmem:[%s271 + $0x1298] sm:$0xff]
        %v950 = vld [vmem:[%s271 + $0x12a0] sm:$0xff]
        %v951 = vld [vmem:[%s271 + $0x12a8] sm:$0xff]
        %v952 = vld [vmem:[%s271 + $0x12b0] sm:$0xff]
        %v953 = vld [vmem:[%s271 + $0x12b8] sm:$0xff]
        %v954 = vld [vmem:[%s271 + $0x12c0] sm:$0xff]
        %v955 = vld [vmem:[%s271 + $0x12c8] sm:$0xff]
        %v956 = vld [vmem:[%s271 + $0x12d0] sm:$0xff]
        %v957 = vld [vmem:[%s271 + $0x12d8] sm:$0xff]
        %v958 = vld [vmem:[%s271 + $0x12e0] sm:$0xff]
        %v959 = vld [vmem:[%s271 + $0x12e8] sm:$0xff]
        %v960 = vld [vmem:[%s271 + $0x12f0] sm:$0xff]
        %v961 = vld [vmem:[%s271 + $0x12f8] sm:$0xff]
        %v962 = vld [vmem:[%s271 + $0x1300] sm:$0xff]
        %v963 = vld [vmem:[%s271 + $0x1308] sm:$0xff]
        %v964 = vld [vmem:[%s271 + $0x1310] sm:$0xff]
        %v965 = vld [vmem:[%s271 + $0x1318] sm:$0xff]
        %v966 = vld [vmem:[%s271 + $0x1320] sm:$0xff]
        %v967 = vld [vmem:[%s271 + $0x1328] sm:$0xff]
        %v968 = vld [vmem:[%s271 + $0x1330] sm:$0xff]
        %v969 = vld [vmem:[%s271 + $0x1338] sm:$0xff]
        %v970 = vld [vmem:[%s271 + $0x1340] sm:$0xff]
        %v971 = vld [vmem:[%s271 + $0x1348] sm:$0xff]
        %v972 = vld [vmem:[%s271 + $0x1350] sm:$0xff]
        %v973 = vld [vmem:[%s271 + $0x1358] sm:$0xff]
        %v974 = vld [vmem:[%s271 + $0x1360] sm:$0xff]
        %v975 = vld [vmem:[%s271 + $0x1368] sm:$0xff]
        %v976 = vld [vmem:[%s271 + $0x1370] sm:$0xff]
        %v977 = vld [vmem:[%s271 + $0x1378] sm:$0xff]
        %v978 = vld [vmem:[%s271 + $0x1380] sm:$0xff]
        %v979 = vld [vmem:[%s271 + $0x1388] sm:$0xff]
        %v980 = vld [vmem:[%s271 + $0x1390] sm:$0xff]
        %v981 = vld [vmem:[%s271 + $0x1398] sm:$0xff]
        %v982 = vld [vmem:[%s271 + $0x13a0] sm:$0xff]
        %v983 = vld [vmem:[%s271 + $0x13a8] sm:$0xff]
        %v984 = vld [vmem:[%s271 + $0x13b0] sm:$0xff]
        %v985 = vld [vmem:[%s271 + $0x13b8] sm:$0xff]
        %v986 = vld [vmem:[%s271 + $0x13c0] sm:$0xff]
        %v987 = vld [vmem:[%s271 + $0x13c8] sm:$0xff]
        %v988 = vld [vmem:[%s271 + $0x13d0] sm:$0xff]
        %v989 = vld [vmem:[%s271 + $0x13d8] sm:$0xff]
        %v990 = vld [vmem:[%s271 + $0x13e0] sm:$0xff]
        %v991 = vld [vmem:[%s271 + $0x13e8] sm:$0xff]
        %v992 = vld [vmem:[%s271 + $0x13f0] sm:$0xff]
        %v993 = vld [vmem:[%s271 + $0x13f8] sm:$0xff]
        %v994 = vld [vmem:[%s271 + $0x1400] sm:$0xff]
        %v995 = vld [vmem:[%s271 + $0x1408] sm:$0xff]
        %v996 = vld [vmem:[%s271 + $0x1410] sm:$0xff]
        %v997 = vld [vmem:[%s271 + $0x1418] sm:$0xff]
        %v998 = vld [vmem:[%s271 + $0x1420] sm:$0xff]
        %v999 = vld [vmem:[%s271 + $0x1428] sm:$0xff]
        %v1000 = vld [vmem:[%s271 + $0x1430] sm:$0xff]
        %v1001 = vld [vmem:[%s271 + $0x1438] sm:$0xff]
        %v1002 = vld [vmem:[%s271 + $0x1440] sm:$0xff]
        %v1003 = vld [vmem:[%s271 + $0x1448] sm:$0xff]
        %v1004 = vld [vmem:[%s271 + $0x1450] sm:$0xff]
        %v1005 = vld [vmem:[%s271 + $0x1458] sm:$0xff]
        %v1006 = vld [vmem:[%s271 + $0x1460] sm:$0xff]
        %v1007 = vld [vmem:[%s271 + $0x1468] sm:$0xff]
        %v1008 = vld [vmem:[%s271 + $0x1470] sm:$0xff]
        %v1009 = vld [vmem:[%s271 + $0x1478] sm:$0xff]
        %v1010 = vld [vmem:[%s271 + $0x1480] sm:$0xff]
        %v1011 = vld [vmem:[%s271 + $0x1488] sm:$0xff]
        %v1012 = vld [vmem:[%s271 + $0x1490] sm:$0xff]
        %v1013 = vld [vmem:[%s271 + $0x1498] sm:$0xff]
        %v1014 = vld [vmem:[%s271 + $0x14a0] sm:$0xff]
        %v1015 = vld [vmem:[%s271 + $0x14a8] sm:$0xff]
        %v1016 = vld [vmem:[%s271 + $0x14b0] sm:$0xff]
        %v1017 = vld [vmem:[%s271 + $0x14b8] sm:$0xff]
        %v1018 = vld [vmem:[%s271 + $0x14c0] sm:$0xff]
        %v1019 = vld [vmem:[%s271 + $0x14c8] sm:$0xff]
        %v1020 = vld [vmem:[%s271 + $0x14d0] sm:$0xff]
        %v1021 = vld [vmem:[%s271 + $0x14d8] sm:$0xff]
        %v1022 = vld [vmem:[%s271 + $0x14e0] sm:$0xff]
        %v1023 = vld [vmem:[%s271 + $0x14e8] sm:$0xff]
        %v1024 = vld [vmem:[%s271 + $0x14f0] sm:$0xff]
        %v1025 = vld [vmem:[%s271 + $0x14f8] sm:$0xff]
        %v1026 = vld [vmem:[%s271 + $0x1500] sm:$0xff]
        %v1027 = vld [vmem:[%s271 + $0x1508] sm:$0xff]
        %v1028 = vld [vmem:[%s271 + $0x1510] sm:$0xff]
        %v1029 = vld [vmem:[%s271 + $0x1518] sm:$0xff]
        %v1030 = vld [vmem:[%s271 + $0x1520] sm:$0xff]
        %v1031 = vld [vmem:[%s271 + $0x1528] sm:$0xff]
        %v1032 = vld [vmem:[%s271 + $0x1530] sm:$0xff]
        %v1033 = vld [vmem:[%s271 + $0x1538] sm:$0xff]
        %v1034 = vld [vmem:[%s271 + $0x1540] sm:$0xff]
        %v1035 = vld [vmem:[%s271 + $0x1548] sm:$0xff]
        %v1036 = vld [vmem:[%s271 + $0x1550] sm:$0xff]
        %v1037 = vld [vmem:[%s271 + $0x1558] sm:$0xff]
        %v1038 = vld [vmem:[%s271 + $0x1560] sm:$0xff]
        %v1039 = vld [vmem:[%s271 + $0x1568] sm:$0xff]
        %v1040 = vld [vmem:[%s271 + $0x1570] sm:$0xff]
        %v1041 = vld [vmem:[%s271 + $0x1578] sm:$0xff]
        %v1042 = vld [vmem:[%s271 + $0x1580] sm:$0xff]
        %v1043 = vld [vmem:[%s271 + $0x1588] sm:$0xff]
        %v1044 = vld [vmem:[%s271 + $0x1590] sm:$0xff]
        %v1045 = vld [vmem:[%s271 + $0x1598] sm:$0xff]
        %v1046 = vld [vmem:[%s271 + $0x15a0] sm:$0xff]
        %v1047 = vld [vmem:[%s271 + $0x15a8] sm:$0xff]
        %v1048 = vld [vmem:[%s271 + $0x15b0] sm:$0xff]
        %v1049 = vld [vmem:[%s271 + $0x15b8] sm:$0xff]
        %v1050 = vld [vmem:[%s271 + $0x15c0] sm:$0xff]
        %v1051 = vld [vmem:[%s271 + $0x15c8] sm:$0xff]
        %v1052 = vld [vmem:[%s271 + $0x15d0] sm:$0xff]
        %v1053 = vld [vmem:[%s271 + $0x15d8] sm:$0xff]
        %v1054 = vld [vmem:[%s271 + $0x15e0] sm:$0xff]
        %v1055 = vld [vmem:[%s271 + $0x15e8] sm:$0xff]
        %v1056 = vld [vmem:[%s271 + $0x15f0] sm:$0xff]
        %v1057 = vld [vmem:[%s271 + $0x15f8] sm:$0xff]
        %v1058 = vld [vmem:[%s271 + $0x1600] sm:$0xff]
        %v1059 = vld [vmem:[%s271 + $0x1608] sm:$0xff]
        %v1060 = vld [vmem:[%s271 + $0x1610] sm:$0xff]
        %v1061 = vld [vmem:[%s271 + $0x1618] sm:$0xff]
        %v1062 = vld [vmem:[%s271 + $0x1620] sm:$0xff]
        %v1063 = vld [vmem:[%s271 + $0x1628] sm:$0xff]
        %v1064 = vld [vmem:[%s271 + $0x1630] sm:$0xff]
        %v1065 = vld [vmem:[%s271 + $0x1638] sm:$0xff]
        %v1066 = vld [vmem:[%s271 + $0x1640] sm:$0xff]
        %v1067 = vld [vmem:[%s271 + $0x1648] sm:$0xff]
        %v1068 = vld [vmem:[%s271 + $0x1650] sm:$0xff]
        %v1069 = vld [vmem:[%s271 + $0x1658] sm:$0xff]
        %v1070 = vld [vmem:[%s271 + $0x1660] sm:$0xff]
        %v1071 = vld [vmem:[%s271 + $0x1668] sm:$0xff]
        %v1072 = vld [vmem:[%s271 + $0x1670] sm:$0xff]
        %v1073 = vld [vmem:[%s271 + $0x1678] sm:$0xff]
        %v1074 = vld [vmem:[%s271 + $0x1680] sm:$0xff]
        %v1075 = vld [vmem:[%s271 + $0x1688] sm:$0xff]
        %v1076 = vld [vmem:[%s271 + $0x1690] sm:$0xff]
        %v1077 = vld [vmem:[%s271 + $0x1698] sm:$0xff]
        %v1078 = vld [vmem:[%s271 + $0x16a0] sm:$0xff]
        %v1079 = vld [vmem:[%s271 + $0x16a8] sm:$0xff]
        %v1080 = vld [vmem:[%s271 + $0x16b0] sm:$0xff]
        %v1081 = vld [vmem:[%s271 + $0x16b8] sm:$0xff]
        %v1082 = vld [vmem:[%s271 + $0x16c0] sm:$0xff]
        %v1083 = vld [vmem:[%s271 + $0x16c8] sm:$0xff]
        %v1084 = vld [vmem:[%s271 + $0x16d0] sm:$0xff]
        %v1085 = vld [vmem:[%s271 + $0x16d8] sm:$0xff]
        %v1086 = vld [vmem:[%s271 + $0x16e0] sm:$0xff]
        %v1087 = vld [vmem:[%s271 + $0x16e8] sm:$0xff]
        %v1088 = vld [vmem:[%s271 + $0x16f0] sm:$0xff]
        %v1089 = vld [vmem:[%s271 + $0x16f8] sm:$0xff]
        %v1090 = vld [vmem:[%s271 + $0x1700] sm:$0xff]
        %v1091 = vld [vmem:[%s271 + $0x1708] sm:$0xff]
        %v1092 = vld [vmem:[%s271 + $0x1710] sm:$0xff]
        %v1093 = vld [vmem:[%s271 + $0x1718] sm:$0xff]
        %v1094 = vld [vmem:[%s271 + $0x1720] sm:$0xff]
        %v1095 = vld [vmem:[%s271 + $0x1728] sm:$0xff]
        %v1096 = vld [vmem:[%s271 + $0x1730] sm:$0xff]
        %v1097 = vld [vmem:[%s271 + $0x1738] sm:$0xff]
        %v1098 = vld [vmem:[%s271 + $0x1740] sm:$0xff]
        %v1099 = vld [vmem:[%s271 + $0x1748] sm:$0xff]
        %v1100 = vld [vmem:[%s271 + $0x1750] sm:$0xff]
        %v1101 = vld [vmem:[%s271 + $0x1758] sm:$0xff]
        %v1102 = vld [vmem:[%s271 + $0x1760] sm:$0xff]
        %v1103 = vld [vmem:[%s271 + $0x1768] sm:$0xff]
        %v1104 = vld [vmem:[%s271 + $0x1770] sm:$0xff]
        %v1105 = vld [vmem:[%s271 + $0x1778] sm:$0xff]
        %v1106 = vld [vmem:[%s271 + $0x1780] sm:$0xff]
        %v1107 = vld [vmem:[%s271 + $0x1788] sm:$0xff]
        %v1108 = vld [vmem:[%s271 + $0x1790] sm:$0xff]
        %v1109 = vld [vmem:[%s271 + $0x1798] sm:$0xff]
        %v1110 = vld [vmem:[%s271 + $0x17a0] sm:$0xff]
        %v1111 = vld [vmem:[%s271 + $0x17a8] sm:$0xff]
        %v1112 = vld [vmem:[%s271 + $0x17b0] sm:$0xff]
        %v1113 = vld [vmem:[%s271 + $0x17b8] sm:$0xff]
        %v1114 = vld [vmem:[%s271 + $0x17c0] sm:$0xff]
        %v1115 = vld [vmem:[%s271 + $0x17c8] sm:$0xff]
        %v1116 = vld [vmem:[%s271 + $0x17d0] sm:$0xff]
        %v1117 = vld [vmem:[%s271 + $0x17d8] sm:$0xff]
        %v1118 = vld [vmem:[%s271 + $0x17e0] sm:$0xff]
        %v1119 = vld [vmem:[%s271 + $0x17e8] sm:$0xff]
        %v1120 = vld [vmem:[%s271 + $0x17f0] sm:$0xff]
        %v1121 = vld [vmem:[%s271 + $0x17f8] sm:$0xff]
        %v1122 = vld [vmem:[%s271 + $0x1800] sm:$0xff]
        %v1123 = vld [vmem:[%s271 + $0x1808] sm:$0xff]
        %v1124 = vld [vmem:[%s271 + $0x1810] sm:$0xff]
        %v1125 = vld [vmem:[%s271 + $0x1818] sm:$0xff]
        %v1126 = vld [vmem:[%s271 + $0x1820] sm:$0xff]
        %v1127 = vld [vmem:[%s271 + $0x1828] sm:$0xff]
        %v1128 = vld [vmem:[%s271 + $0x1830] sm:$0xff]
        %v1129 = vld [vmem:[%s271 + $0x1838] sm:$0xff]
        %v1130 = vld [vmem:[%s271 + $0x1840] sm:$0xff]
        %v1131 = vld [vmem:[%s271 + $0x1848] sm:$0xff]
        %v1132 = vld [vmem:[%s271 + $0x1850] sm:$0xff]
        %v1133 = vld [vmem:[%s271 + $0x1858] sm:$0xff]
        %v1134 = vld [vmem:[%s271 + $0x1860] sm:$0xff]
        %v1135 = vld [vmem:[%s271 + $0x1868] sm:$0xff]
        %v1136 = vld [vmem:[%s271 + $0x1870] sm:$0xff]
        %v1137 = vld [vmem:[%s271 + $0x1878] sm:$0xff]
        %v1138 = vld [vmem:[%s271 + $0x1880] sm:$0xff]
        %v1139 = vld [vmem:[%s271 + $0x1888] sm:$0xff]
        %v1140 = vld [vmem:[%s271 + $0x1890] sm:$0xff]
        %v1141 = vld [vmem:[%s271 + $0x1898] sm:$0xff]
        %v1142 = vld [vmem:[%s271 + $0x18a0] sm:$0xff]
        %v1143 = vld [vmem:[%s271 + $0x18a8] sm:$0xff]
        %v1144 = vld [vmem:[%s271 + $0x18b0] sm:$0xff]
        %v1145 = vld [vmem:[%s271 + $0x18b8] sm:$0xff]
        %v1146 = vld [vmem:[%s271 + $0x18c0] sm:$0xff]
        %v1147 = vld [vmem:[%s271 + $0x18c8] sm:$0xff]
        %v1148 = vld [vmem:[%s271 + $0x18d0] sm:$0xff]
        %v1149 = vld [vmem:[%s271 + $0x18d8] sm:$0xff]
        %v1150 = vld [vmem:[%s271 + $0x18e0] sm:$0xff]
        %v1151 = vld [vmem:[%s271 + $0x18e8] sm:$0xff]
        %v1152 = vld [vmem:[%s271 + $0x18f0] sm:$0xff]
        %v1153 = vld [vmem:[%s271 + $0x18f8] sm:$0xff]
        %v1154 = vld [vmem:[%s271 + $0x1900] sm:$0xff]
        %v1155 = vld [vmem:[%s271 + $0x1908] sm:$0xff]
        %v1156 = vld [vmem:[%s271 + $0x1910] sm:$0xff]
        %v1157 = vld [vmem:[%s271 + $0x1918] sm:$0xff]
        %v1158 = vld [vmem:[%s271 + $0x1920] sm:$0xff]
        %v1159 = vld [vmem:[%s271 + $0x1928] sm:$0xff]
        %v1160 = vld [vmem:[%s271 + $0x1930] sm:$0xff]
        %v1161 = vld [vmem:[%s271 + $0x1938] sm:$0xff]
        %v1162 = vld [vmem:[%s271 + $0x1940] sm:$0xff]
        %v1163 = vld [vmem:[%s271 + $0x1948] sm:$0xff]
        %v1164 = vld [vmem:[%s271 + $0x1950] sm:$0xff]
        %v1165 = vld [vmem:[%s271 + $0x1958] sm:$0xff]
        %v1166 = vld [vmem:[%s271 + $0x1960] sm:$0xff]
        %v1167 = vld [vmem:[%s271 + $0x1968] sm:$0xff]
        %v1168 = vld [vmem:[%s271 + $0x1970] sm:$0xff]
        %v1169 = vld [vmem:[%s271 + $0x1978] sm:$0xff]
        %v1170 = vld [vmem:[%s271 + $0x1980] sm:$0xff]
        %v1171 = vld [vmem:[%s271 + $0x1988] sm:$0xff]
        %v1172 = vld [vmem:[%s271 + $0x1990] sm:$0xff]
        %v1173 = vld [vmem:[%s271 + $0x1998] sm:$0xff]
        %v1174 = vld [vmem:[%s271 + $0x19a0] sm:$0xff]
        %v1175 = vld [vmem:[%s271 + $0x19a8] sm:$0xff]
        %v1176 = vld [vmem:[%s271 + $0x19b0] sm:$0xff]
        %v1177 = vld [vmem:[%s271 + $0x19b8] sm:$0xff]
        %v1178 = vld [vmem:[%s271 + $0x19c0] sm:$0xff]
        %v1179 = vld [vmem:[%s271 + $0x19c8] sm:$0xff]
        %v1180 = vld [vmem:[%s271 + $0x19d0] sm:$0xff]
        %v1181 = vld [vmem:[%s271 + $0x19d8] sm:$0xff]
        %v1182 = vld [vmem:[%s271 + $0x19e0] sm:$0xff]
        %v1183 = vld [vmem:[%s271 + $0x19e8] sm:$0xff]
        %v1184 = vld [vmem:[%s271 + $0x19f0] sm:$0xff]
        %v1185 = vld [vmem:[%s271 + $0x19f8] sm:$0xff]
        %v1186 = vld [vmem:[%s271 + $0x1a00] sm:$0xff]
        %v1187 = vld [vmem:[%s271 + $0x1a08] sm:$0xff]
        %v1188 = vld [vmem:[%s271 + $0x1a10] sm:$0xff]
        %v1189 = vld [vmem:[%s271 + $0x1a18] sm:$0xff]
        %v1190 = vld [vmem:[%s271 + $0x1a20] sm:$0xff]
        %v1191 = vld [vmem:[%s271 + $0x1a28] sm:$0xff]
        %v1192 = vld [vmem:[%s271 + $0x1a30] sm:$0xff]
        %v1193 = vld [vmem:[%s271 + $0x1a38] sm:$0xff]
        %v1194 = vld [vmem:[%s271 + $0x1a40] sm:$0xff]
        %v1195 = vld [vmem:[%s271 + $0x1a48] sm:$0xff]
        %v1196 = vld [vmem:[%s271 + $0x1a50] sm:$0xff]
        %v1197 = vld [vmem:[%s271 + $0x1a58] sm:$0xff]
        %v1198 = vld [vmem:[%s271 + $0x1a60] sm:$0xff]
        %v1199 = vld [vmem:[%s271 + $0x1a68] sm:$0xff]
        %v1200 = vld [vmem:[%s271 + $0x1a70] sm:$0xff]
        %v1201 = vld [vmem:[%s271 + $0x1a78] sm:$0xff]
        %v1202 = vld [vmem:[%s271 + $0x1a80] sm:$0xff]
        %v1203 = vld [vmem:[%s271 + $0x1a88] sm:$0xff]
        %v1204 = vld [vmem:[%s271 + $0x1a90] sm:$0xff]
        %v1205 = vld [vmem:[%s271 + $0x1a98] sm:$0xff]
        %v1206 = vld [vmem:[%s271 + $0x1aa0] sm:$0xff]
        %v1207 = vld [vmem:[%s271 + $0x1aa8] sm:$0xff]
        %v1208 = vld [vmem:[%s271 + $0x1ab0] sm:$0xff]
        %v1209 = vld [vmem:[%s271 + $0x1ab8] sm:$0xff]
        %v1210 = vld [vmem:[%s271 + $0x1ac0] sm:$0xff]
        %v1211 = vld [vmem:[%s271 + $0x1ac8] sm:$0xff]
        %v1212 = vld [vmem:[%s271 + $0x1ad0] sm:$0xff]
        %v1213 = vld [vmem:[%s271 + $0x1ad8] sm:$0xff]
        %v1214 = vld [vmem:[%s271 + $0x1ae0] sm:$0xff]
        %v1215 = vld [vmem:[%s271 + $0x1ae8] sm:$0xff]
        %v1216 = vld [vmem:[%s271 + $0x1af0] sm:$0xff]
        %v1217 = vld [vmem:[%s271 + $0x1af8] sm:$0xff]
        %v1218 = vld [vmem:[%s271 + $0x1b00] sm:$0xff]
        %v1219 = vld [vmem:[%s271 + $0x1b08] sm:$0xff]
        %v1220 = vld [vmem:[%s271 + $0x1b10] sm:$0xff]
        %v1221 = vld [vmem:[%s271 + $0x1b18] sm:$0xff]
        %v1222 = vld [vmem:[%s271 + $0x1b20] sm:$0xff]
        %v1223 = vld [vmem:[%s271 + $0x1b28] sm:$0xff]
        %v1224 = vld [vmem:[%s271 + $0x1b30] sm:$0xff]
        %v1225 = vld [vmem:[%s271 + $0x1b38] sm:$0xff]
        %v1226 = vld [vmem:[%s271 + $0x1b40] sm:$0xff]
        %v1227 = vld [vmem:[%s271 + $0x1b48] sm:$0xff]
        %v1228 = vld [vmem:[%s271 + $0x1b50] sm:$0xff]
        %v1229 = vld [vmem:[%s271 + $0x1b58] sm:$0xff]
        %v1230 = vld [vmem:[%s271 + $0x1b60] sm:$0xff]
        %v1231 = vld [vmem:[%s271 + $0x1b68] sm:$0xff]
        %v1232 = vld [vmem:[%s271 + $0x1b70] sm:$0xff]
        %v1233 = vld [vmem:[%s271 + $0x1b78] sm:$0xff]
        %v1234 = vld [vmem:[%s271 + $0x1b80] sm:$0xff]
        %v1235 = vld [vmem:[%s271 + $0x1b88] sm:$0xff]
        %v1236 = vld [vmem:[%s271 + $0x1b90] sm:$0xff]
        %v1237 = vld [vmem:[%s271 + $0x1b98] sm:$0xff]
        %v1238 = vld [vmem:[%s271 + $0x1ba0] sm:$0xff]
        %v1239 = vld [vmem:[%s271 + $0x1ba8] sm:$0xff]
        %v1240 = vld [vmem:[%s271 + $0x1bb0] sm:$0xff]
        %v1241 = vld [vmem:[%s271 + $0x1bb8] sm:$0xff]
        %v1242 = vld [vmem:[%s271 + $0x1bc0] sm:$0xff]
        %v1243 = vld [vmem:[%s271 + $0x1bc8] sm:$0xff]
        %v1244 = vld [vmem:[%s271 + $0x1bd0] sm:$0xff]
        %v1245 = vld [vmem:[%s271 + $0x1bd8] sm:$0xff]
        %v1246 = vld [vmem:[%s271 + $0x1be0] sm:$0xff]
        %v1247 = vld [vmem:[%s271 + $0x1be8] sm:$0xff]
        %v1248 = vld [vmem:[%s271 + $0x1bf0] sm:$0xff]
        %v1249 = vld [vmem:[%s271 + $0x1bf8] sm:$0xff]
        %v1250 = vld [vmem:[%s271 + $0x1c00] sm:$0xff]
        %v1251 = vld [vmem:[%s271 + $0x1c08] sm:$0xff]
        %v1252 = vld [vmem:[%s271 + $0x1c10] sm:$0xff]
        %v1253 = vld [vmem:[%s271 + $0x1c18] sm:$0xff]
        %v1254 = vld [vmem:[%s271 + $0x1c20] sm:$0xff]
        %v1255 = vld [vmem:[%s271 + $0x1c28] sm:$0xff]
        %v1256 = vld [vmem:[%s271 + $0x1c30] sm:$0xff]
        %v1257 = vld [vmem:[%s271 + $0x1c38] sm:$0xff]
        %v1258 = vld [vmem:[%s271 + $0x1c40] sm:$0xff]
        %v1259 = vld [vmem:[%s271 + $0x1c48] sm:$0xff]
        %v1260 = vld [vmem:[%s271 + $0x1c50] sm:$0xff]
        %v1261 = vld [vmem:[%s271 + $0x1c58] sm:$0xff]
        %v1262 = vld [vmem:[%s271 + $0x1c60] sm:$0xff]
        %v1263 = vld [vmem:[%s271 + $0x1c68] sm:$0xff]
        %v1264 = vld [vmem:[%s271 + $0x1c70] sm:$0xff]
        %v1265 = vld [vmem:[%s271 + $0x1c78] sm:$0xff]
        %v1266 = vld [vmem:[%s271 + $0x1c80] sm:$0xff]
        %v1267 = vld [vmem:[%s271 + $0x1c88] sm:$0xff]
        %v1268 = vld [vmem:[%s271 + $0x1c90] sm:$0xff]
        %v1269 = vld [vmem:[%s271 + $0x1c98] sm:$0xff]
        %v1270 = vld [vmem:[%s271 + $0x1ca0] sm:$0xff]
        %v1271 = vld [vmem:[%s271 + $0x1ca8] sm:$0xff]
        %v1272 = vld [vmem:[%s271 + $0x1cb0] sm:$0xff]
        %v1273 = vld [vmem:[%s271 + $0x1cb8] sm:$0xff]
        %v1274 = vld [vmem:[%s271 + $0x1cc0] sm:$0xff]
        %v1275 = vld [vmem:[%s271 + $0x1cc8] sm:$0xff]
        %v1276 = vld [vmem:[%s271 + $0x1cd0] sm:$0xff]
        %v1277 = vld [vmem:[%s271 + $0x1cd8] sm:$0xff]
        %v1278 = vld [vmem:[%s271 + $0x1ce0] sm:$0xff]
        %v1279 = vld [vmem:[%s271 + $0x1ce8] sm:$0xff]
        %v1280 = vld [vmem:[%s271 + $0x1cf0] sm:$0xff]
        %v1281 = vld [vmem:[%s271 + $0x1cf8] sm:$0xff]
        %v1282 = vld [vmem:[%s271 + $0x1d00] sm:$0xff]
        %v1283 = vld [vmem:[%s271 + $0x1d08] sm:$0xff]
        %v1284 = vld [vmem:[%s271 + $0x1d10] sm:$0xff]
        %v1285 = vld [vmem:[%s271 + $0x1d18] sm:$0xff]
        %v1286 = vld [vmem:[%s271 + $0x1d20] sm:$0xff]
        %v1287 = vld [vmem:[%s271 + $0x1d28] sm:$0xff]
        %v1288 = vld [vmem:[%s271 + $0x1d30] sm:$0xff]
        %v1289 = vld [vmem:[%s271 + $0x1d38] sm:$0xff]
        %v1290 = vld [vmem:[%s271 + $0x1d40] sm:$0xff]
        %v1291 = vld [vmem:[%s271 + $0x1d48] sm:$0xff]
        %v1292 = vld [vmem:[%s271 + $0x1d50] sm:$0xff]
        %v1293 = vld [vmem:[%s271 + $0x1d58] sm:$0xff]
        %v1294 = vld [vmem:[%s271 + $0x1d60] sm:$0xff]
        %v1295 = vld [vmem:[%s271 + $0x1d68] sm:$0xff]
        %v1296 = vld [vmem:[%s271 + $0x1d70] sm:$0xff]
        %v1297 = vld [vmem:[%s271 + $0x1d78] sm:$0xff]
        %v1298 = vld [vmem:[%s271 + $0x1d80] sm:$0xff]
        %v1299 = vld [vmem:[%s271 + $0x1d88] sm:$0xff]
        %v1300 = vld [vmem:[%s271 + $0x1d90] sm:$0xff]
        %v1301 = vld [vmem:[%s271 + $0x1d98] sm:$0xff]
        %v1302 = vld [vmem:[%s271 + $0x1da0] sm:$0xff]
        %v1303 = vld [vmem:[%s271 + $0x1da8] sm:$0xff]
        %v1304 = vld [vmem:[%s271 + $0x1db0] sm:$0xff]
        %v1305 = vld [vmem:[%s271 + $0x1db8] sm:$0xff]
        %v1306 = vld [vmem:[%s271 + $0x1dc0] sm:$0xff]
        %v1307 = vld [vmem:[%s271 + $0x1dc8] sm:$0xff]
        %v1308 = vld [vmem:[%s271 + $0x1dd0] sm:$0xff]
        %v1309 = vld [vmem:[%s271 + $0x1dd8] sm:$0xff]
        %v1310 = vld [vmem:[%s271 + $0x1de0] sm:$0xff]
        %v1311 = vld [vmem:[%s271 + $0x1de8] sm:$0xff]
        %v1312 = vld [vmem:[%s271 + $0x1df0] sm:$0xff]
        %v1313 = vld [vmem:[%s271 + $0x1df8] sm:$0xff]
        %v1314 = vld [vmem:[%s271 + $0x1e00] sm:$0xff]
        %v1315 = vld [vmem:[%s271 + $0x1e08] sm:$0xff]
        %v1316 = vld [vmem:[%s271 + $0x1e10] sm:$0xff]
        %v1317 = vld [vmem:[%s271 + $0x1e18] sm:$0xff]
        %v1318 = vld [vmem:[%s271 + $0x1e20] sm:$0xff]
        %v1319 = vld [vmem:[%s271 + $0x1e28] sm:$0xff]
        %v1320 = vld [vmem:[%s271 + $0x1e30] sm:$0xff]
        %v1321 = vld [vmem:[%s271 + $0x1e38] sm:$0xff]
        %v1322 = vld [vmem:[%s271 + $0x1e40] sm:$0xff]
        %v1323 = vld [vmem:[%s271 + $0x1e48] sm:$0xff]
        %v1324 = vld [vmem:[%s271 + $0x1e50] sm:$0xff]
        %v1325 = vld [vmem:[%s271 + $0x1e58] sm:$0xff]
        %v1326 = vld [vmem:[%s271 + $0x1e60] sm:$0xff]
        %v1327 = vld [vmem:[%s271 + $0x1e68] sm:$0xff]
        %v1328 = vld [vmem:[%s271 + $0x1e70] sm:$0xff]
        %v1329 = vld [vmem:[%s271 + $0x1e78] sm:$0xff]
        %v1330 = vld [vmem:[%s271 + $0x1e80] sm:$0xff]
        %v1331 = vld [vmem:[%s271 + $0x1e88] sm:$0xff]
        %v1332 = vld [vmem:[%s271 + $0x1e90] sm:$0xff]
        %v1333 = vld [vmem:[%s271 + $0x1e98] sm:$0xff]
        %v1334 = vld [vmem:[%s271 + $0x1ea0] sm:$0xff]
        %v1335 = vld [vmem:[%s271 + $0x1ea8] sm:$0xff]
        %v1336 = vld [vmem:[%s271 + $0x1eb0] sm:$0xff]
        %v1337 = vld [vmem:[%s271 + $0x1eb8] sm:$0xff]
        %v1338 = vld [vmem:[%s271 + $0x1ec0] sm:$0xff]
        %v1339 = vld [vmem:[%s271 + $0x1ec8] sm:$0xff]
        %v1340 = vld [vmem:[%s271 + $0x1ed0] sm:$0xff]
        %v1341 = vld [vmem:[%s271 + $0x1ed8] sm:$0xff]
        %v1342 = vld [vmem:[%s271 + $0x1ee0] sm:$0xff]
        %v1343 = vld [vmem:[%s271 + $0x1ee8] sm:$0xff]
        %v1344 = vld [vmem:[%s271 + $0x1ef0] sm:$0xff]
        %v1345 = vld [vmem:[%s271 + $0x1ef8] sm:$0xff]
        %v1346 = vld [vmem:[%s271 + $0x1f00] sm:$0xff]
        %v1347 = vld [vmem:[%s271 + $0x1f08] sm:$0xff]
        %v1348 = vld [vmem:[%s271 + $0x1f10] sm:$0xff]
        %v1349 = vld [vmem:[%s271 + $0x1f18] sm:$0xff]
        %v1350 = vld [vmem:[%s271 + $0x1f20] sm:$0xff]
        %v1351 = vld [vmem:[%s271 + $0x1f28] sm:$0xff]
        %v1352 = vld [vmem:[%s271 + $0x1f30] sm:$0xff]
        %v1353 = vld [vmem:[%s271 + $0x1f38] sm:$0xff]
        %v1354 = vld [vmem:[%s271 + $0x1f40] sm:$0xff]
        %v1355 = vld [vmem:[%s271 + $0x1f48] sm:$0xff]
        %v1356 = vld [vmem:[%s271 + $0x1f50] sm:$0xff]
        %v1357 = vld [vmem:[%s271 + $0x1f58] sm:$0xff]
        %v1358 = vld [vmem:[%s271 + $0x1f60] sm:$0xff]
        %v1359 = vld [vmem:[%s271 + $0x1f68] sm:$0xff]
        %v1360 = vld [vmem:[%s271 + $0x1f70] sm:$0xff]
        %v1361 = vld [vmem:[%s271 + $0x1f78] sm:$0xff]
        %v1362 = vld [vmem:[%s271 + $0x1f80] sm:$0xff]
        %v1363 = vld [vmem:[%s271 + $0x1f88] sm:$0xff]
        %v1364 = vld [vmem:[%s271 + $0x1f90] sm:$0xff]
        %v1365 = vld [vmem:[%s271 + $0x1f98] sm:$0xff]
        %v1366 = vld [vmem:[%s271 + $0x1fa0] sm:$0xff]
        %v1367 = vld [vmem:[%s271 + $0x1fa8] sm:$0xff]
        %v1368 = vld [vmem:[%s271 + $0x1fb0] sm:$0xff]
        %v1369 = vld [vmem:[%s271 + $0x1fb8] sm:$0xff]
        %v1370 = vld [vmem:[%s271 + $0x1fc0] sm:$0xff]
        %v1371 = vld [vmem:[%s271 + $0x1fc8] sm:$0xff]
        %v1372 = vld [vmem:[%s271 + $0x1fd0] sm:$0xff]
        %v1373 = vld [vmem:[%s271 + $0x1fd8] sm:$0xff]
        %v1374 = vld [vmem:[%s271 + $0x1fe0] sm:$0xff]
        %v1375 = vld [vmem:[%s271 + $0x1fe8] sm:$0xff]
        %v1376 = vld [vmem:[%s271 + $0x1ff0] sm:$0xff]
        %v1377 = vld [vmem:[%s271 + $0x1ff8] sm:$0xff]
        %v1378 = vld [vmem:[%s271 + $0x2000] sm:$0xff]
        %v1379 = vld [vmem:[%s271 + $0x2008] sm:$0xff]
        %v1380 = vld [vmem:[%s271 + $0x2010] sm:$0xff]
        %v1381 = vld [vmem:[%s271 + $0x2018] sm:$0xff]
        %v1382 = vld [vmem:[%s271 + $0x2020] sm:$0xff]
        %v1383 = vld [vmem:[%s271 + $0x2028] sm:$0xff]
        %v1384 = vld [vmem:[%s271 + $0x2030] sm:$0xff]
        %v1385 = vld [vmem:[%s271 + $0x2038] sm:$0xff]
        %v1386 = vld [vmem:[%s271 + $0x2040] sm:$0xff]
        %v1387 = vld [vmem:[%s271 + $0x2048] sm:$0xff]
        %v1388 = vld [vmem:[%s271 + $0x2050] sm:$0xff]
        %v1389 = vld [vmem:[%s271 + $0x2058] sm:$0xff]
        %v1390 = vld [vmem:[%s271 + $0x2060] sm:$0xff]
        %v1391 = vld [vmem:[%s271 + $0x2068] sm:$0xff]
        %v1392 = vld [vmem:[%s271 + $0x2070] sm:$0xff]
        %v1393 = vld [vmem:[%s271 + $0x2078] sm:$0xff]
        %v1394 = vld [vmem:[%s271 + $0x2080] sm:$0xff]
        %v1395 = vld [vmem:[%s271 + $0x2088] sm:$0xff]
        %v1396 = vld [vmem:[%s271 + $0x2090] sm:$0xff]
        %v1397 = vld [vmem:[%s271 + $0x2098] sm:$0xff]
        %v1398 = vld [vmem:[%s271 + $0x20a0] sm:$0xff]
        %v1399 = vld [vmem:[%s271 + $0x20a8] sm:$0xff]
        %v1400 = vld [vmem:[%s271 + $0x20b0] sm:$0xff]
        %v1401 = vld [vmem:[%s271 + $0x20b8] sm:$0xff]
        %v1402 = vld [vmem:[%s271 + $0x20c0] sm:$0xff]
        %v1403 = vld [vmem:[%s271 + $0x20c8] sm:$0xff]
        %v1404 = vld [vmem:[%s271 + $0x20d0] sm:$0xff]
        %v1405 = vld [vmem:[%s271 + $0x20d8] sm:$0xff]
        %v1406 = vld [vmem:[%s271 + $0x20e0] sm:$0xff]
        %v1407 = vld [vmem:[%s271 + $0x20e8] sm:$0xff]
        %v1408 = vld [vmem:[%s271 + $0x20f0] sm:$0xff]
        %v1409 = vld [vmem:[%s271 + $0x20f8] sm:$0xff]
        %v1410 = vld [vmem:[%s271 + $0x2100] sm:$0xff]
        %v1411 = vld [vmem:[%s271 + $0x2108] sm:$0xff]
        %v1412 = vld [vmem:[%s271 + $0x2110] sm:$0xff]
        %v1413 = vld [vmem:[%s271 + $0x2118] sm:$0xff]
        %v1414 = vld [vmem:[%s271 + $0x2120] sm:$0xff]
        %v1415 = vld [vmem:[%s271 + $0x2128] sm:$0xff]
        %v1416 = vld [vmem:[%s271 + $0x2130] sm:$0xff]
        %v1417 = vld [vmem:[%s271 + $0x2138] sm:$0xff]
        %v1418 = vld [vmem:[%s271 + $0x2140] sm:$0xff]
        %v1419 = vld [vmem:[%s271 + $0x2148] sm:$0xff]
        %v1420 = vld [vmem:[%s271 + $0x2150] sm:$0xff]
        %v1421 = vld [vmem:[%s271 + $0x2158] sm:$0xff]
        %v1422 = vld [vmem:[%s271 + $0x2160] sm:$0xff]
        %v1423 = vld [vmem:[%s271 + $0x2168] sm:$0xff]
        %v1424 = vld [vmem:[%s271 + $0x2170] sm:$0xff]
        %v1425 = vld [vmem:[%s271 + $0x2178] sm:$0xff]
        %v1426 = vld [vmem:[%s271 + $0x2180] sm:$0xff]
        %v1427 = vld [vmem:[%s271 + $0x2188] sm:$0xff]
        %v1428 = vld [vmem:[%s271 + $0x2190] sm:$0xff]
        %v1429 = vld [vmem:[%s271 + $0x2198] sm:$0xff]
        %v1430 = vld [vmem:[%s271 + $0x21a0] sm:$0xff]
        %v1431 = vld [vmem:[%s271 + $0x21a8] sm:$0xff]
        %v1432 = vld [vmem:[%s271 + $0x21b0] sm:$0xff]
        %v1433 = vld [vmem:[%s271 + $0x21b8] sm:$0xff]
        %v1434 = vld [vmem:[%s271 + $0x21c0] sm:$0xff]
        %v1435 = vld [vmem:[%s271 + $0x21c8] sm:$0xff]
        %v1436 = vld [vmem:[%s271 + $0x21d0] sm:$0xff]
        %v1437 = vld [vmem:[%s271 + $0x21d8] sm:$0xff]
        %v1438 = vld [vmem:[%s271 + $0x21e0] sm:$0xff]
        %v1439 = vld [vmem:[%s271 + $0x21e8] sm:$0xff]
        %v1440 = vld [vmem:[%s271 + $0x21f0] sm:$0xff]
        %v1441 = vld [vmem:[%s271 + $0x21f8] sm:$0xff]
        %v1442 = vld [vmem:[%s271 + $0x2200] sm:$0xff]
        %v1443 = vld [vmem:[%s271 + $0x2208] sm:$0xff]
        %v1444 = vld [vmem:[%s271 + $0x2210] sm:$0xff]
        %v1445 = vld [vmem:[%s271 + $0x2218] sm:$0xff]
        %v1446 = vld [vmem:[%s271 + $0x2220] sm:$0xff]
        %v1447 = vld [vmem:[%s271 + $0x2228] sm:$0xff]
        %v1448 = vld [vmem:[%s271 + $0x2230] sm:$0xff]
        %v1449 = vld [vmem:[%s271 + $0x2238] sm:$0xff]
        %v1450 = vld [vmem:[%s271 + $0x2240] sm:$0xff]
        %v1451 = vld [vmem:[%s271 + $0x2248] sm:$0xff]
        %v1452 = vld [vmem:[%s271 + $0x2250] sm:$0xff]
        %v1453 = vld [vmem:[%s271 + $0x2258] sm:$0xff]
        %v1454 = vld [vmem:[%s271 + $0x2260] sm:$0xff]
        %v1455 = vld [vmem:[%s271 + $0x2268] sm:$0xff]
        %v1456 = vld [vmem:[%s271 + $0x2270] sm:$0xff]
        %v1457 = vld [vmem:[%s271 + $0x2278] sm:$0xff]
        %v1458 = vld [vmem:[%s271 + $0x2280] sm:$0xff]
        %v1459 = vld [vmem:[%s271 + $0x2288] sm:$0xff]
        %v1460 = vld [vmem:[%s271 + $0x2290] sm:$0xff]
        %v1461 = vld [vmem:[%s271 + $0x2298] sm:$0xff]
        %v1462 = vld [vmem:[%s271 + $0x22a0] sm:$0xff]
        %v1463 = vld [vmem:[%s271 + $0x22a8] sm:$0xff]
        %v1464 = vld [vmem:[%s271 + $0x22b0] sm:$0xff]
        %v1465 = vld [vmem:[%s271 + $0x22b8] sm:$0xff]
        %v1466 = vld [vmem:[%s271 + $0x22c0] sm:$0xff]
        %v1467 = vld [vmem:[%s271 + $0x22c8] sm:$0xff]
        %v1468 = vld [vmem:[%s271 + $0x22d0] sm:$0xff]
        %v1469 = vld [vmem:[%s271 + $0x22d8] sm:$0xff]
        %v1470 = vld [vmem:[%s271 + $0x22e0] sm:$0xff]
        %v1471 = vld [vmem:[%s271 + $0x22e8] sm:$0xff]
        %v1472 = vld [vmem:[%s271 + $0x22f0] sm:$0xff]
        %v1473 = vld [vmem:[%s271 + $0x22f8] sm:$0xff]
        %v1474 = vld [vmem:[%s271 + $0x2300] sm:$0xff]
        %v1475 = vld [vmem:[%s271 + $0x2308] sm:$0xff]
        %v1476 = vld [vmem:[%s271 + $0x2310] sm:$0xff]
        %v1477 = vld [vmem:[%s271 + $0x2318] sm:$0xff]
        %v1478 = vld [vmem:[%s271 + $0x2320] sm:$0xff]
        %v1479 = vld [vmem:[%s271 + $0x2328] sm:$0xff]
        %v1480 = vld [vmem:[%s271 + $0x2330] sm:$0xff]
        %v1481 = vld [vmem:[%s271 + $0x2338] sm:$0xff]
        %v1482 = vld [vmem:[%s271 + $0x2340] sm:$0xff]
        %v1483 = vld [vmem:[%s271 + $0x2348] sm:$0xff]
        %v1484 = vld [vmem:[%s271 + $0x2350] sm:$0xff]
        %v1485 = vld [vmem:[%s271 + $0x2358] sm:$0xff]
        %v1486 = vld [vmem:[%s271 + $0x2360] sm:$0xff]
        %v1487 = vld [vmem:[%s271 + $0x2368] sm:$0xff]
        %v1488 = vld [vmem:[%s271 + $0x2370] sm:$0xff]
        %v1489 = vld [vmem:[%s271 + $0x2378] sm:$0xff]
        %v1490 = vld [vmem:[%s271 + $0x2380] sm:$0xff]
        %v1491 = vld [vmem:[%s271 + $0x2388] sm:$0xff]
        %v1492 = vld [vmem:[%s271 + $0x2390] sm:$0xff]
        %v1493 = vld [vmem:[%s271 + $0x2398] sm:$0xff]
        %v1494 = vld [vmem:[%s271 + $0x23a0] sm:$0xff]
        %v1495 = vld [vmem:[%s271 + $0x23a8] sm:$0xff]
        %v1496 = vld [vmem:[%s271 + $0x23b0] sm:$0xff]
        %v1497 = vld [vmem:[%s271 + $0x23b8] sm:$0xff]
        %v1498 = vld [vmem:[%s271 + $0x23c0] sm:$0xff]
        %v1499 = vld [vmem:[%s271 + $0x23c8] sm:$0xff]
        %v1500 = vld [vmem:[%s271 + $0x23d0] sm:$0xff]
        %v1501 = vld [vmem:[%s271 + $0x23d8] sm:$0xff]
        %v1502 = vld [vmem:[%s271 + $0x23e0] sm:$0xff]
        %v1503 = vld [vmem:[%s271 + $0x23e8] sm:$0xff]
        %v1504 = vld [vmem:[%s271 + $0x23f0] sm:$0xff]
        %v1505 = vld [vmem:[%s271 + $0x23f8] sm:$0xff]
        %v1506 = vld [vmem:[%s271 + $0x2400] sm:$0xff]
        %v1507 = vld [vmem:[%s271 + $0x2408] sm:$0xff]
        %v1508 = vld [vmem:[%s271 + $0x2410] sm:$0xff]
        %v1509 = vld [vmem:[%s271 + $0x2418] sm:$0xff]
        %v1510 = vld [vmem:[%s271 + $0x2420] sm:$0xff]
        %v1511 = vld [vmem:[%s271 + $0x2428] sm:$0xff]
        %v1512 = vld [vmem:[%s271 + $0x2430] sm:$0xff]
        %v1513 = vld [vmem:[%s271 + $0x2438] sm:$0xff]
        %v1514 = vld [vmem:[%s271 + $0x2440] sm:$0xff]
        %v1515 = vld [vmem:[%s271 + $0x2448] sm:$0xff]
        %v1516 = vld [vmem:[%s271 + $0x2450] sm:$0xff]
        %v1517 = vld [vmem:[%s271 + $0x2458] sm:$0xff]
        %v1518 = vld [vmem:[%s271 + $0x2460] sm:$0xff]
        %v1519 = vld [vmem:[%s271 + $0x2468] sm:$0xff]
        %v1520 = vld [vmem:[%s271 + $0x2470] sm:$0xff]
        %v1521 = vld [vmem:[%s271 + $0x2478] sm:$0xff]
        %v1522 = vld [vmem:[%s271 + $0x2480] sm:$0xff]
        %v1523 = vld [vmem:[%s271 + $0x2488] sm:$0xff]
        %v1524 = vld [vmem:[%s271 + $0x2490] sm:$0xff]
        %v1525 = vld [vmem:[%s271 + $0x2498] sm:$0xff]
        %v1526 = vld [vmem:[%s271 + $0x24a0] sm:$0xff]
        %v1527 = vld [vmem:[%s271 + $0x24a8] sm:$0xff]
        %v1528 = vld [vmem:[%s271 + $0x24b0] sm:$0xff]
        %v1529 = vld [vmem:[%s271 + $0x24b8] sm:$0xff]
        %v1530 = vld [vmem:[%s271 + $0x24c0] sm:$0xff]
        %v1531 = vld [vmem:[%s271 + $0x24c8] sm:$0xff]
        %v1532 = vld [vmem:[%s271 + $0x24d0] sm:$0xff]
        %v1533 = vld [vmem:[%s271 + $0x24d8] sm:$0xff]
        %v1534 = vld [vmem:[%s271 + $0x24e0] sm:$0xff]
        %v1535 = vld [vmem:[%s271 + $0x24e8] sm:$0xff]
        %v1536 = vld [vmem:[%s271 + $0x24f0] sm:$0xff]
        %v1537 = vld [vmem:[%s271 + $0x24f8] sm:$0xff]
        %v1538 = vld [vmem:[%s271 + $0x2500] sm:$0xff]
        %v1539 = vld [vmem:[%s271 + $0x2508] sm:$0xff]
        %v1540 = vld [vmem:[%s271 + $0x2510] sm:$0xff]
        %v1541 = vld [vmem:[%s271 + $0x2518] sm:$0xff]
        %v1542 = vld [vmem:[%s271 + $0x2520] sm:$0xff]
        %v1543 = vld [vmem:[%s271 + $0x2528] sm:$0xff]
        %v1544 = vld [vmem:[%s271 + $0x2530] sm:$0xff]
        %v1545 = vld [vmem:[%s271 + $0x2538] sm:$0xff]
        %v1546 = vld [vmem:[%s271 + $0x2540] sm:$0xff]
        %v1547 = vld [vmem:[%s271 + $0x2548] sm:$0xff]
        %v1548 = vld [vmem:[%s271 + $0x2550] sm:$0xff]
        %v1549 = vld [vmem:[%s271 + $0x2558] sm:$0xff]
        %v1550 = vld [vmem:[%s271 + $0x2560] sm:$0xff]
        %v1551 = vld [vmem:[%s271 + $0x2568] sm:$0xff]
        %v1552 = vld [vmem:[%s271 + $0x2570] sm:$0xff]
        %v1553 = vld [vmem:[%s271 + $0x2578] sm:$0xff]
        %v1554 = vld [vmem:[%s271 + $0x2580] sm:$0xff]
        %v1555 = vld [vmem:[%s271 + $0x2588] sm:$0xff]
        %v1556 = vld [vmem:[%s271 + $0x2590] sm:$0xff]
        %v1557 = vld [vmem:[%s271 + $0x2598] sm:$0xff]
        %v1558 = vld [vmem:[%s271 + $0x25a0] sm:$0xff]
        %v1559 = vld [vmem:[%s271 + $0x25a8] sm:$0xff]
        %v1560 = vld [vmem:[%s271 + $0x25b0] sm:$0xff]
        %v1561 = vld [vmem:[%s271 + $0x25b8] sm:$0xff]
        %v1562 = vld [vmem:[%s271 + $0x25c0] sm:$0xff]
        %v1563 = vld [vmem:[%s271 + $0x25c8] sm:$0xff]
        %v1564 = vld [vmem:[%s271 + $0x25d0] sm:$0xff]
        %v1565 = vld [vmem:[%s271 + $0x25d8] sm:$0xff]
        %v1566 = vld [vmem:[%s271 + $0x25e0] sm:$0xff]
        %v1567 = vld [vmem:[%s271 + $0x25e8] sm:$0xff]
        %v1568 = vld [vmem:[%s271 + $0x25f0] sm:$0xff]
        %v1569 = vld [vmem:[%s271 + $0x25f8] sm:$0xff]
        %v1570 = vld [vmem:[%s271 + $0x2600] sm:$0xff]
        %v1571 = vld [vmem:[%s271 + $0x2608] sm:$0xff]
        %v1572 = vld [vmem:[%s271 + $0x2610] sm:$0xff]
        %v1573 = vld [vmem:[%s271 + $0x2618] sm:$0xff]
        %v1574 = vld [vmem:[%s271 + $0x2620] sm:$0xff]
        %v1575 = vld [vmem:[%s271 + $0x2628] sm:$0xff]
        %v1576 = vld [vmem:[%s271 + $0x2630] sm:$0xff]
        %v1577 = vld [vmem:[%s271 + $0x2638] sm:$0xff]
        %v1578 = vld [vmem:[%s271 + $0x2640] sm:$0xff]
        %v1579 = vld [vmem:[%s271 + $0x2648] sm:$0xff]
        %v1580 = vld [vmem:[%s271 + $0x2650] sm:$0xff]
        %v1581 = vld [vmem:[%s271 + $0x2658] sm:$0xff]
        %v1582 = vld [vmem:[%s271 + $0x2660] sm:$0xff]
        %v1583 = vld [vmem:[%s271 + $0x2668] sm:$0xff]
        %v1584 = vld [vmem:[%s271 + $0x2670] sm:$0xff]
        %v1585 = vld [vmem:[%s271 + $0x2678] sm:$0xff]
        %v1586 = vld [vmem:[%s271 + $0x2680] sm:$0xff]
        %v1587 = vld [vmem:[%s271 + $0x2688] sm:$0xff]
        %v1588 = vld [vmem:[%s271 + $0x2690] sm:$0xff]
        %v1589 = vld [vmem:[%s271 + $0x2698] sm:$0xff]
        %v1590 = vld [vmem:[%s271 + $0x26a0] sm:$0xff]
        %v1591 = vld [vmem:[%s271 + $0x26a8] sm:$0xff]
        %v1592 = vld [vmem:[%s271 + $0x26b0] sm:$0xff]
        %v1593 = vld [vmem:[%s271 + $0x26b8] sm:$0xff]
        %v1594 = vld [vmem:[%s271 + $0x26c0] sm:$0xff]
        %v1595 = vld [vmem:[%s271 + $0x26c8] sm:$0xff]
        %v1596 = vld [vmem:[%s271 + $0x26d0] sm:$0xff]
        %v1597 = vld [vmem:[%s271 + $0x26d8] sm:$0xff]
        %v1598 = vld [vmem:[%s271 + $0x26e0] sm:$0xff]
        %v1599 = vld [vmem:[%s271 + $0x26e8] sm:$0xff]
        %v1600 = vld [vmem:[%s271 + $0x26f0] sm:$0xff]
        %v1601 = vld [vmem:[%s271 + $0x26f8] sm:$0xff]
        %v1602 = vld [vmem:[%s271 + $0x2700] sm:$0xff]
        %v1603 = vld [vmem:[%s271 + $0x2708] sm:$0xff]
        %v1604 = vld [vmem:[%s271 + $0x2710] sm:$0xff]
        %v1605 = vld [vmem:[%s271 + $0x2718] sm:$0xff]
        %v1606 = vld [vmem:[%s271 + $0x2720] sm:$0xff]
        %v1607 = vld [vmem:[%s271 + $0x2728] sm:$0xff]
        %v1608 = vld [vmem:[%s271 + $0x2730] sm:$0xff]
        %v1609 = vld [vmem:[%s271 + $0x2738] sm:$0xff]
        %v1610 = vld [vmem:[%s271 + $0x2740] sm:$0xff]
        %v1611 = vld [vmem:[%s271 + $0x2748] sm:$0xff]
        %v1612 = vld [vmem:[%s271 + $0x2750] sm:$0xff]
        %v1613 = vld [vmem:[%s271 + $0x2758] sm:$0xff]
        %v1614 = vld [vmem:[%s271 + $0x2760] sm:$0xff]
        %v1615 = vld [vmem:[%s271 + $0x2768] sm:$0xff]
        %v1616 = vld [vmem:[%s271 + $0x2770] sm:$0xff]
        %v1617 = vld [vmem:[%s271 + $0x2778] sm:$0xff]
        %v1618 = vld [vmem:[%s271 + $0x2780] sm:$0xff]
        %v1619 = vld [vmem:[%s271 + $0x2788] sm:$0xff]
        %v1620 = vld [vmem:[%s271 + $0x2790] sm:$0xff]
        %v1621 = vld [vmem:[%s271 + $0x2798] sm:$0xff]
        %v1622 = vld [vmem:[%s271 + $0x27a0] sm:$0xff]
        %v1623 = vld [vmem:[%s271 + $0x27a8] sm:$0xff]
        %v1624 = vld [vmem:[%s271 + $0x27b0] sm:$0xff]
        %v1625 = vld [vmem:[%s271 + $0x27b8] sm:$0xff]
        %v1626 = vld [vmem:[%s271 + $0x27c0] sm:$0xff]
        %v1627 = vld [vmem:[%s271 + $0x27c8] sm:$0xff]
        %v1628 = vld [vmem:[%s271 + $0x27d0] sm:$0xff]
        %v1629 = vld [vmem:[%s271 + $0x27d8] sm:$0xff]
        %v1630 = vld [vmem:[%s271 + $0x27e0] sm:$0xff]
        %v1631 = vld [vmem:[%s271 + $0x27e8] sm:$0xff]
        %v1632 = vld [vmem:[%s271 + $0x27f0] sm:$0xff]
        %v1633 = vld [vmem:[%s271 + $0x27f8] sm:$0xff]
        %v1634 = vld [vmem:[%s271 + $0x2800] sm:$0xff]
        %v1635 = vld [vmem:[%s271 + $0x2808] sm:$0xff]
        %v1636 = vld [vmem:[%s271 + $0x2810] sm:$0xff]
        %v1637 = vld [vmem:[%s271 + $0x2818] sm:$0xff]
        %v1638 = vld [vmem:[%s271 + $0x2820] sm:$0xff]
        %v1639 = vld [vmem:[%s271 + $0x2828] sm:$0xff]
        %v1640 = vld [vmem:[%s271 + $0x2830] sm:$0xff]
        %v1641 = vld [vmem:[%s271 + $0x2838] sm:$0xff]
        %v1642 = vld [vmem:[%s271 + $0x2840] sm:$0xff]
        %v1643 = vld [vmem:[%s271 + $0x2848] sm:$0xff]
        %v1644 = vld [vmem:[%s271 + $0x2850] sm:$0xff]
        %v1645 = vld [vmem:[%s271 + $0x2858] sm:$0xff]
        %v1646 = vld [vmem:[%s271 + $0x2860] sm:$0xff]
        %v1647 = vld [vmem:[%s271 + $0x2868] sm:$0xff]
        %v1648 = vld [vmem:[%s271 + $0x2870] sm:$0xff]
        %v1649 = vld [vmem:[%s271 + $0x2878] sm:$0xff]
        %v1650 = vld [vmem:[%s271 + $0x2880] sm:$0xff]
        %v1651 = vld [vmem:[%s271 + $0x2888] sm:$0xff]
        %v1652 = vld [vmem:[%s271 + $0x2890] sm:$0xff]
        %v1653 = vld [vmem:[%s271 + $0x2898] sm:$0xff]
        %v1654 = vld [vmem:[%s271 + $0x28a0] sm:$0xff]
        %v1655 = vld [vmem:[%s271 + $0x28a8] sm:$0xff]
        %v1656 = vld [vmem:[%s271 + $0x28b0] sm:$0xff]
        %v1657 = vld [vmem:[%s271 + $0x28b8] sm:$0xff]
        %v1658 = vld [vmem:[%s271 + $0x28c0] sm:$0xff]
        %v1659 = vld [vmem:[%s271 + $0x28c8] sm:$0xff]
        %v1660 = vld [vmem:[%s271 + $0x28d0] sm:$0xff]
        %v1661 = vld [vmem:[%s271 + $0x28d8] sm:$0xff]
        %v1662 = vld [vmem:[%s271 + $0x28e0] sm:$0xff]
        %v1663 = vld [vmem:[%s271 + $0x28e8] sm:$0xff]
        %v1664 = vld [vmem:[%s271 + $0x28f0] sm:$0xff]
        %v1665 = vld [vmem:[%s271 + $0x28f8] sm:$0xff]
        %v1666 = vld [vmem:[%s271 + $0x2900] sm:$0xff]
        %v1667 = vld [vmem:[%s271 + $0x2908] sm:$0xff]
        %v1668 = vld [vmem:[%s271 + $0x2910] sm:$0xff]
        %v1669 = vld [vmem:[%s271 + $0x2918] sm:$0xff]
        %v1670 = vld [vmem:[%s271 + $0x2920] sm:$0xff]
        %v1671 = vld [vmem:[%s271 + $0x2928] sm:$0xff]
        %v1672 = vld [vmem:[%s271 + $0x2930] sm:$0xff]
        %v1673 = vld [vmem:[%s271 + $0x2938] sm:$0xff]
        %v1674 = vld [vmem:[%s271 + $0x2940] sm:$0xff]
        %v1675 = vld [vmem:[%s271 + $0x2948] sm:$0xff]
        %v1676 = vld [vmem:[%s271 + $0x2950] sm:$0xff]
        %v1677 = vld [vmem:[%s271 + $0x2958] sm:$0xff]
        %v1678 = vld [vmem:[%s271 + $0x2960] sm:$0xff]
        %v1679 = vld [vmem:[%s271 + $0x2968] sm:$0xff]
        %v1680 = vld [vmem:[%s271 + $0x2970] sm:$0xff]
        %v1681 = vld [vmem:[%s271 + $0x2978] sm:$0xff]
        %v1682 = vld [vmem:[%s271 + $0x2980] sm:$0xff]
        %v1683 = vld [vmem:[%s271 + $0x2988] sm:$0xff]
        %v1684 = vld [vmem:[%s271 + $0x2990] sm:$0xff]
        %v1685 = vld [vmem:[%s271 + $0x2998] sm:$0xff]
        %v1686 = vld [vmem:[%s271 + $0x29a0] sm:$0xff]
        %v1687 = vld [vmem:[%s271 + $0x29a8] sm:$0xff]
        %v1688 = vld [vmem:[%s271 + $0x29b0] sm:$0xff]
        %v1689 = vld [vmem:[%s271 + $0x29b8] sm:$0xff]
        %v1690 = vld [vmem:[%s271 + $0x29c0] sm:$0xff]
        %v1691 = vld [vmem:[%s271 + $0x29c8] sm:$0xff]
        %v1692 = vld [vmem:[%s271 + $0x29d0] sm:$0xff]
        %v1693 = vld [vmem:[%s271 + $0x29d8] sm:$0xff]
        %v1694 = vld [vmem:[%s271 + $0x29e0] sm:$0xff]
        %v1695 = vld [vmem:[%s271 + $0x29e8] sm:$0xff]
        %v1696 = vld [vmem:[%s271 + $0x29f0] sm:$0xff]
        %v1697 = vld [vmem:[%s271 + $0x29f8] sm:$0xff]
        %v1698 = vld [vmem:[%s271 + $0x2a00] sm:$0xff]
        %v1699 = vld [vmem:[%s271 + $0x2a08] sm:$0xff]
        %v1700 = vld [vmem:[%s271 + $0x2a10] sm:$0xff]
        %v1701 = vld [vmem:[%s271 + $0x2a18] sm:$0xff]
        %v1702 = vld [vmem:[%s271 + $0x2a20] sm:$0xff]
        %v1703 = vld [vmem:[%s271 + $0x2a28] sm:$0xff]
        %v1704 = vld [vmem:[%s271 + $0x2a30] sm:$0xff]
        %v1705 = vld [vmem:[%s271 + $0x2a38] sm:$0xff]
        %v1706 = vld [vmem:[%s271 + $0x2a40] sm:$0xff]
        %v1707 = vld [vmem:[%s271 + $0x2a48] sm:$0xff]
        %v1708 = vld [vmem:[%s271 + $0x2a50] sm:$0xff]
        %v1709 = vld [vmem:[%s271 + $0x2a58] sm:$0xff]
        %v1710 = vld [vmem:[%s271 + $0x2a60] sm:$0xff]
        %v1711 = vld [vmem:[%s271 + $0x2a68] sm:$0xff]
        %v1712 = vld [vmem:[%s271 + $0x2a70] sm:$0xff]
        %v1713 = vld [vmem:[%s271 + $0x2a78] sm:$0xff]
        %v1714 = vld [vmem:[%s271 + $0x2a80] sm:$0xff]
        %v1715 = vld [vmem:[%s271 + $0x2a88] sm:$0xff]
        %v1716 = vld [vmem:[%s271 + $0x2a90] sm:$0xff]
        %v1717 = vld [vmem:[%s271 + $0x2a98] sm:$0xff]
        %v1718 = vld [vmem:[%s271 + $0x2aa0] sm:$0xff]
        %v1719 = vld [vmem:[%s271 + $0x2aa8] sm:$0xff]
        %v1720 = vld [vmem:[%s271 + $0x2ab0] sm:$0xff]
        %v1721 = vld [vmem:[%s271 + $0x2ab8] sm:$0xff]
        %v1722 = vld [vmem:[%s271 + $0x2ac0] sm:$0xff]
        %v1723 = vld [vmem:[%s271 + $0x2ac8] sm:$0xff]
        %v1724 = vld [vmem:[%s271 + $0x2ad0] sm:$0xff]
        %v1725 = vld [vmem:[%s271 + $0x2ad8] sm:$0xff]
        %v1726 = vld [vmem:[%s271 + $0x2ae0] sm:$0xff]
        %v1727 = vld [vmem:[%s271 + $0x2ae8] sm:$0xff]
        %v1728 = vld [vmem:[%s271 + $0x2af0] sm:$0xff]
        %v1729 = vld [vmem:[%s271 + $0x2af8] sm:$0xff]
        %v1730 = vld [vmem:[%s271 + $0x2b00] sm:$0xff]
        %v1731 = vld [vmem:[%s271 + $0x2b08] sm:$0xff]
        %v1732 = vld [vmem:[%s271 + $0x2b10] sm:$0xff]
        %v1733 = vld [vmem:[%s271 + $0x2b18] sm:$0xff]
        %v1734 = vld [vmem:[%s271 + $0x2b20] sm:$0xff]
        %v1735 = vld [vmem:[%s271 + $0x2b28] sm:$0xff]
        %v1736 = vld [vmem:[%s271 + $0x2b30] sm:$0xff]
        %v1737 = vld [vmem:[%s271 + $0x2b38] sm:$0xff]
        %v1738 = vld [vmem:[%s271 + $0x2b40] sm:$0xff]
        %v1739 = vld [vmem:[%s271 + $0x2b48] sm:$0xff]
        %v1740 = vld [vmem:[%s271 + $0x2b50] sm:$0xff]
        %v1741 = vld [vmem:[%s271 + $0x2b58] sm:$0xff]
        %v1742 = vld [vmem:[%s271 + $0x2b60] sm:$0xff]
        %v1743 = vld [vmem:[%s271 + $0x2b68] sm:$0xff]
        %v1744 = vld [vmem:[%s271 + $0x2b70] sm:$0xff]
        %v1745 = vld [vmem:[%s271 + $0x2b78] sm:$0xff]
        %v1746 = vld [vmem:[%s271 + $0x2b80] sm:$0xff]
        %v1747 = vld [vmem:[%s271 + $0x2b88] sm:$0xff]
        %v1748 = vld [vmem:[%s271 + $0x2b90] sm:$0xff]
        %v1749 = vld [vmem:[%s271 + $0x2b98] sm:$0xff]
        %v1750 = vld [vmem:[%s271 + $0x2ba0] sm:$0xff]
        %v1751 = vld [vmem:[%s271 + $0x2ba8] sm:$0xff]
        %v1752 = vld [vmem:[%s271 + $0x2bb0] sm:$0xff]
        %v1753 = vld [vmem:[%s271 + $0x2bb8] sm:$0xff]
        %v1754 = vld [vmem:[%s271 + $0x2bc0] sm:$0xff]
        %v1755 = vld [vmem:[%s271 + $0x2bc8] sm:$0xff]
        %v1756 = vld [vmem:[%s271 + $0x2bd0] sm:$0xff]
        %v1757 = vld [vmem:[%s271 + $0x2bd8] sm:$0xff]
        %v1758 = vld [vmem:[%s271 + $0x2be0] sm:$0xff]
        %v1759 = vld [vmem:[%s271 + $0x2be8] sm:$0xff]
        %v1760 = vld [vmem:[%s271 + $0x2bf0] sm:$0xff]
        %v1761 = vld [vmem:[%s271 + $0x2bf8] sm:$0xff]
        %v1762 = vld [vmem:[%s271 + $0x2c00] sm:$0xff]
        %v1763 = vld [vmem:[%s271 + $0x2c08] sm:$0xff]
        %v1764 = vld [vmem:[%s271 + $0x2c10] sm:$0xff]
        %v1765 = vld [vmem:[%s271 + $0x2c18] sm:$0xff]
        %v1766 = vld [vmem:[%s271 + $0x2c20] sm:$0xff]
        %v1767 = vld [vmem:[%s271 + $0x2c28] sm:$0xff]
        %v1768 = vld [vmem:[%s271 + $0x2c30] sm:$0xff]
        %v1769 = vld [vmem:[%s271 + $0x2c38] sm:$0xff]
        %v1770 = vld [vmem:[%s271 + $0x2c40] sm:$0xff]
        %v1771 = vld [vmem:[%s271 + $0x2c48] sm:$0xff]
        %v1772 = vld [vmem:[%s271 + $0x2c50] sm:$0xff]
        %v1773 = vld [vmem:[%s271 + $0x2c58] sm:$0xff]
        %v1774 = vld [vmem:[%s271 + $0x2c60] sm:$0xff]
        %v1775 = vld [vmem:[%s271 + $0x2c68] sm:$0xff]
        %v1776 = vld [vmem:[%s271 + $0x2c70] sm:$0xff]
        %v1777 = vld [vmem:[%s271 + $0x2c78] sm:$0xff]
        %v1778 = vld [vmem:[%s271 + $0x2c80] sm:$0xff]
        %v1779 = vld [vmem:[%s271 + $0x2c88] sm:$0xff]
        %v1780 = vld [vmem:[%s271 + $0x2c90] sm:$0xff]
        %v1781 = vld [vmem:[%s271 + $0x2c98] sm:$0xff]
        %v1782 = vld [vmem:[%s271 + $0x2ca0] sm:$0xff]
        %v1783 = vld [vmem:[%s271 + $0x2ca8] sm:$0xff]
        %v1784 = vld [vmem:[%s271 + $0x2cb0] sm:$0xff]
        %v1785 = vld [vmem:[%s271 + $0x2cb8] sm:$0xff]
        %v1786 = vld [vmem:[%s271 + $0x2cc0] sm:$0xff]
        %v1787 = vld [vmem:[%s271 + $0x2cc8] sm:$0xff]
        %v1788 = vld [vmem:[%s271 + $0x2cd0] sm:$0xff]
        %v1789 = vld [vmem:[%s271 + $0x2cd8] sm:$0xff]
        %v1790 = vld [vmem:[%s271 + $0x2ce0] sm:$0xff]
        %v1791 = vld [vmem:[%s271 + $0x2ce8] sm:$0xff]
        %v1792 = vld [vmem:[%s271 + $0x2cf0] sm:$0xff]
        %v1793 = vld [vmem:[%s271 + $0x2cf8] sm:$0xff]
        %v1794 = vld [vmem:[%s271 + $0x2d00] sm:$0xff]
        %v1795 = vld [vmem:[%s271 + $0x2d08] sm:$0xff]
        %v1796 = vld [vmem:[%s271 + $0x2d10] sm:$0xff]
        %v1797 = vld [vmem:[%s271 + $0x2d18] sm:$0xff]
        %v1798 = vld [vmem:[%s271 + $0x2d20] sm:$0xff]
        %v1799 = vld [vmem:[%s271 + $0x2d28] sm:$0xff]
        %v1800 = vld [vmem:[%s271 + $0x2d30] sm:$0xff]
        %v1801 = vld [vmem:[%s271 + $0x2d38] sm:$0xff]
        %v1802 = vld [vmem:[%s271 + $0x2d40] sm:$0xff]
        %v1803 = vld [vmem:[%s271 + $0x2d48] sm:$0xff]
        %v1804 = vld [vmem:[%s271 + $0x2d50] sm:$0xff]
        %v1805 = vld [vmem:[%s271 + $0x2d58] sm:$0xff]
        %v1806 = vld [vmem:[%s271 + $0x2d60] sm:$0xff]
        %v1807 = vld [vmem:[%s271 + $0x2d68] sm:$0xff]
        %v1808 = vld [vmem:[%s271 + $0x2d70] sm:$0xff]
        %v1809 = vld [vmem:[%s271 + $0x2d78] sm:$0xff]
        %v1810 = vld [vmem:[%s271 + $0x2d80] sm:$0xff]
        %v1811 = vld [vmem:[%s271 + $0x2d88] sm:$0xff]
        %v1812 = vld [vmem:[%s271 + $0x2d90] sm:$0xff]
        %v1813 = vld [vmem:[%s271 + $0x2d98] sm:$0xff]
        %v1814 = vld [vmem:[%s271 + $0x2da0] sm:$0xff]
        %v1815 = vld [vmem:[%s271 + $0x2da8] sm:$0xff]
        %v1816 = vld [vmem:[%s271 + $0x2db0] sm:$0xff]
        %v1817 = vld [vmem:[%s271 + $0x2db8] sm:$0xff]
        %v1818 = vld [vmem:[%s271 + $0x2dc0] sm:$0xff]
        %v1819 = vld [vmem:[%s271 + $0x2dc8] sm:$0xff]
        %v1820 = vld [vmem:[%s271 + $0x2dd0] sm:$0xff]
        %v1821 = vld [vmem:[%s271 + $0x2dd8] sm:$0xff]
        %v1822 = vld [vmem:[%s271 + $0x2de0] sm:$0xff]
        %v1823 = vld [vmem:[%s271 + $0x2de8] sm:$0xff]
        %v1824 = vld [vmem:[%s271 + $0x2df0] sm:$0xff]
        %v1825 = vld [vmem:[%s271 + $0x2df8] sm:$0xff]
        %v1826 = vld [vmem:[%s271 + $0x2e00] sm:$0xff]
        %v1827 = vld [vmem:[%s271 + $0x2e08] sm:$0xff]
        %v1828 = vld [vmem:[%s271 + $0x2e10] sm:$0xff]
        %v1829 = vld [vmem:[%s271 + $0x2e18] sm:$0xff]
        %v1830 = vld [vmem:[%s271 + $0x2e20] sm:$0xff]
        %v1831 = vld [vmem:[%s271 + $0x2e28] sm:$0xff]
        %v1832 = vld [vmem:[%s271 + $0x2e30] sm:$0xff]
        %v1833 = vld [vmem:[%s271 + $0x2e38] sm:$0xff]
        %v1834 = vld [vmem:[%s271 + $0x2e40] sm:$0xff]
        %v1835 = vld [vmem:[%s271 + $0x2e48] sm:$0xff]
        %v1836 = vld [vmem:[%s271 + $0x2e50] sm:$0xff]
        %v1837 = vld [vmem:[%s271 + $0x2e58] sm:$0xff]
        %v1838 = vld [vmem:[%s271 + $0x2e60] sm:$0xff]
        %v1839 = vld [vmem:[%s271 + $0x2e68] sm:$0xff]
        %v1840 = vld [vmem:[%s271 + $0x2e70] sm:$0xff]
        %v1841 = vld [vmem:[%s271 + $0x2e78] sm:$0xff]
        %v1842 = vld [vmem:[%s271 + $0x2e80] sm:$0xff]
        %v1843 = vld [vmem:[%s271 + $0x2e88] sm:$0xff]
        %v1844 = vld [vmem:[%s271 + $0x2e90] sm:$0xff]
        %v1845 = vld [vmem:[%s271 + $0x2e98] sm:$0xff]
        %v1846 = vld [vmem:[%s271 + $0x2ea0] sm:$0xff]
        %v1847 = vld [vmem:[%s271 + $0x2ea8] sm:$0xff]
        %v1848 = vld [vmem:[%s271 + $0x2eb0] sm:$0xff]
        %v1849 = vld [vmem:[%s271 + $0x2eb8] sm:$0xff]
        %v1850 = vld [vmem:[%s271 + $0x2ec0] sm:$0xff]
        %v1851 = vld [vmem:[%s271 + $0x2ec8] sm:$0xff]
        %v1852 = vld [vmem:[%s271 + $0x2ed0] sm:$0xff]
        %v1853 = vld [vmem:[%s271 + $0x2ed8] sm:$0xff]
        %v1854 = vld [vmem:[%s271 + $0x2ee0] sm:$0xff]
        %v1855 = vld [vmem:[%s271 + $0x2ee8] sm:$0xff]
        %v1856 = vld [vmem:[%s271 + $0x2ef0] sm:$0xff]
        %v1857 = vld [vmem:[%s271 + $0x2ef8] sm:$0xff]
        %v1858 = vld [vmem:[%s271 + $0x2f00] sm:$0xff]
        %v1859 = vld [vmem:[%s271 + $0x2f08] sm:$0xff]
        %v1860 = vld [vmem:[%s271 + $0x2f10] sm:$0xff]
        %v1861 = vld [vmem:[%s271 + $0x2f18] sm:$0xff]
        %v1862 = vld [vmem:[%s271 + $0x2f20] sm:$0xff]
        %v1863 = vld [vmem:[%s271 + $0x2f28] sm:$0xff]
        %v1864 = vld [vmem:[%s271 + $0x2f30] sm:$0xff]
        %v1865 = vld [vmem:[%s271 + $0x2f38] sm:$0xff]
        %v1866 = vld [vmem:[%s271 + $0x2f40] sm:$0xff]
        %v1867 = vld [vmem:[%s271 + $0x2f48] sm:$0xff]
        %v1868 = vld [vmem:[%s271 + $0x2f50] sm:$0xff]
        %v1869 = vld [vmem:[%s271 + $0x2f58] sm:$0xff]
        %v1870 = vld [vmem:[%s271 + $0x2f60] sm:$0xff]
        %v1871 = vld [vmem:[%s271 + $0x2f68] sm:$0xff]
        %v1872 = vld [vmem:[%s271 + $0x2f70] sm:$0xff]
        %v1873 = vld [vmem:[%s271 + $0x2f78] sm:$0xff]
        %v1874 = vld [vmem:[%s271 + $0x2f80] sm:$0xff]
        %v1875 = vld [vmem:[%s271 + $0x2f88] sm:$0xff]
        %v1876 = vld [vmem:[%s271 + $0x2f90] sm:$0xff]
        %v1877 = vld [vmem:[%s271 + $0x2f98] sm:$0xff]
        %v1878 = vld [vmem:[%s271 + $0x2fa0] sm:$0xff]
        %v1879 = vld [vmem:[%s271 + $0x2fa8] sm:$0xff]
        %v1880 = vld [vmem:[%s271 + $0x2fb0] sm:$0xff]
        %v1881 = vld [vmem:[%s271 + $0x2fb8] sm:$0xff]
        %v1882 = vld [vmem:[%s271 + $0x2fc0] sm:$0xff]
        %v1883 = vld [vmem:[%s271 + $0x2fc8] sm:$0xff]
        %v1884 = vld [vmem:[%s271 + $0x2fd0] sm:$0xff]
        %v1885 = vld [vmem:[%s271 + $0x2fd8] sm:$0xff]
        %v1886 = vld [vmem:[%s271 + $0x2fe0] sm:$0xff]
        %v1887 = vld [vmem:[%s271 + $0x2fe8] sm:$0xff]
        %v1888 = vld [vmem:[%s271 + $0x2ff0] sm:$0xff]
        %v1889 = vld [vmem:[%s271 + $0x2ff8] sm:$0xff]
        %v1890 = vld [vmem:[%s271 + $0x3000] sm:$0xff]
        %v1891 = vld [vmem:[%s271 + $0x3008] sm:$0xff]
        %v1892 = vld [vmem:[%s271 + $0x3010] sm:$0xff]
        %v1893 = vld [vmem:[%s271 + $0x3018] sm:$0xff]
        %v1894 = vld [vmem:[%s271 + $0x3020] sm:$0xff]
        %v1895 = vld [vmem:[%s271 + $0x3028] sm:$0xff]
        %v1896 = vld [vmem:[%s271 + $0x3030] sm:$0xff]
        %v1897 = vld [vmem:[%s271 + $0x3038] sm:$0xff]
        %v1898 = vld [vmem:[%s271 + $0x3040] sm:$0xff]
        %v1899 = vld [vmem:[%s271 + $0x3048] sm:$0xff]
        %v1900 = vld [vmem:[%s271 + $0x3050] sm:$0xff]
        %v1901 = vld [vmem:[%s271 + $0x3058] sm:$0xff]
        %v1902 = vld [vmem:[%s271 + $0x3060] sm:$0xff]
        %v1903 = vld [vmem:[%s271 + $0x3068] sm:$0xff]
        %v1904 = vld [vmem:[%s271 + $0x3070] sm:$0xff]
        %v1905 = vld [vmem:[%s271 + $0x3078] sm:$0xff]
        %v1906 = vld [vmem:[%s271 + $0x3080] sm:$0xff]
        %v1907 = vld [vmem:[%s271 + $0x3088] sm:$0xff]
        %v1908 = vld [vmem:[%s271 + $0x3090] sm:$0xff]
        %v1909 = vld [vmem:[%s271 + $0x3098] sm:$0xff]
        %v1910 = vld [vmem:[%s271 + $0x30a0] sm:$0xff]
        %v1911 = vld [vmem:[%s271 + $0x30a8] sm:$0xff]
        %v1912 = vld [vmem:[%s271 + $0x30b0] sm:$0xff]
        %v1913 = vld [vmem:[%s271 + $0x30b8] sm:$0xff]
        %v1914 = vld [vmem:[%s271 + $0x30c0] sm:$0xff]
        %v1915 = vld [vmem:[%s271 + $0x30c8] sm:$0xff]
        %v1916 = vld [vmem:[%s271 + $0x30d0] sm:$0xff]
        %v1917 = vld [vmem:[%s271 + $0x30d8] sm:$0xff]
        %v1918 = vld [vmem:[%s271 + $0x30e0] sm:$0xff]
        %v1919 = vld [vmem:[%s271 + $0x30e8] sm:$0xff]
        %v1920 = vld [vmem:[%s271 + $0x30f0] sm:$0xff]
        %v1921 = vld [vmem:[%s271 + $0x30f8] sm:$0xff]
        %v1922 = vld [vmem:[%s271 + $0x3100] sm:$0xff]
        %v1923 = vld [vmem:[%s271 + $0x3108] sm:$0xff]
        %v1924 = vld [vmem:[%s271 + $0x3110] sm:$0xff]
        %v1925 = vld [vmem:[%s271 + $0x3118] sm:$0xff]
        %v1926 = vld [vmem:[%s271 + $0x3120] sm:$0xff]
        %v1927 = vld [vmem:[%s271 + $0x3128] sm:$0xff]
        %v1928 = vld [vmem:[%s271 + $0x3130] sm:$0xff]
        %v1929 = vld [vmem:[%s271 + $0x3138] sm:$0xff]
        %v1930 = vld [vmem:[%s271 + $0x3140] sm:$0xff]
        %v1931 = vld [vmem:[%s271 + $0x3148] sm:$0xff]
        %v1932 = vld [vmem:[%s271 + $0x3150] sm:$0xff]
        %v1933 = vld [vmem:[%s271 + $0x3158] sm:$0xff]
        %v1934 = vld [vmem:[%s271 + $0x3160] sm:$0xff]
        %v1935 = vld [vmem:[%s271 + $0x3168] sm:$0xff]
        %v1936 = vld [vmem:[%s271 + $0x3170] sm:$0xff]
        %v1937 = vld [vmem:[%s271 + $0x3178] sm:$0xff]
        %v1938 = vld [vmem:[%s271 + $0x3180] sm:$0xff]
        %v1939 = vld [vmem:[%s271 + $0x3188] sm:$0xff]
        %v1940 = vld [vmem:[%s271 + $0x3190] sm:$0xff]
        %v1941 = vld [vmem:[%s271 + $0x3198] sm:$0xff]
        %v1942 = vld [vmem:[%s271 + $0x31a0] sm:$0xff]
        %v1943 = vld [vmem:[%s271 + $0x31a8] sm:$0xff]
        %v1944 = vld [vmem:[%s271 + $0x31b0] sm:$0xff]
        %v1945 = vld [vmem:[%s271 + $0x31b8] sm:$0xff]
        %v1946 = vld [vmem:[%s271 + $0x31c0] sm:$0xff]
        %v1947 = vld [vmem:[%s271 + $0x31c8] sm:$0xff]
        %v1948 = vld [vmem:[%s271 + $0x31d0] sm:$0xff]
        %v1949 = vld [vmem:[%s271 + $0x31d8] sm:$0xff]
        %v1950 = vld [vmem:[%s271 + $0x31e0] sm:$0xff]
        %v1951 = vld [vmem:[%s271 + $0x31e8] sm:$0xff]
        %v1952 = vld [vmem:[%s271 + $0x31f0] sm:$0xff]
        %v1953 = vld [vmem:[%s271 + $0x31f8] sm:$0xff]
        %v1954 = vld [vmem:[%s271 + $0x3200] sm:$0xff]
        %v1955 = vld [vmem:[%s271 + $0x3208] sm:$0xff]
        %v1956 = vld [vmem:[%s271 + $0x3210] sm:$0xff]
        %v1957 = vld [vmem:[%s271 + $0x3218] sm:$0xff]
        %v1958 = vld [vmem:[%s271 + $0x3220] sm:$0xff]
        %v1959 = vld [vmem:[%s271 + $0x3228] sm:$0xff]
        %v1960 = vld [vmem:[%s271 + $0x3230] sm:$0xff]
        %v1961 = vld [vmem:[%s271 + $0x3238] sm:$0xff]
        %v1962 = vld [vmem:[%s271 + $0x3240] sm:$0xff]
        %v1963 = vld [vmem:[%s271 + $0x3248] sm:$0xff]
        %v1964 = vld [vmem:[%s271 + $0x3250] sm:$0xff]
        %v1965 = vld [vmem:[%s271 + $0x3258] sm:$0xff]
        %v1966 = vld [vmem:[%s271 + $0x3260] sm:$0xff]
        %v1967 = vld [vmem:[%s271 + $0x3268] sm:$0xff]
        %v1968 = vld [vmem:[%s271 + $0x3270] sm:$0xff]
        %v1969 = vld [vmem:[%s271 + $0x3278] sm:$0xff]
        %v1970 = vld [vmem:[%s271 + $0x3280] sm:$0xff]
        %v1971 = vld [vmem:[%s271 + $0x3288] sm:$0xff]
        %v1972 = vld [vmem:[%s271 + $0x3290] sm:$0xff]
        %v1973 = vld [vmem:[%s271 + $0x3298] sm:$0xff]
        %v1974 = vld [vmem:[%s271 + $0x32a0] sm:$0xff]
        %v1975 = vld [vmem:[%s271 + $0x32a8] sm:$0xff]
        %v1976 = vld [vmem:[%s271 + $0x32b0] sm:$0xff]
        %v1977 = vld [vmem:[%s271 + $0x32b8] sm:$0xff]
        %v1978 = vld [vmem:[%s271 + $0x32c0] sm:$0xff]
        %v1979 = vld [vmem:[%s271 + $0x32c8] sm:$0xff]
        %v1980 = vld [vmem:[%s271 + $0x32d0] sm:$0xff]
        %v1981 = vld [vmem:[%s271 + $0x32d8] sm:$0xff]
        %v1982 = vld [vmem:[%s271 + $0x32e0] sm:$0xff]
        %v1983 = vld [vmem:[%s271 + $0x32e8] sm:$0xff]
        %v1984 = vld [vmem:[%s271 + $0x32f0] sm:$0xff]
        %v1985 = vld [vmem:[%s271 + $0x32f8] sm:$0xff]
        %v1986 = vld [vmem:[%s271 + $0x3300] sm:$0xff]
        %v1987 = vld [vmem:[%s271 + $0x3308] sm:$0xff]
        %v1988 = vld [vmem:[%s271 + $0x3310] sm:$0xff]
        %v1989 = vld [vmem:[%s271 + $0x3318] sm:$0xff]
        %v1990 = vld [vmem:[%s271 + $0x3320] sm:$0xff]
        %v1991 = vld [vmem:[%s271 + $0x3328] sm:$0xff]
        %v1992 = vld [vmem:[%s271 + $0x3330] sm:$0xff]
        %v1993 = vld [vmem:[%s271 + $0x3338] sm:$0xff]
        %v1994 = vld [vmem:[%s271 + $0x3340] sm:$0xff]
        %v1995 = vld [vmem:[%s271 + $0x3348] sm:$0xff]
        %v1996 = vld [vmem:[%s271 + $0x3350] sm:$0xff]
        %v1997 = vld [vmem:[%s271 + $0x3358] sm:$0xff]
        %v1998 = vld [vmem:[%s271 + $0x3360] sm:$0xff]
        %v1999 = vld [vmem:[%s271 + $0x3368] sm:$0xff]
        %v2000 = vld [vmem:[%s271 + $0x3370] sm:$0xff]
        %v2001 = vld [vmem:[%s271 + $0x3378] sm:$0xff]
        %v2002 = vld [vmem:[%s271 + $0x3380] sm:$0xff]
        %v2003 = vld [vmem:[%s271 + $0x3388] sm:$0xff]
        %v2004 = vld [vmem:[%s271 + $0x3390] sm:$0xff]
        %v2005 = vld [vmem:[%s271 + $0x3398] sm:$0xff]
        %v2006 = vld [vmem:[%s271 + $0x33a0] sm:$0xff]
        %v2007 = vld [vmem:[%s271 + $0x33a8] sm:$0xff]
        %v2008 = vld [vmem:[%s271 + $0x33b0] sm:$0xff]
        %v2009 = vld [vmem:[%s271 + $0x33b8] sm:$0xff]
        %v2010 = vld [vmem:[%s271 + $0x33c0] sm:$0xff]
        %v2011 = vld [vmem:[%s271 + $0x33c8] sm:$0xff]
        %v2012 = vld [vmem:[%s271 + $0x33d0] sm:$0xff]
        %v2013 = vld [vmem:[%s271 + $0x33d8] sm:$0xff]
        %v2014 = vld [vmem:[%s271 + $0x33e0] sm:$0xff]
        %v2015 = vld [vmem:[%s271 + $0x33e8] sm:$0xff]
        %v2016 = vld [vmem:[%s271 + $0x33f0] sm:$0xff]
        %v2017 = vld [vmem:[%s271 + $0x33f8] sm:$0xff]
        %v2018 = vld [vmem:[%s271 + $0x3400] sm:$0xff]
        %v2019 = vld [vmem:[%s271 + $0x3408] sm:$0xff]
        %v2020 = vld [vmem:[%s271 + $0x3410] sm:$0xff]
        %v2021 = vld [vmem:[%s271 + $0x3418] sm:$0xff]
        %v2022 = vld [vmem:[%s271 + $0x3420] sm:$0xff]
        %v2023 = vld [vmem:[%s271 + $0x3428] sm:$0xff]
        %v2024 = vld [vmem:[%s271 + $0x3430] sm:$0xff]
        %v2025 = vld [vmem:[%s271 + $0x3438] sm:$0xff]
        %v2026 = vld [vmem:[%s271 + $0x3440] sm:$0xff]
        %v2027 = vld [vmem:[%s271 + $0x3448] sm:$0xff]
        %v2028 = vld [vmem:[%s271 + $0x3450] sm:$0xff]
        %v2029 = vld [vmem:[%s271 + $0x3458] sm:$0xff]
        %v2030 = vld [vmem:[%s271 + $0x3460] sm:$0xff]
        %v2031 = vld [vmem:[%s271 + $0x3468] sm:$0xff]
        %v2032 = vld [vmem:[%s271 + $0x3470] sm:$0xff]
        %v2033 = vld [vmem:[%s271 + $0x3478] sm:$0xff]
        %v2034 = vld [vmem:[%s271 + $0x3480] sm:$0xff]
        %v2035 = vld [vmem:[%s271 + $0x3488] sm:$0xff]
        %v2036 = vld [vmem:[%s271 + $0x3490] sm:$0xff]
        %v2037 = vld [vmem:[%s271 + $0x3498] sm:$0xff]
        %v2038 = vld [vmem:[%s271 + $0x34a0] sm:$0xff]
        %v2039 = vld [vmem:[%s271 + $0x34a8] sm:$0xff]
        %v2040 = vld [vmem:[%s271 + $0x34b0] sm:$0xff]
        %v2041 = vld [vmem:[%s271 + $0x34b8] sm:$0xff]
        %v2042 = vld [vmem:[%s271 + $0x34c0] sm:$0xff]
        %v2043 = vld [vmem:[%s271 + $0x34c8] sm:$0xff]
        %v2044 = vld [vmem:[%s271 + $0x34d0] sm:$0xff]
        %v2045 = vld [vmem:[%s271 + $0x34d8] sm:$0xff]
        %v2046 = vld [vmem:[%s271 + $0x34e0] sm:$0xff]
        %v2047 = vld [vmem:[%s271 + $0x34e8] sm:$0xff]
        %v2048 = vld [vmem:[%s271 + $0x34f0] sm:$0xff]
        %v2049 = vld [vmem:[%s271 + $0x34f8] sm:$0xff]
        %v2050 = vld [vmem:[%s271 + $0x3500] sm:$0xff]
        %v2051 = vld [vmem:[%s271 + $0x3508] sm:$0xff]
        %v2052 = vld [vmem:[%s271 + $0x3510] sm:$0xff]
        %v2053 = vld [vmem:[%s271 + $0x3518] sm:$0xff]
        %v2054 = vld [vmem:[%s271 + $0x3520] sm:$0xff]
        %v2055 = vld [vmem:[%s271 + $0x3528] sm:$0xff]
        %v2056 = vld [vmem:[%s271 + $0x3530] sm:$0xff]
        %v2057 = vld [vmem:[%s271 + $0x3538] sm:$0xff]
        %v2058 = vld [vmem:[%s271 + $0x3540] sm:$0xff]
        %v2059 = vld [vmem:[%s271 + $0x3548] sm:$0xff]
        %v2060 = vld [vmem:[%s271 + $0x3550] sm:$0xff]
        %v2061 = vld [vmem:[%s271 + $0x3558] sm:$0xff]
        %v2062 = vld [vmem:[%s271 + $0x3560] sm:$0xff]
        %v2063 = vld [vmem:[%s271 + $0x3568] sm:$0xff]
        %v2064 = vld [vmem:[%s271 + $0x3570] sm:$0xff]
        %v2065 = vld [vmem:[%s271 + $0x3578] sm:$0xff]
        %v2066 = vld [vmem:[%s271 + $0x3580] sm:$0xff]
        %v2067 = vld [vmem:[%s271 + $0x3588] sm:$0xff]
        %v2068 = vld [vmem:[%s271 + $0x3590] sm:$0xff]
        %v2069 = vld [vmem:[%s271 + $0x3598] sm:$0xff]
        %v2070 = vld [vmem:[%s271 + $0x35a0] sm:$0xff]
        %v2071 = vld [vmem:[%s271 + $0x35a8] sm:$0xff]
        %v2072 = vld [vmem:[%s271 + $0x35b0] sm:$0xff]
        %v2073 = vld [vmem:[%s271 + $0x35b8] sm:$0xff]
        %v2074 = vld [vmem:[%s271 + $0x35c0] sm:$0xff]
        %v2075 = vld [vmem:[%s271 + $0x35c8] sm:$0xff]
        %v2076 = vld [vmem:[%s271 + $0x35d0] sm:$0xff]
        %v2077 = vld [vmem:[%s271 + $0x35d8] sm:$0xff]
        %v2078 = vld [vmem:[%s271 + $0x35e0] sm:$0xff]
        %v2079 = vld [vmem:[%s271 + $0x35e8] sm:$0xff]
        %v2080 = vld [vmem:[%s271 + $0x35f0] sm:$0xff]
        %v2081 = vld [vmem:[%s271 + $0x35f8] sm:$0xff]
        %v2082 = vld [vmem:[%s271 + $0x3600] sm:$0xff]
        %v2083 = vld [vmem:[%s271 + $0x3608] sm:$0xff]
        %v2084 = vld [vmem:[%s271 + $0x3610] sm:$0xff]
        %v2085 = vld [vmem:[%s271 + $0x3618] sm:$0xff]
        %v2086 = vld [vmem:[%s271 + $0x3620] sm:$0xff]
        %v2087 = vld [vmem:[%s271 + $0x3628] sm:$0xff]
        %v2088 = vld [vmem:[%s271 + $0x3630] sm:$0xff]
        %v2089 = vld [vmem:[%s271 + $0x3638] sm:$0xff]
        %v2090 = vld [vmem:[%s271 + $0x3640] sm:$0xff]
        %v2091 = vld [vmem:[%s271 + $0x3648] sm:$0xff]
        %v2092 = vld [vmem:[%s271 + $0x3650] sm:$0xff]
        %v2093 = vld [vmem:[%s271 + $0x3658] sm:$0xff]
        %v2094 = vld [vmem:[%s271 + $0x3660] sm:$0xff]
        %v2095 = vld [vmem:[%s271 + $0x3668] sm:$0xff]
        %v2096 = vld [vmem:[%s271 + $0x3670] sm:$0xff]
        %v2097 = vld [vmem:[%s271 + $0x3678] sm:$0xff]
        %v2098 = vld [vmem:[%s271 + $0x3680] sm:$0xff]
        %v2099 = vld [vmem:[%s271 + $0x3688] sm:$0xff]
        %v2100 = vld [vmem:[%s271 + $0x3690] sm:$0xff]
        %v2101 = vld [vmem:[%s271 + $0x3698] sm:$0xff]
        %v2102 = vld [vmem:[%s271 + $0x36a0] sm:$0xff]
        %v2103 = vld [vmem:[%s271 + $0x36a8] sm:$0xff]
        %v2104 = vld [vmem:[%s271 + $0x36b0] sm:$0xff]
        %v2105 = vld [vmem:[%s271 + $0x36b8] sm:$0xff]
        %v2106 = vld [vmem:[%s271 + $0x36c0] sm:$0xff]
        %v2107 = vld [vmem:[%s271 + $0x36c8] sm:$0xff]
        %v2108 = vld [vmem:[%s271 + $0x36d0] sm:$0xff]
        %v2109 = vld [vmem:[%s271 + $0x36d8] sm:$0xff]
        %v2110 = vld [vmem:[%s271 + $0x36e0] sm:$0xff]
        %v2111 = vld [vmem:[%s271 + $0x36e8] sm:$0xff]
        %v2112 = vld [vmem:[%s271 + $0x36f0] sm:$0xff]
        %v2113 = vld [vmem:[%s271 + $0x36f8] sm:$0xff]
        %v2114 = vld [vmem:[%s271 + $0x3700] sm:$0xff]
        %v2115 = vld [vmem:[%s271 + $0x3708] sm:$0xff]
        %v2116 = vld [vmem:[%s271 + $0x3710] sm:$0xff]
        %v2117 = vld [vmem:[%s271 + $0x3718] sm:$0xff]
        %v2118 = vld [vmem:[%s271 + $0x3720] sm:$0xff]
        %v2119 = vld [vmem:[%s271 + $0x3728] sm:$0xff]
        %v2120 = vld [vmem:[%s271 + $0x3730] sm:$0xff]
        %v2121 = vld [vmem:[%s271 + $0x3738] sm:$0xff]
        %v2122 = vld [vmem:[%s271 + $0x3740] sm:$0xff]
        %v2123 = vld [vmem:[%s271 + $0x3748] sm:$0xff]
        %v2124 = vld [vmem:[%s271 + $0x3750] sm:$0xff]
        %v2125 = vld [vmem:[%s271 + $0x3758] sm:$0xff]
        %v2126 = vld [vmem:[%s271 + $0x3760] sm:$0xff]
        %v2127 = vld [vmem:[%s271 + $0x3768] sm:$0xff]
        %v2128 = vld [vmem:[%s271 + $0x3770] sm:$0xff]
        %v2129 = vld [vmem:[%s271 + $0x3778] sm:$0xff]
        %v2130 = vld [vmem:[%s271 + $0x3780] sm:$0xff]
        %v2131 = vld [vmem:[%s271 + $0x3788] sm:$0xff]
        %v2132 = vld [vmem:[%s271 + $0x3790] sm:$0xff]
        %v2133 = vld [vmem:[%s271 + $0x3798] sm:$0xff]
        %v2134 = vld [vmem:[%s271 + $0x37a0] sm:$0xff]
        %v2135 = vld [vmem:[%s271 + $0x37a8] sm:$0xff]
        %v2136 = vld [vmem:[%s271 + $0x37b0] sm:$0xff]
        %v2137 = vld [vmem:[%s271 + $0x37b8] sm:$0xff]
        %v2138 = vld [vmem:[%s271 + $0x37c0] sm:$0xff]
        %v2139 = vld [vmem:[%s271 + $0x37c8] sm:$0xff]
        %v2140 = vld [vmem:[%s271 + $0x37d0] sm:$0xff]
        %v2141 = vld [vmem:[%s271 + $0x37d8] sm:$0xff]
        %v2142 = vld [vmem:[%s271 + $0x37e0] sm:$0xff]
        %v2143 = vld [vmem:[%s271 + $0x37e8] sm:$0xff]
        %v2144 = vld [vmem:[%s271 + $0x37f0] sm:$0xff]
        %v2145 = vld [vmem:[%s271 + $0x37f8] sm:$0xff]
        %v2146 = vld [vmem:[%s271 + $0x3800] sm:$0xff]
        %v2147 = vld [vmem:[%s271 + $0x3808] sm:$0xff]
        %v2148 = vld [vmem:[%s271 + $0x3810] sm:$0xff]
        %v2149 = vld [vmem:[%s271 + $0x3818] sm:$0xff]
        %v2150 = vld [vmem:[%s271 + $0x3820] sm:$0xff]
        %v2151 = vld [vmem:[%s271 + $0x3828] sm:$0xff]
        %v2152 = vld [vmem:[%s271 + $0x3830] sm:$0xff]
        %v2153 = vld [vmem:[%s271 + $0x3838] sm:$0xff]
        %v2154 = vld [vmem:[%s271 + $0x3840] sm:$0xff]
        %v2155 = vld [vmem:[%s271 + $0x3848] sm:$0xff]
        %v2156 = vld [vmem:[%s271 + $0x3850] sm:$0xff]
        %v2157 = vld [vmem:[%s271 + $0x3858] sm:$0xff]
        %v2158 = vld [vmem:[%s271 + $0x3860] sm:$0xff]
        %v2159 = vld [vmem:[%s271 + $0x3868] sm:$0xff]
        %v2160 = vld [vmem:[%s271 + $0x3870] sm:$0xff]
        %v2161 = vld [vmem:[%s271 + $0x3878] sm:$0xff]
        %v2162 = vld [vmem:[%s271 + $0x3880] sm:$0xff]
        %v2163 = vld [vmem:[%s271 + $0x3888] sm:$0xff]
        %v2164 = vld [vmem:[%s271 + $0x3890] sm:$0xff]
        %v2165 = vld [vmem:[%s271 + $0x3898] sm:$0xff]
        %v2166 = vld [vmem:[%s271 + $0x38a0] sm:$0xff]
        %v2167 = vld [vmem:[%s271 + $0x38a8] sm:$0xff]
        %v2168 = vld [vmem:[%s271 + $0x38b0] sm:$0xff]
        %v2169 = vld [vmem:[%s271 + $0x38b8] sm:$0xff]
        %v2170 = vld [vmem:[%s271 + $0x38c0] sm:$0xff]
        %v2171 = vld [vmem:[%s271 + $0x38c8] sm:$0xff]
        %v2172 = vld [vmem:[%s271 + $0x38d0] sm:$0xff]
        %v2173 = vld [vmem:[%s271 + $0x38d8] sm:$0xff]
        %v2174 = vld [vmem:[%s271 + $0x38e0] sm:$0xff]
        %v2175 = vld [vmem:[%s271 + $0x38e8] sm:$0xff]
        %v2176 = vld [vmem:[%s271 + $0x38f0] sm:$0xff]
        %v2177 = vld [vmem:[%s271 + $0x38f8] sm:$0xff]
        %v2178 = vld [vmem:[%s271 + $0x3900] sm:$0xff]
        %v2179 = vld [vmem:[%s271 + $0x3908] sm:$0xff]
        %v2180 = vld [vmem:[%s271 + $0x3910] sm:$0xff]
        %v2181 = vld [vmem:[%s271 + $0x3918] sm:$0xff]
        %v2182 = vld [vmem:[%s271 + $0x3920] sm:$0xff]
        %v2183 = vld [vmem:[%s271 + $0x3928] sm:$0xff]
        %v2184 = vld [vmem:[%s271 + $0x3930] sm:$0xff]
        %v2185 = vld [vmem:[%s271 + $0x3938] sm:$0xff]
        %v2186 = vld [vmem:[%s271 + $0x3940] sm:$0xff]
        %v2187 = vld [vmem:[%s271 + $0x3948] sm:$0xff]
        %v2188 = vld [vmem:[%s271 + $0x3950] sm:$0xff]
        %v2189 = vld [vmem:[%s271 + $0x3958] sm:$0xff]
        %v2190 = vld [vmem:[%s271 + $0x3960] sm:$0xff]
        %v2191 = vld [vmem:[%s271 + $0x3968] sm:$0xff]
        %v2192 = vld [vmem:[%s271 + $0x3970] sm:$0xff]
        %v2193 = vld [vmem:[%s271 + $0x3978] sm:$0xff]
        %v2194 = vld [vmem:[%s271 + $0x3980] sm:$0xff]
        %v2195 = vld [vmem:[%s271 + $0x3988] sm:$0xff]
        %v2196 = vld [vmem:[%s271 + $0x3990] sm:$0xff]
        %v2197 = vld [vmem:[%s271 + $0x3998] sm:$0xff]
        %v2198 = vld [vmem:[%s271 + $0x39a0] sm:$0xff]
        %v2199 = vld [vmem:[%s271 + $0x39a8] sm:$0xff]
        %v2200 = vld [vmem:[%s271 + $0x39b0] sm:$0xff]
        %v2201 = vld [vmem:[%s271 + $0x39b8] sm:$0xff]
        %v2202 = vld [vmem:[%s271 + $0x39c0] sm:$0xff]
        %v2203 = vld [vmem:[%s271 + $0x39c8] sm:$0xff]
        %v2204 = vld [vmem:[%s271 + $0x39d0] sm:$0xff]
        %v2205 = vld [vmem:[%s271 + $0x39d8] sm:$0xff]
        %v2206 = vld [vmem:[%s271 + $0x39e0] sm:$0xff]
        %v2207 = vld [vmem:[%s271 + $0x39e8] sm:$0xff]
        %v2208 = vld [vmem:[%s271 + $0x39f0] sm:$0xff]
        %v2209 = vld [vmem:[%s271 + $0x39f8] sm:$0xff]
        %v2210 = vld [vmem:[%s271 + $0x3a00] sm:$0xff]
        %v2211 = vld [vmem:[%s271 + $0x3a08] sm:$0xff]
        %v2212 = vld [vmem:[%s271 + $0x3a10] sm:$0xff]
        %v2213 = vld [vmem:[%s271 + $0x3a18] sm:$0xff]
        %v2214 = vld [vmem:[%s271 + $0x3a20] sm:$0xff]
        %v2215 = vld [vmem:[%s271 + $0x3a28] sm:$0xff]
        %v2216 = vld [vmem:[%s271 + $0x3a30] sm:$0xff]
        %v2217 = vld [vmem:[%s271 + $0x3a38] sm:$0xff]
        %v2218 = vld [vmem:[%s271 + $0x3a40] sm:$0xff]
        %v2219 = vld [vmem:[%s271 + $0x3a48] sm:$0xff]
        %v2220 = vld [vmem:[%s271 + $0x3a50] sm:$0xff]
        %v2221 = vld [vmem:[%s271 + $0x3a58] sm:$0xff]
        %v2222 = vld [vmem:[%s271 + $0x3a60] sm:$0xff]
        %v2223 = vld [vmem:[%s271 + $0x3a68] sm:$0xff]
        %v2224 = vld [vmem:[%s271 + $0x3a70] sm:$0xff]
        %v2225 = vld [vmem:[%s271 + $0x3a78] sm:$0xff]
        %v2226 = vld [vmem:[%s271 + $0x3a80] sm:$0xff]
        %v2227 = vld [vmem:[%s271 + $0x3a88] sm:$0xff]
        %v2228 = vld [vmem:[%s271 + $0x3a90] sm:$0xff]
        %v2229 = vld [vmem:[%s271 + $0x3a98] sm:$0xff]
        %v2230 = vld [vmem:[%s271 + $0x3aa0] sm:$0xff]
        %v2231 = vld [vmem:[%s271 + $0x3aa8] sm:$0xff]
        %v2232 = vld [vmem:[%s271 + $0x3ab0] sm:$0xff]
        %v2233 = vld [vmem:[%s271 + $0x3ab8] sm:$0xff]
        %v2234 = vld [vmem:[%s271 + $0x3ac0] sm:$0xff]
        %v2235 = vld [vmem:[%s271 + $0x3ac8] sm:$0xff]
        %v2236 = vld [vmem:[%s271 + $0x3ad0] sm:$0xff]
        %v2237 = vld [vmem:[%s271 + $0x3ad8] sm:$0xff]
        %v2238 = vld [vmem:[%s271 + $0x3ae0] sm:$0xff]
        %v2239 = vld [vmem:[%s271 + $0x3ae8] sm:$0xff]
        %v2240 = vld [vmem:[%s271 + $0x3af0] sm:$0xff]
        %v2241 = vld [vmem:[%s271 + $0x3af8] sm:$0xff]
        %v2242 = vld [vmem:[%s271 + $0x3b00] sm:$0xff]
        %v2243 = vld [vmem:[%s271 + $0x3b08] sm:$0xff]
        %v2244 = vld [vmem:[%s271 + $0x3b10] sm:$0xff]
        %v2245 = vld [vmem:[%s271 + $0x3b18] sm:$0xff]
        %v2246 = vld [vmem:[%s271 + $0x3b20] sm:$0xff]
        %v2247 = vld [vmem:[%s271 + $0x3b28] sm:$0xff]
        %v2248 = vld [vmem:[%s271 + $0x3b30] sm:$0xff]
        %v2249 = vld [vmem:[%s271 + $0x3b38] sm:$0xff]
        %v2250 = vld [vmem:[%s271 + $0x3b40] sm:$0xff]
        %v2251 = vld [vmem:[%s271 + $0x3b48] sm:$0xff]
        %v2252 = vld [vmem:[%s271 + $0x3b50] sm:$0xff]
        %v2253 = vld [vmem:[%s271 + $0x3b58] sm:$0xff]
        %v2254 = vld [vmem:[%s271 + $0x3b60] sm:$0xff]
        %v2255 = vld [vmem:[%s271 + $0x3b68] sm:$0xff]
        %v2256 = vld [vmem:[%s271 + $0x3b70] sm:$0xff]
        %v2257 = vld [vmem:[%s271 + $0x3b78] sm:$0xff]
        %v2258 = vld [vmem:[%s271 + $0x3b80] sm:$0xff]
        %v2259 = vld [vmem:[%s271 + $0x3b88] sm:$0xff]
        %v2260 = vld [vmem:[%s271 + $0x3b90] sm:$0xff]
        %v2261 = vld [vmem:[%s271 + $0x3b98] sm:$0xff]
        %v2262 = vld [vmem:[%s271 + $0x3ba0] sm:$0xff]
        %v2263 = vld [vmem:[%s271 + $0x3ba8] sm:$0xff]
        %v2264 = vld [vmem:[%s271 + $0x3bb0] sm:$0xff]
        %v2265 = vld [vmem:[%s271 + $0x3bb8] sm:$0xff]
        %v2266 = vld [vmem:[%s271 + $0x3bc0] sm:$0xff]
        %v2267 = vld [vmem:[%s271 + $0x3bc8] sm:$0xff]
        %v2268 = vld [vmem:[%s271 + $0x3bd0] sm:$0xff]
        %v2269 = vld [vmem:[%s271 + $0x3bd8] sm:$0xff]
        %v2270 = vld [vmem:[%s271 + $0x3be0] sm:$0xff]
        %v2271 = vld [vmem:[%s271 + $0x3be8] sm:$0xff]
        %v2272 = vld [vmem:[%s271 + $0x3bf0] sm:$0xff]
        %v2273 = vld [vmem:[%s271 + $0x3bf8] sm:$0xff]
        %v2274 = vld [vmem:[%s271 + $0x3c00] sm:$0xff]
        %v2275 = vld [vmem:[%s271 + $0x3c08] sm:$0xff]
        %v2276 = vld [vmem:[%s271 + $0x3c10] sm:$0xff]
        %v2277 = vld [vmem:[%s271 + $0x3c18] sm:$0xff]
        %v2278 = vld [vmem:[%s271 + $0x3c20] sm:$0xff]
        %v2279 = vld [vmem:[%s271 + $0x3c28] sm:$0xff]
        %v2280 = vld [vmem:[%s271 + $0x3c30] sm:$0xff]
        %v2281 = vld [vmem:[%s271 + $0x3c38] sm:$0xff]
        %v2282 = vld [vmem:[%s271 + $0x3c40] sm:$0xff]
        %v2283 = vld [vmem:[%s271 + $0x3c48] sm:$0xff]
        %v2284 = vld [vmem:[%s271 + $0x3c50] sm:$0xff]
        %v2285 = vld [vmem:[%s271 + $0x3c58] sm:$0xff]
        %v2286 = vld [vmem:[%s271 + $0x3c60] sm:$0xff]
        %v2287 = vld [vmem:[%s271 + $0x3c68] sm:$0xff]
        %v2288 = vld [vmem:[%s271 + $0x3c70] sm:$0xff]
        %v2289 = vld [vmem:[%s271 + $0x3c78] sm:$0xff]
        %v2290 = vld [vmem:[%s271 + $0x3c80] sm:$0xff]
        %v2291 = vld [vmem:[%s271 + $0x3c88] sm:$0xff]
        %v2292 = vld [vmem:[%s271 + $0x3c90] sm:$0xff]
        %v2293 = vld [vmem:[%s271 + $0x3c98] sm:$0xff]
        %v2294 = vld [vmem:[%s271 + $0x3ca0] sm:$0xff]
        %v2295 = vld [vmem:[%s271 + $0x3ca8] sm:$0xff]
        %v2296 = vld [vmem:[%s271 + $0x3cb0] sm:$0xff]
        %v2297 = vld [vmem:[%s271 + $0x3cb8] sm:$0xff]
        %v2298 = vld [vmem:[%s271 + $0x3cc0] sm:$0xff]
        %v2299 = vld [vmem:[%s271 + $0x3cc8] sm:$0xff]
        %v2300 = vld [vmem:[%s271 + $0x3cd0] sm:$0xff]
        %v2301 = vld [vmem:[%s271 + $0x3cd8] sm:$0xff]
        %v2302 = vld [vmem:[%s271 + $0x3ce0] sm:$0xff]
        %v2303 = vld [vmem:[%s271 + $0x3ce8] sm:$0xff]
        %v2304 = vld [vmem:[%s271 + $0x3cf0] sm:$0xff]
        %v2305 = vld [vmem:[%s271 + $0x3cf8] sm:$0xff]
        %v2306 = vld [vmem:[%s271 + $0x3d00] sm:$0xff]
        %v2307 = vld [vmem:[%s271 + $0x3d08] sm:$0xff]
        %v2308 = vld [vmem:[%s271 + $0x3d10] sm:$0xff]
        %v2309 = vld [vmem:[%s271 + $0x3d18] sm:$0xff]
        %v2310 = vld [vmem:[%s271 + $0x3d20] sm:$0xff]
        %v2311 = vld [vmem:[%s271 + $0x3d28] sm:$0xff]
        %v2312 = vld [vmem:[%s271 + $0x3d30] sm:$0xff]
        %v2313 = vld [vmem:[%s271 + $0x3d38] sm:$0xff]
        %v2314 = vld [vmem:[%s271 + $0x3d40] sm:$0xff]
        %v2315 = vld [vmem:[%s271 + $0x3d48] sm:$0xff]
        %v2316 = vld [vmem:[%s271 + $0x3d50] sm:$0xff]
        %v2317 = vld [vmem:[%s271 + $0x3d58] sm:$0xff]
        %v2318 = vld [vmem:[%s271 + $0x3d60] sm:$0xff]
        %v2319 = vld [vmem:[%s271 + $0x3d68] sm:$0xff]
        %v2320 = vld [vmem:[%s271 + $0x3d70] sm:$0xff]
        %v2321 = vld [vmem:[%s271 + $0x3d78] sm:$0xff]
        %v2322 = vld [vmem:[%s271 + $0x3d80] sm:$0xff]
        %v2323 = vld [vmem:[%s271 + $0x3d88] sm:$0xff]
        %v2324 = vld [vmem:[%s271 + $0x3d90] sm:$0xff]
        %v2325 = vld [vmem:[%s271 + $0x3d98] sm:$0xff]
        %v2326 = vld [vmem:[%s271 + $0x3da0] sm:$0xff]
        %v2327 = vld [vmem:[%s271 + $0x3da8] sm:$0xff]
        %v2328 = vld [vmem:[%s271 + $0x3db0] sm:$0xff]
        %v2329 = vld [vmem:[%s271 + $0x3db8] sm:$0xff]
        %v2330 = vld [vmem:[%s271 + $0x3dc0] sm:$0xff]
        %v2331 = vld [vmem:[%s271 + $0x3dc8] sm:$0xff]
        %v2332 = vld [vmem:[%s271 + $0x3dd0] sm:$0xff]
        %v2333 = vld [vmem:[%s271 + $0x3dd8] sm:$0xff]
        %v2334 = vld [vmem:[%s271 + $0x3de0] sm:$0xff]
        %v2335 = vld [vmem:[%s271 + $0x3de8] sm:$0xff]
        %v2336 = vld [vmem:[%s271 + $0x3df0] sm:$0xff]
        %v2337 = vld [vmem:[%s271 + $0x3df8] sm:$0xff]
        %v2338 = vld [vmem:[%s271 + $0x3e00] sm:$0xff]
        %v2339 = vld [vmem:[%s271 + $0x3e08] sm:$0xff]
        %v2340 = vld [vmem:[%s271 + $0x3e10] sm:$0xff]
        %v2341 = vld [vmem:[%s271 + $0x3e18] sm:$0xff]
        %v2342 = vld [vmem:[%s271 + $0x3e20] sm:$0xff]
        %v2343 = vld [vmem:[%s271 + $0x3e28] sm:$0xff]
        %v2344 = vld [vmem:[%s271 + $0x3e30] sm:$0xff]
        %v2345 = vld [vmem:[%s271 + $0x3e38] sm:$0xff]
        %v2346 = vld [vmem:[%s271 + $0x3e40] sm:$0xff]
        %v2347 = vld [vmem:[%s271 + $0x3e48] sm:$0xff]
        %v2348 = vld [vmem:[%s271 + $0x3e50] sm:$0xff]
        %v2349 = vld [vmem:[%s271 + $0x3e58] sm:$0xff]
        %v2350 = vld [vmem:[%s271 + $0x3e60] sm:$0xff]
        %v2351 = vld [vmem:[%s271 + $0x3e68] sm:$0xff]
        %v2352 = vld [vmem:[%s271 + $0x3e70] sm:$0xff]
        %v2353 = vld [vmem:[%s271 + $0x3e78] sm:$0xff]
        %v2354 = vld [vmem:[%s271 + $0x3e80] sm:$0xff]
        %v2355 = vld [vmem:[%s271 + $0x3e88] sm:$0xff]
        %v2356 = vld [vmem:[%s271 + $0x3e90] sm:$0xff]
        %v2357 = vld [vmem:[%s271 + $0x3e98] sm:$0xff]
        %v2358 = vld [vmem:[%s271 + $0x3ea0] sm:$0xff]
        %v2359 = vld [vmem:[%s271 + $0x3ea8] sm:$0xff]
        %v2360 = vld [vmem:[%s271 + $0x3eb0] sm:$0xff]
        %v2361 = vld [vmem:[%s271 + $0x3eb8] sm:$0xff]
        %v2362 = vld [vmem:[%s271 + $0x3ec0] sm:$0xff]
        %v2363 = vld [vmem:[%s271 + $0x3ec8] sm:$0xff]
        %v2364 = vld [vmem:[%s271 + $0x3ed0] sm:$0xff]
        %v2365 = vld [vmem:[%s271 + $0x3ed8] sm:$0xff]
        %v2366 = vld [vmem:[%s271 + $0x3ee0] sm:$0xff]
        %v2367 = vld [vmem:[%s271 + $0x3ee8] sm:$0xff]
        %v2368 = vld [vmem:[%s271 + $0x3ef0] sm:$0xff]
        %v2369 = vld [vmem:[%s271 + $0x3ef8] sm:$0xff]
        %v2370 = vld [vmem:[%s271 + $0x3f00] sm:$0xff]
        %v2371 = vld [vmem:[%s271 + $0x3f08] sm:$0xff]
        %v2372 = vld [vmem:[%s271 + $0x3f10] sm:$0xff]
        %v2373 = vld [vmem:[%s271 + $0x3f18] sm:$0xff]
        %v2374 = vld [vmem:[%s271 + $0x3f20] sm:$0xff]
        %v2375 = vld [vmem:[%s271 + $0x3f28] sm:$0xff]
        %v2376 = vld [vmem:[%s271 + $0x3f30] sm:$0xff]
        %v2377 = vld [vmem:[%s271 + $0x3f38] sm:$0xff]
        %v2378 = vld [vmem:[%s271 + $0x3f40] sm:$0xff]
        %v2379 = vld [vmem:[%s271 + $0x3f48] sm:$0xff]
        %v2380 = vld [vmem:[%s271 + $0x3f50] sm:$0xff]
        %v2381 = vld [vmem:[%s271 + $0x3f58] sm:$0xff]
        %v2382 = vld [vmem:[%s271 + $0x3f60] sm:$0xff]
        %v2383 = vld [vmem:[%s271 + $0x3f68] sm:$0xff]
        %v2384 = vld [vmem:[%s271 + $0x3f70] sm:$0xff]
        %v2385 = vld [vmem:[%s271 + $0x3f78] sm:$0xff]
        %v2386 = vld [vmem:[%s271 + $0x3f80] sm:$0xff]
        %v2387 = vld [vmem:[%s271 + $0x3f88] sm:$0xff]
        %v2388 = vld [vmem:[%s271 + $0x3f90] sm:$0xff]
        %v2389 = vld [vmem:[%s271 + $0x3f98] sm:$0xff]
        %v2390 = vld [vmem:[%s271 + $0x3fa0] sm:$0xff]
        %v2391 = vld [vmem:[%s271 + $0x3fa8] sm:$0xff]
        %v2392 = vld [vmem:[%s271 + $0x3fb0] sm:$0xff]
        %v2393 = vld [vmem:[%s271 + $0x3fb8] sm:$0xff]
        %v2394 = vld [vmem:[%s271 + $0x3fc0] sm:$0xff]
        %v2395 = vld [vmem:[%s271 + $0x3fc8] sm:$0xff]
        %v2396 = vld [vmem:[%s271 + $0x3fd0] sm:$0xff]
        %v2397 = vld [vmem:[%s271 + $0x3fd8] sm:$0xff]
        %v2398 = vld [vmem:[%s271 + $0x3fe0] sm:$0xff]
        %v2399 = vld [vmem:[%s271 + $0x3fe8] sm:$0xff]
        %v2400 = vld [vmem:[%s271 + $0x3ff0] sm:$0xff]
        %v2401 = vld [vmem:[%s271 + $0x3ff8] sm:$0xff]
        %v2402 = vld [vmem:[%s271 + $0x4000] sm:$0xff]
        %v2403 = vld [vmem:[%s271 + $0x4008] sm:$0xff]
        %v2404 = vld [vmem:[%s271 + $0x4010] sm:$0xff]
        %v2405 = vld [vmem:[%s271 + $0x4018] sm:$0xff]
        %v2406 = vld [vmem:[%s271 + $0x4020] sm:$0xff]
        %v2407 = vld [vmem:[%s271 + $0x4028] sm:$0xff]
        %v2408 = vld [vmem:[%s271 + $0x4030] sm:$0xff]
        %v2409 = vld [vmem:[%s271 + $0x4038] sm:$0xff]
        %v2410 = vld [vmem:[%s271 + $0x4040] sm:$0xff]
        %v2411 = vld [vmem:[%s271 + $0x4048] sm:$0xff]
        %v2412 = vld [vmem:[%s271 + $0x4050] sm:$0xff]
        %v2413 = vld [vmem:[%s271 + $0x4058] sm:$0xff]
        %v2414 = vld [vmem:[%s271 + $0x4060] sm:$0xff]
        %v2415 = vld [vmem:[%s271 + $0x4068] sm:$0xff]
        %v2416 = vld [vmem:[%s271 + $0x4070] sm:$0xff]
        %v2417 = vld [vmem:[%s271 + $0x4078] sm:$0xff]
        %v2418 = vld [vmem:[%s271 + $0x4080] sm:$0xff]
        %v2419 = vld [vmem:[%s271 + $0x4088] sm:$0xff]
        %v2420 = vld [vmem:[%s271 + $0x4090] sm:$0xff]
        %v2421 = vld [vmem:[%s271 + $0x4098] sm:$0xff]
        %v2422 = vld [vmem:[%s271 + $0x40a0] sm:$0xff]
        %v2423 = vld [vmem:[%s271 + $0x40a8] sm:$0xff]
        %v2424 = vld [vmem:[%s271 + $0x40b0] sm:$0xff]
        %v2425 = vld [vmem:[%s271 + $0x40b8] sm:$0xff]
        %v2426 = vld [vmem:[%s271 + $0x40c0] sm:$0xff]
        %v2427 = vld [vmem:[%s271 + $0x40c8] sm:$0xff]
        %v2428 = vld [vmem:[%s271 + $0x40d0] sm:$0xff]
        %v2429 = vld [vmem:[%s271 + $0x40d8] sm:$0xff]
        %v2430 = vld [vmem:[%s271 + $0x40e0] sm:$0xff]
        %v2431 = vld [vmem:[%s271 + $0x40e8] sm:$0xff]
        %v2432 = vld [vmem:[%s271 + $0x40f0] sm:$0xff]
        %v2433 = vld [vmem:[%s271 + $0x40f8] sm:$0xff]
        %v2434 = vld [vmem:[%s271 + $0x4100] sm:$0xff]
        %v2435 = vld [vmem:[%s271 + $0x4108] sm:$0xff]
        %v2436 = vld [vmem:[%s271 + $0x4110] sm:$0xff]
        %v2437 = vld [vmem:[%s271 + $0x4118] sm:$0xff]
        %v2438 = vld [vmem:[%s271 + $0x4120] sm:$0xff]
        %v2439 = vld [vmem:[%s271 + $0x4128] sm:$0xff]
        %v2440 = vld [vmem:[%s271 + $0x4130] sm:$0xff]
        %v2441 = vld [vmem:[%s271 + $0x4138] sm:$0xff]
        %v2442 = vld [vmem:[%s271 + $0x4140] sm:$0xff]
        %v2443 = vld [vmem:[%s271 + $0x4148] sm:$0xff]
        %v2444 = vld [vmem:[%s271 + $0x4150] sm:$0xff]
        %v2445 = vld [vmem:[%s271 + $0x4158] sm:$0xff]
        %v2446 = vld [vmem:[%s271 + $0x4160] sm:$0xff]
        %v2447 = vld [vmem:[%s271 + $0x4168] sm:$0xff]
        %v2448 = vld [vmem:[%s271 + $0x4170] sm:$0xff]
        %v2449 = vld [vmem:[%s271 + $0x4178] sm:$0xff]
        %v2450 = vld [vmem:[%s271 + $0x4180] sm:$0xff]
        %v2451 = vld [vmem:[%s271 + $0x4188] sm:$0xff]
        %v2452 = vld [vmem:[%s271 + $0x4190] sm:$0xff]
        %v2453 = vld [vmem:[%s271 + $0x4198] sm:$0xff]
        %v2454 = vld [vmem:[%s271 + $0x41a0] sm:$0xff]
        %v2455 = vld [vmem:[%s271 + $0x41a8] sm:$0xff]
        %v2456 = vld [vmem:[%s271 + $0x41b0] sm:$0xff]
        %v2457 = vld [vmem:[%s271 + $0x41b8] sm:$0xff]
        %v2458 = vld [vmem:[%s271 + $0x41c0] sm:$0xff]
        %v2459 = vld [vmem:[%s271 + $0x41c8] sm:$0xff]
        %v2460 = vld [vmem:[%s271 + $0x41d0] sm:$0xff]
        %v2461 = vld [vmem:[%s271 + $0x41d8] sm:$0xff]
        %v2462 = vld [vmem:[%s271 + $0x41e0] sm:$0xff]
        %v2463 = vld [vmem:[%s271 + $0x41e8] sm:$0xff]
        %v2464 = vld [vmem:[%s271 + $0x41f0] sm:$0xff]
        %v2465 = vld [vmem:[%s271 + $0x41f8] sm:$0xff]
        %v2466 = vld [vmem:[%s271 + $0x4200] sm:$0xff]
        %v2467 = vld [vmem:[%s271 + $0x4208] sm:$0xff]
        %v2468 = vld [vmem:[%s271 + $0x4210] sm:$0xff]
        %v2469 = vld [vmem:[%s271 + $0x4218] sm:$0xff]
        %v2470 = vld [vmem:[%s271 + $0x4220] sm:$0xff]
        %v2471 = vld [vmem:[%s271 + $0x4228] sm:$0xff]
        %v2472 = vld [vmem:[%s271 + $0x4230] sm:$0xff]
        %v2473 = vld [vmem:[%s271 + $0x4238] sm:$0xff]
        %v2474 = vld [vmem:[%s271 + $0x4240] sm:$0xff]
        %v2475 = vld [vmem:[%s271 + $0x4248] sm:$0xff]
        %v2476 = vld [vmem:[%s271 + $0x4250] sm:$0xff]
        %v2477 = vld [vmem:[%s271 + $0x4258] sm:$0xff]
        %v2478 = vld [vmem:[%s271 + $0x4260] sm:$0xff]
        %v2479 = vld [vmem:[%s271 + $0x4268] sm:$0xff]
        %v2480 = vld [vmem:[%s271 + $0x4270] sm:$0xff]
        %v2481 = vld [vmem:[%s271 + $0x4278] sm:$0xff]
        %v2482 = vld [vmem:[%s271 + $0x4280] sm:$0xff]
        %v2483 = vld [vmem:[%s271 + $0x4288] sm:$0xff]
        %v2484 = vld [vmem:[%s271 + $0x4290] sm:$0xff]
        %v2485 = vld [vmem:[%s271 + $0x4298] sm:$0xff]
        %v2486 = vld [vmem:[%s271 + $0x42a0] sm:$0xff]
        %v2487 = vld [vmem:[%s271 + $0x42a8] sm:$0xff]
        %v2488 = vld [vmem:[%s271 + $0x42b0] sm:$0xff]
        %v2489 = vld [vmem:[%s271 + $0x42b8] sm:$0xff]
        %v2490 = vld [vmem:[%s271 + $0x42c0] sm:$0xff]
        %v2491 = vld [vmem:[%s271 + $0x42c8] sm:$0xff]
        %v2492 = vld [vmem:[%s271 + $0x42d0] sm:$0xff]
        %v2493 = vld [vmem:[%s271 + $0x42d8] sm:$0xff]
        %v2494 = vld [vmem:[%s271 + $0x42e0] sm:$0xff]
        %v2495 = vld [vmem:[%s271 + $0x42e8] sm:$0xff]
        %v2496 = vld [vmem:[%s271 + $0x42f0] sm:$0xff]
        %v2497 = vld [vmem:[%s271 + $0x42f8] sm:$0xff]
        %v2498 = vld [vmem:[%s271 + $0x4300] sm:$0xff]
        %v2499 = vld [vmem:[%s271 + $0x4308] sm:$0xff]
        %v2500 = vld [vmem:[%s271 + $0x4310] sm:$0xff]
        %v2501 = vld [vmem:[%s271 + $0x4318] sm:$0xff]
        %v2502 = vld [vmem:[%s271 + $0x4320] sm:$0xff]
        %v2503 = vld [vmem:[%s271 + $0x4328] sm:$0xff]
        %v2504 = vld [vmem:[%s271 + $0x4330] sm:$0xff]
        %v2505 = vld [vmem:[%s271 + $0x4338] sm:$0xff]
        %v2506 = vld [vmem:[%s271 + $0x4340] sm:$0xff]
        %v2507 = vld [vmem:[%s271 + $0x4348] sm:$0xff]
        %v2508 = vld [vmem:[%s271 + $0x4350] sm:$0xff]
        %v2509 = vld [vmem:[%s271 + $0x4358] sm:$0xff]
        %v2510 = vld [vmem:[%s271 + $0x4360] sm:$0xff]
        %v2511 = vld [vmem:[%s271 + $0x4368] sm:$0xff]
        %v2512 = vld [vmem:[%s271 + $0x4370] sm:$0xff]
        %v2513 = vld [vmem:[%s271 + $0x4378] sm:$0xff]
        %v2514 = vld [vmem:[%s271 + $0x4380] sm:$0xff]
        %v2515 = vld [vmem:[%s271 + $0x4388] sm:$0xff]
        %v2516 = vld [vmem:[%s271 + $0x4390] sm:$0xff]
        %v2517 = vld [vmem:[%s271 + $0x4398] sm:$0xff]
        %v2518 = vld [vmem:[%s271 + $0x43a0] sm:$0xff]
        %v2519 = vld [vmem:[%s271 + $0x43a8] sm:$0xff]
        %v2520 = vld [vmem:[%s271 + $0x43b0] sm:$0xff]
        %v2521 = vld [vmem:[%s271 + $0x43b8] sm:$0xff]
        %v2522 = vld [vmem:[%s271 + $0x43c0] sm:$0xff]
        %v2523 = vld [vmem:[%s271 + $0x43c8] sm:$0xff]
        %v2524 = vld [vmem:[%s271 + $0x43d0] sm:$0xff]
        %v2525 = vld [vmem:[%s271 + $0x43d8] sm:$0xff]
        %v2526 = vld [vmem:[%s271 + $0x43e0] sm:$0xff]
        %v2527 = vld [vmem:[%s271 + $0x43e8] sm:$0xff]
        %v2528 = vld [vmem:[%s271 + $0x43f0] sm:$0xff]
        %v2529 = vld [vmem:[%s271 + $0x43f8] sm:$0xff]
        %v2530 = vld [vmem:[%s271 + $0x4400] sm:$0xff]
        %v2531 = vld [vmem:[%s271 + $0x4408] sm:$0xff]
        %v2532 = vld [vmem:[%s271 + $0x4410] sm:$0xff]
        %v2533 = vld [vmem:[%s271 + $0x4418] sm:$0xff]
        %v2534 = vld [vmem:[%s271 + $0x4420] sm:$0xff]
        %v2535 = vld [vmem:[%s271 + $0x4428] sm:$0xff]
        %v2536 = vld [vmem:[%s271 + $0x4430] sm:$0xff]
        %v2537 = vld [vmem:[%s271 + $0x4438] sm:$0xff]
        %v2538 = vld [vmem:[%s271 + $0x4440] sm:$0xff]
        %v2539 = vld [vmem:[%s271 + $0x4448] sm:$0xff]
        %v2540 = vld [vmem:[%s271 + $0x4450] sm:$0xff]
        %v2541 = vld [vmem:[%s271 + $0x4458] sm:$0xff]
        %v2542 = vld [vmem:[%s271 + $0x4460] sm:$0xff]
        %v2543 = vld [vmem:[%s271 + $0x4468] sm:$0xff]
        %v2544 = vld [vmem:[%s271 + $0x4470] sm:$0xff]
        %v2545 = vld [vmem:[%s271 + $0x4478] sm:$0xff]
        %v2546 = vld [vmem:[%s271 + $0x4480] sm:$0xff]
        %v2547 = vld [vmem:[%s271 + $0x4488] sm:$0xff]
        %v2548 = vld [vmem:[%s271 + $0x4490] sm:$0xff]
        %v2549 = vld [vmem:[%s271 + $0x4498] sm:$0xff]
        %v2550 = vld [vmem:[%s271 + $0x44a0] sm:$0xff]
        %v2551 = vld [vmem:[%s271 + $0x44a8] sm:$0xff]
        %v2552 = vld [vmem:[%s271 + $0x44b0] sm:$0xff]
        %v2553 = vld [vmem:[%s271 + $0x44b8] sm:$0xff]
        %v2554 = vld [vmem:[%s271 + $0x44c0] sm:$0xff]
        %v2555 = vld [vmem:[%s271 + $0x44c8] sm:$0xff]
        %v2556 = vld [vmem:[%s271 + $0x44d0] sm:$0xff]
        %v2557 = vld [vmem:[%s271 + $0x44d8] sm:$0xff]
        %v2558 = vld [vmem:[%s271 + $0x44e0] sm:$0xff]
        %v2559 = vld [vmem:[%s271 + $0x44e8] sm:$0xff]
        %v2560 = vld [vmem:[%s271 + $0x44f0] sm:$0xff]
        %v2561 = vld [vmem:[%s271 + $0x44f8] sm:$0xff]
        %v2562 = vld [vmem:[%s271 + $0x4500] sm:$0xff]
        %v2563 = vld [vmem:[%s271 + $0x4508] sm:$0xff]
        %v2564 = vld [vmem:[%s271 + $0x4510] sm:$0xff]
        %v2565 = vld [vmem:[%s271 + $0x4518] sm:$0xff]
        %v2566 = vld [vmem:[%s271 + $0x4520] sm:$0xff]
        %v2567 = vld [vmem:[%s271 + $0x4528] sm:$0xff]
        %v2568 = vld [vmem:[%s271 + $0x4530] sm:$0xff]
        %v2569 = vld [vmem:[%s271 + $0x4538] sm:$0xff]
        %v2570 = vld [vmem:[%s271 + $0x4540] sm:$0xff]
        %v2571 = vld [vmem:[%s271 + $0x4548] sm:$0xff]
        %v2572 = vld [vmem:[%s271 + $0x4550] sm:$0xff]
        %v2573 = vld [vmem:[%s271 + $0x4558] sm:$0xff]
        %v2574 = vld [vmem:[%s271 + $0x4560] sm:$0xff]
        %v2575 = vld [vmem:[%s271 + $0x4568] sm:$0xff]
        %v2576 = vld [vmem:[%s271 + $0x4570] sm:$0xff]
        %v2577 = vld [vmem:[%s271 + $0x4578] sm:$0xff]
        %v2578 = vld [vmem:[%s271 + $0x4580] sm:$0xff]
        %v2579 = vld [vmem:[%s271 + $0x4588] sm:$0xff]
        %v2580 = vld [vmem:[%s271 + $0x4590] sm:$0xff]
        %v2581 = vld [vmem:[%s271 + $0x4598] sm:$0xff]
        %v2582 = vld [vmem:[%s271 + $0x45a0] sm:$0xff]
        %v2583 = vld [vmem:[%s271 + $0x45a8] sm:$0xff]
        %v2584 = vld [vmem:[%s271 + $0x45b0] sm:$0xff]
        %v2585 = vld [vmem:[%s271 + $0x45b8] sm:$0xff]
        %v2586 = vld [vmem:[%s271 + $0x45c0] sm:$0xff]
        %v2587 = vld [vmem:[%s271 + $0x45c8] sm:$0xff]
        %v2588 = vld [vmem:[%s271 + $0x45d0] sm:$0xff]
        %v2589 = vld [vmem:[%s271 + $0x45d8] sm:$0xff]
        %v2590 = vld [vmem:[%s271 + $0x45e0] sm:$0xff]
        %v2591 = vld [vmem:[%s271 + $0x45e8] sm:$0xff]
        %v2592 = vld [vmem:[%s271 + $0x45f0] sm:$0xff]
        %v2593 = vld [vmem:[%s271 + $0x45f8] sm:$0xff]
        %v2594 = vld [vmem:[%s271 + $0x4600] sm:$0xff]
        %v2595 = vld [vmem:[%s271 + $0x4608] sm:$0xff]
        %v2596 = vld [vmem:[%s271 + $0x4610] sm:$0xff]
        %v2597 = vld [vmem:[%s271 + $0x4618] sm:$0xff]
        %v2598 = vld [vmem:[%s271 + $0x4620] sm:$0xff]
        %v2599 = vld [vmem:[%s271 + $0x4628] sm:$0xff]
        %v2600 = vld [vmem:[%s271 + $0x4630] sm:$0xff]
        %v2601 = vld [vmem:[%s271 + $0x4638] sm:$0xff]
        %v2602 = vld [vmem:[%s271 + $0x4640] sm:$0xff]
        %v2603 = vld [vmem:[%s271 + $0x4648] sm:$0xff]
        %v2604 = vld [vmem:[%s271 + $0x4650] sm:$0xff]
        %v2605 = vld [vmem:[%s271 + $0x4658] sm:$0xff]
        %v2606 = vld [vmem:[%s271 + $0x4660] sm:$0xff]
        %v2607 = vld [vmem:[%s271 + $0x4668] sm:$0xff]
        %v2608 = vld [vmem:[%s271 + $0x4670] sm:$0xff]
        %v2609 = vld [vmem:[%s271 + $0x4678] sm:$0xff]
        %v2610 = vld [vmem:[%s271 + $0x4680] sm:$0xff]
        %v2611 = vld [vmem:[%s271 + $0x4688] sm:$0xff]
        %v2612 = vld [vmem:[%s271 + $0x4690] sm:$0xff]
        %v2613 = vld [vmem:[%s271 + $0x4698] sm:$0xff]
        %v2614 = vld [vmem:[%s271 + $0x46a0] sm:$0xff]
        %v2615 = vld [vmem:[%s271 + $0x46a8] sm:$0xff]
        %v2616 = vld [vmem:[%s271 + $0x46b0] sm:$0xff]
        %v2617 = vld [vmem:[%s271 + $0x46b8] sm:$0xff]
        %v2618 = vld [vmem:[%s271 + $0x46c0] sm:$0xff]
        %v2619 = vld [vmem:[%s271 + $0x46c8] sm:$0xff]
        %v2620 = vld [vmem:[%s271 + $0x46d0] sm:$0xff]
        %v2621 = vld [vmem:[%s271 + $0x46d8] sm:$0xff]
        %v2622 = vld [vmem:[%s271 + $0x46e0] sm:$0xff]
        %v2623 = vld [vmem:[%s271 + $0x46e8] sm:$0xff]
        %v2624 = vld [vmem:[%s271 + $0x46f0] sm:$0xff]
        %v2625 = vld [vmem:[%s271 + $0x46f8] sm:$0xff]
        %v2626 = vld [vmem:[%s271 + $0x4700] sm:$0xff]
        %v2627 = vld [vmem:[%s271 + $0x4708] sm:$0xff]
        %v2628 = vld [vmem:[%s271 + $0x4710] sm:$0xff]
        %v2629 = vld [vmem:[%s271 + $0x4718] sm:$0xff]
        %v2630 = vld [vmem:[%s271 + $0x4720] sm:$0xff]
        %v2631 = vld [vmem:[%s271 + $0x4728] sm:$0xff]
        %v2632 = vld [vmem:[%s271 + $0x4730] sm:$0xff]
        %v2633 = vld [vmem:[%s271 + $0x4738] sm:$0xff]
        %v2634 = vld [vmem:[%s271 + $0x4740] sm:$0xff]
        %v2635 = vld [vmem:[%s271 + $0x4748] sm:$0xff]
        %v2636 = vld [vmem:[%s271 + $0x4750] sm:$0xff]
        %v2637 = vld [vmem:[%s271 + $0x4758] sm:$0xff]
        %v2638 = vld [vmem:[%s271 + $0x4760] sm:$0xff]
        %v2639 = vld [vmem:[%s271 + $0x4768] sm:$0xff]
        %v2640 = vld [vmem:[%s271 + $0x4770] sm:$0xff]
        %v2641 = vld [vmem:[%s271 + $0x4778] sm:$0xff]
        %v2642 = vld [vmem:[%s271 + $0x4780] sm:$0xff]
        %v2643 = vld [vmem:[%s271 + $0x4788] sm:$0xff]
        %v2644 = vld [vmem:[%s271 + $0x4790] sm:$0xff]
        %v2645 = vld [vmem:[%s271 + $0x4798] sm:$0xff]
        %v2646 = vld [vmem:[%s271 + $0x47a0] sm:$0xff]
        %v2647 = vld [vmem:[%s271 + $0x47a8] sm:$0xff]
        %v2648 = vld [vmem:[%s271 + $0x47b0] sm:$0xff]
        %v2649 = vld [vmem:[%s271 + $0x47b8] sm:$0xff]
        %v2650 = vld [vmem:[%s271 + $0x47c0] sm:$0xff]
        %v2651 = vld [vmem:[%s271 + $0x47c8] sm:$0xff]
        %v2652 = vld [vmem:[%s271 + $0x47d0] sm:$0xff]
        %v2653 = vld [vmem:[%s271 + $0x47d8] sm:$0xff]
        %v2654 = vld [vmem:[%s271 + $0x47e0] sm:$0xff]
        %v2655 = vld [vmem:[%s271 + $0x47e8] sm:$0xff]
        %v2656 = vld [vmem:[%s271 + $0x47f0] sm:$0xff]
        %v2657 = vld [vmem:[%s271 + $0x47f8] sm:$0xff]
        %v2658 = vld [vmem:[%s271 + $0x4800] sm:$0xff]
        %v2659 = vld [vmem:[%s271 + $0x4808] sm:$0xff]
        %v2660 = vld [vmem:[%s271 + $0x4810] sm:$0xff]
        %v2661 = vld [vmem:[%s271 + $0x4818] sm:$0xff]
        %v2662 = vld [vmem:[%s271 + $0x4820] sm:$0xff]
        %v2663 = vld [vmem:[%s271 + $0x4828] sm:$0xff]
        %v2664 = vld [vmem:[%s271 + $0x4830] sm:$0xff]
        %v2665 = vld [vmem:[%s271 + $0x4838] sm:$0xff]
        %v2666 = vld [vmem:[%s271 + $0x4840] sm:$0xff]
        %v2667 = vld [vmem:[%s271 + $0x4848] sm:$0xff]
        %v2668 = vld [vmem:[%s271 + $0x4850] sm:$0xff]
        %v2669 = vld [vmem:[%s271 + $0x4858] sm:$0xff]
        %v2670 = vld [vmem:[%s271 + $0x4860] sm:$0xff]
        %v2671 = vld [vmem:[%s271 + $0x4868] sm:$0xff]
        %v2672 = vld [vmem:[%s271 + $0x4870] sm:$0xff]
        %v2673 = vld [vmem:[%s271 + $0x4878] sm:$0xff]
        %v2674 = vld [vmem:[%s271 + $0x4880] sm:$0xff]
        %v2675 = vld [vmem:[%s271 + $0x4888] sm:$0xff]
        %v2676 = vld [vmem:[%s271 + $0x4890] sm:$0xff]
        %v2677 = vld [vmem:[%s271 + $0x4898] sm:$0xff]
        %v2678 = vld [vmem:[%s271 + $0x48a0] sm:$0xff]
        %v2679 = vld [vmem:[%s271 + $0x48a8] sm:$0xff]
        %v2680 = vld [vmem:[%s271 + $0x48b0] sm:$0xff]
        %v2681 = vld [vmem:[%s271 + $0x48b8] sm:$0xff]
        %v2682 = vld [vmem:[%s271 + $0x48c0] sm:$0xff]
        %v2683 = vld [vmem:[%s271 + $0x48c8] sm:$0xff]
        %v2684 = vld [vmem:[%s271 + $0x48d0] sm:$0xff]
        %v2685 = vld [vmem:[%s271 + $0x48d8] sm:$0xff]
        %v2686 = vld [vmem:[%s271 + $0x48e0] sm:$0xff]
        %v2687 = vld [vmem:[%s271 + $0x48e8] sm:$0xff]
        %v2688 = vld [vmem:[%s271 + $0x48f0] sm:$0xff]
        %v2689 = vld [vmem:[%s271 + $0x48f8] sm:$0xff]
        %v2690 = vld [vmem:[%s271 + $0x4900] sm:$0xff]
        %v2691 = vld [vmem:[%s271 + $0x4908] sm:$0xff]
        %v2692 = vld [vmem:[%s271 + $0x4910] sm:$0xff]
        %v2693 = vld [vmem:[%s271 + $0x4918] sm:$0xff]
        %v2694 = vld [vmem:[%s271 + $0x4920] sm:$0xff]
        %v2695 = vld [vmem:[%s271 + $0x4928] sm:$0xff]
        %v2696 = vld [vmem:[%s271 + $0x4930] sm:$0xff]
        %v2697 = vld [vmem:[%s271 + $0x4938] sm:$0xff]
        %v2698 = vld [vmem:[%s271 + $0x4940] sm:$0xff]
        %v2699 = vld [vmem:[%s271 + $0x4948] sm:$0xff]
        %v2700 = vld [vmem:[%s271 + $0x4950] sm:$0xff]
        %v2701 = vld [vmem:[%s271 + $0x4958] sm:$0xff]
        %v2702 = vld [vmem:[%s271 + $0x4960] sm:$0xff]
        %v2703 = vld [vmem:[%s271 + $0x4968] sm:$0xff]
        %v2704 = vld [vmem:[%s271 + $0x4970] sm:$0xff]
        %v2705 = vld [vmem:[%s271 + $0x4978] sm:$0xff]
        %v2706 = vld [vmem:[%s271 + $0x4980] sm:$0xff]
        %v2707 = vld [vmem:[%s271 + $0x4988] sm:$0xff]
        %v2708 = vld [vmem:[%s271 + $0x4990] sm:$0xff]
        %v2709 = vld [vmem:[%s271 + $0x4998] sm:$0xff]
        %v2710 = vld [vmem:[%s271 + $0x49a0] sm:$0xff]
        %v2711 = vld [vmem:[%s271 + $0x49a8] sm:$0xff]
        %v2712 = vld [vmem:[%s271 + $0x49b0] sm:$0xff]
        %v2713 = vld [vmem:[%s271 + $0x49b8] sm:$0xff]
        %v2714 = vld [vmem:[%s271 + $0x49c0] sm:$0xff]
        %v2715 = vld [vmem:[%s271 + $0x49c8] sm:$0xff]
        %v2716 = vld [vmem:[%s271 + $0x49d0] sm:$0xff]
        %v2717 = vld [vmem:[%s271 + $0x49d8] sm:$0xff]
        %v2718 = vld [vmem:[%s271 + $0x49e0] sm:$0xff]
        %v2719 = vld [vmem:[%s271 + $0x49e8] sm:$0xff]
        %v2720 = vld [vmem:[%s271 + $0x49f0] sm:$0xff]
        %v2721 = vld [vmem:[%s271 + $0x49f8] sm:$0xff]
        %v2722 = vld [vmem:[%s271 + $0x4a00] sm:$0xff]
        %v2723 = vld [vmem:[%s271 + $0x4a08] sm:$0xff]
        %v2724 = vld [vmem:[%s271 + $0x4a10] sm:$0xff]
        %v2725 = vld [vmem:[%s271 + $0x4a18] sm:$0xff]
        %v2726 = vld [vmem:[%s271 + $0x4a20] sm:$0xff]
        %v2727 = vld [vmem:[%s271 + $0x4a28] sm:$0xff]
        %v2728 = vld [vmem:[%s271 + $0x4a30] sm:$0xff]
        %v2729 = vld [vmem:[%s271 + $0x4a38] sm:$0xff]
        %v2730 = vld [vmem:[%s271 + $0x4a40] sm:$0xff]
        %v2731 = vld [vmem:[%s271 + $0x4a48] sm:$0xff]
        %v2732 = vld [vmem:[%s271 + $0x4a50] sm:$0xff]
        %v2733 = vld [vmem:[%s271 + $0x4a58] sm:$0xff]
        %v2734 = vld [vmem:[%s271 + $0x4a60] sm:$0xff]
        %v2735 = vld [vmem:[%s271 + $0x4a68] sm:$0xff]
        %v2736 = vld [vmem:[%s271 + $0x4a70] sm:$0xff]
        %v2737 = vld [vmem:[%s271 + $0x4a78] sm:$0xff]
        %v2738 = vld [vmem:[%s271 + $0x4a80] sm:$0xff]
        %v2739 = vld [vmem:[%s271 + $0x4a88] sm:$0xff]
        %v2740 = vld [vmem:[%s271 + $0x4a90] sm:$0xff]
        %v2741 = vld [vmem:[%s271 + $0x4a98] sm:$0xff]
        %v2742 = vld [vmem:[%s271 + $0x4aa0] sm:$0xff]
        %v2743 = vld [vmem:[%s271 + $0x4aa8] sm:$0xff]
        %v2744 = vld [vmem:[%s271 + $0x4ab0] sm:$0xff]
        %v2745 = vld [vmem:[%s271 + $0x4ab8] sm:$0xff]
        %v2746 = vld [vmem:[%s271 + $0x4ac0] sm:$0xff]
        %v2747 = vld [vmem:[%s271 + $0x4ac8] sm:$0xff]
        %v2748 = vld [vmem:[%s271 + $0x4ad0] sm:$0xff]
        %v2749 = vld [vmem:[%s271 + $0x4ad8] sm:$0xff]
        %v2750 = vld [vmem:[%s271 + $0x4ae0] sm:$0xff]
        %v2751 = vld [vmem:[%s271 + $0x4ae8] sm:$0xff]
        %v2752 = vld [vmem:[%s271 + $0x4af0] sm:$0xff]
        %v2753 = vld [vmem:[%s271 + $0x4af8] sm:$0xff]
        %v2754 = vld [vmem:[%s271 + $0x4b00] sm:$0xff]
        %v2755 = vld [vmem:[%s271 + $0x4b08] sm:$0xff]
        %v2756 = vld [vmem:[%s271 + $0x4b10] sm:$0xff]
        %v2757 = vld [vmem:[%s271 + $0x4b18] sm:$0xff]
        %v2758 = vld [vmem:[%s271 + $0x4b20] sm:$0xff]
        %v2759 = vld [vmem:[%s271 + $0x4b28] sm:$0xff]
        %v2760 = vld [vmem:[%s271 + $0x4b30] sm:$0xff]
        %v2761 = vld [vmem:[%s271 + $0x4b38] sm:$0xff]
        %v2762 = vld [vmem:[%s271 + $0x4b40] sm:$0xff]
        %v2763 = vld [vmem:[%s271 + $0x4b48] sm:$0xff]
        %v2764 = vld [vmem:[%s271 + $0x4b50] sm:$0xff]
        %v2765 = vld [vmem:[%s271 + $0x4b58] sm:$0xff]
        %v2766 = vld [vmem:[%s271 + $0x4b60] sm:$0xff]
        %v2767 = vld [vmem:[%s271 + $0x4b68] sm:$0xff]
        %v2768 = vld [vmem:[%s271 + $0x4b70] sm:$0xff]
        %v2769 = vld [vmem:[%s271 + $0x4b78] sm:$0xff]
        %v2770 = vld [vmem:[%s271 + $0x4b80] sm:$0xff]
        %v2771 = vld [vmem:[%s271 + $0x4b88] sm:$0xff]
        %v2772 = vld [vmem:[%s271 + $0x4b90] sm:$0xff]
        %v2773 = vld [vmem:[%s271 + $0x4b98] sm:$0xff]
        %v2774 = vld [vmem:[%s271 + $0x4ba0] sm:$0xff]
        %v2775 = vld [vmem:[%s271 + $0x4ba8] sm:$0xff]
        %v2776 = vld [vmem:[%s271 + $0x4bb0] sm:$0xff]
        %v2777 = vld [vmem:[%s271 + $0x4bb8] sm:$0xff]
        %v2778 = vld [vmem:[%s271 + $0x4bc0] sm:$0xff]
        %v2779 = vld [vmem:[%s271 + $0x4bc8] sm:$0xff]
        %v2780 = vld [vmem:[%s271 + $0x4bd0] sm:$0xff]
        %v2781 = vld [vmem:[%s271 + $0x4bd8] sm:$0xff]
        %v2782 = vld [vmem:[%s271 + $0x4be0] sm:$0xff]
        %v2783 = vld [vmem:[%s271 + $0x4be8] sm:$0xff]
        %v2784 = vld [vmem:[%s271 + $0x4bf0] sm:$0xff]
        %v2785 = vld [vmem:[%s271 + $0x4bf8] sm:$0xff]
        %v2786 = vld [vmem:[%s271 + $0x4c00] sm:$0xff]
        %v2787 = vld [vmem:[%s271 + $0x4c08] sm:$0xff]
        %v2788 = vld [vmem:[%s271 + $0x4c10] sm:$0xff]
        %v2789 = vld [vmem:[%s271 + $0x4c18] sm:$0xff]
        %v2790 = vld [vmem:[%s271 + $0x4c20] sm:$0xff]
        %v2791 = vld [vmem:[%s271 + $0x4c28] sm:$0xff]
        %v2792 = vld [vmem:[%s271 + $0x4c30] sm:$0xff]
        %v2793 = vld [vmem:[%s271 + $0x4c38] sm:$0xff]
        %v2794 = vld [vmem:[%s271 + $0x4c40] sm:$0xff]
        %v2795 = vld [vmem:[%s271 + $0x4c48] sm:$0xff]
        %v2796 = vld [vmem:[%s271 + $0x4c50] sm:$0xff]
        %v2797 = vld [vmem:[%s271 + $0x4c58] sm:$0xff]
        %v2798 = vld [vmem:[%s271 + $0x4c60] sm:$0xff]
        %v2799 = vld [vmem:[%s271 + $0x4c68] sm:$0xff]
        %v2800 = vld [vmem:[%s271 + $0x4c70] sm:$0xff]
        %v2801 = vld [vmem:[%s271 + $0x4c78] sm:$0xff]
        %v2802 = vld [vmem:[%s271 + $0x4c80] sm:$0xff]
        %v2803 = vld [vmem:[%s271 + $0x4c88] sm:$0xff]
        %v2804 = vld [vmem:[%s271 + $0x4c90] sm:$0xff]
        %v2805 = vld [vmem:[%s271 + $0x4c98] sm:$0xff]
        %v2806 = vld [vmem:[%s271 + $0x4ca0] sm:$0xff]
        %v2807 = vld [vmem:[%s271 + $0x4ca8] sm:$0xff]
        %v2808 = vld [vmem:[%s271 + $0x4cb0] sm:$0xff]
        %v2809 = vld [vmem:[%s271 + $0x4cb8] sm:$0xff]
        %v2810 = vld [vmem:[%s271 + $0x4cc0] sm:$0xff]
        %v2811 = vld [vmem:[%s271 + $0x4cc8] sm:$0xff]
        %v2812 = vld [vmem:[%s271 + $0x4cd0] sm:$0xff]
        %v2813 = vld [vmem:[%s271 + $0x4cd8] sm:$0xff]
        %v2814 = vld [vmem:[%s271 + $0x4ce0] sm:$0xff]
        %v2815 = vld [vmem:[%s271 + $0x4ce8] sm:$0xff]
        %v2816 = vld [vmem:[%s271 + $0x4cf0] sm:$0xff]
        %v2817 = vld [vmem:[%s271 + $0x4cf8] sm:$0xff]
        %v2818 = vld [vmem:[%s271 + $0x4d00] sm:$0xff]
        %v2819 = vld [vmem:[%s271 + $0x4d08] sm:$0xff]
        %v2820 = vld [vmem:[%s271 + $0x4d10] sm:$0xff]
        %v2821 = vld [vmem:[%s271 + $0x4d18] sm:$0xff]
        %v2822 = vld [vmem:[%s271 + $0x4d20] sm:$0xff]
        %v2823 = vld [vmem:[%s271 + $0x4d28] sm:$0xff]
        %v2824 = vld [vmem:[%s271 + $0x4d30] sm:$0xff]
        %v2825 = vld [vmem:[%s271 + $0x4d38] sm:$0xff]
        %v2826 = vld [vmem:[%s271 + $0x4d40] sm:$0xff]
        %v2827 = vld [vmem:[%s271 + $0x4d48] sm:$0xff]
        %v2828 = vld [vmem:[%s271 + $0x4d50] sm:$0xff]
        %v2829 = vld [vmem:[%s271 + $0x4d58] sm:$0xff]
        %v2830 = vld [vmem:[%s271 + $0x4d60] sm:$0xff]
        %v2831 = vld [vmem:[%s271 + $0x4d68] sm:$0xff]
        %v2832 = vld [vmem:[%s271 + $0x4d70] sm:$0xff]
        %v2833 = vld [vmem:[%s271 + $0x4d78] sm:$0xff]
        %v2834 = vld [vmem:[%s271 + $0x4d80] sm:$0xff]
        %v2835 = vld [vmem:[%s271 + $0x4d88] sm:$0xff]
        %v2836 = vld [vmem:[%s271 + $0x4d90] sm:$0xff]
        %v2837 = vld [vmem:[%s271 + $0x4d98] sm:$0xff]
        %v2838 = vld [vmem:[%s271 + $0x4da0] sm:$0xff]
        %v2839 = vld [vmem:[%s271 + $0x4da8] sm:$0xff]
        %v2840 = vld [vmem:[%s271 + $0x4db0] sm:$0xff]
        %v2841 = vld [vmem:[%s271 + $0x4db8] sm:$0xff]
        %v2842 = vld [vmem:[%s271 + $0x4dc0] sm:$0xff]
        %v2843 = vld [vmem:[%s271 + $0x4dc8] sm:$0xff]
        %v2844 = vld [vmem:[%s271 + $0x4dd0] sm:$0xff]
        %v2845 = vld [vmem:[%s271 + $0x4dd8] sm:$0xff]
        %v2846 = vld [vmem:[%s271 + $0x4de0] sm:$0xff]
        %v2847 = vld [vmem:[%s271 + $0x4de8] sm:$0xff]
        %v2848 = vld [vmem:[%s271 + $0x4df0] sm:$0xff]
        %v2849 = vld [vmem:[%s271 + $0x4df8] sm:$0xff]
        %v2850 = vld [vmem:[%s271 + $0x4e00] sm:$0xff]
        %v2851 = vld [vmem:[%s271 + $0x4e08] sm:$0xff]
        %v2852 = vld [vmem:[%s271 + $0x4e10] sm:$0xff]
        %v2853 = vld [vmem:[%s271 + $0x4e18] sm:$0xff]
        %v2854 = vld [vmem:[%s271 + $0x4e20] sm:$0xff]
        %v2855 = vld [vmem:[%s271 + $0x4e28] sm:$0xff]
        %v2856 = vld [vmem:[%s271 + $0x4e30] sm:$0xff]
        %v2857 = vld [vmem:[%s271 + $0x4e38] sm:$0xff]
        %v2858 = vld [vmem:[%s271 + $0x4e40] sm:$0xff]
        %v2859 = vld [vmem:[%s271 + $0x4e48] sm:$0xff]
        %v2860 = vld [vmem:[%s271 + $0x4e50] sm:$0xff]
        %v2861 = vld [vmem:[%s271 + $0x4e58] sm:$0xff]
        %v2862 = vld [vmem:[%s271 + $0x4e60] sm:$0xff]
        %v2863 = vld [vmem:[%s271 + $0x4e68] sm:$0xff]
        %v2864 = vld [vmem:[%s271 + $0x4e70] sm:$0xff]
        %v2865 = vld [vmem:[%s271 + $0x4e78] sm:$0xff]
        %v2866 = vld [vmem:[%s271 + $0x4e80] sm:$0xff]
        %v2867 = vld [vmem:[%s271 + $0x4e88] sm:$0xff]
        %v2868 = vld [vmem:[%s271 + $0x4e90] sm:$0xff]
        %v2869 = vld [vmem:[%s271 + $0x4e98] sm:$0xff]
        %v2870 = vld [vmem:[%s271 + $0x4ea0] sm:$0xff]
        %v2871 = vld [vmem:[%s271 + $0x4ea8] sm:$0xff]
        %v2872 = vld [vmem:[%s271 + $0x4eb0] sm:$0xff]
        %v2873 = vld [vmem:[%s271 + $0x4eb8] sm:$0xff]
        %v2874 = vld [vmem:[%s271 + $0x4ec0] sm:$0xff]
        %v2875 = vld [vmem:[%s271 + $0x4ec8] sm:$0xff]
        %v2876 = vld [vmem:[%s271 + $0x4ed0] sm:$0xff]
        %v2877 = vld [vmem:[%s271 + $0x4ed8] sm:$0xff]
        %v2878 = vld [vmem:[%s271 + $0x4ee0] sm:$0xff]
        %v2879 = vld [vmem:[%s271 + $0x4ee8] sm:$0xff]
        %v2880 = vld [vmem:[%s271 + $0x4ef0] sm:$0xff]
        %v2881 = vld [vmem:[%s271 + $0x4ef8] sm:$0xff]
        %v2882 = vld [vmem:[%s271 + $0x4f00] sm:$0xff]
        %v2883 = vld [vmem:[%s271 + $0x4f08] sm:$0xff]
        %v2884 = vld [vmem:[%s271 + $0x4f10] sm:$0xff]
        %v2885 = vld [vmem:[%s271 + $0x4f18] sm:$0xff]
        %v2886 = vld [vmem:[%s271 + $0x4f20] sm:$0xff]
        %v2887 = vld [vmem:[%s271 + $0x4f28] sm:$0xff]
        %v2888 = vld [vmem:[%s271 + $0x4f30] sm:$0xff]
        %v2889 = vld [vmem:[%s271 + $0x4f38] sm:$0xff]
        %v2890 = vld [vmem:[%s271 + $0x4f40] sm:$0xff]
        %v2891 = vld [vmem:[%s271 + $0x4f48] sm:$0xff]
        %v2892 = vld [vmem:[%s271 + $0x4f50] sm:$0xff]
        %v2893 = vld [vmem:[%s271 + $0x4f58] sm:$0xff]
        %v2894 = vld [vmem:[%s271 + $0x4f60] sm:$0xff]
        %v2895 = vld [vmem:[%s271 + $0x4f68] sm:$0xff]
        %v2896 = vld [vmem:[%s271 + $0x4f70] sm:$0xff]
        %v2897 = vld [vmem:[%s271 + $0x4f78] sm:$0xff]
        %v2898 = vld [vmem:[%s271 + $0x4f80] sm:$0xff]
        %v2899 = vld [vmem:[%s271 + $0x4f88] sm:$0xff]
        %v2900 = vld [vmem:[%s271 + $0x4f90] sm:$0xff]
        %v2901 = vld [vmem:[%s271 + $0x4f98] sm:$0xff]
        %v2902 = vld [vmem:[%s271 + $0x4fa0] sm:$0xff]
        %v2903 = vld [vmem:[%s271 + $0x4fa8] sm:$0xff]
        %v2904 = vld [vmem:[%s271 + $0x4fb0] sm:$0xff]
        %v2905 = vld [vmem:[%s271 + $0x4fb8] sm:$0xff]
        %v2906 = vld [vmem:[%s271 + $0x4fc0] sm:$0xff]
        %v2907 = vld [vmem:[%s271 + $0x4fc8] sm:$0xff]
        %v2908 = vld [vmem:[%s271 + $0x4fd0] sm:$0xff]
        %v2909 = vld [vmem:[%s271 + $0x4fd8] sm:$0xff]
        %v2910 = vld [vmem:[%s271 + $0x4fe0] sm:$0xff]
        %v2911 = vld [vmem:[%s271 + $0x4fe8] sm:$0xff]
        %v2912 = vld [vmem:[%s271 + $0x4ff0] sm:$0xff]
        %v2913 = vld [vmem:[%s271 + $0x4ff8] sm:$0xff]
        %v2914 = vld [vmem:[%s271 + $0x5000] sm:$0xff]
        %v2915 = vld [vmem:[%s271 + $0x5008] sm:$0xff]
        %v2916 = vld [vmem:[%s271 + $0x5010] sm:$0xff]
        %v2917 = vld [vmem:[%s271 + $0x5018] sm:$0xff]
        %v2918 = vld [vmem:[%s271 + $0x5020] sm:$0xff]
        %v2919 = vld [vmem:[%s271 + $0x5028] sm:$0xff]
        %v2920 = vld [vmem:[%s271 + $0x5030] sm:$0xff]
        %v2921 = vld [vmem:[%s271 + $0x5038] sm:$0xff]
        %v2922 = vld [vmem:[%s271 + $0x5040] sm:$0xff]
        %v2923 = vld [vmem:[%s271 + $0x5048] sm:$0xff]
        %v2924 = vld [vmem:[%s271 + $0x5050] sm:$0xff]
        %v2925 = vld [vmem:[%s271 + $0x5058] sm:$0xff]
        %v2926 = vld [vmem:[%s271 + $0x5060] sm:$0xff]
        %v2927 = vld [vmem:[%s271 + $0x5068] sm:$0xff]
        %v2928 = vld [vmem:[%s271 + $0x5070] sm:$0xff]
        %v2929 = vld [vmem:[%s271 + $0x5078] sm:$0xff]
        %v2930 = vld [vmem:[%s271 + $0x5080] sm:$0xff]
        %v2931 = vld [vmem:[%s271 + $0x5088] sm:$0xff]
        %v2932 = vld [vmem:[%s271 + $0x5090] sm:$0xff]
        %v2933 = vld [vmem:[%s271 + $0x5098] sm:$0xff]
        %v2934 = vld [vmem:[%s271 + $0x50a0] sm:$0xff]
        %v2935 = vld [vmem:[%s271 + $0x50a8] sm:$0xff]
        %v2936 = vld [vmem:[%s271 + $0x50b0] sm:$0xff]
        %v2937 = vld [vmem:[%s271 + $0x50b8] sm:$0xff]
        %v2938 = vld [vmem:[%s271 + $0x50c0] sm:$0xff]
        %v2939 = vld [vmem:[%s271 + $0x50c8] sm:$0xff]
        %v2940 = vld [vmem:[%s271 + $0x50d0] sm:$0xff]
        %v2941 = vld [vmem:[%s271 + $0x50d8] sm:$0xff]
        %v2942 = vld [vmem:[%s271 + $0x50e0] sm:$0xff]
        %v2943 = vld [vmem:[%s271 + $0x50e8] sm:$0xff]
        %v2944 = vld [vmem:[%s271 + $0x50f0] sm:$0xff]
        %v2945 = vld [vmem:[%s271 + $0x50f8] sm:$0xff]
        %v2946 = vld [vmem:[%s271 + $0x5100] sm:$0xff]
        %v2947 = vld [vmem:[%s271 + $0x5108] sm:$0xff]
        %v2948 = vld [vmem:[%s271 + $0x5110] sm:$0xff]
        %v2949 = vld [vmem:[%s271 + $0x5118] sm:$0xff]
        %v2950 = vld [vmem:[%s271 + $0x5120] sm:$0xff]
        %v2951 = vld [vmem:[%s271 + $0x5128] sm:$0xff]
        %v2952 = vld [vmem:[%s271 + $0x5130] sm:$0xff]
        %v2953 = vld [vmem:[%s271 + $0x5138] sm:$0xff]
        %v2954 = vld [vmem:[%s271 + $0x5140] sm:$0xff]
        %v2955 = vld [vmem:[%s271 + $0x5148] sm:$0xff]
        %v2956 = vld [vmem:[%s271 + $0x5150] sm:$0xff]
        %v2957 = vld [vmem:[%s271 + $0x5158] sm:$0xff]
        %v2958 = vld [vmem:[%s271 + $0x5160] sm:$0xff]
        %v2959 = vld [vmem:[%s271 + $0x5168] sm:$0xff]
        %v2960 = vld [vmem:[%s271 + $0x5170] sm:$0xff]
        %v2961 = vld [vmem:[%s271 + $0x5178] sm:$0xff]
        %v2962 = vld [vmem:[%s271 + $0x5180] sm:$0xff]
        %v2963 = vld [vmem:[%s271 + $0x5188] sm:$0xff]
        %v2964 = vld [vmem:[%s271 + $0x5190] sm:$0xff]
        %v2965 = vld [vmem:[%s271 + $0x5198] sm:$0xff]
        %v2966 = vld [vmem:[%s271 + $0x51a0] sm:$0xff]
        %v2967 = vld [vmem:[%s271 + $0x51a8] sm:$0xff]
        %v2968 = vld [vmem:[%s271 + $0x51b0] sm:$0xff]
        %v2969 = vld [vmem:[%s271 + $0x51b8] sm:$0xff]
        %v2970 = vld [vmem:[%s271 + $0x51c0] sm:$0xff]
        %v2971 = vld [vmem:[%s271 + $0x51c8] sm:$0xff]
        %v2972 = vld [vmem:[%s271 + $0x51d0] sm:$0xff]
        %v2973 = vld [vmem:[%s271 + $0x51d8] sm:$0xff]
        %v2974 = vld [vmem:[%s271 + $0x51e0] sm:$0xff]
        %v2975 = vld [vmem:[%s271 + $0x51e8] sm:$0xff]
        %v2976 = vld [vmem:[%s271 + $0x51f0] sm:$0xff]
        %v2977 = vld [vmem:[%s271 + $0x51f8] sm:$0xff]
        %v2978 = vld [vmem:[%s271 + $0x5200] sm:$0xff]
        %v2979 = vld [vmem:[%s271 + $0x5208] sm:$0xff]
        %v2980 = vld [vmem:[%s271 + $0x5210] sm:$0xff]
        %v2981 = vld [vmem:[%s271 + $0x5218] sm:$0xff]
        %v2982 = vld [vmem:[%s271 + $0x5220] sm:$0xff]
        %v2983 = vld [vmem:[%s271 + $0x5228] sm:$0xff]
        %v2984 = vld [vmem:[%s271 + $0x5230] sm:$0xff]
        %v2985 = vld [vmem:[%s271 + $0x5238] sm:$0xff]
        %v2986 = vld [vmem:[%s271 + $0x5240] sm:$0xff]
        %v2987 = vld [vmem:[%s271 + $0x5248] sm:$0xff]
        %v2988 = vld [vmem:[%s271 + $0x5250] sm:$0xff]
        %v2989 = vld [vmem:[%s271 + $0x5258] sm:$0xff]
        %v2990 = vld [vmem:[%s271 + $0x5260] sm:$0xff]
        %v2991 = vld [vmem:[%s271 + $0x5268] sm:$0xff]
        %v2992 = vld [vmem:[%s271 + $0x5270] sm:$0xff]
        %v2993 = vld [vmem:[%s271 + $0x5278] sm:$0xff]
        %v2994 = vld [vmem:[%s271 + $0x5280] sm:$0xff]
        %v2995 = vld [vmem:[%s271 + $0x5288] sm:$0xff]
        %v2996 = vld [vmem:[%s271 + $0x5290] sm:$0xff]
        %v2997 = vld [vmem:[%s271 + $0x5298] sm:$0xff]
        %v2998 = vld [vmem:[%s271 + $0x52a0] sm:$0xff]
        %v2999 = vld [vmem:[%s271 + $0x52a8] sm:$0xff]
        %v3000 = vld [vmem:[%s271 + $0x52b0] sm:$0xff]
        %v3001 = vld [vmem:[%s271 + $0x52b8] sm:$0xff]
        %v3002 = vld [vmem:[%s271 + $0x52c0] sm:$0xff]
        %v3003 = vld [vmem:[%s271 + $0x52c8] sm:$0xff]
        %v3004 = vld [vmem:[%s271 + $0x52d0] sm:$0xff]
        %v3005 = vld [vmem:[%s271 + $0x52d8] sm:$0xff]
        %v3006 = vld [vmem:[%s271 + $0x52e0] sm:$0xff]
        %v3007 = vld [vmem:[%s271 + $0x52e8] sm:$0xff]
        %v3008 = vld [vmem:[%s271 + $0x52f0] sm:$0xff]
        %v3009 = vld [vmem:[%s271 + $0x52f8] sm:$0xff]
        %v3010 = vld [vmem:[%s271 + $0x5300] sm:$0xff]
        %v3011 = vld [vmem:[%s271 + $0x5308] sm:$0xff]
        %v3012 = vld [vmem:[%s271 + $0x5310] sm:$0xff]
        %v3013 = vld [vmem:[%s271 + $0x5318] sm:$0xff]
        %v3014 = vld [vmem:[%s271 + $0x5320] sm:$0xff]
        %v3015 = vld [vmem:[%s271 + $0x5328] sm:$0xff]
        %v3016 = vld [vmem:[%s271 + $0x5330] sm:$0xff]
        %v3017 = vld [vmem:[%s271 + $0x5338] sm:$0xff]
        %v3018 = vld [vmem:[%s271 + $0x5340] sm:$0xff]
        %v3019 = vld [vmem:[%s271 + $0x5348] sm:$0xff]
        %v3020 = vld [vmem:[%s271 + $0x5350] sm:$0xff]
        %v3021 = vld [vmem:[%s271 + $0x5358] sm:$0xff]
        %v3022 = vld [vmem:[%s271 + $0x5360] sm:$0xff]
        %v3023 = vld [vmem:[%s271 + $0x5368] sm:$0xff]
        %v3024 = vld [vmem:[%s271 + $0x5370] sm:$0xff]
        %v3025 = vld [vmem:[%s271 + $0x5378] sm:$0xff]
        %v3026 = vld [vmem:[%s271 + $0x5380] sm:$0xff]
        %v3027 = vld [vmem:[%s271 + $0x5388] sm:$0xff]
        %v3028 = vld [vmem:[%s271 + $0x5390] sm:$0xff]
        %v3029 = vld [vmem:[%s271 + $0x5398] sm:$0xff]
        %v3030 = vld [vmem:[%s271 + $0x53a0] sm:$0xff]
        %v3031 = vld [vmem:[%s271 + $0x53a8] sm:$0xff]
        %v3032 = vld [vmem:[%s271 + $0x53b0] sm:$0xff]
        %v3033 = vld [vmem:[%s271 + $0x53b8] sm:$0xff]
        %v3034 = vld [vmem:[%s271 + $0x53c0] sm:$0xff]
        %v3035 = vld [vmem:[%s271 + $0x53c8] sm:$0xff]
        %v3036 = vld [vmem:[%s271 + $0x53d0] sm:$0xff]
        %v3037 = vld [vmem:[%s271 + $0x53d8] sm:$0xff]
        %v3038 = vld [vmem:[%s271 + $0x53e0] sm:$0xff]
        %v3039 = vld [vmem:[%s271 + $0x53e8] sm:$0xff]
        %v3040 = vld [vmem:[%s271 + $0x53f0] sm:$0xff]
        %v3041 = vld [vmem:[%s271 + $0x53f8] sm:$0xff]
        %v3042 = vld [vmem:[%s271 + $0x5400] sm:$0xff]
        %v3043 = vld [vmem:[%s271 + $0x5408] sm:$0xff]
        %v3044 = vld [vmem:[%s271 + $0x5410] sm:$0xff]
        %v3045 = vld [vmem:[%s271 + $0x5418] sm:$0xff]
        %v3046 = vld [vmem:[%s271 + $0x5420] sm:$0xff]
        %v3047 = vld [vmem:[%s271 + $0x5428] sm:$0xff]
        %v3048 = vld [vmem:[%s271 + $0x5430] sm:$0xff]
        %v3049 = vld [vmem:[%s271 + $0x5438] sm:$0xff]
        %v3050 = vld [vmem:[%s271 + $0x5440] sm:$0xff]
        %v3051 = vld [vmem:[%s271 + $0x5448] sm:$0xff]
        %v3052 = vld [vmem:[%s271 + $0x5450] sm:$0xff]
        %v3053 = vld [vmem:[%s271 + $0x5458] sm:$0xff]
        %v3054 = vld [vmem:[%s271 + $0x5460] sm:$0xff]
        %v3055 = vld [vmem:[%s271 + $0x5468] sm:$0xff]
        %v3056 = vld [vmem:[%s271 + $0x5470] sm:$0xff]
        %v3057 = vld [vmem:[%s271 + $0x5478] sm:$0xff]
        %v3058 = vld [vmem:[%s271 + $0x5480] sm:$0xff]
        %v3059 = vld [vmem:[%s271 + $0x5488] sm:$0xff]
        %v3060 = vld [vmem:[%s271 + $0x5490] sm:$0xff]
        %v3061 = vld [vmem:[%s271 + $0x5498] sm:$0xff]
        %v3062 = vld [vmem:[%s271 + $0x54a0] sm:$0xff]
        %v3063 = vld [vmem:[%s271 + $0x54a8] sm:$0xff]
        %v3064 = vld [vmem:[%s271 + $0x54b0] sm:$0xff]
        %v3065 = vld [vmem:[%s271 + $0x54b8] sm:$0xff]
        %v3066 = vld [vmem:[%s271 + $0x54c0] sm:$0xff]
        %v3067 = vld [vmem:[%s271 + $0x54c8] sm:$0xff]
        %v3068 = vld [vmem:[%s271 + $0x54d0] sm:$0xff]
        %v3069 = vld [vmem:[%s271 + $0x54d8] sm:$0xff]
        %v3070 = vld [vmem:[%s271 + $0x54e0] sm:$0xff]
        %v3071 = vld [vmem:[%s271 + $0x54e8] sm:$0xff]
        %v3072 = vld [vmem:[%s271 + $0x54f0] sm:$0xff]
        %v3073 = vld [vmem:[%s271 + $0x54f8] sm:$0xff]
        %v3074 = vld [vmem:[%s271 + $0x5500] sm:$0xff]
        %v3075 = vld [vmem:[%s271 + $0x5508] sm:$0xff]
        %v3076 = vld [vmem:[%s271 + $0x5510] sm:$0xff]
        %v3077 = vld [vmem:[%s271 + $0x5518] sm:$0xff]
        %v3078 = vld [vmem:[%s271 + $0x5520] sm:$0xff]
        %v3079 = vld [vmem:[%s271 + $0x5528] sm:$0xff]
        %v3080 = vld [vmem:[%s271 + $0x5530] sm:$0xff]
        %v3081 = vld [vmem:[%s271 + $0x5538] sm:$0xff]
        %v3082 = vld [vmem:[%s271 + $0x5540] sm:$0xff]
        %v3083 = vld [vmem:[%s271 + $0x5548] sm:$0xff]
        %v3084 = vld [vmem:[%s271 + $0x5550] sm:$0xff]
        %v3085 = vld [vmem:[%s271 + $0x5558] sm:$0xff]
        %v3086 = vld [vmem:[%s271 + $0x5560] sm:$0xff]
        %v3087 = vld [vmem:[%s271 + $0x5568] sm:$0xff]
        %v3088 = vld [vmem:[%s271 + $0x5570] sm:$0xff]
        %v3089 = vld [vmem:[%s271 + $0x5578] sm:$0xff]
        %v3090 = vld [vmem:[%s271 + $0x5580] sm:$0xff]
        %v3091 = vld [vmem:[%s271 + $0x5588] sm:$0xff]
        %v3092 = vld [vmem:[%s271 + $0x5590] sm:$0xff]
        %v3093 = vld [vmem:[%s271 + $0x5598] sm:$0xff]
        %v3094 = vld [vmem:[%s271 + $0x55a0] sm:$0xff]
        %v3095 = vld [vmem:[%s271 + $0x55a8] sm:$0xff]
        %v3096 = vld [vmem:[%s271 + $0x55b0] sm:$0xff]
        %v3097 = vld [vmem:[%s271 + $0x55b8] sm:$0xff]
        %v3098 = vld [vmem:[%s271 + $0x55c0] sm:$0xff]
        %v3099 = vld [vmem:[%s271 + $0x55c8] sm:$0xff]
        %v3100 = vld [vmem:[%s271 + $0x55d0] sm:$0xff]
        %v3101 = vld [vmem:[%s271 + $0x55d8] sm:$0xff]
        %v3102 = vld [vmem:[%s271 + $0x55e0] sm:$0xff]
        %v3103 = vld [vmem:[%s271 + $0x55e8] sm:$0xff]
        %v3104 = vld [vmem:[%s271 + $0x55f0] sm:$0xff]
        %v3105 = vld [vmem:[%s271 + $0x55f8] sm:$0xff]
        %v3106 = vld [vmem:[%s271 + $0x5600] sm:$0xff]
        %v3107 = vld [vmem:[%s271 + $0x5608] sm:$0xff]
        %v3108 = vld [vmem:[%s271 + $0x5610] sm:$0xff]
        %v3109 = vld [vmem:[%s271 + $0x5618] sm:$0xff]
        %v3110 = vld [vmem:[%s271 + $0x5620] sm:$0xff]
        %v3111 = vld [vmem:[%s271 + $0x5628] sm:$0xff]
        %v3112 = vld [vmem:[%s271 + $0x5630] sm:$0xff]
        %v3113 = vld [vmem:[%s271 + $0x5638] sm:$0xff]
        %v3114 = vld [vmem:[%s271 + $0x5640] sm:$0xff]
        %v3115 = vld [vmem:[%s271 + $0x5648] sm:$0xff]
        %v3116 = vld [vmem:[%s271 + $0x5650] sm:$0xff]
        %v3117 = vld [vmem:[%s271 + $0x5658] sm:$0xff]
        %v3118 = vld [vmem:[%s271 + $0x5660] sm:$0xff]
        %v3119 = vld [vmem:[%s271 + $0x5668] sm:$0xff]
        %v3120 = vld [vmem:[%s271 + $0x5670] sm:$0xff]
        %v3121 = vld [vmem:[%s271 + $0x5678] sm:$0xff]
        %v3122 = vld [vmem:[%s271 + $0x5680] sm:$0xff]
        %v3123 = vld [vmem:[%s271 + $0x5688] sm:$0xff]
        %v3124 = vld [vmem:[%s271 + $0x5690] sm:$0xff]
        %v3125 = vld [vmem:[%s271 + $0x5698] sm:$0xff]
        %v3126 = vld [vmem:[%s271 + $0x56a0] sm:$0xff]
        %v3127 = vld [vmem:[%s271 + $0x56a8] sm:$0xff]
        %v3128 = vld [vmem:[%s271 + $0x56b0] sm:$0xff]
        %v3129 = vld [vmem:[%s271 + $0x56b8] sm:$0xff]
        %v3130 = vld [vmem:[%s271 + $0x56c0] sm:$0xff]
        %v3131 = vld [vmem:[%s271 + $0x56c8] sm:$0xff]
        %v3132 = vld [vmem:[%s271 + $0x56d0] sm:$0xff]
        %v3133 = vld [vmem:[%s271 + $0x56d8] sm:$0xff]
        %v3134 = vld [vmem:[%s271 + $0x56e0] sm:$0xff]
        %v3135 = vld [vmem:[%s271 + $0x56e8] sm:$0xff]
        %v3136 = vld [vmem:[%s271 + $0x56f0] sm:$0xff]
        %v3137 = vld [vmem:[%s271 + $0x56f8] sm:$0xff]
        %v3138 = vld [vmem:[%s271 + $0x5700] sm:$0xff]
        %v3139 = vld [vmem:[%s271 + $0x5708] sm:$0xff]
        %v3140 = vld [vmem:[%s271 + $0x5710] sm:$0xff]
        %v3141 = vld [vmem:[%s271 + $0x5718] sm:$0xff]
        %v3142 = vld [vmem:[%s271 + $0x5720] sm:$0xff]
        %v3143 = vld [vmem:[%s271 + $0x5728] sm:$0xff]
        %v3144 = vld [vmem:[%s271 + $0x5730] sm:$0xff]
        %v3145 = vld [vmem:[%s271 + $0x5738] sm:$0xff]
        %v3146 = vld [vmem:[%s271 + $0x5740] sm:$0xff]
        %v3147 = vld [vmem:[%s271 + $0x5748] sm:$0xff]
        %v3148 = vld [vmem:[%s271 + $0x5750] sm:$0xff]
        %v3149 = vld [vmem:[%s271 + $0x5758] sm:$0xff]
        %v3150 = vld [vmem:[%s271 + $0x5760] sm:$0xff]
        %v3151 = vld [vmem:[%s271 + $0x5768] sm:$0xff]
        %v3152 = vld [vmem:[%s271 + $0x5770] sm:$0xff]
        %v3153 = vld [vmem:[%s271 + $0x5778] sm:$0xff]
        %v3154 = vld [vmem:[%s271 + $0x5780] sm:$0xff]
        %v3155 = vld [vmem:[%s271 + $0x5788] sm:$0xff]
        %v3156 = vld [vmem:[%s271 + $0x5790] sm:$0xff]
        %v3157 = vld [vmem:[%s271 + $0x5798] sm:$0xff]
        %v3158 = vld [vmem:[%s271 + $0x57a0] sm:$0xff]
        %v3159 = vld [vmem:[%s271 + $0x57a8] sm:$0xff]
        %v3160 = vld [vmem:[%s271 + $0x57b0] sm:$0xff]
        %v3161 = vld [vmem:[%s271 + $0x57b8] sm:$0xff]
        %v3162 = vld [vmem:[%s271 + $0x57c0] sm:$0xff]
        %v3163 = vld [vmem:[%s271 + $0x57c8] sm:$0xff]
        %v3164 = vld [vmem:[%s271 + $0x57d0] sm:$0xff]
        %v3165 = vld [vmem:[%s271 + $0x57d8] sm:$0xff]
        %v3166 = vld [vmem:[%s271 + $0x57e0] sm:$0xff]
        %v3167 = vld [vmem:[%s271 + $0x57e8] sm:$0xff]
        %v3168 = vld [vmem:[%s271 + $0x57f0] sm:$0xff]
        %v3169 = vld [vmem:[%s271 + $0x57f8] sm:$0xff]
        %v3176 = vcombine.high %v348, %v348
        %v3178 = vunpack.c.l.s4 1983009808
        %v3179 = vunpack.c.0.s8 %v3178
        %v3180 = vlaneseq
        %v3181 = vshrl.u32 %v3180, 7
        %v3182 = vsub.s32 %v3179, %v3181
        %v3183 = vrot.slane %v348, %v3182
        %v3185 = vunpack.c.l.s4 1983009808
        %v3186 = vunpack.c.0.s8 %v3185
        %v3187 = vlaneseq
        %v3188 = vshrl.u32 %v3187, 7
        %v3189 = vsub.s32 %v3186, %v3188
        %v3190 = vrot.slane %v3176, %v3189
        %v3191 = vcombine.high %v3183, %v3183
        %v3192 = vcombine.high %v3190, %v3190
        %v3193 = vcombine.high %v349, %v349
        %v3195 = vunpack.c.l.s4 1983009808
        %v3196 = vunpack.c.0.s8 %v3195
        %v3197 = vlaneseq
        %v3198 = vshrl.u32 %v3197, 7
        %v3199 = vsub.s32 %v3196, %v3198
        %v3200 = vrot.slane %v349, %v3199
        %v3202 = vunpack.c.l.s4 1983009808
        %v3203 = vunpack.c.0.s8 %v3202
        %v3204 = vlaneseq
        %v3205 = vshrl.u32 %v3204, 7
        %v3206 = vsub.s32 %v3203, %v3205
        %v3207 = vrot.slane %v3193, %v3206
        %v3208 = vcombine.high %v3200, %v3200
        %v3209 = vcombine.high %v3207, %v3207
        %v3210 = vcombine.high %v350, %v350
        %v3212 = vunpack.c.l.s4 1983009808
        %v3213 = vunpack.c.0.s8 %v3212
        %v3214 = vlaneseq
        %v3215 = vshrl.u32 %v3214, 7
        %v3216 = vsub.s32 %v3213, %v3215
        %v3217 = vrot.slane %v350, %v3216
        %v3219 = vunpack.c.l.s4 1983009808
        %v3220 = vunpack.c.0.s8 %v3219
        %v3221 = vlaneseq
        %v3222 = vshrl.u32 %v3221, 7
        %v3223 = vsub.s32 %v3220, %v3222
        %v3224 = vrot.slane %v3210, %v3223
        %v3225 = vcombine.high %v3217, %v3217
        %v3226 = vcombine.high %v3224, %v3224
        %v3227 = vcombine.high %v351, %v351
        %v3229 = vunpack.c.l.s4 1983009808
        %v3230 = vunpack.c.0.s8 %v3229
        %v3231 = vlaneseq
        %v3232 = vshrl.u32 %v3231, 7
        %v3233 = vsub.s32 %v3230, %v3232
        %v3234 = vrot.slane %v351, %v3233
        %v3236 = vunpack.c.l.s4 1983009808
        %v3237 = vunpack.c.0.s8 %v3236
        %v3238 = vlaneseq
        %v3239 = vshrl.u32 %v3238, 7
        %v3240 = vsub.s32 %v3237, %v3239
        %v3241 = vrot.slane %v3227, %v3240
        %v3242 = vcombine.high %v3234, %v3234
        %v3243 = vcombine.high %v3241, %v3241
        %v3244 = vcombine.high %v352, %v352
        %v3246 = vunpack.c.l.s4 1983009808
        %v3247 = vunpack.c.0.s8 %v3246
        %v3248 = vlaneseq
        %v3249 = vshrl.u32 %v3248, 7
        %v3250 = vsub.s32 %v3247, %v3249
        %v3251 = vrot.slane %v352, %v3250
        %v3253 = vunpack.c.l.s4 1983009808
        %v3254 = vunpack.c.0.s8 %v3253
        %v3255 = vlaneseq
        %v3256 = vshrl.u32 %v3255, 7
        %v3257 = vsub.s32 %v3254, %v3256
        %v3258 = vrot.slane %v3244, %v3257
        %v3259 = vcombine.high %v3251, %v3251
        %v3260 = vcombine.high %v3258, %v3258
        %v3262 = vunpack.c.l.s4 1983009808
        %v3263 = vunpack.c.0.s8 %v3262
        %v3264 = vlaneseq
        %v3265 = vshrl.u32 %v3264, 7
        %v3266 = vsub.s32 %v3263, %v3265
        %v3267 = vrot.slane %v353, %v3266
        %v3268 = vcombine.high %v3267, %v3267
        %3291 = vmatprep.subr.mxu0 %v355
        %3292 = vmatpush1.msra.mxu0 %v354
        %3293 = vmatprep.subr.mxu0 %v363
        %3294 = vmatpush1.msra.mxu0 %v362
        %3295 = vmatprep.subr.mxu0 %v371
        %3296 = vmatpush1.msra.mxu0 %v370
        %3297 = vmatprep.subr.mxu0 %v379
        %3298 = vmatpush1.msra.mxu0 %v378
        %3299 = vmatprep.subr.mxu0 %v387
        %3300 = vmatpush1.msra.mxu0 %v386
        %3301 = vmatprep.subr.mxu0 %v395
        %3302 = vmatpush1.msra.mxu0 %v394
        %3303 = vmatprep.subr.mxu0 %v403
        %3304 = vmatpush1.msra.mxu0 %v402
        %3305 = vmatprep.subr.mxu0 %v411
        %3306 = vmatpush1.msra.mxu0 %v410
        %3307 = vmatprep.subr.mxu0 %v419
        %3308 = vmatpush1.msra.mxu0 %v418
        %3309 = vmatprep.subr.mxu0 %v427
        %3310 = vmatpush1.msra.mxu0 %v426
        %3311 = vmatprep.subr.mxu0 %v435
        %3312 = vmatpush1.msra.mxu0 %v434
        %3313 = vmatprep.subr.mxu0 %v443
        %3314 = vmatpush1.msra.mxu0 %v442
        %3315 = vmatprep.subr.mxu0 %v451
        %3316 = vmatpush1.msra.mxu0 %v450
        %3317 = vmatprep.subr.mxu0 %v459
        %3318 = vmatpush1.msra.mxu0 %v458
        %3319 = vmatprep.subr.mxu0 %v467
        %3320 = vmatpush1.msra.mxu0 %v466
        %3321 = vmatprep.subr.mxu0 %v475
        %3322 = vmatpush1.msra.mxu0 %v474
        %3323 = vmatprep.subr.mxu0 %v483
        %3324 = vmatpush1.msra.mxu0 %v482
        %3325 = vmatprep.subr.mxu0 %v491
        %3326 = vmatpush1.msra.mxu0 %v490
        %3327 = vmatprep.subr.mxu0 %v499
        %3328 = vmatpush1.msra.mxu0 %v498
        %3329 = vmatprep.subr.mxu0 %v507
        %3330 = vmatpush1.msra.mxu0 %v506
        %3331 = vmatprep.subr.mxu0 %v515
        %3332 = vmatpush1.msra.mxu0 %v514
        %3333 = vmatprep.subr.mxu0 %v523
        %3334 = vmatpush1.msra.mxu0 %v522
        %3335 = vmatprep.subr.mxu0 %v531
        %3336 = vmatpush1.msra.mxu0 %v530
        %3337 = vmatprep.subr.mxu0 %v539
        %3338 = vmatpush1.msra.mxu0 %v538
        %3339 = vmatprep.subr.mxu0 %v547
        %3340 = vmatpush1.msra.mxu0 %v546
        %3341 = vmatprep.subr.mxu0 %v555
        %3342 = vmatpush1.msra.mxu0 %v554
        %3343 = vmatprep.subr.mxu0 %v563
        %3344 = vmatpush1.msra.mxu0 %v562
        %3345 = vmatprep.subr.mxu0 %v571
        %3346 = vmatpush1.msra.mxu0 %v570
        %3347 = vmatprep.subr.mxu0 %v579
        %3348 = vmatpush1.msra.mxu0 %v578
        %3349 = vmatprep.subr.mxu0 %v587
        %3350 = vmatpush1.msra.mxu0 %v586
        %3351 = vmatprep.subr.mxu0 %v595
        %3352 = vmatpush1.msra.mxu0 %v594
        %3353 = vmatprep.subr.mxu0 %v603
        %3354 = vmatpush1.msra.mxu0 %v602
        %3355 = vmatprep.mubr.f32.mxu0 %v3191
        %3356 = vmatmul.mubr.f32.gmra.mrb[0].mxu0 %v3183
        %v3357 = vpop.f32.mrb[0].mxu0
        %v3358 = vadd.f32 0.0, %v3357
        %v3359 = vpop.f32.mrb[0].mxu0
        %v3360 = vadd.f32 0.0, %v3359
        %3361 = vdwg.mxu0
        %3362 = vmatprep.subr.mxu0 %v611
        %3363 = vmatpush1.msra.mxu0 %v610
        %3364 = vmatprep.subr.mxu0 %v619
        %3365 = vmatpush1.msra.mxu0 %v618
        %3366 = vmatprep.subr.mxu0 %v627
        %3367 = vmatpush1.msra.mxu0 %v626
        %3368 = vmatprep.subr.mxu0 %v635
        %3369 = vmatpush1.msra.mxu0 %v634
        %3370 = vmatprep.subr.mxu0 %v643
        %3371 = vmatpush1.msra.mxu0 %v642
        %3372 = vmatprep.subr.mxu0 %v651
        %3373 = vmatpush1.msra.mxu0 %v650
        %3374 = vmatprep.subr.mxu0 %v659
        %3375 = vmatpush1.msra.mxu0 %v658
        %3376 = vmatprep.subr.mxu0 %v667
        %3377 = vmatpush1.msra.mxu0 %v666
        %3378 = vmatprep.subr.mxu0 %v675
        %3379 = vmatpush1.msra.mxu0 %v674
        %3380 = vmatprep.subr.mxu0 %v683
        %3381 = vmatpush1.msra.mxu0 %v682
        %3382 = vmatprep.subr.mxu0 %v691
        %3383 = vmatpush1.msra.mxu0 %v690
        %3384 = vmatprep.subr.mxu0 %v699
        %3385 = vmatpush1.msra.mxu0 %v698
        %3386 = vmatprep.subr.mxu0 %v707
        %3387 = vmatpush1.msra.mxu0 %v706
        %3388 = vmatprep.subr.mxu0 %v715
        %3389 = vmatpush1.msra.mxu0 %v714
        %3390 = vmatprep.subr.mxu0 %v723
        %3391 = vmatpush1.msra.mxu0 %v722
        %3392 = vmatprep.subr.mxu0 %v731
        %3393 = vmatpush1.msra.mxu0 %v730
        %3394 = vmatprep.subr.mxu0 %v739
        %3395 = vmatpush1.msra.mxu0 %v738
        %3396 = vmatprep.subr.mxu0 %v747
        %3397 = vmatpush1.msra.mxu0 %v746
        %3398 = vmatprep.subr.mxu0 %v755
        %3399 = vmatpush1.msra.mxu0 %v754
        %3400 = vmatprep.subr.mxu0 %v763
        %3401 = vmatpush1.msra.mxu0 %v762
        %3402 = vmatprep.subr.mxu0 %v771
        %3403 = vmatpush1.msra.mxu0 %v770
        %3404 = vmatprep.subr.mxu0 %v779
        %3405 = vmatpush1.msra.mxu0 %v778
        %3406 = vmatprep.subr.mxu0 %v787
        %3407 = vmatpush1.msra.mxu0 %v786
        %3408 = vmatprep.subr.mxu0 %v795
        %3409 = vmatpush1.msra.mxu0 %v794
        %3410 = vmatprep.subr.mxu0 %v803
        %3411 = vmatpush1.msra.mxu0 %v802
        %3412 = vmatprep.subr.mxu0 %v811
        %3413 = vmatpush1.msra.mxu0 %v810
        %3414 = vmatprep.subr.mxu0 %v819
        %3415 = vmatpush1.msra.mxu0 %v818
        %3416 = vmatprep.subr.mxu0 %v827
        %3417 = vmatpush1.msra.mxu0 %v826
        %3418 = vmatprep.subr.mxu0 %v835
        %3419 = vmatpush1.msra.mxu0 %v834
        %3420 = vmatprep.subr.mxu0 %v843
        %3421 = vmatpush1.msra.mxu0 %v842
        %3422 = vmatprep.subr.mxu0 %v851
        %3423 = vmatpush1.msra.mxu0 %v850
        %3424 = vmatprep.subr.mxu0 %v859
        %3425 = vmatpush1.msra.mxu0 %v858
        %3426 = vmatprep.mubr.f32.mxu0 %v3192
        %3427 = vmatmul.mubr.f32.gmra.mrb[0].mxu0 %v3190
        %v3428 = vpop.f32.mrb[0].mxu0
        %v3429 = vadd.f32 %v3358, %v3428
        %v3430 = vpop.f32.mrb[0].mxu0
        %v3431 = vadd.f32 %v3360, %v3430
        %3432 = vdwg.mxu0
        %3433 = vmatprep.subr.mxu0 %v867
        %3434 = vmatpush1.msra.mxu0 %v866
        %3435 = vmatprep.subr.mxu0 %v875
        %3436 = vmatpush1.msra.mxu0 %v874
        %3437 = vmatprep.subr.mxu0 %v883
        %3438 = vmatpush1.msra.mxu0 %v882
        %3439 = vmatprep.subr.mxu0 %v891
        %3440 = vmatpush1.msra.mxu0 %v890
        %3441 = vmatprep.subr.mxu0 %v899
        %3442 = vmatpush1.msra.mxu0 %v898
        %3443 = vmatprep.subr.mxu0 %v907
        %3444 = vmatpush1.msra.mxu0 %v906
        %3445 = vmatprep.subr.mxu0 %v915
        %3446 = vmatpush1.msra.mxu0 %v914
        %3447 = vmatprep.subr.mxu0 %v923
        %3448 = vmatpush1.msra.mxu0 %v922
        %3449 = vmatprep.subr.mxu0 %v931
        %3450 = vmatpush1.msra.mxu0 %v930
        %3451 = vmatprep.subr.mxu0 %v939
        %3452 = vmatpush1.msra.mxu0 %v938
        %3453 = vmatprep.subr.mxu0 %v947
        %3454 = vmatpush1.msra.mxu0 %v946
        %3455 = vmatprep.subr.mxu0 %v955
        %3456 = vmatpush1.msra.mxu0 %v954
        %3457 = vmatprep.subr.mxu0 %v963
        %3458 = vmatpush1.msra.mxu0 %v962
        %3459 = vmatprep.subr.mxu0 %v971
        %3460 = vmatpush1.msra.mxu0 %v970
        %3461 = vmatprep.subr.mxu0 %v979
        %3462 = vmatpush1.msra.mxu0 %v978
        %3463 = vmatprep.subr.mxu0 %v987
        %3464 = vmatpush1.msra.mxu0 %v986
        %3465 = vmatprep.subr.mxu0 %v995
        %3466 = vmatpush1.msra.mxu0 %v994
        %3467 = vmatprep.subr.mxu0 %v1003
        %3468 = vmatpush1.msra.mxu0 %v1002
        %3469 = vmatprep.subr.mxu0 %v1011
        %3470 = vmatpush1.msra.mxu0 %v1010
        %3471 = vmatprep.subr.mxu0 %v1019
        %3472 = vmatpush1.msra.mxu0 %v1018
        %3473 = vmatprep.subr.mxu0 %v1027
        %3474 = vmatpush1.msra.mxu0 %v1026
        %3475 = vmatprep.subr.mxu0 %v1035
        %3476 = vmatpush1.msra.mxu0 %v1034
        %3477 = vmatprep.subr.mxu0 %v1043
        %3478 = vmatpush1.msra.mxu0 %v1042
        %3479 = vmatprep.subr.mxu0 %v1051
        %3480 = vmatpush1.msra.mxu0 %v1050
        %3481 = vmatprep.subr.mxu0 %v1059
        %3482 = vmatpush1.msra.mxu0 %v1058
        %3483 = vmatprep.subr.mxu0 %v1067
        %3484 = vmatpush1.msra.mxu0 %v1066
        %3485 = vmatprep.subr.mxu0 %v1075
        %3486 = vmatpush1.msra.mxu0 %v1074
        %3487 = vmatprep.subr.mxu0 %v1083
        %3488 = vmatpush1.msra.mxu0 %v1082
        %3489 = vmatprep.subr.mxu0 %v1091
        %3490 = vmatpush1.msra.mxu0 %v1090
        %3491 = vmatprep.subr.mxu0 %v1099
        %3492 = vmatpush1.msra.mxu0 %v1098
        %3493 = vmatprep.subr.mxu0 %v1107
        %3494 = vmatpush1.msra.mxu0 %v1106
        %3495 = vmatprep.subr.mxu0 %v1115
        %3496 = vmatpush1.msra.mxu0 %v1114
        %3497 = vmatprep.mubr.f32.mxu0 %v3208
        %3498 = vmatmul.mubr.f32.gmra.mrb[0].mxu0 %v3200
        %v3499 = vpop.f32.mrb[0].mxu0
        %v3500 = vadd.f32 %v3429, %v3499
        %v3501 = vpop.f32.mrb[0].mxu0
        %v3502 = vadd.f32 %v3431, %v3501
        %3503 = vdwg.mxu0
        %3504 = vmatprep.subr.mxu0 %v1123
        %3505 = vmatpush1.msra.mxu0 %v1122
        %3506 = vmatprep.subr.mxu0 %v1131
        %3507 = vmatpush1.msra.mxu0 %v1130
        %3508 = vmatprep.subr.mxu0 %v1139
        %3509 = vmatpush1.msra.mxu0 %v1138
        %3510 = vmatprep.subr.mxu0 %v1147
        %3511 = vmatpush1.msra.mxu0 %v1146
        %3512 = vmatprep.subr.mxu0 %v1155
        %3513 = vmatpush1.msra.mxu0 %v1154
        %3514 = vmatprep.subr.mxu0 %v1163
        %3515 = vmatpush1.msra.mxu0 %v1162
        %3516 = vmatprep.subr.mxu0 %v1171
        %3517 = vmatpush1.msra.mxu0 %v1170
        %3518 = vmatprep.subr.mxu0 %v1179
        %3519 = vmatpush1.msra.mxu0 %v1178
        %3520 = vmatprep.subr.mxu0 %v1187
        %3521 = vmatpush1.msra.mxu0 %v1186
        %3522 = vmatprep.subr.mxu0 %v1195
        %3523 = vmatpush1.msra.mxu0 %v1194
        %3524 = vmatprep.subr.mxu0 %v1203
        %3525 = vmatpush1.msra.mxu0 %v1202
        %3526 = vmatprep.subr.mxu0 %v1211
        %3527 = vmatpush1.msra.mxu0 %v1210
        %3528 = vmatprep.subr.mxu0 %v1219
        %3529 = vmatpush1.msra.mxu0 %v1218
        %3530 = vmatprep.subr.mxu0 %v1227
        %3531 = vmatpush1.msra.mxu0 %v1226
        %3532 = vmatprep.subr.mxu0 %v1235
        %3533 = vmatpush1.msra.mxu0 %v1234
        %3534 = vmatprep.subr.mxu0 %v1243
        %3535 = vmatpush1.msra.mxu0 %v1242
        %3536 = vmatprep.subr.mxu0 %v1251
        %3537 = vmatpush1.msra.mxu0 %v1250
        %3538 = vmatprep.subr.mxu0 %v1259
        %3539 = vmatpush1.msra.mxu0 %v1258
        %3540 = vmatprep.subr.mxu0 %v1267
        %3541 = vmatpush1.msra.mxu0 %v1266
        %3542 = vmatprep.subr.mxu0 %v1275
        %3543 = vmatpush1.msra.mxu0 %v1274
        %3544 = vmatprep.subr.mxu0 %v1283
        %3545 = vmatpush1.msra.mxu0 %v1282
        %3546 = vmatprep.subr.mxu0 %v1291
        %3547 = vmatpush1.msra.mxu0 %v1290
        %3548 = vmatprep.subr.mxu0 %v1299
        %3549 = vmatpush1.msra.mxu0 %v1298
        %3550 = vmatprep.subr.mxu0 %v1307
        %3551 = vmatpush1.msra.mxu0 %v1306
        %3552 = vmatprep.subr.mxu0 %v1315
        %3553 = vmatpush1.msra.mxu0 %v1314
        %3554 = vmatprep.subr.mxu0 %v1323
        %3555 = vmatpush1.msra.mxu0 %v1322
        %3556 = vmatprep.subr.mxu0 %v1331
        %3557 = vmatpush1.msra.mxu0 %v1330
        %3558 = vmatprep.subr.mxu0 %v1339
        %3559 = vmatpush1.msra.mxu0 %v1338
        %3560 = vmatprep.subr.mxu0 %v1347
        %3561 = vmatpush1.msra.mxu0 %v1346
        %3562 = vmatprep.subr.mxu0 %v1355
        %3563 = vmatpush1.msra.mxu0 %v1354
        %3564 = vmatprep.subr.mxu0 %v1363
        %3565 = vmatpush1.msra.mxu0 %v1362
        %3566 = vmatprep.subr.mxu0 %v1371
        %3567 = vmatpush1.msra.mxu0 %v1370
        %3568 = vmatprep.mubr.f32.mxu0 %v3209
        %3569 = vmatmul.mubr.f32.gmra.mrb[0].mxu0 %v3207
        %v3570 = vpop.f32.mrb[0].mxu0
        %v3571 = vadd.f32 %v3500, %v3570
        %v3572 = vpop.f32.mrb[0].mxu0
        %v3573 = vadd.f32 %v3502, %v3572
        %3574 = vdwg.mxu0
        %3575 = vmatprep.subr.mxu0 %v1379
        %3576 = vmatpush1.msra.mxu0 %v1378
        %3577 = vmatprep.subr.mxu0 %v1387
        %3578 = vmatpush1.msra.mxu0 %v1386
        %3579 = vmatprep.subr.mxu0 %v1395
        %3580 = vmatpush1.msra.mxu0 %v1394
        %3581 = vmatprep.subr.mxu0 %v1403
        %3582 = vmatpush1.msra.mxu0 %v1402
        %3583 = vmatprep.subr.mxu0 %v1411
        %3584 = vmatpush1.msra.mxu0 %v1410
        %3585 = vmatprep.subr.mxu0 %v1419
        %3586 = vmatpush1.msra.mxu0 %v1418
        %3587 = vmatprep.subr.mxu0 %v1427
        %3588 = vmatpush1.msra.mxu0 %v1426
        %3589 = vmatprep.subr.mxu0 %v1435
        %3590 = vmatpush1.msra.mxu0 %v1434
        %3591 = vmatprep.subr.mxu0 %v1443
        %3592 = vmatpush1.msra.mxu0 %v1442
        %3593 = vmatprep.subr.mxu0 %v1451
        %3594 = vmatpush1.msra.mxu0 %v1450
        %3595 = vmatprep.subr.mxu0 %v1459
        %3596 = vmatpush1.msra.mxu0 %v1458
        %3597 = vmatprep.subr.mxu0 %v1467
        %3598 = vmatpush1.msra.mxu0 %v1466
        %3599 = vmatprep.subr.mxu0 %v1475
        %3600 = vmatpush1.msra.mxu0 %v1474
        %3601 = vmatprep.subr.mxu0 %v1483
        %3602 = vmatpush1.msra.mxu0 %v1482
        %3603 = vmatprep.subr.mxu0 %v1491
        %3604 = vmatpush1.msra.mxu0 %v1490
        %3605 = vmatprep.subr.mxu0 %v1499
        %3606 = vmatpush1.msra.mxu0 %v1498
        %3607 = vmatprep.subr.mxu0 %v1507
        %3608 = vmatpush1.msra.mxu0 %v1506
        %3609 = vmatprep.subr.mxu0 %v1515
        %3610 = vmatpush1.msra.mxu0 %v1514
        %3611 = vmatprep.subr.mxu0 %v1523
        %3612 = vmatpush1.msra.mxu0 %v1522
        %3613 = vmatprep.subr.mxu0 %v1531
        %3614 = vmatpush1.msra.mxu0 %v1530
        %3615 = vmatprep.subr.mxu0 %v1539
        %3616 = vmatpush1.msra.mxu0 %v1538
        %3617 = vmatprep.subr.mxu0 %v1547
        %3618 = vmatpush1.msra.mxu0 %v1546
        %3619 = vmatprep.subr.mxu0 %v1555
        %3620 = vmatpush1.msra.mxu0 %v1554
        %3621 = vmatprep.subr.mxu0 %v1563
        %3622 = vmatpush1.msra.mxu0 %v1562
        %3623 = vmatprep.subr.mxu0 %v1571
        %3624 = vmatpush1.msra.mxu0 %v1570
        %3625 = vmatprep.subr.mxu0 %v1579
        %3626 = vmatpush1.msra.mxu0 %v1578
        %3627 = vmatprep.subr.mxu0 %v1587
        %3628 = vmatpush1.msra.mxu0 %v1586
        %3629 = vmatprep.subr.mxu0 %v1595
        %3630 = vmatpush1.msra.mxu0 %v1594
        %3631 = vmatprep.subr.mxu0 %v1603
        %3632 = vmatpush1.msra.mxu0 %v1602
        %3633 = vmatprep.subr.mxu0 %v1611
        %3634 = vmatpush1.msra.mxu0 %v1610
        %3635 = vmatprep.subr.mxu0 %v1619
        %3636 = vmatpush1.msra.mxu0 %v1618
        %3637 = vmatprep.subr.mxu0 %v1627
        %3638 = vmatpush1.msra.mxu0 %v1626
        %3639 = vmatprep.mubr.f32.mxu0 %v3225
        %3640 = vmatmul.mubr.f32.gmra.mrb[0].mxu0 %v3217
        %v3641 = vpop.f32.mrb[0].mxu0
        %v3642 = vadd.f32 %v3571, %v3641
        %v3643 = vpop.f32.mrb[0].mxu0
        %v3644 = vadd.f32 %v3573, %v3643
        %3645 = vdwg.mxu0
        %3646 = vmatprep.subr.mxu0 %v1635
        %3647 = vmatpush1.msra.mxu0 %v1634
        %3648 = vmatprep.subr.mxu0 %v1643
        %3649 = vmatpush1.msra.mxu0 %v1642
        %3650 = vmatprep.subr.mxu0 %v1651
        %3651 = vmatpush1.msra.mxu0 %v1650
        %3652 = vmatprep.subr.mxu0 %v1659
        %3653 = vmatpush1.msra.mxu0 %v1658
        %3654 = vmatprep.subr.mxu0 %v1667
        %3655 = vmatpush1.msra.mxu0 %v1666
        %3656 = vmatprep.subr.mxu0 %v1675
        %3657 = vmatpush1.msra.mxu0 %v1674
        %3658 = vmatprep.subr.mxu0 %v1683
        %3659 = vmatpush1.msra.mxu0 %v1682
        %3660 = vmatprep.subr.mxu0 %v1691
        %3661 = vmatpush1.msra.mxu0 %v1690
        %3662 = vmatprep.subr.mxu0 %v1699
        %3663 = vmatpush1.msra.mxu0 %v1698
        %3664 = vmatprep.subr.mxu0 %v1707
        %3665 = vmatpush1.msra.mxu0 %v1706
        %3666 = vmatprep.subr.mxu0 %v1715
        %3667 = vmatpush1.msra.mxu0 %v1714
        %3668 = vmatprep.subr.mxu0 %v1723
        %3669 = vmatpush1.msra.mxu0 %v1722
        %3670 = vmatprep.subr.mxu0 %v1731
        %3671 = vmatpush1.msra.mxu0 %v1730
        %3672 = vmatprep.subr.mxu0 %v1739
        %3673 = vmatpush1.msra.mxu0 %v1738
        %3674 = vmatprep.subr.mxu0 %v1747
        %3675 = vmatpush1.msra.mxu0 %v1746
        %3676 = vmatprep.subr.mxu0 %v1755
        %3677 = vmatpush1.msra.mxu0 %v1754
        %3678 = vmatprep.subr.mxu0 %v1763
        %3679 = vmatpush1.msra.mxu0 %v1762
        %3680 = vmatprep.subr.mxu0 %v1771
        %3681 = vmatpush1.msra.mxu0 %v1770
        %3682 = vmatprep.subr.mxu0 %v1779
        %3683 = vmatpush1.msra.mxu0 %v1778
        %3684 = vmatprep.subr.mxu0 %v1787
        %3685 = vmatpush1.msra.mxu0 %v1786
        %3686 = vmatprep.subr.mxu0 %v1795
        %3687 = vmatpush1.msra.mxu0 %v1794
        %3688 = vmatprep.subr.mxu0 %v1803
        %3689 = vmatpush1.msra.mxu0 %v1802
        %3690 = vmatprep.subr.mxu0 %v1811
        %3691 = vmatpush1.msra.mxu0 %v1810
        %3692 = vmatprep.subr.mxu0 %v1819
        %3693 = vmatpush1.msra.mxu0 %v1818
        %3694 = vmatprep.subr.mxu0 %v1827
        %3695 = vmatpush1.msra.mxu0 %v1826
        %3696 = vmatprep.subr.mxu0 %v1835
        %3697 = vmatpush1.msra.mxu0 %v1834
        %3698 = vmatprep.subr.mxu0 %v1843
        %3699 = vmatpush1.msra.mxu0 %v1842
        %3700 = vmatprep.subr.mxu0 %v1851
        %3701 = vmatpush1.msra.mxu0 %v1850
        %3702 = vmatprep.subr.mxu0 %v1859
        %3703 = vmatpush1.msra.mxu0 %v1858
        %3704 = vmatprep.subr.mxu0 %v1867
        %3705 = vmatpush1.msra.mxu0 %v1866
        %3706 = vmatprep.subr.mxu0 %v1875
        %3707 = vmatpush1.msra.mxu0 %v1874
        %3708 = vmatprep.subr.mxu0 %v1883
        %3709 = vmatpush1.msra.mxu0 %v1882
        %3710 = vmatprep.mubr.f32.mxu0 %v3226
        %3711 = vmatmul.mubr.f32.gmra.mrb[0].mxu0 %v3224
        %v3712 = vpop.f32.mrb[0].mxu0
        %v3713 = vadd.f32 %v3642, %v3712
        %v3714 = vpop.f32.mrb[0].mxu0
        %v3715 = vadd.f32 %v3644, %v3714
        %3716 = vdwg.mxu0
        %3717 = vmatprep.subr.mxu0 %v1891
        %3718 = vmatpush1.msra.mxu0 %v1890
        %3719 = vmatprep.subr.mxu0 %v1899
        %3720 = vmatpush1.msra.mxu0 %v1898
        %3721 = vmatprep.subr.mxu0 %v1907
        %3722 = vmatpush1.msra.mxu0 %v1906
        %3723 = vmatprep.subr.mxu0 %v1915
        %3724 = vmatpush1.msra.mxu0 %v1914
        %3725 = vmatprep.subr.mxu0 %v1923
        %3726 = vmatpush1.msra.mxu0 %v1922
        %3727 = vmatprep.subr.mxu0 %v1931
        %3728 = vmatpush1.msra.mxu0 %v1930
        %3729 = vmatprep.subr.mxu0 %v1939
        %3730 = vmatpush1.msra.mxu0 %v1938
        %3731 = vmatprep.subr.mxu0 %v1947
        %3732 = vmatpush1.msra.mxu0 %v1946
        %3733 = vmatprep.subr.mxu0 %v1955
        %3734 = vmatpush1.msra.mxu0 %v1954
        %3735 = vmatprep.subr.mxu0 %v1963
        %3736 = vmatpush1.msra.mxu0 %v1962
        %3737 = vmatprep.subr.mxu0 %v1971
        %3738 = vmatpush1.msra.mxu0 %v1970
        %3739 = vmatprep.subr.mxu0 %v1979
        %3740 = vmatpush1.msra.mxu0 %v1978
        %3741 = vmatprep.subr.mxu0 %v1987
        %3742 = vmatpush1.msra.mxu0 %v1986
        %3743 = vmatprep.subr.mxu0 %v1995
        %3744 = vmatpush1.msra.mxu0 %v1994
        %3745 = vmatprep.subr.mxu0 %v2003
        %3746 = vmatpush1.msra.mxu0 %v2002
        %3747 = vmatprep.subr.mxu0 %v2011
        %3748 = vmatpush1.msra.mxu0 %v2010
        %3749 = vmatprep.subr.mxu0 %v2019
        %3750 = vmatpush1.msra.mxu0 %v2018
        %3751 = vmatprep.subr.mxu0 %v2027
        %3752 = vmatpush1.msra.mxu0 %v2026
        %3753 = vmatprep.subr.mxu0 %v2035
        %3754 = vmatpush1.msra.mxu0 %v2034
        %3755 = vmatprep.subr.mxu0 %v2043
        %3756 = vmatpush1.msra.mxu0 %v2042
        %3757 = vmatprep.subr.mxu0 %v2051
        %3758 = vmatpush1.msra.mxu0 %v2050
        %3759 = vmatprep.subr.mxu0 %v2059
        %3760 = vmatpush1.msra.mxu0 %v2058
        %3761 = vmatprep.subr.mxu0 %v2067
        %3762 = vmatpush1.msra.mxu0 %v2066
        %3763 = vmatprep.subr.mxu0 %v2075
        %3764 = vmatpush1.msra.mxu0 %v2074
        %3765 = vmatprep.subr.mxu0 %v2083
        %3766 = vmatpush1.msra.mxu0 %v2082
        %3767 = vmatprep.subr.mxu0 %v2091
        %3768 = vmatpush1.msra.mxu0 %v2090
        %3769 = vmatprep.subr.mxu0 %v2099
        %3770 = vmatpush1.msra.mxu0 %v2098
        %3771 = vmatprep.subr.mxu0 %v2107
        %3772 = vmatpush1.msra.mxu0 %v2106
        %3773 = vmatprep.subr.mxu0 %v2115
        %3774 = vmatpush1.msra.mxu0 %v2114
        %3775 = vmatprep.subr.mxu0 %v2123
        %3776 = vmatpush1.msra.mxu0 %v2122
        %3777 = vmatprep.subr.mxu0 %v2131
        %3778 = vmatpush1.msra.mxu0 %v2130
        %3779 = vmatprep.subr.mxu0 %v2139
        %3780 = vmatpush1.msra.mxu0 %v2138
        %3781 = vmatprep.mubr.f32.mxu0 %v3242
        %3782 = vmatmul.mubr.f32.gmra.mrb[0].mxu0 %v3234
        %v3783 = vpop.f32.mrb[0].mxu0
        %v3784 = vadd.f32 %v3713, %v3783
        %v3785 = vpop.f32.mrb[0].mxu0
        %v3786 = vadd.f32 %v3715, %v3785
        %3787 = vdwg.mxu0
        %3788 = vmatprep.subr.mxu0 %v2147
        %3789 = vmatpush1.msra.mxu0 %v2146
        %3790 = vmatprep.subr.mxu0 %v2155
        %3791 = vmatpush1.msra.mxu0 %v2154
        %3792 = vmatprep.subr.mxu0 %v2163
        %3793 = vmatpush1.msra.mxu0 %v2162
        %3794 = vmatprep.subr.mxu0 %v2171
        %3795 = vmatpush1.msra.mxu0 %v2170
        %3796 = vmatprep.subr.mxu0 %v2179
        %3797 = vmatpush1.msra.mxu0 %v2178
        %3798 = vmatprep.subr.mxu0 %v2187
        %3799 = vmatpush1.msra.mxu0 %v2186
        %3800 = vmatprep.subr.mxu0 %v2195
        %3801 = vmatpush1.msra.mxu0 %v2194
        %3802 = vmatprep.subr.mxu0 %v2203
        %3803 = vmatpush1.msra.mxu0 %v2202
        %3804 = vmatprep.subr.mxu0 %v2211
        %3805 = vmatpush1.msra.mxu0 %v2210
        %3806 = vmatprep.subr.mxu0 %v2219
        %3807 = vmatpush1.msra.mxu0 %v2218
        %3808 = vmatprep.subr.mxu0 %v2227
        %3809 = vmatpush1.msra.mxu0 %v2226
        %3810 = vmatprep.subr.mxu0 %v2235
        %3811 = vmatpush1.msra.mxu0 %v2234
        %3812 = vmatprep.subr.mxu0 %v2243
        %3813 = vmatpush1.msra.mxu0 %v2242
        %3814 = vmatprep.subr.mxu0 %v2251
        %3815 = vmatpush1.msra.mxu0 %v2250
        %3816 = vmatprep.subr.mxu0 %v2259
        %3817 = vmatpush1.msra.mxu0 %v2258
        %3818 = vmatprep.subr.mxu0 %v2267
        %3819 = vmatpush1.msra.mxu0 %v2266
        %3820 = vmatprep.subr.mxu0 %v2275
        %3821 = vmatpush1.msra.mxu0 %v2274
        %3822 = vmatprep.subr.mxu0 %v2283
        %3823 = vmatpush1.msra.mxu0 %v2282
        %3824 = vmatprep.subr.mxu0 %v2291
        %3825 = vmatpush1.msra.mxu0 %v2290
        %3826 = vmatprep.subr.mxu0 %v2299
        %3827 = vmatpush1.msra.mxu0 %v2298
        %3828 = vmatprep.subr.mxu0 %v2307
        %3829 = vmatpush1.msra.mxu0 %v2306
        %3830 = vmatprep.subr.mxu0 %v2315
        %3831 = vmatpush1.msra.mxu0 %v2314
        %3832 = vmatprep.subr.mxu0 %v2323
        %3833 = vmatpush1.msra.mxu0 %v2322
        %3834 = vmatprep.subr.mxu0 %v2331
        %3835 = vmatpush1.msra.mxu0 %v2330
        %3836 = vmatprep.subr.mxu0 %v2339
        %3837 = vmatpush1.msra.mxu0 %v2338
        %3838 = vmatprep.subr.mxu0 %v2347
        %3839 = vmatpush1.msra.mxu0 %v2346
        %3840 = vmatprep.subr.mxu0 %v2355
        %3841 = vmatpush1.msra.mxu0 %v2354
        %3842 = vmatprep.subr.mxu0 %v2363
        %3843 = vmatpush1.msra.mxu0 %v2362
        %3844 = vmatprep.subr.mxu0 %v2371
        %3845 = vmatpush1.msra.mxu0 %v2370
        %3846 = vmatprep.subr.mxu0 %v2379
        %3847 = vmatpush1.msra.mxu0 %v2378
        %3848 = vmatprep.subr.mxu0 %v2387
        %3849 = vmatpush1.msra.mxu0 %v2386
        %3850 = vmatprep.subr.mxu0 %v2395
        %3851 = vmatpush1.msra.mxu0 %v2394
        %3852 = vmatprep.mubr.f32.mxu0 %v3243
        %3853 = vmatmul.mubr.f32.gmra.mrb[0].mxu0 %v3241
        %v3854 = vpop.f32.mrb[0].mxu0
        %v3855 = vadd.f32 %v3784, %v3854
        %v3856 = vpop.f32.mrb[0].mxu0
        %v3857 = vadd.f32 %v3786, %v3856
        %3858 = vdwg.mxu0
        %3859 = vmatprep.subr.mxu0 %v2403
        %3860 = vmatpush1.msra.mxu0 %v2402
        %3861 = vmatprep.subr.mxu0 %v2411
        %3862 = vmatpush1.msra.mxu0 %v2410
        %3863 = vmatprep.subr.mxu0 %v2419
        %3864 = vmatpush1.msra.mxu0 %v2418
        %3865 = vmatprep.subr.mxu0 %v2427
        %3866 = vmatpush1.msra.mxu0 %v2426
        %3867 = vmatprep.subr.mxu0 %v2435
        %3868 = vmatpush1.msra.mxu0 %v2434
        %3869 = vmatprep.subr.mxu0 %v2443
        %3870 = vmatpush1.msra.mxu0 %v2442
        %3871 = vmatprep.subr.mxu0 %v2451
        %3872 = vmatpush1.msra.mxu0 %v2450
        %3873 = vmatprep.subr.mxu0 %v2459
        %3874 = vmatpush1.msra.mxu0 %v2458
        %3875 = vmatprep.subr.mxu0 %v2467
        %3876 = vmatpush1.msra.mxu0 %v2466
        %3877 = vmatprep.subr.mxu0 %v2475
        %3878 = vmatpush1.msra.mxu0 %v2474
        %3879 = vmatprep.subr.mxu0 %v2483
        %3880 = vmatpush1.msra.mxu0 %v2482
        %3881 = vmatprep.subr.mxu0 %v2491
        %3882 = vmatpush1.msra.mxu0 %v2490
        %3883 = vmatprep.subr.mxu0 %v2499
        %3884 = vmatpush1.msra.mxu0 %v2498
        %3885 = vmatprep.subr.mxu0 %v2507
        %3886 = vmatpush1.msra.mxu0 %v2506
        %3887 = vmatprep.subr.mxu0 %v2515
        %3888 = vmatpush1.msra.mxu0 %v2514
        %3889 = vmatprep.subr.mxu0 %v2523
        %3890 = vmatpush1.msra.mxu0 %v2522
        %3891 = vmatprep.subr.mxu0 %v2531
        %3892 = vmatpush1.msra.mxu0 %v2530
        %3893 = vmatprep.subr.mxu0 %v2539
        %3894 = vmatpush1.msra.mxu0 %v2538
        %3895 = vmatprep.subr.mxu0 %v2547
        %3896 = vmatpush1.msra.mxu0 %v2546
        %3897 = vmatprep.subr.mxu0 %v2555
        %3898 = vmatpush1.msra.mxu0 %v2554
        %3899 = vmatprep.subr.mxu0 %v2563
        %3900 = vmatpush1.msra.mxu0 %v2562
        %3901 = vmatprep.subr.mxu0 %v2571
        %3902 = vmatpush1.msra.mxu0 %v2570
        %3903 = vmatprep.subr.mxu0 %v2579
        %3904 = vmatpush1.msra.mxu0 %v2578
        %3905 = vmatprep.subr.mxu0 %v2587
        %3906 = vmatpush1.msra.mxu0 %v2586
        %3907 = vmatprep.subr.mxu0 %v2595
        %3908 = vmatpush1.msra.mxu0 %v2594
        %3909 = vmatprep.subr.mxu0 %v2603
        %3910 = vmatpush1.msra.mxu0 %v2602
        %3911 = vmatprep.subr.mxu0 %v2611
        %3912 = vmatpush1.msra.mxu0 %v2610
        %3913 = vmatprep.subr.mxu0 %v2619
        %3914 = vmatpush1.msra.mxu0 %v2618
        %3915 = vmatprep.subr.mxu0 %v2627
        %3916 = vmatpush1.msra.mxu0 %v2626
        %3917 = vmatprep.subr.mxu0 %v2635
        %3918 = vmatpush1.msra.mxu0 %v2634
        %3919 = vmatprep.subr.mxu0 %v2643
        %3920 = vmatpush1.msra.mxu0 %v2642
        %3921 = vmatprep.subr.mxu0 %v2651
        %3922 = vmatpush1.msra.mxu0 %v2650
        %3923 = vmatprep.mubr.f32.mxu0 %v3259
        %3924 = vmatmul.mubr.f32.gmra.mrb[0].mxu0 %v3251
        %v3925 = vpop.f32.mrb[0].mxu0
        %v3926 = vadd.f32 %v3855, %v3925
        %v3927 = vpop.f32.mrb[0].mxu0
        %v3928 = vadd.f32 %v3857, %v3927
        %3929 = vdwg.mxu0
        %3930 = vmatprep.subr.mxu0 %v2659
        %3931 = vmatpush1.msra.mxu0 %v2658
        %3932 = vmatprep.subr.mxu0 %v2667
        %3933 = vmatpush1.msra.mxu0 %v2666
        %3934 = vmatprep.subr.mxu0 %v2675
        %3935 = vmatpush1.msra.mxu0 %v2674
        %3936 = vmatprep.subr.mxu0 %v2683
        %3937 = vmatpush1.msra.mxu0 %v2682
        %3938 = vmatprep.subr.mxu0 %v2691
        %3939 = vmatpush1.msra.mxu0 %v2690
        %3940 = vmatprep.subr.mxu0 %v2699
        %3941 = vmatpush1.msra.mxu0 %v2698
        %3942 = vmatprep.subr.mxu0 %v2707
        %3943 = vmatpush1.msra.mxu0 %v2706
        %3944 = vmatprep.subr.mxu0 %v2715
        %3945 = vmatpush1.msra.mxu0 %v2714
        %3946 = vmatprep.subr.mxu0 %v2723
        %3947 = vmatpush1.msra.mxu0 %v2722
        %3948 = vmatprep.subr.mxu0 %v2731
        %3949 = vmatpush1.msra.mxu0 %v2730
        %3950 = vmatprep.subr.mxu0 %v2739
        %3951 = vmatpush1.msra.mxu0 %v2738
        %3952 = vmatprep.subr.mxu0 %v2747
        %3953 = vmatpush1.msra.mxu0 %v2746
        %3954 = vmatprep.subr.mxu0 %v2755
        %3955 = vmatpush1.msra.mxu0 %v2754
        %3956 = vmatprep.subr.mxu0 %v2763
        %3957 = vmatpush1.msra.mxu0 %v2762
        %3958 = vmatprep.subr.mxu0 %v2771
        %3959 = vmatpush1.msra.mxu0 %v2770
        %3960 = vmatprep.subr.mxu0 %v2779
        %3961 = vmatpush1.msra.mxu0 %v2778
        %3962 = vmatprep.subr.mxu0 %v2787
        %3963 = vmatpush1.msra.mxu0 %v2786
        %3964 = vmatprep.subr.mxu0 %v2795
        %3965 = vmatpush1.msra.mxu0 %v2794
        %3966 = vmatprep.subr.mxu0 %v2803
        %3967 = vmatpush1.msra.mxu0 %v2802
        %3968 = vmatprep.subr.mxu0 %v2811
        %3969 = vmatpush1.msra.mxu0 %v2810
        %3970 = vmatprep.subr.mxu0 %v2819
        %3971 = vmatpush1.msra.mxu0 %v2818
        %3972 = vmatprep.subr.mxu0 %v2827
        %3973 = vmatpush1.msra.mxu0 %v2826
        %3974 = vmatprep.subr.mxu0 %v2835
        %3975 = vmatpush1.msra.mxu0 %v2834
        %3976 = vmatprep.subr.mxu0 %v2843
        %3977 = vmatpush1.msra.mxu0 %v2842
        %3978 = vmatprep.subr.mxu0 %v2851
        %3979 = vmatpush1.msra.mxu0 %v2850
        %3980 = vmatprep.subr.mxu0 %v2859
        %3981 = vmatpush1.msra.mxu0 %v2858
        %3982 = vmatprep.subr.mxu0 %v2867
        %3983 = vmatpush1.msra.mxu0 %v2866
        %3984 = vmatprep.subr.mxu0 %v2875
        %3985 = vmatpush1.msra.mxu0 %v2874
        %3986 = vmatprep.subr.mxu0 %v2883
        %3987 = vmatpush1.msra.mxu0 %v2882
        %3988 = vmatprep.subr.mxu0 %v2891
        %3989 = vmatpush1.msra.mxu0 %v2890
        %3990 = vmatprep.subr.mxu0 %v2899
        %3991 = vmatpush1.msra.mxu0 %v2898
        %3992 = vmatprep.subr.mxu0 %v2907
        %3993 = vmatpush1.msra.mxu0 %v2906
        %3994 = vmatprep.mubr.f32.mxu0 %v3260
        %3995 = vmatmul.mubr.f32.gmra.mrb[0].mxu0 %v3258
        %v3996 = vpop.f32.mrb[0].mxu0
        %v3997 = vadd.f32 %v3926, %v3996
        %v3998 = vpop.f32.mrb[0].mxu0
        %v3999 = vadd.f32 %v3928, %v3998
        %4000 = vdwg.mxu0
        %4001 = vmatprep.subr.mxu0 %v2915
        %4002 = vmatpush1.msra.mxu0 %v2914
        %4003 = vmatprep.subr.mxu0 %v2923
        %4004 = vmatpush1.msra.mxu0 %v2922
        %4005 = vmatprep.subr.mxu0 %v2931
        %4006 = vmatpush1.msra.mxu0 %v2930
        %4007 = vmatprep.subr.mxu0 %v2939
        %4008 = vmatpush1.msra.mxu0 %v2938
        %4009 = vmatprep.subr.mxu0 %v2947
        %4010 = vmatpush1.msra.mxu0 %v2946
        %4011 = vmatprep.subr.mxu0 %v2955
        %4012 = vmatpush1.msra.mxu0 %v2954
        %4013 = vmatprep.subr.mxu0 %v2963
        %4014 = vmatpush1.msra.mxu0 %v2962
        %4015 = vmatprep.subr.mxu0 %v2971
        %4016 = vmatpush1.msra.mxu0 %v2970
        %4017 = vmatprep.subr.mxu0 %v2979
        %4018 = vmatpush1.msra.mxu0 %v2978
        %4019 = vmatprep.subr.mxu0 %v2987
        %4020 = vmatpush1.msra.mxu0 %v2986
        %4021 = vmatprep.subr.mxu0 %v2995
        %4022 = vmatpush1.msra.mxu0 %v2994
        %4023 = vmatprep.subr.mxu0 %v3003
        %4024 = vmatpush1.msra.mxu0 %v3002
        %4025 = vmatprep.subr.mxu0 %v3011
        %4026 = vmatpush1.msra.mxu0 %v3010
        %4027 = vmatprep.subr.mxu0 %v3019
        %4028 = vmatpush1.msra.mxu0 %v3018
        %4029 = vmatprep.subr.mxu0 %v3027
        %4030 = vmatpush1.msra.mxu0 %v3026
        %4031 = vmatprep.subr.mxu0 %v3035
        %4032 = vmatpush1.msra.mxu0 %v3034
        %4033 = vmatprep.subr.mxu0 %v3043
        %4034 = vmatpush1.msra.mxu0 %v3042
        %4035 = vmatprep.subr.mxu0 %v3051
        %4036 = vmatpush1.msra.mxu0 %v3050
        %4037 = vmatprep.subr.mxu0 %v3059
        %4038 = vmatpush1.msra.mxu0 %v3058
        %4039 = vmatprep.subr.mxu0 %v3067
        %4040 = vmatpush1.msra.mxu0 %v3066
        %4041 = vmatprep.subr.mxu0 %v3075
        %4042 = vmatpush1.msra.mxu0 %v3074
        %4043 = vmatprep.subr.mxu0 %v3083
        %4044 = vmatpush1.msra.mxu0 %v3082
        %4045 = vmatprep.subr.mxu0 %v3091
        %4046 = vmatpush1.msra.mxu0 %v3090
        %4047 = vmatprep.subr.mxu0 %v3099
        %4048 = vmatpush1.msra.mxu0 %v3098
        %4049 = vmatprep.subr.mxu0 %v3107
        %4050 = vmatpush1.msra.mxu0 %v3106
        %4051 = vmatprep.subr.mxu0 %v3115
        %4052 = vmatpush1.msra.mxu0 %v3114
        %4053 = vmatprep.subr.mxu0 %v3123
        %4054 = vmatpush1.msra.mxu0 %v3122
        %4055 = vmatprep.subr.mxu0 %v3131
        %4056 = vmatpush1.msra.mxu0 %v3130
        %4057 = vmatprep.subr.mxu0 %v3139
        %4058 = vmatpush1.msra.mxu0 %v3138
        %4059 = vmatprep.subr.mxu0 %v3147
        %4060 = vmatpush1.msra.mxu0 %v3146
        %4061 = vmatprep.subr.mxu0 %v3155
        %4062 = vmatpush1.msra.mxu0 %v3154
        %4063 = vmatprep.subr.mxu0 %v3163
        %4064 = vmatpush1.msra.mxu0 %v3162
        %4065 = vmatprep.mubr.f32.mxu0 %v3268
        %4066 = vmatmul.mubr.f32.gmra.mrb[0].mxu0 %v3267
        %v4067 = vpop.f32.mrb[0].mxu0
        %v4068 = vadd.f32 %v3997, %v4067
        %v4069 = vpop.f32.mrb[0].mxu0
        %v4070 = vadd.f32 %v3999, %v4069
        %4071 = vdwg.mxu0
        %4072 = vmatprep.subr.mxu0 %v357
        %4073 = vmatpush1.msra.mxu0 %v356
        %4074 = vmatprep.subr.mxu0 %v365
        %4075 = vmatpush1.msra.mxu0 %v364
        %4076 = vmatprep.subr.mxu0 %v373
        %4077 = vmatpush1.msra.mxu0 %v372
        %4078 = vmatprep.subr.mxu0 %v381
        %4079 = vmatpush1.msra.mxu0 %v380
        %4080 = vmatprep.subr.mxu0 %v389
        %4081 = vmatpush1.msra.mxu0 %v388
        %4082 = vmatprep.subr.mxu0 %v397
        %4083 = vmatpush1.msra.mxu0 %v396
        %4084 = vmatprep.subr.mxu0 %v405
        %4085 = vmatpush1.msra.mxu0 %v404
        %4086 = vmatprep.subr.mxu0 %v413
        %4087 = vmatpush1.msra.mxu0 %v412
        %4088 = vmatprep.subr.mxu0 %v421
        %4089 = vmatpush1.msra.mxu0 %v420
        %4090 = vmatprep.subr.mxu0 %v429
        %4091 = vmatpush1.msra.mxu0 %v428
        %4092 = vmatprep.subr.mxu0 %v437
        %4093 = vmatpush1.msra.mxu0 %v436
        %4094 = vmatprep.subr.mxu0 %v445
        %4095 = vmatpush1.msra.mxu0 %v444
        %4096 = vmatprep.subr.mxu0 %v453
        %4097 = vmatpush1.msra.mxu0 %v452
        %4098 = vmatprep.subr.mxu0 %v461
        %4099 = vmatpush1.msra.mxu0 %v460
        %4100 = vmatprep.subr.mxu0 %v469
        %4101 = vmatpush1.msra.mxu0 %v468
        %4102 = vmatprep.subr.mxu0 %v477
        %4103 = vmatpush1.msra.mxu0 %v476
        %4104 = vmatprep.subr.mxu0 %v485
        %4105 = vmatpush1.msra.mxu0 %v484
        %4106 = vmatprep.subr.mxu0 %v493
        %4107 = vmatpush1.msra.mxu0 %v492
        %4108 = vmatprep.subr.mxu0 %v501
        %4109 = vmatpush1.msra.mxu0 %v500
        %4110 = vmatprep.subr.mxu0 %v509
        %4111 = vmatpush1.msra.mxu0 %v508
        %4112 = vmatprep.subr.mxu0 %v517
        %4113 = vmatpush1.msra.mxu0 %v516
        %4114 = vmatprep.subr.mxu0 %v525
        %4115 = vmatpush1.msra.mxu0 %v524
        %4116 = vmatprep.subr.mxu0 %v533
        %4117 = vmatpush1.msra.mxu0 %v532
        %4118 = vmatprep.subr.mxu0 %v541
        %4119 = vmatpush1.msra.mxu0 %v540
        %4120 = vmatprep.subr.mxu0 %v549
        %4121 = vmatpush1.msra.mxu0 %v548
        %4122 = vmatprep.subr.mxu0 %v557
        %4123 = vmatpush1.msra.mxu0 %v556
        %4124 = vmatprep.subr.mxu0 %v565
        %4125 = vmatpush1.msra.mxu0 %v564
        %4126 = vmatprep.subr.mxu0 %v573
        %4127 = vmatpush1.msra.mxu0 %v572
        %4128 = vmatprep.subr.mxu0 %v581
        %4129 = vmatpush1.msra.mxu0 %v580
        %4130 = vmatprep.subr.mxu0 %v589
        %4131 = vmatpush1.msra.mxu0 %v588
        %4132 = vmatprep.subr.mxu0 %v597
        %4133 = vmatpush1.msra.mxu0 %v596
        %4134 = vmatprep.subr.mxu0 %v605
        %4135 = vmatpush1.msra.mxu0 %v604
        %4136 = vmatprep.mubr.f32.mxu0 %v3191
        %4137 = vmatmul.mubr.f32.gmra.mrb[0].mxu0 %v3183
        %v4138 = vpop.f32.mrb[0].mxu0
        %v4139 = vadd.f32 0.0, %v4138
        %v4140 = vpop.f32.mrb[0].mxu0
        %v4141 = vadd.f32 0.0, %v4140
        %4142 = vdwg.mxu0
        %4143 = vmatprep.subr.mxu0 %v613
        %4144 = vmatpush1.msra.mxu0 %v612
        %4145 = vmatprep.subr.mxu0 %v621
        %4146 = vmatpush1.msra.mxu0 %v620
        %4147 = vmatprep.subr.mxu0 %v629
        %4148 = vmatpush1.msra.mxu0 %v628
        %4149 = vmatprep.subr.mxu0 %v637
        %4150 = vmatpush1.msra.mxu0 %v636
        %4151 = vmatprep.subr.mxu0 %v645
        %4152 = vmatpush1.msra.mxu0 %v644
        %4153 = vmatprep.subr.mxu0 %v653
        %4154 = vmatpush1.msra.mxu0 %v652
        %4155 = vmatprep.subr.mxu0 %v661
        %4156 = vmatpush1.msra.mxu0 %v660
        %4157 = vmatprep.subr.mxu0 %v669
        %4158 = vmatpush1.msra.mxu0 %v668
        %4159 = vmatprep.subr.mxu0 %v677
        %4160 = vmatpush1.msra.mxu0 %v676
        %4161 = vmatprep.subr.mxu0 %v685
        %4162 = vmatpush1.msra.mxu0 %v684
        %4163 = vmatprep.subr.mxu0 %v693
        %4164 = vmatpush1.msra.mxu0 %v692
        %4165 = vmatprep.subr.mxu0 %v701
        %4166 = vmatpush1.msra.mxu0 %v700
        %4167 = vmatprep.subr.mxu0 %v709
        %4168 = vmatpush1.msra.mxu0 %v708
        %4169 = vmatprep.subr.mxu0 %v717
        %4170 = vmatpush1.msra.mxu0 %v716
        %4171 = vmatprep.subr.mxu0 %v725
        %4172 = vmatpush1.msra.mxu0 %v724
        %4173 = vmatprep.subr.mxu0 %v733
        %4174 = vmatpush1.msra.mxu0 %v732
        %4175 = vmatprep.subr.mxu0 %v741
        %4176 = vmatpush1.msra.mxu0 %v740
        %4177 = vmatprep.subr.mxu0 %v749
        %4178 = vmatpush1.msra.mxu0 %v748
        %4179 = vmatprep.subr.mxu0 %v757
        %4180 = vmatpush1.msra.mxu0 %v756
        %4181 = vmatprep.subr.mxu0 %v765
        %4182 = vmatpush1.msra.mxu0 %v764
        %4183 = vmatprep.subr.mxu0 %v773
        %4184 = vmatpush1.msra.mxu0 %v772
        %4185 = vmatprep.subr.mxu0 %v781
        %4186 = vmatpush1.msra.mxu0 %v780
        %4187 = vmatprep.subr.mxu0 %v789
        %4188 = vmatpush1.msra.mxu0 %v788
        %4189 = vmatprep.subr.mxu0 %v797
        %4190 = vmatpush1.msra.mxu0 %v796
        %4191 = vmatprep.subr.mxu0 %v805
        %4192 = vmatpush1.msra.mxu0 %v804
        %4193 = vmatprep.subr.mxu0 %v813
        %4194 = vmatpush1.msra.mxu0 %v812
        %4195 = vmatprep.subr.mxu0 %v821
        %4196 = vmatpush1.msra.mxu0 %v820
        %4197 = vmatprep.subr.mxu0 %v829
        %4198 = vmatpush1.msra.mxu0 %v828
        %4199 = vmatprep.subr.mxu0 %v837
        %4200 = vmatpush1.msra.mxu0 %v836
        %4201 = vmatprep.subr.mxu0 %v845
        %4202 = vmatpush1.msra.mxu0 %v844
        %4203 = vmatprep.subr.mxu0 %v853
        %4204 = vmatpush1.msra.mxu0 %v852
        %4205 = vmatprep.subr.mxu0 %v861
        %4206 = vmatpush1.msra.mxu0 %v860
        %4207 = vmatprep.mubr.f32.mxu0 %v3192
        %4208 = vmatmul.mubr.f32.gmra.mrb[0].mxu0 %v3190
        %v4209 = vpop.f32.mrb[0].mxu0
        %v4210 = vadd.f32 %v4139, %v4209
        %v4211 = vpop.f32.mrb[0].mxu0
        %v4212 = vadd.f32 %v4141, %v4211
        %4213 = vdwg.mxu0
        %4214 = vmatprep.subr.mxu0 %v869
        %4215 = vmatpush1.msra.mxu0 %v868
        %4216 = vmatprep.subr.mxu0 %v877
        %4217 = vmatpush1.msra.mxu0 %v876
        %4218 = vmatprep.subr.mxu0 %v885
        %4219 = vmatpush1.msra.mxu0 %v884
        %4220 = vmatprep.subr.mxu0 %v893
        %4221 = vmatpush1.msra.mxu0 %v892
        %4222 = vmatprep.subr.mxu0 %v901
        %4223 = vmatpush1.msra.mxu0 %v900
        %4224 = vmatprep.subr.mxu0 %v909
        %4225 = vmatpush1.msra.mxu0 %v908
        %4226 = vmatprep.subr.mxu0 %v917
        %4227 = vmatpush1.msra.mxu0 %v916
        %4228 = vmatprep.subr.mxu0 %v925
        %4229 = vmatpush1.msra.mxu0 %v924
        %4230 = vmatprep.subr.mxu0 %v933
        %4231 = vmatpush1.msra.mxu0 %v932
        %4232 = vmatprep.subr.mxu0 %v941
        %4233 = vmatpush1.msra.mxu0 %v940
        %4234 = vmatprep.subr.mxu0 %v949
        %4235 = vmatpush1.msra.mxu0 %v948
        %4236 = vmatprep.subr.mxu0 %v957
        %4237 = vmatpush1.msra.mxu0 %v956
        %4238 = vmatprep.subr.mxu0 %v965
        %4239 = vmatpush1.msra.mxu0 %v964
        %4240 = vmatprep.subr.mxu0 %v973
        %4241 = vmatpush1.msra.mxu0 %v972
        %4242 = vmatprep.subr.mxu0 %v981
        %4243 = vmatpush1.msra.mxu0 %v980
        %4244 = vmatprep.subr.mxu0 %v989
        %4245 = vmatpush1.msra.mxu0 %v988
        %4246 = vmatprep.subr.mxu0 %v997
        %4247 = vmatpush1.msra.mxu0 %v996
        %4248 = vmatprep.subr.mxu0 %v1005
        %4249 = vmatpush1.msra.mxu0 %v1004
        %4250 = vmatprep.subr.mxu0 %v1013
        %4251 = vmatpush1.msra.mxu0 %v1012
        %4252 = vmatprep.subr.mxu0 %v1021
        %4253 = vmatpush1.msra.mxu0 %v1020
        %4254 = vmatprep.subr.mxu0 %v1029
        %4255 = vmatpush1.msra.mxu0 %v1028
        %4256 = vmatprep.subr.mxu0 %v1037
        %4257 = vmatpush1.msra.mxu0 %v1036
        %4258 = vmatprep.subr.mxu0 %v1045
        %4259 = vmatpush1.msra.mxu0 %v1044
        %4260 = vmatprep.subr.mxu0 %v1053
        %4261 = vmatpush1.msra.mxu0 %v1052
        %4262 = vmatprep.subr.mxu0 %v1061
        %4263 = vmatpush1.msra.mxu0 %v1060
        %4264 = vmatprep.subr.mxu0 %v1069
        %4265 = vmatpush1.msra.mxu0 %v1068
        %4266 = vmatprep.subr.mxu0 %v1077
        %4267 = vmatpush1.msra.mxu0 %v1076
        %4268 = vmatprep.subr.mxu0 %v1085
        %4269 = vmatpush1.msra.mxu0 %v1084
        %4270 = vmatprep.subr.mxu0 %v1093
        %4271 = vmatpush1.msra.mxu0 %v1092
        %4272 = vmatprep.subr.mxu0 %v1101
        %4273 = vmatpush1.msra.mxu0 %v1100
        %4274 = vmatprep.subr.mxu0 %v1109
        %4275 = vmatpush1.msra.mxu0 %v1108
        %4276 = vmatprep.subr.mxu0 %v1117
        %4277 = vmatpush1.msra.mxu0 %v1116
        %4278 = vmatprep.mubr.f32.mxu0 %v3208
        %4279 = vmatmul.mubr.f32.gmra.mrb[0].mxu0 %v3200
        %v4280 = vpop.f32.mrb[0].mxu0
        %v4281 = vadd.f32 %v4210, %v4280
        %v4282 = vpop.f32.mrb[0].mxu0
        %v4283 = vadd.f32 %v4212, %v4282
        %4284 = vdwg.mxu0
        %4285 = vmatprep.subr.mxu0 %v1125
        %4286 = vmatpush1.msra.mxu0 %v1124
        %4287 = vmatprep.subr.mxu0 %v1133
        %4288 = vmatpush1.msra.mxu0 %v1132
        %4289 = vmatprep.subr.mxu0 %v1141
        %4290 = vmatpush1.msra.mxu0 %v1140
        %4291 = vmatprep.subr.mxu0 %v1149
        %4292 = vmatpush1.msra.mxu0 %v1148
        %4293 = vmatprep.subr.mxu0 %v1157
        %4294 = vmatpush1.msra.mxu0 %v1156
        %4295 = vmatprep.subr.mxu0 %v1165
        %4296 = vmatpush1.msra.mxu0 %v1164
        %4297 = vmatprep.subr.mxu0 %v1173
        %4298 = vmatpush1.msra.mxu0 %v1172
        %4299 = vmatprep.subr.mxu0 %v1181
        %4300 = vmatpush1.msra.mxu0 %v1180
        %4301 = vmatprep.subr.mxu0 %v1189
        %4302 = vmatpush1.msra.mxu0 %v1188
        %4303 = vmatprep.subr.mxu0 %v1197
        %4304 = vmatpush1.msra.mxu0 %v1196
        %4305 = vmatprep.subr.mxu0 %v1205
        %4306 = vmatpush1.msra.mxu0 %v1204
        %4307 = vmatprep.subr.mxu0 %v1213
        %4308 = vmatpush1.msra.mxu0 %v1212
        %4309 = vmatprep.subr.mxu0 %v1221
        %4310 = vmatpush1.msra.mxu0 %v1220
        %4311 = vmatprep.subr.mxu0 %v1229
        %4312 = vmatpush1.msra.mxu0 %v1228
        %4313 = vmatprep.subr.mxu0 %v1237
        %4314 = vmatpush1.msra.mxu0 %v1236
        %4315 = vmatprep.subr.mxu0 %v1245
        %4316 = vmatpush1.msra.mxu0 %v1244
        %4317 = vmatprep.subr.mxu0 %v1253
        %4318 = vmatpush1.msra.mxu0 %v1252
        %4319 = vmatprep.subr.mxu0 %v1261
        %4320 = vmatpush1.msra.mxu0 %v1260
        %4321 = vmatprep.subr.mxu0 %v1269
        %4322 = vmatpush1.msra.mxu0 %v1268
        %4323 = vmatprep.subr.mxu0 %v1277
        %4324 = vmatpush1.msra.mxu0 %v1276
        %4325 = vmatprep.subr.mxu0 %v1285
        %4326 = vmatpush1.msra.mxu0 %v1284
        %4327 = vmatprep.subr.mxu0 %v1293
        %4328 = vmatpush1.msra.mxu0 %v1292
        %4329 = vmatprep.subr.mxu0 %v1301
        %4330 = vmatpush1.msra.mxu0 %v1300
        %4331 = vmatprep.subr.mxu0 %v1309
        %4332 = vmatpush1.msra.mxu0 %v1308
        %4333 = vmatprep.subr.mxu0 %v1317
        %4334 = vmatpush1.msra.mxu0 %v1316
        %4335 = vmatprep.subr.mxu0 %v1325
        %4336 = vmatpush1.msra.mxu0 %v1324
        %4337 = vmatprep.subr.mxu0 %v1333
        %4338 = vmatpush1.msra.mxu0 %v1332
        %4339 = vmatprep.subr.mxu0 %v1341
        %4340 = vmatpush1.msra.mxu0 %v1340
        %4341 = vmatprep.subr.mxu0 %v1349
        %4342 = vmatpush1.msra.mxu0 %v1348
        %4343 = vmatprep.subr.mxu0 %v1357
        %4344 = vmatpush1.msra.mxu0 %v1356
        %4345 = vmatprep.subr.mxu0 %v1365
        %4346 = vmatpush1.msra.mxu0 %v1364
        %4347 = vmatprep.subr.mxu0 %v1373
        %4348 = vmatpush1.msra.mxu0 %v1372
        %4349 = vmatprep.mubr.f32.mxu0 %v3209
        %4350 = vmatmul.mubr.f32.gmra.mrb[0].mxu0 %v3207
        %v4351 = vpop.f32.mrb[0].mxu0
        %v4352 = vadd.f32 %v4281, %v4351
        %v4353 = vpop.f32.mrb[0].mxu0
        %v4354 = vadd.f32 %v4283, %v4353
        %4355 = vdwg.mxu0
        %4356 = vmatprep.subr.mxu0 %v1381
        %4357 = vmatpush1.msra.mxu0 %v1380
        %4358 = vmatprep.subr.mxu0 %v1389
        %4359 = vmatpush1.msra.mxu0 %v1388
        %4360 = vmatprep.subr.mxu0 %v1397
        %4361 = vmatpush1.msra.mxu0 %v1396
        %4362 = vmatprep.subr.mxu0 %v1405
        %4363 = vmatpush1.msra.mxu0 %v1404
        %4364 = vmatprep.subr.mxu0 %v1413
        %4365 = vmatpush1.msra.mxu0 %v1412
        %4366 = vmatprep.subr.mxu0 %v1421
        %4367 = vmatpush1.msra.mxu0 %v1420
        %4368 = vmatprep.subr.mxu0 %v1429
        %4369 = vmatpush1.msra.mxu0 %v1428
        %4370 = vmatprep.subr.mxu0 %v1437
        %4371 = vmatpush1.msra.mxu0 %v1436
        %4372 = vmatprep.subr.mxu0 %v1445
        %4373 = vmatpush1.msra.mxu0 %v1444
        %4374 = vmatprep.subr.mxu0 %v1453
        %4375 = vmatpush1.msra.mxu0 %v1452
        %4376 = vmatprep.subr.mxu0 %v1461
        %4377 = vmatpush1.msra.mxu0 %v1460
        %4378 = vmatprep.subr.mxu0 %v1469
        %4379 = vmatpush1.msra.mxu0 %v1468
        %4380 = vmatprep.subr.mxu0 %v1477
        %4381 = vmatpush1.msra.mxu0 %v1476
        %4382 = vmatprep.subr.mxu0 %v1485
        %4383 = vmatpush1.msra.mxu0 %v1484
        %4384 = vmatprep.subr.mxu0 %v1493
        %4385 = vmatpush1.msra.mxu0 %v1492
        %4386 = vmatprep.subr.mxu0 %v1501
        %4387 = vmatpush1.msra.mxu0 %v1500
        %4388 = vmatprep.subr.mxu0 %v1509
        %4389 = vmatpush1.msra.mxu0 %v1508
        %4390 = vmatprep.subr.mxu0 %v1517
        %4391 = vmatpush1.msra.mxu0 %v1516
        %4392 = vmatprep.subr.mxu0 %v1525
        %4393 = vmatpush1.msra.mxu0 %v1524
        %4394 = vmatprep.subr.mxu0 %v1533
        %4395 = vmatpush1.msra.mxu0 %v1532
        %4396 = vmatprep.subr.mxu0 %v1541
        %4397 = vmatpush1.msra.mxu0 %v1540
        %4398 = vmatprep.subr.mxu0 %v1549
        %4399 = vmatpush1.msra.mxu0 %v1548
        %4400 = vmatprep.subr.mxu0 %v1557
        %4401 = vmatpush1.msra.mxu0 %v1556
        %4402 = vmatprep.subr.mxu0 %v1565
        %4403 = vmatpush1.msra.mxu0 %v1564
        %4404 = vmatprep.subr.mxu0 %v1573
        %4405 = vmatpush1.msra.mxu0 %v1572
        %4406 = vmatprep.subr.mxu0 %v1581
        %4407 = vmatpush1.msra.mxu0 %v1580
        %4408 = vmatprep.subr.mxu0 %v1589
        %4409 = vmatpush1.msra.mxu0 %v1588
        %4410 = vmatprep.subr.mxu0 %v1597
        %4411 = vmatpush1.msra.mxu0 %v1596
        %4412 = vmatprep.subr.mxu0 %v1605
        %4413 = vmatpush1.msra.mxu0 %v1604
        %4414 = vmatprep.subr.mxu0 %v1613
        %4415 = vmatpush1.msra.mxu0 %v1612
        %4416 = vmatprep.subr.mxu0 %v1621
        %4417 = vmatpush1.msra.mxu0 %v1620
        %4418 = vmatprep.subr.mxu0 %v1629
        %4419 = vmatpush1.msra.mxu0 %v1628
        %4420 = vmatprep.mubr.f32.mxu0 %v3225
        %4421 = vmatmul.mubr.f32.gmra.mrb[0].mxu0 %v3217
        %v4422 = vpop.f32.mrb[0].mxu0
        %v4423 = vadd.f32 %v4352, %v4422
        %v4424 = vpop.f32.mrb[0].mxu0
        %v4425 = vadd.f32 %v4354, %v4424
        %4426 = vdwg.mxu0
        %4427 = vmatprep.subr.mxu0 %v1637
        %4428 = vmatpush1.msra.mxu0 %v1636
        %4429 = vmatprep.subr.mxu0 %v1645
        %4430 = vmatpush1.msra.mxu0 %v1644
        %4431 = vmatprep.subr.mxu0 %v1653
        %4432 = vmatpush1.msra.mxu0 %v1652
        %4433 = vmatprep.subr.mxu0 %v1661
        %4434 = vmatpush1.msra.mxu0 %v1660
        %4435 = vmatprep.subr.mxu0 %v1669
        %4436 = vmatpush1.msra.mxu0 %v1668
        %4437 = vmatprep.subr.mxu0 %v1677
        %4438 = vmatpush1.msra.mxu0 %v1676
        %4439 = vmatprep.subr.mxu0 %v1685
        %4440 = vmatpush1.msra.mxu0 %v1684
        %4441 = vmatprep.subr.mxu0 %v1693
        %4442 = vmatpush1.msra.mxu0 %v1692
        %4443 = vmatprep.subr.mxu0 %v1701
        %4444 = vmatpush1.msra.mxu0 %v1700
        %4445 = vmatprep.subr.mxu0 %v1709
        %4446 = vmatpush1.msra.mxu0 %v1708
        %4447 = vmatprep.subr.mxu0 %v1717
        %4448 = vmatpush1.msra.mxu0 %v1716
        %4449 = vmatprep.subr.mxu0 %v1725
        %4450 = vmatpush1.msra.mxu0 %v1724
        %4451 = vmatprep.subr.mxu0 %v1733
        %4452 = vmatpush1.msra.mxu0 %v1732
        %4453 = vmatprep.subr.mxu0 %v1741
        %4454 = vmatpush1.msra.mxu0 %v1740
        %4455 = vmatprep.subr.mxu0 %v1749
        %4456 = vmatpush1.msra.mxu0 %v1748
        %4457 = vmatprep.subr.mxu0 %v1757
        %4458 = vmatpush1.msra.mxu0 %v1756
        %4459 = vmatprep.subr.mxu0 %v1765
        %4460 = vmatpush1.msra.mxu0 %v1764
        %4461 = vmatprep.subr.mxu0 %v1773
        %4462 = vmatpush1.msra.mxu0 %v1772
        %4463 = vmatprep.subr.mxu0 %v1781
        %4464 = vmatpush1.msra.mxu0 %v1780
        %4465 = vmatprep.subr.mxu0 %v1789
        %4466 = vmatpush1.msra.mxu0 %v1788
        %4467 = vmatprep.subr.mxu0 %v1797
        %4468 = vmatpush1.msra.mxu0 %v1796
        %4469 = vmatprep.subr.mxu0 %v1805
        %4470 = vmatpush1.msra.mxu0 %v1804
        %4471 = vmatprep.subr.mxu0 %v1813
        %4472 = vmatpush1.msra.mxu0 %v1812
        %4473 = vmatprep.subr.mxu0 %v1821
        %4474 = vmatpush1.msra.mxu0 %v1820
        %4475 = vmatprep.subr.mxu0 %v1829
        %4476 = vmatpush1.msra.mxu0 %v1828
        %4477 = vmatprep.subr.mxu0 %v1837
        %4478 = vmatpush1.msra.mxu0 %v1836
        %4479 = vmatprep.subr.mxu0 %v1845
        %4480 = vmatpush1.msra.mxu0 %v1844
        %4481 = vmatprep.subr.mxu0 %v1853
        %4482 = vmatpush1.msra.mxu0 %v1852
        %4483 = vmatprep.subr.mxu0 %v1861
        %4484 = vmatpush1.msra.mxu0 %v1860
        %4485 = vmatprep.subr.mxu0 %v1869
        %4486 = vmatpush1.msra.mxu0 %v1868
        %4487 = vmatprep.subr.mxu0 %v1877
        %4488 = vmatpush1.msra.mxu0 %v1876
        %4489 = vmatprep.subr.mxu0 %v1885
        %4490 = vmatpush1.msra.mxu0 %v1884
        %4491 = vmatprep.mubr.f32.mxu0 %v3226
        %4492 = vmatmul.mubr.f32.gmra.mrb[0].mxu0 %v3224
        %v4493 = vpop.f32.mrb[0].mxu0
        %v4494 = vadd.f32 %v4423, %v4493
        %v4495 = vpop.f32.mrb[0].mxu0
        %v4496 = vadd.f32 %v4425, %v4495
        %4497 = vdwg.mxu0
        %4498 = vmatprep.subr.mxu0 %v1893
        %4499 = vmatpush1.msra.mxu0 %v1892
        %4500 = vmatprep.subr.mxu0 %v1901
        %4501 = vmatpush1.msra.mxu0 %v1900
        %4502 = vmatprep.subr.mxu0 %v1909
        %4503 = vmatpush1.msra.mxu0 %v1908
        %4504 = vmatprep.subr.mxu0 %v1917
        %4505 = vmatpush1.msra.mxu0 %v1916
        %4506 = vmatprep.subr.mxu0 %v1925
        %4507 = vmatpush1.msra.mxu0 %v1924
        %4508 = vmatprep.subr.mxu0 %v1933
        %4509 = vmatpush1.msra.mxu0 %v1932
        %4510 = vmatprep.subr.mxu0 %v1941
        %4511 = vmatpush1.msra.mxu0 %v1940
        %4512 = vmatprep.subr.mxu0 %v1949
        %4513 = vmatpush1.msra.mxu0 %v1948
        %4514 = vmatprep.subr.mxu0 %v1957
        %4515 = vmatpush1.msra.mxu0 %v1956
        %4516 = vmatprep.subr.mxu0 %v1965
        %4517 = vmatpush1.msra.mxu0 %v1964
        %4518 = vmatprep.subr.mxu0 %v1973
        %4519 = vmatpush1.msra.mxu0 %v1972
        %4520 = vmatprep.subr.mxu0 %v1981
        %4521 = vmatpush1.msra.mxu0 %v1980
        %4522 = vmatprep.subr.mxu0 %v1989
        %4523 = vmatpush1.msra.mxu0 %v1988
        %4524 = vmatprep.subr.mxu0 %v1997
        %4525 = vmatpush1.msra.mxu0 %v1996
        %4526 = vmatprep.subr.mxu0 %v2005
        %4527 = vmatpush1.msra.mxu0 %v2004
        %4528 = vmatprep.subr.mxu0 %v2013
        %4529 = vmatpush1.msra.mxu0 %v2012
        %4530 = vmatprep.subr.mxu0 %v2021
        %4531 = vmatpush1.msra.mxu0 %v2020
        %4532 = vmatprep.subr.mxu0 %v2029
        %4533 = vmatpush1.msra.mxu0 %v2028
        %4534 = vmatprep.subr.mxu0 %v2037
        %4535 = vmatpush1.msra.mxu0 %v2036
        %4536 = vmatprep.subr.mxu0 %v2045
        %4537 = vmatpush1.msra.mxu0 %v2044
        %4538 = vmatprep.subr.mxu0 %v2053
        %4539 = vmatpush1.msra.mxu0 %v2052
        %4540 = vmatprep.subr.mxu0 %v2061
        %4541 = vmatpush1.msra.mxu0 %v2060
        %4542 = vmatprep.subr.mxu0 %v2069
        %4543 = vmatpush1.msra.mxu0 %v2068
        %4544 = vmatprep.subr.mxu0 %v2077
        %4545 = vmatpush1.msra.mxu0 %v2076
        %4546 = vmatprep.subr.mxu0 %v2085
        %4547 = vmatpush1.msra.mxu0 %v2084
        %4548 = vmatprep.subr.mxu0 %v2093
        %4549 = vmatpush1.msra.mxu0 %v2092
        %4550 = vmatprep.subr.mxu0 %v2101
        %4551 = vmatpush1.msra.mxu0 %v2100
        %4552 = vmatprep.subr.mxu0 %v2109
        %4553 = vmatpush1.msra.mxu0 %v2108
        %4554 = vmatprep.subr.mxu0 %v2117
        %4555 = vmatpush1.msra.mxu0 %v2116
        %4556 = vmatprep.subr.mxu0 %v2125
        %4557 = vmatpush1.msra.mxu0 %v2124
        %4558 = vmatprep.subr.mxu0 %v2133
        %4559 = vmatpush1.msra.mxu0 %v2132
        %4560 = vmatprep.subr.mxu0 %v2141
        %4561 = vmatpush1.msra.mxu0 %v2140
        %4562 = vmatprep.mubr.f32.mxu0 %v3242
        %4563 = vmatmul.mubr.f32.gmra.mrb[0].mxu0 %v3234
        %v4564 = vpop.f32.mrb[0].mxu0
        %v4565 = vadd.f32 %v4494, %v4564
        %v4566 = vpop.f32.mrb[0].mxu0
        %v4567 = vadd.f32 %v4496, %v4566
        %4568 = vdwg.mxu0
        %4569 = vmatprep.subr.mxu0 %v2149
        %4570 = vmatpush1.msra.mxu0 %v2148
        %4571 = vmatprep.subr.mxu0 %v2157
        %4572 = vmatpush1.msra.mxu0 %v2156
        %4573 = vmatprep.subr.mxu0 %v2165
        %4574 = vmatpush1.msra.mxu0 %v2164
        %4575 = vmatprep.subr.mxu0 %v2173
        %4576 = vmatpush1.msra.mxu0 %v2172
        %4577 = vmatprep.subr.mxu0 %v2181
        %4578 = vmatpush1.msra.mxu0 %v2180
        %4579 = vmatprep.subr.mxu0 %v2189
        %4580 = vmatpush1.msra.mxu0 %v2188
        %4581 = vmatprep.subr.mxu0 %v2197
        %4582 = vmatpush1.msra.mxu0 %v2196
        %4583 = vmatprep.subr.mxu0 %v2205
        %4584 = vmatpush1.msra.mxu0 %v2204
        %4585 = vmatprep.subr.mxu0 %v2213
        %4586 = vmatpush1.msra.mxu0 %v2212
        %4587 = vmatprep.subr.mxu0 %v2221
        %4588 = vmatpush1.msra.mxu0 %v2220
        %4589 = vmatprep.subr.mxu0 %v2229
        %4590 = vmatpush1.msra.mxu0 %v2228
        %4591 = vmatprep.subr.mxu0 %v2237
        %4592 = vmatpush1.msra.mxu0 %v2236
        %4593 = vmatprep.subr.mxu0 %v2245
        %4594 = vmatpush1.msra.mxu0 %v2244
        %4595 = vmatprep.subr.mxu0 %v2253
        %4596 = vmatpush1.msra.mxu0 %v2252
        %4597 = vmatprep.subr.mxu0 %v2261
        %4598 = vmatpush1.msra.mxu0 %v2260
        %4599 = vmatprep.subr.mxu0 %v2269
        %4600 = vmatpush1.msra.mxu0 %v2268
        %4601 = vmatprep.subr.mxu0 %v2277
        %4602 = vmatpush1.msra.mxu0 %v2276
        %4603 = vmatprep.subr.mxu0 %v2285
        %4604 = vmatpush1.msra.mxu0 %v2284
        %4605 = vmatprep.subr.mxu0 %v2293
        %4606 = vmatpush1.msra.mxu0 %v2292
        %4607 = vmatprep.subr.mxu0 %v2301
        %4608 = vmatpush1.msra.mxu0 %v2300
        %4609 = vmatprep.subr.mxu0 %v2309
        %4610 = vmatpush1.msra.mxu0 %v2308
        %4611 = vmatprep.subr.mxu0 %v2317
        %4612 = vmatpush1.msra.mxu0 %v2316
        %4613 = vmatprep.subr.mxu0 %v2325
        %4614 = vmatpush1.msra.mxu0 %v2324
        %4615 = vmatprep.subr.mxu0 %v2333
        %4616 = vmatpush1.msra.mxu0 %v2332
        %4617 = vmatprep.subr.mxu0 %v2341
        %4618 = vmatpush1.msra.mxu0 %v2340
        %4619 = vmatprep.subr.mxu0 %v2349
        %4620 = vmatpush1.msra.mxu0 %v2348
        %4621 = vmatprep.subr.mxu0 %v2357
        %4622 = vmatpush1.msra.mxu0 %v2356
        %4623 = vmatprep.subr.mxu0 %v2365
        %4624 = vmatpush1.msra.mxu0 %v2364
        %4625 = vmatprep.subr.mxu0 %v2373
        %4626 = vmatpush1.msra.mxu0 %v2372
        %4627 = vmatprep.subr.mxu0 %v2381
        %4628 = vmatpush1.msra.mxu0 %v2380
        %4629 = vmatprep.subr.mxu0 %v2389
        %4630 = vmatpush1.msra.mxu0 %v2388
        %4631 = vmatprep.subr.mxu0 %v2397
        %4632 = vmatpush1.msra.mxu0 %v2396
        %4633 = vmatprep.mubr.f32.mxu0 %v3243
        %4634 = vmatmul.mubr.f32.gmra.mrb[0].mxu0 %v3241
        %v4635 = vpop.f32.mrb[0].mxu0
        %v4636 = vadd.f32 %v4565, %v4635
        %v4637 = vpop.f32.mrb[0].mxu0
        %v4638 = vadd.f32 %v4567, %v4637
        %4639 = vdwg.mxu0
        %4640 = vmatprep.subr.mxu0 %v2405
        %4641 = vmatpush1.msra.mxu0 %v2404
        %4642 = vmatprep.subr.mxu0 %v2413
        %4643 = vmatpush1.msra.mxu0 %v2412
        %4644 = vmatprep.subr.mxu0 %v2421
        %4645 = vmatpush1.msra.mxu0 %v2420
        %4646 = vmatprep.subr.mxu0 %v2429
        %4647 = vmatpush1.msra.mxu0 %v2428
        %4648 = vmatprep.subr.mxu0 %v2437
        %4649 = vmatpush1.msra.mxu0 %v2436
        %4650 = vmatprep.subr.mxu0 %v2445
        %4651 = vmatpush1.msra.mxu0 %v2444
        %4652 = vmatprep.subr.mxu0 %v2453
        %4653 = vmatpush1.msra.mxu0 %v2452
        %4654 = vmatprep.subr.mxu0 %v2461
        %4655 = vmatpush1.msra.mxu0 %v2460
        %4656 = vmatprep.subr.mxu0 %v2469
        %4657 = vmatpush1.msra.mxu0 %v2468
        %4658 = vmatprep.subr.mxu0 %v2477
        %4659 = vmatpush1.msra.mxu0 %v2476
        %4660 = vmatprep.subr.mxu0 %v2485
        %4661 = vmatpush1.msra.mxu0 %v2484
        %4662 = vmatprep.subr.mxu0 %v2493
        %4663 = vmatpush1.msra.mxu0 %v2492
        %4664 = vmatprep.subr.mxu0 %v2501
        %4665 = vmatpush1.msra.mxu0 %v2500
        %4666 = vmatprep.subr.mxu0 %v2509
        %4667 = vmatpush1.msra.mxu0 %v2508
        %4668 = vmatprep.subr.mxu0 %v2517
        %4669 = vmatpush1.msra.mxu0 %v2516
        %4670 = vmatprep.subr.mxu0 %v2525
        %4671 = vmatpush1.msra.mxu0 %v2524
        %4672 = vmatprep.subr.mxu0 %v2533
        %4673 = vmatpush1.msra.mxu0 %v2532
        %4674 = vmatprep.subr.mxu0 %v2541
        %4675 = vmatpush1.msra.mxu0 %v2540
        %4676 = vmatprep.subr.mxu0 %v2549
        %4677 = vmatpush1.msra.mxu0 %v2548
        %4678 = vmatprep.subr.mxu0 %v2557
        %4679 = vmatpush1.msra.mxu0 %v2556
        %4680 = vmatprep.subr.mxu0 %v2565
        %4681 = vmatpush1.msra.mxu0 %v2564
        %4682 = vmatprep.subr.mxu0 %v2573
        %4683 = vmatpush1.msra.mxu0 %v2572
        %4684 = vmatprep.subr.mxu0 %v2581
        %4685 = vmatpush1.msra.mxu0 %v2580
        %4686 = vmatprep.subr.mxu0 %v2589
        %4687 = vmatpush1.msra.mxu0 %v2588
        %4688 = vmatprep.subr.mxu0 %v2597
        %4689 = vmatpush1.msra.mxu0 %v2596
        %4690 = vmatprep.subr.mxu0 %v2605
        %4691 = vmatpush1.msra.mxu0 %v2604
        %4692 = vmatprep.subr.mxu0 %v2613
        %4693 = vmatpush1.msra.mxu0 %v2612
        %4694 = vmatprep.subr.mxu0 %v2621
        %4695 = vmatpush1.msra.mxu0 %v2620
        %4696 = vmatprep.subr.mxu0 %v2629
        %4697 = vmatpush1.msra.mxu0 %v2628
        %4698 = vmatprep.subr.mxu0 %v2637
        %4699 = vmatpush1.msra.mxu0 %v2636
        %4700 = vmatprep.subr.mxu0 %v2645
        %4701 = vmatpush1.msra.mxu0 %v2644
        %4702 = vmatprep.subr.mxu0 %v2653
        %4703 = vmatpush1.msra.mxu0 %v2652
        %4704 = vmatprep.mubr.f32.mxu0 %v3259
        %4705 = vmatmul.mubr.f32.gmra.mrb[0].mxu0 %v3251
        %v4706 = vpop.f32.mrb[0].mxu0
        %v4707 = vadd.f32 %v4636, %v4706
        %v4708 = vpop.f32.mrb[0].mxu0
        %v4709 = vadd.f32 %v4638, %v4708
        %4710 = vdwg.mxu0
        %4711 = vmatprep.subr.mxu0 %v2661
        %4712 = vmatpush1.msra.mxu0 %v2660
        %4713 = vmatprep.subr.mxu0 %v2669
        %4714 = vmatpush1.msra.mxu0 %v2668
        %4715 = vmatprep.subr.mxu0 %v2677
        %4716 = vmatpush1.msra.mxu0 %v2676
        %4717 = vmatprep.subr.mxu0 %v2685
        %4718 = vmatpush1.msra.mxu0 %v2684
        %4719 = vmatprep.subr.mxu0 %v2693
        %4720 = vmatpush1.msra.mxu0 %v2692
        %4721 = vmatprep.subr.mxu0 %v2701
        %4722 = vmatpush1.msra.mxu0 %v2700
        %4723 = vmatprep.subr.mxu0 %v2709
        %4724 = vmatpush1.msra.mxu0 %v2708
        %4725 = vmatprep.subr.mxu0 %v2717
        %4726 = vmatpush1.msra.mxu0 %v2716
        %4727 = vmatprep.subr.mxu0 %v2725
        %4728 = vmatpush1.msra.mxu0 %v2724
        %4729 = vmatprep.subr.mxu0 %v2733
        %4730 = vmatpush1.msra.mxu0 %v2732
        %4731 = vmatprep.subr.mxu0 %v2741
        %4732 = vmatpush1.msra.mxu0 %v2740
        %4733 = vmatprep.subr.mxu0 %v2749
        %4734 = vmatpush1.msra.mxu0 %v2748
        %4735 = vmatprep.subr.mxu0 %v2757
        %4736 = vmatpush1.msra.mxu0 %v2756
        %4737 = vmatprep.subr.mxu0 %v2765
        %4738 = vmatpush1.msra.mxu0 %v2764
        %4739 = vmatprep.subr.mxu0 %v2773
        %4740 = vmatpush1.msra.mxu0 %v2772
        %4741 = vmatprep.subr.mxu0 %v2781
        %4742 = vmatpush1.msra.mxu0 %v2780
        %4743 = vmatprep.subr.mxu0 %v2789
        %4744 = vmatpush1.msra.mxu0 %v2788
        %4745 = vmatprep.subr.mxu0 %v2797
        %4746 = vmatpush1.msra.mxu0 %v2796
        %4747 = vmatprep.subr.mxu0 %v2805
        %4748 = vmatpush1.msra.mxu0 %v2804
        %4749 = vmatprep.subr.mxu0 %v2813
        %4750 = vmatpush1.msra.mxu0 %v2812
        %4751 = vmatprep.subr.mxu0 %v2821
        %4752 = vmatpush1.msra.mxu0 %v2820
        %4753 = vmatprep.subr.mxu0 %v2829
        %4754 = vmatpush1.msra.mxu0 %v2828
        %4755 = vmatprep.subr.mxu0 %v2837
        %4756 = vmatpush1.msra.mxu0 %v2836
        %4757 = vmatprep.subr.mxu0 %v2845
        %4758 = vmatpush1.msra.mxu0 %v2844
        %4759 = vmatprep.subr.mxu0 %v2853
        %4760 = vmatpush1.msra.mxu0 %v2852
        %4761 = vmatprep.subr.mxu0 %v2861
        %4762 = vmatpush1.msra.mxu0 %v2860
        %4763 = vmatprep.subr.mxu0 %v2869
        %4764 = vmatpush1.msra.mxu0 %v2868
        %4765 = vmatprep.subr.mxu0 %v2877
        %4766 = vmatpush1.msra.mxu0 %v2876
        %4767 = vmatprep.subr.mxu0 %v2885
        %4768 = vmatpush1.msra.mxu0 %v2884
        %4769 = vmatprep.subr.mxu0 %v2893
        %4770 = vmatpush1.msra.mxu0 %v2892
        %4771 = vmatprep.subr.mxu0 %v2901
        %4772 = vmatpush1.msra.mxu0 %v2900
        %4773 = vmatprep.subr.mxu0 %v2909
        %4774 = vmatpush1.msra.mxu0 %v2908
        %4775 = vmatprep.mubr.f32.mxu0 %v3260
        %4776 = vmatmul.mubr.f32.gmra.mrb[0].mxu0 %v3258
        %v4777 = vpop.f32.mrb[0].mxu0
        %v4778 = vadd.f32 %v4707, %v4777
        %v4779 = vpop.f32.mrb[0].mxu0
        %v4780 = vadd.f32 %v4709, %v4779
        %4781 = vdwg.mxu0
        %4782 = vmatprep.subr.mxu0 %v2917
        %4783 = vmatpush1.msra.mxu0 %v2916
        %4784 = vmatprep.subr.mxu0 %v2925
        %4785 = vmatpush1.msra.mxu0 %v2924
        %4786 = vmatprep.subr.mxu0 %v2933
        %4787 = vmatpush1.msra.mxu0 %v2932
        %4788 = vmatprep.subr.mxu0 %v2941
        %4789 = vmatpush1.msra.mxu0 %v2940
        %4790 = vmatprep.subr.mxu0 %v2949
        %4791 = vmatpush1.msra.mxu0 %v2948
        %4792 = vmatprep.subr.mxu0 %v2957
        %4793 = vmatpush1.msra.mxu0 %v2956
        %4794 = vmatprep.subr.mxu0 %v2965
        %4795 = vmatpush1.msra.mxu0 %v2964
        %4796 = vmatprep.subr.mxu0 %v2973
        %4797 = vmatpush1.msra.mxu0 %v2972
        %4798 = vmatprep.subr.mxu0 %v2981
        %4799 = vmatpush1.msra.mxu0 %v2980
        %4800 = vmatprep.subr.mxu0 %v2989
        %4801 = vmatpush1.msra.mxu0 %v2988
        %4802 = vmatprep.subr.mxu0 %v2997
        %4803 = vmatpush1.msra.mxu0 %v2996
        %4804 = vmatprep.subr.mxu0 %v3005
        %4805 = vmatpush1.msra.mxu0 %v3004
        %4806 = vmatprep.subr.mxu0 %v3013
        %4807 = vmatpush1.msra.mxu0 %v3012
        %4808 = vmatprep.subr.mxu0 %v3021
        %4809 = vmatpush1.msra.mxu0 %v3020
        %4810 = vmatprep.subr.mxu0 %v3029
        %4811 = vmatpush1.msra.mxu0 %v3028
        %4812 = vmatprep.subr.mxu0 %v3037
        %4813 = vmatpush1.msra.mxu0 %v3036
        %4814 = vmatprep.subr.mxu0 %v3045
        %4815 = vmatpush1.msra.mxu0 %v3044
        %4816 = vmatprep.subr.mxu0 %v3053
        %4817 = vmatpush1.msra.mxu0 %v3052
        %4818 = vmatprep.subr.mxu0 %v3061
        %4819 = vmatpush1.msra.mxu0 %v3060
        %4820 = vmatprep.subr.mxu0 %v3069
        %4821 = vmatpush1.msra.mxu0 %v3068
        %4822 = vmatprep.subr.mxu0 %v3077
        %4823 = vmatpush1.msra.mxu0 %v3076
        %4824 = vmatprep.subr.mxu0 %v3085
        %4825 = vmatpush1.msra.mxu0 %v3084
        %4826 = vmatprep.subr.mxu0 %v3093
        %4827 = vmatpush1.msra.mxu0 %v3092
        %4828 = vmatprep.subr.mxu0 %v3101
        %4829 = vmatpush1.msra.mxu0 %v3100
        %4830 = vmatprep.subr.mxu0 %v3109
        %4831 = vmatpush1.msra.mxu0 %v3108
        %4832 = vmatprep.subr.mxu0 %v3117
        %4833 = vmatpush1.msra.mxu0 %v3116
        %4834 = vmatprep.subr.mxu0 %v3125
        %4835 = vmatpush1.msra.mxu0 %v3124
        %4836 = vmatprep.subr.mxu0 %v3133
        %4837 = vmatpush1.msra.mxu0 %v3132
        %4838 = vmatprep.subr.mxu0 %v3141
        %4839 = vmatpush1.msra.mxu0 %v3140
        %4840 = vmatprep.subr.mxu0 %v3149
        %4841 = vmatpush1.msra.mxu0 %v3148
        %4842 = vmatprep.subr.mxu0 %v3157
        %4843 = vmatpush1.msra.mxu0 %v3156
        %4844 = vmatprep.subr.mxu0 %v3165
        %4845 = vmatpush1.msra.mxu0 %v3164
        %4846 = vmatprep.mubr.f32.mxu0 %v3268
        %4847 = vmatmul.mubr.f32.gmra.mrb[0].mxu0 %v3267
        %v4848 = vpop.f32.mrb[0].mxu0
        %v4849 = vadd.f32 %v4778, %v4848
        %v4850 = vpop.f32.mrb[0].mxu0
        %v4851 = vadd.f32 %v4780, %v4850
        %4852 = vdwg.mxu0
        %4853 = vmatprep.subr.mxu0 %v359
        %4854 = vmatpush1.msra.mxu0 %v358
        %4855 = vmatprep.subr.mxu0 %v367
        %4856 = vmatpush1.msra.mxu0 %v366
        %4857 = vmatprep.subr.mxu0 %v375
        %4858 = vmatpush1.msra.mxu0 %v374
        %4859 = vmatprep.subr.mxu0 %v383
        %4860 = vmatpush1.msra.mxu0 %v382
        %4861 = vmatprep.subr.mxu0 %v391
        %4862 = vmatpush1.msra.mxu0 %v390
        %4863 = vmatprep.subr.mxu0 %v399
        %4864 = vmatpush1.msra.mxu0 %v398
        %4865 = vmatprep.subr.mxu0 %v407
        %4866 = vmatpush1.msra.mxu0 %v406
        %4867 = vmatprep.subr.mxu0 %v415
        %4868 = vmatpush1.msra.mxu0 %v414
        %4869 = vmatprep.subr.mxu0 %v423
        %4870 = vmatpush1.msra.mxu0 %v422
        %4871 = vmatprep.subr.mxu0 %v431
        %4872 = vmatpush1.msra.mxu0 %v430
        %4873 = vmatprep.subr.mxu0 %v439
        %4874 = vmatpush1.msra.mxu0 %v438
        %4875 = vmatprep.subr.mxu0 %v447
        %4876 = vmatpush1.msra.mxu0 %v446
        %4877 = vmatprep.subr.mxu0 %v455
        %4878 = vmatpush1.msra.mxu0 %v454
        %4879 = vmatprep.subr.mxu0 %v463
        %4880 = vmatpush1.msra.mxu0 %v462
        %4881 = vmatprep.subr.mxu0 %v471
        %4882 = vmatpush1.msra.mxu0 %v470
        %4883 = vmatprep.subr.mxu0 %v479
        %4884 = vmatpush1.msra.mxu0 %v478
        %4885 = vmatprep.subr.mxu0 %v487
        %4886 = vmatpush1.msra.mxu0 %v486
        %4887 = vmatprep.subr.mxu0 %v495
        %4888 = vmatpush1.msra.mxu0 %v494
        %4889 = vmatprep.subr.mxu0 %v503
        %4890 = vmatpush1.msra.mxu0 %v502
        %4891 = vmatprep.subr.mxu0 %v511
        %4892 = vmatpush1.msra.mxu0 %v510
        %4893 = vmatprep.subr.mxu0 %v519
        %4894 = vmatpush1.msra.mxu0 %v518
        %4895 = vmatprep.subr.mxu0 %v527
        %4896 = vmatpush1.msra.mxu0 %v526
        %4897 = vmatprep.subr.mxu0 %v535
        %4898 = vmatpush1.msra.mxu0 %v534
        %4899 = vmatprep.subr.mxu0 %v543
        %4900 = vmatpush1.msra.mxu0 %v542
        %4901 = vmatprep.subr.mxu0 %v551
        %4902 = vmatpush1.msra.mxu0 %v550
        %4903 = vmatprep.subr.mxu0 %v559
        %4904 = vmatpush1.msra.mxu0 %v558
        %4905 = vmatprep.subr.mxu0 %v567
        %4906 = vmatpush1.msra.mxu0 %v566
        %4907 = vmatprep.subr.mxu0 %v575
        %4908 = vmatpush1.msra.mxu0 %v574
        %4909 = vmatprep.subr.mxu0 %v583
        %4910 = vmatpush1.msra.mxu0 %v582
        %4911 = vmatprep.subr.mxu0 %v591
        %4912 = vmatpush1.msra.mxu0 %v590
        %4913 = vmatprep.subr.mxu0 %v599
        %4914 = vmatpush1.msra.mxu0 %v598
        %4915 = vmatprep.subr.mxu0 %v607
        %4916 = vmatpush1.msra.mxu0 %v606
        %4917 = vmatprep.mubr.f32.mxu0 %v3191
        %4918 = vmatmul.mubr.f32.gmra.mrb[0].mxu0 %v3183
        %v4919 = vpop.f32.mrb[0].mxu0
        %v4920 = vadd.f32 0.0, %v4919
        %v4921 = vpop.f32.mrb[0].mxu0
        %v4922 = vadd.f32 0.0, %v4921
        %4923 = vdwg.mxu0
        %4924 = vmatprep.subr.mxu0 %v615
        %4925 = vmatpush1.msra.mxu0 %v614
        %4926 = vmatprep.subr.mxu0 %v623
        %4927 = vmatpush1.msra.mxu0 %v622
        %4928 = vmatprep.subr.mxu0 %v631
        %4929 = vmatpush1.msra.mxu0 %v630
        %4930 = vmatprep.subr.mxu0 %v639
        %4931 = vmatpush1.msra.mxu0 %v638
        %4932 = vmatprep.subr.mxu0 %v647
        %4933 = vmatpush1.msra.mxu0 %v646
        %4934 = vmatprep.subr.mxu0 %v655
        %4935 = vmatpush1.msra.mxu0 %v654
        %4936 = vmatprep.subr.mxu0 %v663
        %4937 = vmatpush1.msra.mxu0 %v662
        %4938 = vmatprep.subr.mxu0 %v671
        %4939 = vmatpush1.msra.mxu0 %v670
        %4940 = vmatprep.subr.mxu0 %v679
        %4941 = vmatpush1.msra.mxu0 %v678
        %4942 = vmatprep.subr.mxu0 %v687
        %4943 = vmatpush1.msra.mxu0 %v686
        %4944 = vmatprep.subr.mxu0 %v695
        %4945 = vmatpush1.msra.mxu0 %v694
        %4946 = vmatprep.subr.mxu0 %v703
        %4947 = vmatpush1.msra.mxu0 %v702
        %4948 = vmatprep.subr.mxu0 %v711
        %4949 = vmatpush1.msra.mxu0 %v710
        %4950 = vmatprep.subr.mxu0 %v719
        %4951 = vmatpush1.msra.mxu0 %v718
        %4952 = vmatprep.subr.mxu0 %v727
        %4953 = vmatpush1.msra.mxu0 %v726
        %4954 = vmatprep.subr.mxu0 %v735
        %4955 = vmatpush1.msra.mxu0 %v734
        %4956 = vmatprep.subr.mxu0 %v743
        %4957 = vmatpush1.msra.mxu0 %v742
        %4958 = vmatprep.subr.mxu0 %v751
        %4959 = vmatpush1.msra.mxu0 %v750
        %4960 = vmatprep.subr.mxu0 %v759
        %4961 = vmatpush1.msra.mxu0 %v758
        %4962 = vmatprep.subr.mxu0 %v767
        %4963 = vmatpush1.msra.mxu0 %v766
        %4964 = vmatprep.subr.mxu0 %v775
        %4965 = vmatpush1.msra.mxu0 %v774
        %4966 = vmatprep.subr.mxu0 %v783
        %4967 = vmatpush1.msra.mxu0 %v782
        %4968 = vmatprep.subr.mxu0 %v791
        %4969 = vmatpush1.msra.mxu0 %v790
        %4970 = vmatprep.subr.mxu0 %v799
        %4971 = vmatpush1.msra.mxu0 %v798
        %4972 = vmatprep.subr.mxu0 %v807
        %4973 = vmatpush1.msra.mxu0 %v806
        %4974 = vmatprep.subr.mxu0 %v815
        %4975 = vmatpush1.msra.mxu0 %v814
        %4976 = vmatprep.subr.mxu0 %v823
        %4977 = vmatpush1.msra.mxu0 %v822
        %4978 = vmatprep.subr.mxu0 %v831
        %4979 = vmatpush1.msra.mxu0 %v830
        %4980 = vmatprep.subr.mxu0 %v839
        %4981 = vmatpush1.msra.mxu0 %v838
        %4982 = vmatprep.subr.mxu0 %v847
        %4983 = vmatpush1.msra.mxu0 %v846
        %4984 = vmatprep.subr.mxu0 %v855
        %4985 = vmatpush1.msra.mxu0 %v854
        %4986 = vmatprep.subr.mxu0 %v863
        %4987 = vmatpush1.msra.mxu0 %v862
        %4988 = vmatprep.mubr.f32.mxu0 %v3192
        %4989 = vmatmul.mubr.f32.gmra.mrb[0].mxu0 %v3190
        %v4990 = vpop.f32.mrb[0].mxu0
        %v4991 = vadd.f32 %v4920, %v4990
        %v4992 = vpop.f32.mrb[0].mxu0
        %v4993 = vadd.f32 %v4922, %v4992
        %4994 = vdwg.mxu0
        %4995 = vmatprep.subr.mxu0 %v871
        %4996 = vmatpush1.msra.mxu0 %v870
        %4997 = vmatprep.subr.mxu0 %v879
        %4998 = vmatpush1.msra.mxu0 %v878
        %4999 = vmatprep.subr.mxu0 %v887
        %5000 = vmatpush1.msra.mxu0 %v886
        %5001 = vmatprep.subr.mxu0 %v895
        %5002 = vmatpush1.msra.mxu0 %v894
        %5003 = vmatprep.subr.mxu0 %v903
        %5004 = vmatpush1.msra.mxu0 %v902
        %5005 = vmatprep.subr.mxu0 %v911
        %5006 = vmatpush1.msra.mxu0 %v910
        %5007 = vmatprep.subr.mxu0 %v919
        %5008 = vmatpush1.msra.mxu0 %v918
        %5009 = vmatprep.subr.mxu0 %v927
        %5010 = vmatpush1.msra.mxu0 %v926
        %5011 = vmatprep.subr.mxu0 %v935
        %5012 = vmatpush1.msra.mxu0 %v934
        %5013 = vmatprep.subr.mxu0 %v943
        %5014 = vmatpush1.msra.mxu0 %v942
        %5015 = vmatprep.subr.mxu0 %v951
        %5016 = vmatpush1.msra.mxu0 %v950
        %5017 = vmatprep.subr.mxu0 %v959
        %5018 = vmatpush1.msra.mxu0 %v958
        %5019 = vmatprep.subr.mxu0 %v967
        %5020 = vmatpush1.msra.mxu0 %v966
        %5021 = vmatprep.subr.mxu0 %v975
        %5022 = vmatpush1.msra.mxu0 %v974
        %5023 = vmatprep.subr.mxu0 %v983
        %5024 = vmatpush1.msra.mxu0 %v982
        %5025 = vmatprep.subr.mxu0 %v991
        %5026 = vmatpush1.msra.mxu0 %v990
        %5027 = vmatprep.subr.mxu0 %v999
        %5028 = vmatpush1.msra.mxu0 %v998
        %5029 = vmatprep.subr.mxu0 %v1007
        %5030 = vmatpush1.msra.mxu0 %v1006
        %5031 = vmatprep.subr.mxu0 %v1015
        %5032 = vmatpush1.msra.mxu0 %v1014
        %5033 = vmatprep.subr.mxu0 %v1023
        %5034 = vmatpush1.msra.mxu0 %v1022
        %5035 = vmatprep.subr.mxu0 %v1031
        %5036 = vmatpush1.msra.mxu0 %v1030
        %5037 = vmatprep.subr.mxu0 %v1039
        %5038 = vmatpush1.msra.mxu0 %v1038
        %5039 = vmatprep.subr.mxu0 %v1047
        %5040 = vmatpush1.msra.mxu0 %v1046
        %5041 = vmatprep.subr.mxu0 %v1055
        %5042 = vmatpush1.msra.mxu0 %v1054
        %5043 = vmatprep.subr.mxu0 %v1063
        %5044 = vmatpush1.msra.mxu0 %v1062
        %5045 = vmatprep.subr.mxu0 %v1071
        %5046 = vmatpush1.msra.mxu0 %v1070
        %5047 = vmatprep.subr.mxu0 %v1079
        %5048 = vmatpush1.msra.mxu0 %v1078
        %5049 = vmatprep.subr.mxu0 %v1087
        %5050 = vmatpush1.msra.mxu0 %v1086
        %5051 = vmatprep.subr.mxu0 %v1095
        %5052 = vmatpush1.msra.mxu0 %v1094
        %5053 = vmatprep.subr.mxu0 %v1103
        %5054 = vmatpush1.msra.mxu0 %v1102
        %5055 = vmatprep.subr.mxu0 %v1111
        %5056 = vmatpush1.msra.mxu0 %v1110
        %5057 = vmatprep.subr.mxu0 %v1119
        %5058 = vmatpush1.msra.mxu0 %v1118
        %5059 = vmatprep.mubr.f32.mxu0 %v3208
        %5060 = vmatmul.mubr.f32.gmra.mrb[0].mxu0 %v3200
        %v5061 = vpop.f32.mrb[0].mxu0
        %v5062 = vadd.f32 %v4991, %v5061
        %v5063 = vpop.f32.mrb[0].mxu0
        %v5064 = vadd.f32 %v4993, %v5063
        %5065 = vdwg.mxu0
        %5066 = vmatprep.subr.mxu0 %v1127
        %5067 = vmatpush1.msra.mxu0 %v1126
        %5068 = vmatprep.subr.mxu0 %v1135
        %5069 = vmatpush1.msra.mxu0 %v1134
        %5070 = vmatprep.subr.mxu0 %v1143
        %5071 = vmatpush1.msra.mxu0 %v1142
        %5072 = vmatprep.subr.mxu0 %v1151
        %5073 = vmatpush1.msra.mxu0 %v1150
        %5074 = vmatprep.subr.mxu0 %v1159
        %5075 = vmatpush1.msra.mxu0 %v1158
        %5076 = vmatprep.subr.mxu0 %v1167
        %5077 = vmatpush1.msra.mxu0 %v1166
        %5078 = vmatprep.subr.mxu0 %v1175
        %5079 = vmatpush1.msra.mxu0 %v1174
        %5080 = vmatprep.subr.mxu0 %v1183
        %5081 = vmatpush1.msra.mxu0 %v1182
        %5082 = vmatprep.subr.mxu0 %v1191
        %5083 = vmatpush1.msra.mxu0 %v1190
        %5084 = vmatprep.subr.mxu0 %v1199
        %5085 = vmatpush1.msra.mxu0 %v1198
        %5086 = vmatprep.subr.mxu0 %v1207
        %5087 = vmatpush1.msra.mxu0 %v1206
        %5088 = vmatprep.subr.mxu0 %v1215
        %5089 = vmatpush1.msra.mxu0 %v1214
        %5090 = vmatprep.subr.mxu0 %v1223
        %5091 = vmatpush1.msra.mxu0 %v1222
        %5092 = vmatprep.subr.mxu0 %v1231
        %5093 = vmatpush1.msra.mxu0 %v1230
        %5094 = vmatprep.subr.mxu0 %v1239
        %5095 = vmatpush1.msra.mxu0 %v1238
        %5096 = vmatprep.subr.mxu0 %v1247
        %5097 = vmatpush1.msra.mxu0 %v1246
        %5098 = vmatprep.subr.mxu0 %v1255
        %5099 = vmatpush1.msra.mxu0 %v1254
        %5100 = vmatprep.subr.mxu0 %v1263
        %5101 = vmatpush1.msra.mxu0 %v1262
        %5102 = vmatprep.subr.mxu0 %v1271
        %5103 = vmatpush1.msra.mxu0 %v1270
        %5104 = vmatprep.subr.mxu0 %v1279
        %5105 = vmatpush1.msra.mxu0 %v1278
        %5106 = vmatprep.subr.mxu0 %v1287
        %5107 = vmatpush1.msra.mxu0 %v1286
        %5108 = vmatprep.subr.mxu0 %v1295
        %5109 = vmatpush1.msra.mxu0 %v1294
        %5110 = vmatprep.subr.mxu0 %v1303
        %5111 = vmatpush1.msra.mxu0 %v1302
        %5112 = vmatprep.subr.mxu0 %v1311
        %5113 = vmatpush1.msra.mxu0 %v1310
        %5114 = vmatprep.subr.mxu0 %v1319
        %5115 = vmatpush1.msra.mxu0 %v1318
        %5116 = vmatprep.subr.mxu0 %v1327
        %5117 = vmatpush1.msra.mxu0 %v1326
        %5118 = vmatprep.subr.mxu0 %v1335
        %5119 = vmatpush1.msra.mxu0 %v1334
        %5120 = vmatprep.subr.mxu0 %v1343
        %5121 = vmatpush1.msra.mxu0 %v1342
        %5122 = vmatprep.subr.mxu0 %v1351
        %5123 = vmatpush1.msra.mxu0 %v1350
        %5124 = vmatprep.subr.mxu0 %v1359
        %5125 = vmatpush1.msra.mxu0 %v1358
        %5126 = vmatprep.subr.mxu0 %v1367
        %5127 = vmatpush1.msra.mxu0 %v1366
        %5128 = vmatprep.subr.mxu0 %v1375
        %5129 = vmatpush1.msra.mxu0 %v1374
        %5130 = vmatprep.mubr.f32.mxu0 %v3209
        %5131 = vmatmul.mubr.f32.gmra.mrb[0].mxu0 %v3207
        %v5132 = vpop.f32.mrb[0].mxu0
        %v5133 = vadd.f32 %v5062, %v5132
        %v5134 = vpop.f32.mrb[0].mxu0
        %v5135 = vadd.f32 %v5064, %v5134
        %5136 = vdwg.mxu0
        %5137 = vmatprep.subr.mxu0 %v1383
        %5138 = vmatpush1.msra.mxu0 %v1382
        %5139 = vmatprep.subr.mxu0 %v1391
        %5140 = vmatpush1.msra.mxu0 %v1390
        %5141 = vmatprep.subr.mxu0 %v1399
        %5142 = vmatpush1.msra.mxu0 %v1398
        %5143 = vmatprep.subr.mxu0 %v1407
        %5144 = vmatpush1.msra.mxu0 %v1406
        %5145 = vmatprep.subr.mxu0 %v1415
        %5146 = vmatpush1.msra.mxu0 %v1414
        %5147 = vmatprep.subr.mxu0 %v1423
        %5148 = vmatpush1.msra.mxu0 %v1422
        %5149 = vmatprep.subr.mxu0 %v1431
        %5150 = vmatpush1.msra.mxu0 %v1430
        %5151 = vmatprep.subr.mxu0 %v1439
        %5152 = vmatpush1.msra.mxu0 %v1438
        %5153 = vmatprep.subr.mxu0 %v1447
        %5154 = vmatpush1.msra.mxu0 %v1446
        %5155 = vmatprep.subr.mxu0 %v1455
        %5156 = vmatpush1.msra.mxu0 %v1454
        %5157 = vmatprep.subr.mxu0 %v1463
        %5158 = vmatpush1.msra.mxu0 %v1462
        %5159 = vmatprep.subr.mxu0 %v1471
        %5160 = vmatpush1.msra.mxu0 %v1470
        %5161 = vmatprep.subr.mxu0 %v1479
        %5162 = vmatpush1.msra.mxu0 %v1478
        %5163 = vmatprep.subr.mxu0 %v1487
        %5164 = vmatpush1.msra.mxu0 %v1486
        %5165 = vmatprep.subr.mxu0 %v1495
        %5166 = vmatpush1.msra.mxu0 %v1494
        %5167 = vmatprep.subr.mxu0 %v1503
        %5168 = vmatpush1.msra.mxu0 %v1502
        %5169 = vmatprep.subr.mxu0 %v1511
        %5170 = vmatpush1.msra.mxu0 %v1510
        %5171 = vmatprep.subr.mxu0 %v1519
        %5172 = vmatpush1.msra.mxu0 %v1518
        %5173 = vmatprep.subr.mxu0 %v1527
        %5174 = vmatpush1.msra.mxu0 %v1526
        %5175 = vmatprep.subr.mxu0 %v1535
        %5176 = vmatpush1.msra.mxu0 %v1534
        %5177 = vmatprep.subr.mxu0 %v1543
        %5178 = vmatpush1.msra.mxu0 %v1542
        %5179 = vmatprep.subr.mxu0 %v1551
        %5180 = vmatpush1.msra.mxu0 %v1550
        %5181 = vmatprep.subr.mxu0 %v1559
        %5182 = vmatpush1.msra.mxu0 %v1558
        %5183 = vmatprep.subr.mxu0 %v1567
        %5184 = vmatpush1.msra.mxu0 %v1566
        %5185 = vmatprep.subr.mxu0 %v1575
        %5186 = vmatpush1.msra.mxu0 %v1574
        %5187 = vmatprep.subr.mxu0 %v1583
        %5188 = vmatpush1.msra.mxu0 %v1582
        %5189 = vmatprep.subr.mxu0 %v1591
        %5190 = vmatpush1.msra.mxu0 %v1590
        %5191 = vmatprep.subr.mxu0 %v1599
        %5192 = vmatpush1.msra.mxu0 %v1598
        %5193 = vmatprep.subr.mxu0 %v1607
        %5194 = vmatpush1.msra.mxu0 %v1606
        %5195 = vmatprep.subr.mxu0 %v1615
        %5196 = vmatpush1.msra.mxu0 %v1614
        %5197 = vmatprep.subr.mxu0 %v1623
        %5198 = vmatpush1.msra.mxu0 %v1622
        %5199 = vmatprep.subr.mxu0 %v1631
        %5200 = vmatpush1.msra.mxu0 %v1630
        %5201 = vmatprep.mubr.f32.mxu0 %v3225
        %5202 = vmatmul.mubr.f32.gmra.mrb[0].mxu0 %v3217
        %v5203 = vpop.f32.mrb[0].mxu0
        %v5204 = vadd.f32 %v5133, %v5203
        %v5205 = vpop.f32.mrb[0].mxu0
        %v5206 = vadd.f32 %v5135, %v5205
        %5207 = vdwg.mxu0
        %5208 = vmatprep.subr.mxu0 %v1639
        %5209 = vmatpush1.msra.mxu0 %v1638
        %5210 = vmatprep.subr.mxu0 %v1647
        %5211 = vmatpush1.msra.mxu0 %v1646
        %5212 = vmatprep.subr.mxu0 %v1655
        %5213 = vmatpush1.msra.mxu0 %v1654
        %5214 = vmatprep.subr.mxu0 %v1663
        %5215 = vmatpush1.msra.mxu0 %v1662
        %5216 = vmatprep.subr.mxu0 %v1671
        %5217 = vmatpush1.msra.mxu0 %v1670
        %5218 = vmatprep.subr.mxu0 %v1679
        %5219 = vmatpush1.msra.mxu0 %v1678
        %5220 = vmatprep.subr.mxu0 %v1687
        %5221 = vmatpush1.msra.mxu0 %v1686
        %5222 = vmatprep.subr.mxu0 %v1695
        %5223 = vmatpush1.msra.mxu0 %v1694
        %5224 = vmatprep.subr.mxu0 %v1703
        %5225 = vmatpush1.msra.mxu0 %v1702
        %5226 = vmatprep.subr.mxu0 %v1711
        %5227 = vmatpush1.msra.mxu0 %v1710
        %5228 = vmatprep.subr.mxu0 %v1719
        %5229 = vmatpush1.msra.mxu0 %v1718
        %5230 = vmatprep.subr.mxu0 %v1727
        %5231 = vmatpush1.msra.mxu0 %v1726
        %5232 = vmatprep.subr.mxu0 %v1735
        %5233 = vmatpush1.msra.mxu0 %v1734
        %5234 = vmatprep.subr.mxu0 %v1743
        %5235 = vmatpush1.msra.mxu0 %v1742
        %5236 = vmatprep.subr.mxu0 %v1751
        %5237 = vmatpush1.msra.mxu0 %v1750
        %5238 = vmatprep.subr.mxu0 %v1759
        %5239 = vmatpush1.msra.mxu0 %v1758
        %5240 = vmatprep.subr.mxu0 %v1767
        %5241 = vmatpush1.msra.mxu0 %v1766
        %5242 = vmatprep.subr.mxu0 %v1775
        %5243 = vmatpush1.msra.mxu0 %v1774
        %5244 = vmatprep.subr.mxu0 %v1783
        %5245 = vmatpush1.msra.mxu0 %v1782
        %5246 = vmatprep.subr.mxu0 %v1791
        %5247 = vmatpush1.msra.mxu0 %v1790
        %5248 = vmatprep.subr.mxu0 %v1799
        %5249 = vmatpush1.msra.mxu0 %v1798
        %5250 = vmatprep.subr.mxu0 %v1807
        %5251 = vmatpush1.msra.mxu0 %v1806
        %5252 = vmatprep.subr.mxu0 %v1815
        %5253 = vmatpush1.msra.mxu0 %v1814
        %5254 = vmatprep.subr.mxu0 %v1823
        %5255 = vmatpush1.msra.mxu0 %v1822
        %5256 = vmatprep.subr.mxu0 %v1831
        %5257 = vmatpush1.msra.mxu0 %v1830
        %5258 = vmatprep.subr.mxu0 %v1839
        %5259 = vmatpush1.msra.mxu0 %v1838
        %5260 = vmatprep.subr.mxu0 %v1847
        %5261 = vmatpush1.msra.mxu0 %v1846
        %5262 = vmatprep.subr.mxu0 %v1855
        %5263 = vmatpush1.msra.mxu0 %v1854
        %5264 = vmatprep.subr.mxu0 %v1863
        %5265 = vmatpush1.msra.mxu0 %v1862
        %5266 = vmatprep.subr.mxu0 %v1871
        %5267 = vmatpush1.msra.mxu0 %v1870
        %5268 = vmatprep.subr.mxu0 %v1879
        %5269 = vmatpush1.msra.mxu0 %v1878
        %5270 = vmatprep.subr.mxu0 %v1887
        %5271 = vmatpush1.msra.mxu0 %v1886
        %5272 = vmatprep.mubr.f32.mxu0 %v3226
        %5273 = vmatmul.mubr.f32.gmra.mrb[0].mxu0 %v3224
        %v5274 = vpop.f32.mrb[0].mxu0
        %v5275 = vadd.f32 %v5204, %v5274
        %v5276 = vpop.f32.mrb[0].mxu0
        %v5277 = vadd.f32 %v5206, %v5276
        %5278 = vdwg.mxu0
        %5279 = vmatprep.subr.mxu0 %v1895
        %5280 = vmatpush1.msra.mxu0 %v1894
        %5281 = vmatprep.subr.mxu0 %v1903
        %5282 = vmatpush1.msra.mxu0 %v1902
        %5283 = vmatprep.subr.mxu0 %v1911
        %5284 = vmatpush1.msra.mxu0 %v1910
        %5285 = vmatprep.subr.mxu0 %v1919
        %5286 = vmatpush1.msra.mxu0 %v1918
        %5287 = vmatprep.subr.mxu0 %v1927
        %5288 = vmatpush1.msra.mxu0 %v1926
        %5289 = vmatprep.subr.mxu0 %v1935
        %5290 = vmatpush1.msra.mxu0 %v1934
        %5291 = vmatprep.subr.mxu0 %v1943
        %5292 = vmatpush1.msra.mxu0 %v1942
        %5293 = vmatprep.subr.mxu0 %v1951
        %5294 = vmatpush1.msra.mxu0 %v1950
        %5295 = vmatprep.subr.mxu0 %v1959
        %5296 = vmatpush1.msra.mxu0 %v1958
        %5297 = vmatprep.subr.mxu0 %v1967
        %5298 = vmatpush1.msra.mxu0 %v1966
        %5299 = vmatprep.subr.mxu0 %v1975
        %5300 = vmatpush1.msra.mxu0 %v1974
        %5301 = vmatprep.subr.mxu0 %v1983
        %5302 = vmatpush1.msra.mxu0 %v1982
        %5303 = vmatprep.subr.mxu0 %v1991
        %5304 = vmatpush1.msra.mxu0 %v1990
        %5305 = vmatprep.subr.mxu0 %v1999
        %5306 = vmatpush1.msra.mxu0 %v1998
        %5307 = vmatprep.subr.mxu0 %v2007
        %5308 = vmatpush1.msra.mxu0 %v2006
        %5309 = vmatprep.subr.mxu0 %v2015
        %5310 = vmatpush1.msra.mxu0 %v2014
        %5311 = vmatprep.subr.mxu0 %v2023
        %5312 = vmatpush1.msra.mxu0 %v2022
        %5313 = vmatprep.subr.mxu0 %v2031
        %5314 = vmatpush1.msra.mxu0 %v2030
        %5315 = vmatprep.subr.mxu0 %v2039
        %5316 = vmatpush1.msra.mxu0 %v2038
        %5317 = vmatprep.subr.mxu0 %v2047
        %5318 = vmatpush1.msra.mxu0 %v2046
        %5319 = vmatprep.subr.mxu0 %v2055
        %5320 = vmatpush1.msra.mxu0 %v2054
        %5321 = vmatprep.subr.mxu0 %v2063
        %5322 = vmatpush1.msra.mxu0 %v2062
        %5323 = vmatprep.subr.mxu0 %v2071
        %5324 = vmatpush1.msra.mxu0 %v2070
        %5325 = vmatprep.subr.mxu0 %v2079
        %5326 = vmatpush1.msra.mxu0 %v2078
        %5327 = vmatprep.subr.mxu0 %v2087
        %5328 = vmatpush1.msra.mxu0 %v2086
        %5329 = vmatprep.subr.mxu0 %v2095
        %5330 = vmatpush1.msra.mxu0 %v2094
        %5331 = vmatprep.subr.mxu0 %v2103
        %5332 = vmatpush1.msra.mxu0 %v2102
        %5333 = vmatprep.subr.mxu0 %v2111
        %5334 = vmatpush1.msra.mxu0 %v2110
        %5335 = vmatprep.subr.mxu0 %v2119
        %5336 = vmatpush1.msra.mxu0 %v2118
        %5337 = vmatprep.subr.mxu0 %v2127
        %5338 = vmatpush1.msra.mxu0 %v2126
        %5339 = vmatprep.subr.mxu0 %v2135
        %5340 = vmatpush1.msra.mxu0 %v2134
        %5341 = vmatprep.subr.mxu0 %v2143
        %5342 = vmatpush1.msra.mxu0 %v2142
        %5343 = vmatprep.mubr.f32.mxu0 %v3242
        %5344 = vmatmul.mubr.f32.gmra.mrb[0].mxu0 %v3234
        %v5345 = vpop.f32.mrb[0].mxu0
        %v5346 = vadd.f32 %v5275, %v5345
        %v5347 = vpop.f32.mrb[0].mxu0
        %v5348 = vadd.f32 %v5277, %v5347
        %5349 = vdwg.mxu0
        %5350 = vmatprep.subr.mxu0 %v2151
        %5351 = vmatpush1.msra.mxu0 %v2150
        %5352 = vmatprep.subr.mxu0 %v2159
        %5353 = vmatpush1.msra.mxu0 %v2158
        %5354 = vmatprep.subr.mxu0 %v2167
        %5355 = vmatpush1.msra.mxu0 %v2166
        %5356 = vmatprep.subr.mxu0 %v2175
        %5357 = vmatpush1.msra.mxu0 %v2174
        %5358 = vmatprep.subr.mxu0 %v2183
        %5359 = vmatpush1.msra.mxu0 %v2182
        %5360 = vmatprep.subr.mxu0 %v2191
        %5361 = vmatpush1.msra.mxu0 %v2190
        %5362 = vmatprep.subr.mxu0 %v2199
        %5363 = vmatpush1.msra.mxu0 %v2198
        %5364 = vmatprep.subr.mxu0 %v2207
        %5365 = vmatpush1.msra.mxu0 %v2206
        %5366 = vmatprep.subr.mxu0 %v2215
        %5367 = vmatpush1.msra.mxu0 %v2214
        %5368 = vmatprep.subr.mxu0 %v2223
        %5369 = vmatpush1.msra.mxu0 %v2222
        %5370 = vmatprep.subr.mxu0 %v2231
        %5371 = vmatpush1.msra.mxu0 %v2230
        %5372 = vmatprep.subr.mxu0 %v2239
        %5373 = vmatpush1.msra.mxu0 %v2238
        %5374 = vmatprep.subr.mxu0 %v2247
        %5375 = vmatpush1.msra.mxu0 %v2246
        %5376 = vmatprep.subr.mxu0 %v2255
        %5377 = vmatpush1.msra.mxu0 %v2254
        %5378 = vmatprep.subr.mxu0 %v2263
        %5379 = vmatpush1.msra.mxu0 %v2262
        %5380 = vmatprep.subr.mxu0 %v2271
        %5381 = vmatpush1.msra.mxu0 %v2270
        %5382 = vmatprep.subr.mxu0 %v2279
        %5383 = vmatpush1.msra.mxu0 %v2278
        %5384 = vmatprep.subr.mxu0 %v2287
        %5385 = vmatpush1.msra.mxu0 %v2286
        %5386 = vmatprep.subr.mxu0 %v2295
        %5387 = vmatpush1.msra.mxu0 %v2294
        %5388 = vmatprep.subr.mxu0 %v2303
        %5389 = vmatpush1.msra.mxu0 %v2302
        %5390 = vmatprep.subr.mxu0 %v2311
        %5391 = vmatpush1.msra.mxu0 %v2310
        %5392 = vmatprep.subr.mxu0 %v2319
        %5393 = vmatpush1.msra.mxu0 %v2318
        %5394 = vmatprep.subr.mxu0 %v2327
        %5395 = vmatpush1.msra.mxu0 %v2326
        %5396 = vmatprep.subr.mxu0 %v2335
        %5397 = vmatpush1.msra.mxu0 %v2334
        %5398 = vmatprep.subr.mxu0 %v2343
        %5399 = vmatpush1.msra.mxu0 %v2342
        %5400 = vmatprep.subr.mxu0 %v2351
        %5401 = vmatpush1.msra.mxu0 %v2350
        %5402 = vmatprep.subr.mxu0 %v2359
        %5403 = vmatpush1.msra.mxu0 %v2358
        %5404 = vmatprep.subr.mxu0 %v2367
        %5405 = vmatpush1.msra.mxu0 %v2366
        %5406 = vmatprep.subr.mxu0 %v2375
        %5407 = vmatpush1.msra.mxu0 %v2374
        %5408 = vmatprep.subr.mxu0 %v2383
        %5409 = vmatpush1.msra.mxu0 %v2382
        %5410 = vmatprep.subr.mxu0 %v2391
        %5411 = vmatpush1.msra.mxu0 %v2390
        %5412 = vmatprep.subr.mxu0 %v2399
        %5413 = vmatpush1.msra.mxu0 %v2398
        %5414 = vmatprep.mubr.f32.mxu0 %v3243
        %5415 = vmatmul.mubr.f32.gmra.mrb[0].mxu0 %v3241
        %v5416 = vpop.f32.mrb[0].mxu0
        %v5417 = vadd.f32 %v5346, %v5416
        %v5418 = vpop.f32.mrb[0].mxu0
        %v5419 = vadd.f32 %v5348, %v5418
        %5420 = vdwg.mxu0
        %5421 = vmatprep.subr.mxu0 %v2407
        %5422 = vmatpush1.msra.mxu0 %v2406
        %5423 = vmatprep.subr.mxu0 %v2415
        %5424 = vmatpush1.msra.mxu0 %v2414
        %5425 = vmatprep.subr.mxu0 %v2423
        %5426 = vmatpush1.msra.mxu0 %v2422
        %5427 = vmatprep.subr.mxu0 %v2431
        %5428 = vmatpush1.msra.mxu0 %v2430
        %5429 = vmatprep.subr.mxu0 %v2439
        %5430 = vmatpush1.msra.mxu0 %v2438
        %5431 = vmatprep.subr.mxu0 %v2447
        %5432 = vmatpush1.msra.mxu0 %v2446
        %5433 = vmatprep.subr.mxu0 %v2455
        %5434 = vmatpush1.msra.mxu0 %v2454
        %5435 = vmatprep.subr.mxu0 %v2463
        %5436 = vmatpush1.msra.mxu0 %v2462
        %5437 = vmatprep.subr.mxu0 %v2471
        %5438 = vmatpush1.msra.mxu0 %v2470
        %5439 = vmatprep.subr.mxu0 %v2479
        %5440 = vmatpush1.msra.mxu0 %v2478
        %5441 = vmatprep.subr.mxu0 %v2487
        %5442 = vmatpush1.msra.mxu0 %v2486
        %5443 = vmatprep.subr.mxu0 %v2495
        %5444 = vmatpush1.msra.mxu0 %v2494
        %5445 = vmatprep.subr.mxu0 %v2503
        %5446 = vmatpush1.msra.mxu0 %v2502
        %5447 = vmatprep.subr.mxu0 %v2511
        %5448 = vmatpush1.msra.mxu0 %v2510
        %5449 = vmatprep.subr.mxu0 %v2519
        %5450 = vmatpush1.msra.mxu0 %v2518
        %5451 = vmatprep.subr.mxu0 %v2527
        %5452 = vmatpush1.msra.mxu0 %v2526
        %5453 = vmatprep.subr.mxu0 %v2535
        %5454 = vmatpush1.msra.mxu0 %v2534
        %5455 = vmatprep.subr.mxu0 %v2543
        %5456 = vmatpush1.msra.mxu0 %v2542
        %5457 = vmatprep.subr.mxu0 %v2551
        %5458 = vmatpush1.msra.mxu0 %v2550
        %5459 = vmatprep.subr.mxu0 %v2559
        %5460 = vmatpush1.msra.mxu0 %v2558
        %5461 = vmatprep.subr.mxu0 %v2567
        %5462 = vmatpush1.msra.mxu0 %v2566
        %5463 = vmatprep.subr.mxu0 %v2575
        %5464 = vmatpush1.msra.mxu0 %v2574
        %5465 = vmatprep.subr.mxu0 %v2583
        %5466 = vmatpush1.msra.mxu0 %v2582
        %5467 = vmatprep.subr.mxu0 %v2591
        %5468 = vmatpush1.msra.mxu0 %v2590
        %5469 = vmatprep.subr.mxu0 %v2599
        %5470 = vmatpush1.msra.mxu0 %v2598
        %5471 = vmatprep.subr.mxu0 %v2607
        %5472 = vmatpush1.msra.mxu0 %v2606
        %5473 = vmatprep.subr.mxu0 %v2615
        %5474 = vmatpush1.msra.mxu0 %v2614
        %5475 = vmatprep.subr.mxu0 %v2623
        %5476 = vmatpush1.msra.mxu0 %v2622
        %5477 = vmatprep.subr.mxu0 %v2631
        %5478 = vmatpush1.msra.mxu0 %v2630
        %5479 = vmatprep.subr.mxu0 %v2639
        %5480 = vmatpush1.msra.mxu0 %v2638
        %5481 = vmatprep.subr.mxu0 %v2647
        %5482 = vmatpush1.msra.mxu0 %v2646
        %5483 = vmatprep.subr.mxu0 %v2655
        %5484 = vmatpush1.msra.mxu0 %v2654
        %5485 = vmatprep.mubr.f32.mxu0 %v3259
        %5486 = vmatmul.mubr.f32.gmra.mrb[0].mxu0 %v3251
        %v5487 = vpop.f32.mrb[0].mxu0
        %v5488 = vadd.f32 %v5417, %v5487
        %v5489 = vpop.f32.mrb[0].mxu0
        %v5490 = vadd.f32 %v5419, %v5489
        %5491 = vdwg.mxu0
        %5492 = vmatprep.subr.mxu0 %v2663
        %5493 = vmatpush1.msra.mxu0 %v2662
        %5494 = vmatprep.subr.mxu0 %v2671
        %5495 = vmatpush1.msra.mxu0 %v2670
        %5496 = vmatprep.subr.mxu0 %v2679
        %5497 = vmatpush1.msra.mxu0 %v2678
        %5498 = vmatprep.subr.mxu0 %v2687
        %5499 = vmatpush1.msra.mxu0 %v2686
        %5500 = vmatprep.subr.mxu0 %v2695
        %5501 = vmatpush1.msra.mxu0 %v2694
        %5502 = vmatprep.subr.mxu0 %v2703
        %5503 = vmatpush1.msra.mxu0 %v2702
        %5504 = vmatprep.subr.mxu0 %v2711
        %5505 = vmatpush1.msra.mxu0 %v2710
        %5506 = vmatprep.subr.mxu0 %v2719
        %5507 = vmatpush1.msra.mxu0 %v2718
        %5508 = vmatprep.subr.mxu0 %v2727
        %5509 = vmatpush1.msra.mxu0 %v2726
        %5510 = vmatprep.subr.mxu0 %v2735
        %5511 = vmatpush1.msra.mxu0 %v2734
        %5512 = vmatprep.subr.mxu0 %v2743
        %5513 = vmatpush1.msra.mxu0 %v2742
        %5514 = vmatprep.subr.mxu0 %v2751
        %5515 = vmatpush1.msra.mxu0 %v2750
        %5516 = vmatprep.subr.mxu0 %v2759
        %5517 = vmatpush1.msra.mxu0 %v2758
        %5518 = vmatprep.subr.mxu0 %v2767
        %5519 = vmatpush1.msra.mxu0 %v2766
        %5520 = vmatprep.subr.mxu0 %v2775
        %5521 = vmatpush1.msra.mxu0 %v2774
        %5522 = vmatprep.subr.mxu0 %v2783
        %5523 = vmatpush1.msra.mxu0 %v2782
        %5524 = vmatprep.subr.mxu0 %v2791
        %5525 = vmatpush1.msra.mxu0 %v2790
        %5526 = vmatprep.subr.mxu0 %v2799
        %5527 = vmatpush1.msra.mxu0 %v2798
        %5528 = vmatprep.subr.mxu0 %v2807
        %5529 = vmatpush1.msra.mxu0 %v2806
        %5530 = vmatprep.subr.mxu0 %v2815
        %5531 = vmatpush1.msra.mxu0 %v2814
        %5532 = vmatprep.subr.mxu0 %v2823
        %5533 = vmatpush1.msra.mxu0 %v2822
        %5534 = vmatprep.subr.mxu0 %v2831
        %5535 = vmatpush1.msra.mxu0 %v2830
        %5536 = vmatprep.subr.mxu0 %v2839
        %5537 = vmatpush1.msra.mxu0 %v2838
        %5538 = vmatprep.subr.mxu0 %v2847
        %5539 = vmatpush1.msra.mxu0 %v2846
        %5540 = vmatprep.subr.mxu0 %v2855
        %5541 = vmatpush1.msra.mxu0 %v2854
        %5542 = vmatprep.subr.mxu0 %v2863
        %5543 = vmatpush1.msra.mxu0 %v2862
        %5544 = vmatprep.subr.mxu0 %v2871
        %5545 = vmatpush1.msra.mxu0 %v2870
        %5546 = vmatprep.subr.mxu0 %v2879
        %5547 = vmatpush1.msra.mxu0 %v2878
        %5548 = vmatprep.subr.mxu0 %v2887
        %5549 = vmatpush1.msra.mxu0 %v2886
        %5550 = vmatprep.subr.mxu0 %v2895
        %5551 = vmatpush1.msra.mxu0 %v2894
        %5552 = vmatprep.subr.mxu0 %v2903
        %5553 = vmatpush1.msra.mxu0 %v2902
        %5554 = vmatprep.subr.mxu0 %v2911
        %5555 = vmatpush1.msra.mxu0 %v2910
        %5556 = vmatprep.mubr.f32.mxu0 %v3260
        %5557 = vmatmul.mubr.f32.gmra.mrb[0].mxu0 %v3258
        %v5558 = vpop.f32.mrb[0].mxu0
        %v5559 = vadd.f32 %v5488, %v5558
        %v5560 = vpop.f32.mrb[0].mxu0
        %v5561 = vadd.f32 %v5490, %v5560
        %5562 = vdwg.mxu0
        %5563 = vmatprep.subr.mxu0 %v2919
        %5564 = vmatpush1.msra.mxu0 %v2918
        %5565 = vmatprep.subr.mxu0 %v2927
        %5566 = vmatpush1.msra.mxu0 %v2926
        %5567 = vmatprep.subr.mxu0 %v2935
        %5568 = vmatpush1.msra.mxu0 %v2934
        %5569 = vmatprep.subr.mxu0 %v2943
        %5570 = vmatpush1.msra.mxu0 %v2942
        %5571 = vmatprep.subr.mxu0 %v2951
        %5572 = vmatpush1.msra.mxu0 %v2950
        %5573 = vmatprep.subr.mxu0 %v2959
        %5574 = vmatpush1.msra.mxu0 %v2958
        %5575 = vmatprep.subr.mxu0 %v2967
        %5576 = vmatpush1.msra.mxu0 %v2966
        %5577 = vmatprep.subr.mxu0 %v2975
        %5578 = vmatpush1.msra.mxu0 %v2974
        %5579 = vmatprep.subr.mxu0 %v2983
        %5580 = vmatpush1.msra.mxu0 %v2982
        %5581 = vmatprep.subr.mxu0 %v2991
        %5582 = vmatpush1.msra.mxu0 %v2990
        %5583 = vmatprep.subr.mxu0 %v2999
        %5584 = vmatpush1.msra.mxu0 %v2998
        %5585 = vmatprep.subr.mxu0 %v3007
        %5586 = vmatpush1.msra.mxu0 %v3006
        %5587 = vmatprep.subr.mxu0 %v3015
        %5588 = vmatpush1.msra.mxu0 %v3014
        %5589 = vmatprep.subr.mxu0 %v3023
        %5590 = vmatpush1.msra.mxu0 %v3022
        %5591 = vmatprep.subr.mxu0 %v3031
        %5592 = vmatpush1.msra.mxu0 %v3030
        %5593 = vmatprep.subr.mxu0 %v3039
        %5594 = vmatpush1.msra.mxu0 %v3038
        %5595 = vmatprep.subr.mxu0 %v3047
        %5596 = vmatpush1.msra.mxu0 %v3046
        %5597 = vmatprep.subr.mxu0 %v3055
        %5598 = vmatpush1.msra.mxu0 %v3054
        %5599 = vmatprep.subr.mxu0 %v3063
        %5600 = vmatpush1.msra.mxu0 %v3062
        %5601 = vmatprep.subr.mxu0 %v3071
        %5602 = vmatpush1.msra.mxu0 %v3070
        %5603 = vmatprep.subr.mxu0 %v3079
        %5604 = vmatpush1.msra.mxu0 %v3078
        %5605 = vmatprep.subr.mxu0 %v3087
        %5606 = vmatpush1.msra.mxu0 %v3086
        %5607 = vmatprep.subr.mxu0 %v3095
        %5608 = vmatpush1.msra.mxu0 %v3094
        %5609 = vmatprep.subr.mxu0 %v3103
        %5610 = vmatpush1.msra.mxu0 %v3102
        %5611 = vmatprep.subr.mxu0 %v3111
        %5612 = vmatpush1.msra.mxu0 %v3110
        %5613 = vmatprep.subr.mxu0 %v3119
        %5614 = vmatpush1.msra.mxu0 %v3118
        %5615 = vmatprep.subr.mxu0 %v3127
        %5616 = vmatpush1.msra.mxu0 %v3126
        %5617 = vmatprep.subr.mxu0 %v3135
        %5618 = vmatpush1.msra.mxu0 %v3134
        %5619 = vmatprep.subr.mxu0 %v3143
        %5620 = vmatpush1.msra.mxu0 %v3142
        %5621 = vmatprep.subr.mxu0 %v3151
        %5622 = vmatpush1.msra.mxu0 %v3150
        %5623 = vmatprep.subr.mxu0 %v3159
        %5624 = vmatpush1.msra.mxu0 %v3158
        %5625 = vmatprep.subr.mxu0 %v3167
        %5626 = vmatpush1.msra.mxu0 %v3166
        %5627 = vmatprep.mubr.f32.mxu0 %v3268
        %5628 = vmatmul.mubr.f32.gmra.mrb[0].mxu0 %v3267
        %v5629 = vpop.f32.mrb[0].mxu0
        %v5630 = vadd.f32 %v5559, %v5629
        %v5631 = vpop.f32.mrb[0].mxu0
        %v5632 = vadd.f32 %v5561, %v5631
        %5633 = vdwg.mxu0
        %5634 = vmatprep.subr.mxu0 %v361
        %5635 = vmatpush1.msra.mxu0 %v360
        %5636 = vmatprep.subr.mxu0 %v369
        %5637 = vmatpush1.msra.mxu0 %v368
        %5638 = vmatprep.subr.mxu0 %v377
        %5639 = vmatpush1.msra.mxu0 %v376
        %5640 = vmatprep.subr.mxu0 %v385
        %5641 = vmatpush1.msra.mxu0 %v384
        %5642 = vmatprep.subr.mxu0 %v393
        %5643 = vmatpush1.msra.mxu0 %v392
        %5644 = vmatprep.subr.mxu0 %v401
        %5645 = vmatpush1.msra.mxu0 %v400
        %5646 = vmatprep.subr.mxu0 %v409
        %5647 = vmatpush1.msra.mxu0 %v408
        %5648 = vmatprep.subr.mxu0 %v417
        %5649 = vmatpush1.msra.mxu0 %v416
        %5650 = vmatprep.subr.mxu0 %v425
        %5651 = vmatpush1.msra.mxu0 %v424
        %5652 = vmatprep.subr.mxu0 %v433
        %5653 = vmatpush1.msra.mxu0 %v432
        %5654 = vmatprep.subr.mxu0 %v441
        %5655 = vmatpush1.msra.mxu0 %v440
        %5656 = vmatprep.subr.mxu0 %v449
        %5657 = vmatpush1.msra.mxu0 %v448
        %5658 = vmatprep.subr.mxu0 %v457
        %5659 = vmatpush1.msra.mxu0 %v456
        %5660 = vmatprep.subr.mxu0 %v465
        %5661 = vmatpush1.msra.mxu0 %v464
        %5662 = vmatprep.subr.mxu0 %v473
        %5663 = vmatpush1.msra.mxu0 %v472
        %5664 = vmatprep.subr.mxu0 %v481
        %5665 = vmatpush1.msra.mxu0 %v480
        %5666 = vmatprep.subr.mxu0 %v489
        %5667 = vmatpush1.msra.mxu0 %v488
        %5668 = vmatprep.subr.mxu0 %v497
        %5669 = vmatpush1.msra.mxu0 %v496
        %5670 = vmatprep.subr.mxu0 %v505
        %5671 = vmatpush1.msra.mxu0 %v504
        %5672 = vmatprep.subr.mxu0 %v513
        %5673 = vmatpush1.msra.mxu0 %v512
        %5674 = vmatprep.subr.mxu0 %v521
        %5675 = vmatpush1.msra.mxu0 %v520
        %5676 = vmatprep.subr.mxu0 %v529
        %5677 = vmatpush1.msra.mxu0 %v528
        %5678 = vmatprep.subr.mxu0 %v537
        %5679 = vmatpush1.msra.mxu0 %v536
        %5680 = vmatprep.subr.mxu0 %v545
        %5681 = vmatpush1.msra.mxu0 %v544
        %5682 = vmatprep.subr.mxu0 %v553
        %5683 = vmatpush1.msra.mxu0 %v552
        %5684 = vmatprep.subr.mxu0 %v561
        %5685 = vmatpush1.msra.mxu0 %v560
        %5686 = vmatprep.subr.mxu0 %v569
        %5687 = vmatpush1.msra.mxu0 %v568
        %5688 = vmatprep.subr.mxu0 %v577
        %5689 = vmatpush1.msra.mxu0 %v576
        %5690 = vmatprep.subr.mxu0 %v585
        %5691 = vmatpush1.msra.mxu0 %v584
        %5692 = vmatprep.subr.mxu0 %v593
        %5693 = vmatpush1.msra.mxu0 %v592
        %5694 = vmatprep.subr.mxu0 %v601
        %5695 = vmatpush1.msra.mxu0 %v600
        %5696 = vmatprep.subr.mxu0 %v609
        %5697 = vmatpush1.msra.mxu0 %v608
        %5698 = vmatprep.mubr.f32.mxu0 %v3191
        %5699 = vmatmul.mubr.f32.gmra.mrb[0].mxu0 %v3183
        %v5700 = vpop.f32.mrb[0].mxu0
        %v5701 = vadd.f32 0.0, %v5700
        %v5702 = vpop.f32.mrb[0].mxu0
        %v5703 = vadd.f32 0.0, %v5702
        %5704 = vdwg.mxu0
        %5705 = vmatprep.subr.mxu0 %v617
        %5706 = vmatpush1.msra.mxu0 %v616
        %5707 = vmatprep.subr.mxu0 %v625
        %5708 = vmatpush1.msra.mxu0 %v624
        %5709 = vmatprep.subr.mxu0 %v633
        %5710 = vmatpush1.msra.mxu0 %v632
        %5711 = vmatprep.subr.mxu0 %v641
        %5712 = vmatpush1.msra.mxu0 %v640
        %5713 = vmatprep.subr.mxu0 %v649
        %5714 = vmatpush1.msra.mxu0 %v648
        %5715 = vmatprep.subr.mxu0 %v657
        %5716 = vmatpush1.msra.mxu0 %v656
        %5717 = vmatprep.subr.mxu0 %v665
        %5718 = vmatpush1.msra.mxu0 %v664
        %5719 = vmatprep.subr.mxu0 %v673
        %5720 = vmatpush1.msra.mxu0 %v672
        %5721 = vmatprep.subr.mxu0 %v681
        %5722 = vmatpush1.msra.mxu0 %v680
        %5723 = vmatprep.subr.mxu0 %v689
        %5724 = vmatpush1.msra.mxu0 %v688
        %5725 = vmatprep.subr.mxu0 %v697
        %5726 = vmatpush1.msra.mxu0 %v696
        %5727 = vmatprep.subr.mxu0 %v705
        %5728 = vmatpush1.msra.mxu0 %v704
        %5729 = vmatprep.subr.mxu0 %v713
        %5730 = vmatpush1.msra.mxu0 %v712
        %5731 = vmatprep.subr.mxu0 %v721
        %5732 = vmatpush1.msra.mxu0 %v720
        %5733 = vmatprep.subr.mxu0 %v729
        %5734 = vmatpush1.msra.mxu0 %v728
        %5735 = vmatprep.subr.mxu0 %v737
        %5736 = vmatpush1.msra.mxu0 %v736
        %5737 = vmatprep.subr.mxu0 %v745
        %5738 = vmatpush1.msra.mxu0 %v744
        %5739 = vmatprep.subr.mxu0 %v753
        %5740 = vmatpush1.msra.mxu0 %v752
        %5741 = vmatprep.subr.mxu0 %v761
        %5742 = vmatpush1.msra.mxu0 %v760
        %5743 = vmatprep.subr.mxu0 %v769
        %5744 = vmatpush1.msra.mxu0 %v768
        %5745 = vmatprep.subr.mxu0 %v777
        %5746 = vmatpush1.msra.mxu0 %v776
        %5747 = vmatprep.subr.mxu0 %v785
        %5748 = vmatpush1.msra.mxu0 %v784
        %5749 = vmatprep.subr.mxu0 %v793
        %5750 = vmatpush1.msra.mxu0 %v792
        %5751 = vmatprep.subr.mxu0 %v801
        %5752 = vmatpush1.msra.mxu0 %v800
        %5753 = vmatprep.subr.mxu0 %v809
        %5754 = vmatpush1.msra.mxu0 %v808
        %5755 = vmatprep.subr.mxu0 %v817
        %5756 = vmatpush1.msra.mxu0 %v816
        %5757 = vmatprep.subr.mxu0 %v825
        %5758 = vmatpush1.msra.mxu0 %v824
        %5759 = vmatprep.subr.mxu0 %v833
        %5760 = vmatpush1.msra.mxu0 %v832
        %5761 = vmatprep.subr.mxu0 %v841
        %5762 = vmatpush1.msra.mxu0 %v840
        %5763 = vmatprep.subr.mxu0 %v849
        %5764 = vmatpush1.msra.mxu0 %v848
        %5765 = vmatprep.subr.mxu0 %v857
        %5766 = vmatpush1.msra.mxu0 %v856
        %5767 = vmatprep.subr.mxu0 %v865
        %5768 = vmatpush1.msra.mxu0 %v864
        %5769 = vmatprep.mubr.f32.mxu0 %v3192
        %5770 = vmatmul.mubr.f32.gmra.mrb[0].mxu0 %v3190
        %v5771 = vpop.f32.mrb[0].mxu0
        %v5772 = vadd.f32 %v5701, %v5771
        %v5773 = vpop.f32.mrb[0].mxu0
        %v5774 = vadd.f32 %v5703, %v5773
        %5775 = vdwg.mxu0
        %5776 = vmatprep.subr.mxu0 %v873
        %5777 = vmatpush1.msra.mxu0 %v872
        %5778 = vmatprep.subr.mxu0 %v881
        %5779 = vmatpush1.msra.mxu0 %v880
        %5780 = vmatprep.subr.mxu0 %v889
        %5781 = vmatpush1.msra.mxu0 %v888
        %5782 = vmatprep.subr.mxu0 %v897
        %5783 = vmatpush1.msra.mxu0 %v896
        %5784 = vmatprep.subr.mxu0 %v905
        %5785 = vmatpush1.msra.mxu0 %v904
        %5786 = vmatprep.subr.mxu0 %v913
        %5787 = vmatpush1.msra.mxu0 %v912
        %5788 = vmatprep.subr.mxu0 %v921
        %5789 = vmatpush1.msra.mxu0 %v920
        %5790 = vmatprep.subr.mxu0 %v929
        %5791 = vmatpush1.msra.mxu0 %v928
        %5792 = vmatprep.subr.mxu0 %v937
        %5793 = vmatpush1.msra.mxu0 %v936
        %5794 = vmatprep.subr.mxu0 %v945
        %5795 = vmatpush1.msra.mxu0 %v944
        %5796 = vmatprep.subr.mxu0 %v953
        %5797 = vmatpush1.msra.mxu0 %v952
        %5798 = vmatprep.subr.mxu0 %v961
        %5799 = vmatpush1.msra.mxu0 %v960
        %5800 = vmatprep.subr.mxu0 %v969
        %5801 = vmatpush1.msra.mxu0 %v968
        %5802 = vmatprep.subr.mxu0 %v977
        %5803 = vmatpush1.msra.mxu0 %v976
        %5804 = vmatprep.subr.mxu0 %v985
        %5805 = vmatpush1.msra.mxu0 %v984
        %5806 = vmatprep.subr.mxu0 %v993
        %5807 = vmatpush1.msra.mxu0 %v992
        %5808 = vmatprep.subr.mxu0 %v1001
        %5809 = vmatpush1.msra.mxu0 %v1000
        %5810 = vmatprep.subr.mxu0 %v1009
        %5811 = vmatpush1.msra.mxu0 %v1008
        %5812 = vmatprep.subr.mxu0 %v1017
        %5813 = vmatpush1.msra.mxu0 %v1016
        %5814 = vmatprep.subr.mxu0 %v1025
        %5815 = vmatpush1.msra.mxu0 %v1024
        %5816 = vmatprep.subr.mxu0 %v1033
        %5817 = vmatpush1.msra.mxu0 %v1032
        %5818 = vmatprep.subr.mxu0 %v1041
        %5819 = vmatpush1.msra.mxu0 %v1040
        %5820 = vmatprep.subr.mxu0 %v1049
        %5821 = vmatpush1.msra.mxu0 %v1048
        %5822 = vmatprep.subr.mxu0 %v1057
        %5823 = vmatpush1.msra.mxu0 %v1056
        %5824 = vmatprep.subr.mxu0 %v1065
        %5825 = vmatpush1.msra.mxu0 %v1064
        %5826 = vmatprep.subr.mxu0 %v1073
        %5827 = vmatpush1.msra.mxu0 %v1072
        %5828 = vmatprep.subr.mxu0 %v1081
        %5829 = vmatpush1.msra.mxu0 %v1080
        %5830 = vmatprep.subr.mxu0 %v1089
        %5831 = vmatpush1.msra.mxu0 %v1088
        %5832 = vmatprep.subr.mxu0 %v1097
        %5833 = vmatpush1.msra.mxu0 %v1096
        %5834 = vmatprep.subr.mxu0 %v1105
        %5835 = vmatpush1.msra.mxu0 %v1104
        %5836 = vmatprep.subr.mxu0 %v1113
        %5837 = vmatpush1.msra.mxu0 %v1112
        %5838 = vmatprep.subr.mxu0 %v1121
        %5839 = vmatpush1.msra.mxu0 %v1120
        %5840 = vmatprep.mubr.f32.mxu0 %v3208
        %5841 = vmatmul.mubr.f32.gmra.mrb[0].mxu0 %v3200
        %v5842 = vpop.f32.mrb[0].mxu0
        %v5843 = vadd.f32 %v5772, %v5842
        %v5844 = vpop.f32.mrb[0].mxu0
        %v5845 = vadd.f32 %v5774, %v5844
        %5846 = vdwg.mxu0
        %5847 = vmatprep.subr.mxu0 %v1129
        %5848 = vmatpush1.msra.mxu0 %v1128
        %5849 = vmatprep.subr.mxu0 %v1137
        %5850 = vmatpush1.msra.mxu0 %v1136
        %5851 = vmatprep.subr.mxu0 %v1145
        %5852 = vmatpush1.msra.mxu0 %v1144
        %5853 = vmatprep.subr.mxu0 %v1153
        %5854 = vmatpush1.msra.mxu0 %v1152
        %5855 = vmatprep.subr.mxu0 %v1161
        %5856 = vmatpush1.msra.mxu0 %v1160
        %5857 = vmatprep.subr.mxu0 %v1169
        %5858 = vmatpush1.msra.mxu0 %v1168
        %5859 = vmatprep.subr.mxu0 %v1177
        %5860 = vmatpush1.msra.mxu0 %v1176
        %5861 = vmatprep.subr.mxu0 %v1185
        %5862 = vmatpush1.msra.mxu0 %v1184
        %5863 = vmatprep.subr.mxu0 %v1193
        %5864 = vmatpush1.msra.mxu0 %v1192
        %5865 = vmatprep.subr.mxu0 %v1201
        %5866 = vmatpush1.msra.mxu0 %v1200
        %5867 = vmatprep.subr.mxu0 %v1209
        %5868 = vmatpush1.msra.mxu0 %v1208
        %5869 = vmatprep.subr.mxu0 %v1217
        %5870 = vmatpush1.msra.mxu0 %v1216
        %5871 = vmatprep.subr.mxu0 %v1225
        %5872 = vmatpush1.msra.mxu0 %v1224
        %5873 = vmatprep.subr.mxu0 %v1233
        %5874 = vmatpush1.msra.mxu0 %v1232
        %5875 = vmatprep.subr.mxu0 %v1241
        %5876 = vmatpush1.msra.mxu0 %v1240
        %5877 = vmatprep.subr.mxu0 %v1249
        %5878 = vmatpush1.msra.mxu0 %v1248
        %5879 = vmatprep.subr.mxu0 %v1257
        %5880 = vmatpush1.msra.mxu0 %v1256
        %5881 = vmatprep.subr.mxu0 %v1265
        %5882 = vmatpush1.msra.mxu0 %v1264
        %5883 = vmatprep.subr.mxu0 %v1273
        %5884 = vmatpush1.msra.mxu0 %v1272
        %5885 = vmatprep.subr.mxu0 %v1281
        %5886 = vmatpush1.msra.mxu0 %v1280
        %5887 = vmatprep.subr.mxu0 %v1289
        %5888 = vmatpush1.msra.mxu0 %v1288
        %5889 = vmatprep.subr.mxu0 %v1297
        %5890 = vmatpush1.msra.mxu0 %v1296
        %5891 = vmatprep.subr.mxu0 %v1305
        %5892 = vmatpush1.msra.mxu0 %v1304
        %5893 = vmatprep.subr.mxu0 %v1313
        %5894 = vmatpush1.msra.mxu0 %v1312
        %5895 = vmatprep.subr.mxu0 %v1321
        %5896 = vmatpush1.msra.mxu0 %v1320
        %5897 = vmatprep.subr.mxu0 %v1329
        %5898 = vmatpush1.msra.mxu0 %v1328
        %5899 = vmatprep.subr.mxu0 %v1337
        %5900 = vmatpush1.msra.mxu0 %v1336
        %5901 = vmatprep.subr.mxu0 %v1345
        %5902 = vmatpush1.msra.mxu0 %v1344
        %5903 = vmatprep.subr.mxu0 %v1353
        %5904 = vmatpush1.msra.mxu0 %v1352
        %5905 = vmatprep.subr.mxu0 %v1361
        %5906 = vmatpush1.msra.mxu0 %v1360
        %5907 = vmatprep.subr.mxu0 %v1369
        %5908 = vmatpush1.msra.mxu0 %v1368
        %5909 = vmatprep.subr.mxu0 %v1377
        %5910 = vmatpush1.msra.mxu0 %v1376
        %5911 = vmatprep.mubr.f32.mxu0 %v3209
        %5912 = vmatmul.mubr.f32.gmra.mrb[0].mxu0 %v3207
        %v5913 = vpop.f32.mrb[0].mxu0
        %v5914 = vadd.f32 %v5843, %v5913
        %v5915 = vpop.f32.mrb[0].mxu0
        %v5916 = vadd.f32 %v5845, %v5915
        %5917 = vdwg.mxu0
        %5918 = vmatprep.subr.mxu0 %v1385
        %5919 = vmatpush1.msra.mxu0 %v1384
        %5920 = vmatprep.subr.mxu0 %v1393
        %5921 = vmatpush1.msra.mxu0 %v1392
        %5922 = vmatprep.subr.mxu0 %v1401
        %5923 = vmatpush1.msra.mxu0 %v1400
        %5924 = vmatprep.subr.mxu0 %v1409
        %5925 = vmatpush1.msra.mxu0 %v1408
        %5926 = vmatprep.subr.mxu0 %v1417
        %5927 = vmatpush1.msra.mxu0 %v1416
        %5928 = vmatprep.subr.mxu0 %v1425
        %5929 = vmatpush1.msra.mxu0 %v1424
        %5930 = vmatprep.subr.mxu0 %v1433
        %5931 = vmatpush1.msra.mxu0 %v1432
        %5932 = vmatprep.subr.mxu0 %v1441
        %5933 = vmatpush1.msra.mxu0 %v1440
        %5934 = vmatprep.subr.mxu0 %v1449
        %5935 = vmatpush1.msra.mxu0 %v1448
        %5936 = vmatprep.subr.mxu0 %v1457
        %5937 = vmatpush1.msra.mxu0 %v1456
        %5938 = vmatprep.subr.mxu0 %v1465
        %5939 = vmatpush1.msra.mxu0 %v1464
        %5940 = vmatprep.subr.mxu0 %v1473
        %5941 = vmatpush1.msra.mxu0 %v1472
        %5942 = vmatprep.subr.mxu0 %v1481
        %5943 = vmatpush1.msra.mxu0 %v1480
        %5944 = vmatprep.subr.mxu0 %v1489
        %5945 = vmatpush1.msra.mxu0 %v1488
        %5946 = vmatprep.subr.mxu0 %v1497
        %5947 = vmatpush1.msra.mxu0 %v1496
        %5948 = vmatprep.subr.mxu0 %v1505
        %5949 = vmatpush1.msra.mxu0 %v1504
        %5950 = vmatprep.subr.mxu0 %v1513
        %5951 = vmatpush1.msra.mxu0 %v1512
        %5952 = vmatprep.subr.mxu0 %v1521
        %5953 = vmatpush1.msra.mxu0 %v1520
        %5954 = vmatprep.subr.mxu0 %v1529
        %5955 = vmatpush1.msra.mxu0 %v1528
        %5956 = vmatprep.subr.mxu0 %v1537
        %5957 = vmatpush1.msra.mxu0 %v1536
        %5958 = vmatprep.subr.mxu0 %v1545
        %5959 = vmatpush1.msra.mxu0 %v1544
        %5960 = vmatprep.subr.mxu0 %v1553
        %5961 = vmatpush1.msra.mxu0 %v1552
        %5962 = vmatprep.subr.mxu0 %v1561
        %5963 = vmatpush1.msra.mxu0 %v1560
        %5964 = vmatprep.subr.mxu0 %v1569
        %5965 = vmatpush1.msra.mxu0 %v1568
        %5966 = vmatprep.subr.mxu0 %v1577
        %5967 = vmatpush1.msra.mxu0 %v1576
        %5968 = vmatprep.subr.mxu0 %v1585
        %5969 = vmatpush1.msra.mxu0 %v1584
        %5970 = vmatprep.subr.mxu0 %v1593
        %5971 = vmatpush1.msra.mxu0 %v1592
        %5972 = vmatprep.subr.mxu0 %v1601
        %5973 = vmatpush1.msra.mxu0 %v1600
        %5974 = vmatprep.subr.mxu0 %v1609
        %5975 = vmatpush1.msra.mxu0 %v1608
        %5976 = vmatprep.subr.mxu0 %v1617
        %5977 = vmatpush1.msra.mxu0 %v1616
        %5978 = vmatprep.subr.mxu0 %v1625
        %5979 = vmatpush1.msra.mxu0 %v1624
        %5980 = vmatprep.subr.mxu0 %v1633
        %5981 = vmatpush1.msra.mxu0 %v1632
        %5982 = vmatprep.mubr.f32.mxu0 %v3225
        %5983 = vmatmul.mubr.f32.gmra.mrb[0].mxu0 %v3217
        %v5984 = vpop.f32.mrb[0].mxu0
        %v5985 = vadd.f32 %v5914, %v5984
        %v5986 = vpop.f32.mrb[0].mxu0
        %v5987 = vadd.f32 %v5916, %v5986
        %5988 = vdwg.mxu0
        %5989 = vmatprep.subr.mxu0 %v1641
        %5990 = vmatpush1.msra.mxu0 %v1640
        %5991 = vmatprep.subr.mxu0 %v1649
        %5992 = vmatpush1.msra.mxu0 %v1648
        %5993 = vmatprep.subr.mxu0 %v1657
        %5994 = vmatpush1.msra.mxu0 %v1656
        %5995 = vmatprep.subr.mxu0 %v1665
        %5996 = vmatpush1.msra.mxu0 %v1664
        %5997 = vmatprep.subr.mxu0 %v1673
        %5998 = vmatpush1.msra.mxu0 %v1672
        %5999 = vmatprep.subr.mxu0 %v1681
        %6000 = vmatpush1.msra.mxu0 %v1680
        %6001 = vmatprep.subr.mxu0 %v1689
        %6002 = vmatpush1.msra.mxu0 %v1688
        %6003 = vmatprep.subr.mxu0 %v1697
        %6004 = vmatpush1.msra.mxu0 %v1696
        %6005 = vmatprep.subr.mxu0 %v1705
        %6006 = vmatpush1.msra.mxu0 %v1704
        %6007 = vmatprep.subr.mxu0 %v1713
        %6008 = vmatpush1.msra.mxu0 %v1712
        %6009 = vmatprep.subr.mxu0 %v1721
        %6010 = vmatpush1.msra.mxu0 %v1720
        %6011 = vmatprep.subr.mxu0 %v1729
        %6012 = vmatpush1.msra.mxu0 %v1728
        %6013 = vmatprep.subr.mxu0 %v1737
        %6014 = vmatpush1.msra.mxu0 %v1736
        %6015 = vmatprep.subr.mxu0 %v1745
        %6016 = vmatpush1.msra.mxu0 %v1744
        %6017 = vmatprep.subr.mxu0 %v1753
        %6018 = vmatpush1.msra.mxu0 %v1752
        %6019 = vmatprep.subr.mxu0 %v1761
        %6020 = vmatpush1.msra.mxu0 %v1760
        %6021 = vmatprep.subr.mxu0 %v1769
        %6022 = vmatpush1.msra.mxu0 %v1768
        %6023 = vmatprep.subr.mxu0 %v1777
        %6024 = vmatpush1.msra.mxu0 %v1776
        %6025 = vmatprep.subr.mxu0 %v1785
        %6026 = vmatpush1.msra.mxu0 %v1784
        %6027 = vmatprep.subr.mxu0 %v1793
        %6028 = vmatpush1.msra.mxu0 %v1792
        %6029 = vmatprep.subr.mxu0 %v1801
        %6030 = vmatpush1.msra.mxu0 %v1800
        %6031 = vmatprep.subr.mxu0 %v1809
        %6032 = vmatpush1.msra.mxu0 %v1808
        %6033 = vmatprep.subr.mxu0 %v1817
        %6034 = vmatpush1.msra.mxu0 %v1816
        %6035 = vmatprep.subr.mxu0 %v1825
        %6036 = vmatpush1.msra.mxu0 %v1824
        %6037 = vmatprep.subr.mxu0 %v1833
        %6038 = vmatpush1.msra.mxu0 %v1832
        %6039 = vmatprep.subr.mxu0 %v1841
        %6040 = vmatpush1.msra.mxu0 %v1840
        %6041 = vmatprep.subr.mxu0 %v1849
        %6042 = vmatpush1.msra.mxu0 %v1848
        %6043 = vmatprep.subr.mxu0 %v1857
        %6044 = vmatpush1.msra.mxu0 %v1856
        %6045 = vmatprep.subr.mxu0 %v1865
        %6046 = vmatpush1.msra.mxu0 %v1864
        %6047 = vmatprep.subr.mxu0 %v1873
        %6048 = vmatpush1.msra.mxu0 %v1872
        %6049 = vmatprep.subr.mxu0 %v1881
        %6050 = vmatpush1.msra.mxu0 %v1880
        %6051 = vmatprep.subr.mxu0 %v1889
        %6052 = vmatpush1.msra.mxu0 %v1888
        %6053 = vmatprep.mubr.f32.mxu0 %v3226
        %6054 = vmatmul.mubr.f32.gmra.mrb[0].mxu0 %v3224
        %v6055 = vpop.f32.mrb[0].mxu0
        %v6056 = vadd.f32 %v5985, %v6055
        %v6057 = vpop.f32.mrb[0].mxu0
        %v6058 = vadd.f32 %v5987, %v6057
        %6059 = vdwg.mxu0
        %6060 = vmatprep.subr.mxu0 %v1897
        %6061 = vmatpush1.msra.mxu0 %v1896
        %6062 = vmatprep.subr.mxu0 %v1905
        %6063 = vmatpush1.msra.mxu0 %v1904
        %6064 = vmatprep.subr.mxu0 %v1913
        %6065 = vmatpush1.msra.mxu0 %v1912
        %6066 = vmatprep.subr.mxu0 %v1921
        %6067 = vmatpush1.msra.mxu0 %v1920
        %6068 = vmatprep.subr.mxu0 %v1929
        %6069 = vmatpush1.msra.mxu0 %v1928
        %6070 = vmatprep.subr.mxu0 %v1937
        %6071 = vmatpush1.msra.mxu0 %v1936
        %6072 = vmatprep.subr.mxu0 %v1945
        %6073 = vmatpush1.msra.mxu0 %v1944
        %6074 = vmatprep.subr.mxu0 %v1953
        %6075 = vmatpush1.msra.mxu0 %v1952
        %6076 = vmatprep.subr.mxu0 %v1961
        %6077 = vmatpush1.msra.mxu0 %v1960
        %6078 = vmatprep.subr.mxu0 %v1969
        %6079 = vmatpush1.msra.mxu0 %v1968
        %6080 = vmatprep.subr.mxu0 %v1977
        %6081 = vmatpush1.msra.mxu0 %v1976
        %6082 = vmatprep.subr.mxu0 %v1985
        %6083 = vmatpush1.msra.mxu0 %v1984
        %6084 = vmatprep.subr.mxu0 %v1993
        %6085 = vmatpush1.msra.mxu0 %v1992
        %6086 = vmatprep.subr.mxu0 %v2001
        %6087 = vmatpush1.msra.mxu0 %v2000
        %6088 = vmatprep.subr.mxu0 %v2009
        %6089 = vmatpush1.msra.mxu0 %v2008
        %6090 = vmatprep.subr.mxu0 %v2017
        %6091 = vmatpush1.msra.mxu0 %v2016
        %6092 = vmatprep.subr.mxu0 %v2025
        %6093 = vmatpush1.msra.mxu0 %v2024
        %6094 = vmatprep.subr.mxu0 %v2033
        %6095 = vmatpush1.msra.mxu0 %v2032
        %6096 = vmatprep.subr.mxu0 %v2041
        %6097 = vmatpush1.msra.mxu0 %v2040
        %6098 = vmatprep.subr.mxu0 %v2049
        %6099 = vmatpush1.msra.mxu0 %v2048
        %6100 = vmatprep.subr.mxu0 %v2057
        %6101 = vmatpush1.msra.mxu0 %v2056
        %6102 = vmatprep.subr.mxu0 %v2065
        %6103 = vmatpush1.msra.mxu0 %v2064
        %6104 = vmatprep.subr.mxu0 %v2073
        %6105 = vmatpush1.msra.mxu0 %v2072
        %6106 = vmatprep.subr.mxu0 %v2081
        %6107 = vmatpush1.msra.mxu0 %v2080
        %6108 = vmatprep.subr.mxu0 %v2089
        %6109 = vmatpush1.msra.mxu0 %v2088
        %6110 = vmatprep.subr.mxu0 %v2097
        %6111 = vmatpush1.msra.mxu0 %v2096
        %6112 = vmatprep.subr.mxu0 %v2105
        %6113 = vmatpush1.msra.mxu0 %v2104
        %6114 = vmatprep.subr.mxu0 %v2113
        %6115 = vmatpush1.msra.mxu0 %v2112
        %6116 = vmatprep.subr.mxu0 %v2121
        %6117 = vmatpush1.msra.mxu0 %v2120
        %6118 = vmatprep.subr.mxu0 %v2129
        %6119 = vmatpush1.msra.mxu0 %v2128
        %6120 = vmatprep.subr.mxu0 %v2137
        %6121 = vmatpush1.msra.mxu0 %v2136
        %6122 = vmatprep.subr.mxu0 %v2145
        %6123 = vmatpush1.msra.mxu0 %v2144
        %6124 = vmatprep.mubr.f32.mxu0 %v3242
        %6125 = vmatmul.mubr.f32.gmra.mrb[0].mxu0 %v3234
        %v6126 = vpop.f32.mrb[0].mxu0
        %v6127 = vadd.f32 %v6056, %v6126
        %v6128 = vpop.f32.mrb[0].mxu0
        %v6129 = vadd.f32 %v6058, %v6128
        %6130 = vdwg.mxu0
        %6131 = vmatprep.subr.mxu0 %v2153
        %6132 = vmatpush1.msra.mxu0 %v2152
        %6133 = vmatprep.subr.mxu0 %v2161
        %6134 = vmatpush1.msra.mxu0 %v2160
        %6135 = vmatprep.subr.mxu0 %v2169
        %6136 = vmatpush1.msra.mxu0 %v2168
        %6137 = vmatprep.subr.mxu0 %v2177
        %6138 = vmatpush1.msra.mxu0 %v2176
        %6139 = vmatprep.subr.mxu0 %v2185
        %6140 = vmatpush1.msra.mxu0 %v2184
        %6141 = vmatprep.subr.mxu0 %v2193
        %6142 = vmatpush1.msra.mxu0 %v2192
        %6143 = vmatprep.subr.mxu0 %v2201
        %6144 = vmatpush1.msra.mxu0 %v2200
        %6145 = vmatprep.subr.mxu0 %v2209
        %6146 = vmatpush1.msra.mxu0 %v2208
        %6147 = vmatprep.subr.mxu0 %v2217
        %6148 = vmatpush1.msra.mxu0 %v2216
        %6149 = vmatprep.subr.mxu0 %v2225
        %6150 = vmatpush1.msra.mxu0 %v2224
        %6151 = vmatprep.subr.mxu0 %v2233
        %6152 = vmatpush1.msra.mxu0 %v2232
        %6153 = vmatprep.subr.mxu0 %v2241
        %6154 = vmatpush1.msra.mxu0 %v2240
        %6155 = vmatprep.subr.mxu0 %v2249
        %6156 = vmatpush1.msra.mxu0 %v2248
        %6157 = vmatprep.subr.mxu0 %v2257
        %6158 = vmatpush1.msra.mxu0 %v2256
        %6159 = vmatprep.subr.mxu0 %v2265
        %6160 = vmatpush1.msra.mxu0 %v2264
        %6161 = vmatprep.subr.mxu0 %v2273
        %6162 = vmatpush1.msra.mxu0 %v2272
        %6163 = vmatprep.subr.mxu0 %v2281
        %6164 = vmatpush1.msra.mxu0 %v2280
        %6165 = vmatprep.subr.mxu0 %v2289
        %6166 = vmatpush1.msra.mxu0 %v2288
        %6167 = vmatprep.subr.mxu0 %v2297
        %6168 = vmatpush1.msra.mxu0 %v2296
        %6169 = vmatprep.subr.mxu0 %v2305
        %6170 = vmatpush1.msra.mxu0 %v2304
        %6171 = vmatprep.subr.mxu0 %v2313
        %6172 = vmatpush1.msra.mxu0 %v2312
        %6173 = vmatprep.subr.mxu0 %v2321
        %6174 = vmatpush1.msra.mxu0 %v2320
        %6175 = vmatprep.subr.mxu0 %v2329
        %6176 = vmatpush1.msra.mxu0 %v2328
        %6177 = vmatprep.subr.mxu0 %v2337
        %6178 = vmatpush1.msra.mxu0 %v2336
        %6179 = vmatprep.subr.mxu0 %v2345
        %6180 = vmatpush1.msra.mxu0 %v2344
        %6181 = vmatprep.subr.mxu0 %v2353
        %6182 = vmatpush1.msra.mxu0 %v2352
        %6183 = vmatprep.subr.mxu0 %v2361
        %6184 = vmatpush1.msra.mxu0 %v2360
        %6185 = vmatprep.subr.mxu0 %v2369
        %6186 = vmatpush1.msra.mxu0 %v2368
        %6187 = vmatprep.subr.mxu0 %v2377
        %6188 = vmatpush1.msra.mxu0 %v2376
        %6189 = vmatprep.subr.mxu0 %v2385
        %6190 = vmatpush1.msra.mxu0 %v2384
        %6191 = vmatprep.subr.mxu0 %v2393
        %6192 = vmatpush1.msra.mxu0 %v2392
        %6193 = vmatprep.subr.mxu0 %v2401
        %6194 = vmatpush1.msra.mxu0 %v2400
        %6195 = vmatprep.mubr.f32.mxu0 %v3243
        %6196 = vmatmul.mubr.f32.gmra.mrb[0].mxu0 %v3241
        %v6197 = vpop.f32.mrb[0].mxu0
        %v6198 = vadd.f32 %v6127, %v6197
        %v6199 = vpop.f32.mrb[0].mxu0
        %v6200 = vadd.f32 %v6129, %v6199
        %6201 = vdwg.mxu0
        %6202 = vmatprep.subr.mxu0 %v2409
        %6203 = vmatpush1.msra.mxu0 %v2408
        %6204 = vmatprep.subr.mxu0 %v2417
        %6205 = vmatpush1.msra.mxu0 %v2416
        %6206 = vmatprep.subr.mxu0 %v2425
        %6207 = vmatpush1.msra.mxu0 %v2424
        %6208 = vmatprep.subr.mxu0 %v2433
        %6209 = vmatpush1.msra.mxu0 %v2432
        %6210 = vmatprep.subr.mxu0 %v2441
        %6211 = vmatpush1.msra.mxu0 %v2440
        %6212 = vmatprep.subr.mxu0 %v2449
        %6213 = vmatpush1.msra.mxu0 %v2448
        %6214 = vmatprep.subr.mxu0 %v2457
        %6215 = vmatpush1.msra.mxu0 %v2456
        %6216 = vmatprep.subr.mxu0 %v2465
        %6217 = vmatpush1.msra.mxu0 %v2464
        %6218 = vmatprep.subr.mxu0 %v2473
        %6219 = vmatpush1.msra.mxu0 %v2472
        %6220 = vmatprep.subr.mxu0 %v2481
        %6221 = vmatpush1.msra.mxu0 %v2480
        %6222 = vmatprep.subr.mxu0 %v2489
        %6223 = vmatpush1.msra.mxu0 %v2488
        %6224 = vmatprep.subr.mxu0 %v2497
        %6225 = vmatpush1.msra.mxu0 %v2496
        %6226 = vmatprep.subr.mxu0 %v2505
        %6227 = vmatpush1.msra.mxu0 %v2504
        %6228 = vmatprep.subr.mxu0 %v2513
        %6229 = vmatpush1.msra.mxu0 %v2512
        %6230 = vmatprep.subr.mxu0 %v2521
        %6231 = vmatpush1.msra.mxu0 %v2520
        %6232 = vmatprep.subr.mxu0 %v2529
        %6233 = vmatpush1.msra.mxu0 %v2528
        %6234 = vmatprep.subr.mxu0 %v2537
        %6235 = vmatpush1.msra.mxu0 %v2536
        %6236 = vmatprep.subr.mxu0 %v2545
        %6237 = vmatpush1.msra.mxu0 %v2544
        %6238 = vmatprep.subr.mxu0 %v2553
        %6239 = vmatpush1.msra.mxu0 %v2552
        %6240 = vmatprep.subr.mxu0 %v2561
        %6241 = vmatpush1.msra.mxu0 %v2560
        %6242 = vmatprep.subr.mxu0 %v2569
        %6243 = vmatpush1.msra.mxu0 %v2568
        %6244 = vmatprep.subr.mxu0 %v2577
        %6245 = vmatpush1.msra.mxu0 %v2576
        %6246 = vmatprep.subr.mxu0 %v2585
        %6247 = vmatpush1.msra.mxu0 %v2584
        %6248 = vmatprep.subr.mxu0 %v2593
        %6249 = vmatpush1.msra.mxu0 %v2592
        %6250 = vmatprep.subr.mxu0 %v2601
        %6251 = vmatpush1.msra.mxu0 %v2600
        %6252 = vmatprep.subr.mxu0 %v2609
        %6253 = vmatpush1.msra.mxu0 %v2608
        %6254 = vmatprep.subr.mxu0 %v2617
        %6255 = vmatpush1.msra.mxu0 %v2616
        %6256 = vmatprep.subr.mxu0 %v2625
        %6257 = vmatpush1.msra.mxu0 %v2624
        %6258 = vmatprep.subr.mxu0 %v2633
        %6259 = vmatpush1.msra.mxu0 %v2632
        %6260 = vmatprep.subr.mxu0 %v2641
        %6261 = vmatpush1.msra.mxu0 %v2640
        %6262 = vmatprep.subr.mxu0 %v2649
        %6263 = vmatpush1.msra.mxu0 %v2648
        %6264 = vmatprep.subr.mxu0 %v2657
        %6265 = vmatpush1.msra.mxu0 %v2656
        %6266 = vmatprep.mubr.f32.mxu0 %v3259
        %6267 = vmatmul.mubr.f32.gmra.mrb[0].mxu0 %v3251
        %v6268 = vpop.f32.mrb[0].mxu0
        %v6269 = vadd.f32 %v6198, %v6268
        %v6270 = vpop.f32.mrb[0].mxu0
        %v6271 = vadd.f32 %v6200, %v6270
        %6272 = vdwg.mxu0
        %6273 = vmatprep.subr.mxu0 %v2665
        %6274 = vmatpush1.msra.mxu0 %v2664
        %6275 = vmatprep.subr.mxu0 %v2673
        %6276 = vmatpush1.msra.mxu0 %v2672
        %6277 = vmatprep.subr.mxu0 %v2681
        %6278 = vmatpush1.msra.mxu0 %v2680
        %6279 = vmatprep.subr.mxu0 %v2689
        %6280 = vmatpush1.msra.mxu0 %v2688
        %6281 = vmatprep.subr.mxu0 %v2697
        %6282 = vmatpush1.msra.mxu0 %v2696
        %6283 = vmatprep.subr.mxu0 %v2705
        %6284 = vmatpush1.msra.mxu0 %v2704
        %6285 = vmatprep.subr.mxu0 %v2713
        %6286 = vmatpush1.msra.mxu0 %v2712
        %6287 = vmatprep.subr.mxu0 %v2721
        %6288 = vmatpush1.msra.mxu0 %v2720
        %6289 = vmatprep.subr.mxu0 %v2729
        %6290 = vmatpush1.msra.mxu0 %v2728
        %6291 = vmatprep.subr.mxu0 %v2737
        %6292 = vmatpush1.msra.mxu0 %v2736
        %6293 = vmatprep.subr.mxu0 %v2745
        %6294 = vmatpush1.msra.mxu0 %v2744
        %6295 = vmatprep.subr.mxu0 %v2753
        %6296 = vmatpush1.msra.mxu0 %v2752
        %6297 = vmatprep.subr.mxu0 %v2761
        %6298 = vmatpush1.msra.mxu0 %v2760
        %6299 = vmatprep.subr.mxu0 %v2769
        %6300 = vmatpush1.msra.mxu0 %v2768
        %6301 = vmatprep.subr.mxu0 %v2777
        %6302 = vmatpush1.msra.mxu0 %v2776
        %6303 = vmatprep.subr.mxu0 %v2785
        %6304 = vmatpush1.msra.mxu0 %v2784
        %6305 = vmatprep.subr.mxu0 %v2793
        %6306 = vmatpush1.msra.mxu0 %v2792
        %6307 = vmatprep.subr.mxu0 %v2801
        %6308 = vmatpush1.msra.mxu0 %v2800
        %6309 = vmatprep.subr.mxu0 %v2809
        %6310 = vmatpush1.msra.mxu0 %v2808
        %6311 = vmatprep.subr.mxu0 %v2817
        %6312 = vmatpush1.msra.mxu0 %v2816
        %6313 = vmatprep.subr.mxu0 %v2825
        %6314 = vmatpush1.msra.mxu0 %v2824
        %6315 = vmatprep.subr.mxu0 %v2833
        %6316 = vmatpush1.msra.mxu0 %v2832
        %6317 = vmatprep.subr.mxu0 %v2841
        %6318 = vmatpush1.msra.mxu0 %v2840
        %6319 = vmatprep.subr.mxu0 %v2849
        %6320 = vmatpush1.msra.mxu0 %v2848
        %6321 = vmatprep.subr.mxu0 %v2857
        %6322 = vmatpush1.msra.mxu0 %v2856
        %6323 = vmatprep.subr.mxu0 %v2865
        %6324 = vmatpush1.msra.mxu0 %v2864
        %6325 = vmatprep.subr.mxu0 %v2873
        %6326 = vmatpush1.msra.mxu0 %v2872
        %6327 = vmatprep.subr.mxu0 %v2881
        %6328 = vmatpush1.msra.mxu0 %v2880
        %6329 = vmatprep.subr.mxu0 %v2889
        %6330 = vmatpush1.msra.mxu0 %v2888
        %6331 = vmatprep.subr.mxu0 %v2897
        %6332 = vmatpush1.msra.mxu0 %v2896
        %6333 = vmatprep.subr.mxu0 %v2905
        %6334 = vmatpush1.msra.mxu0 %v2904
        %6335 = vmatprep.subr.mxu0 %v2913
        %6336 = vmatpush1.msra.mxu0 %v2912
        %6337 = vmatprep.mubr.f32.mxu0 %v3260
        %6338 = vmatmul.mubr.f32.gmra.mrb[0].mxu0 %v3258
        %v6339 = vpop.f32.mrb[0].mxu0
        %v6340 = vadd.f32 %v6269, %v6339
        %v6341 = vpop.f32.mrb[0].mxu0
        %v6342 = vadd.f32 %v6271, %v6341
        %6343 = vdwg.mxu0
        %6344 = vmatprep.subr.mxu0 %v2921
        %6345 = vmatpush1.msra.mxu0 %v2920
        %6346 = vmatprep.subr.mxu0 %v2929
        %6347 = vmatpush1.msra.mxu0 %v2928
        %6348 = vmatprep.subr.mxu0 %v2937
        %6349 = vmatpush1.msra.mxu0 %v2936
        %6350 = vmatprep.subr.mxu0 %v2945
        %6351 = vmatpush1.msra.mxu0 %v2944
        %6352 = vmatprep.subr.mxu0 %v2953
        %6353 = vmatpush1.msra.mxu0 %v2952
        %6354 = vmatprep.subr.mxu0 %v2961
        %6355 = vmatpush1.msra.mxu0 %v2960
        %6356 = vmatprep.subr.mxu0 %v2969
        %6357 = vmatpush1.msra.mxu0 %v2968
        %6358 = vmatprep.subr.mxu0 %v2977
        %6359 = vmatpush1.msra.mxu0 %v2976
        %6360 = vmatprep.subr.mxu0 %v2985
        %6361 = vmatpush1.msra.mxu0 %v2984
        %6362 = vmatprep.subr.mxu0 %v2993
        %6363 = vmatpush1.msra.mxu0 %v2992
        %6364 = vmatprep.subr.mxu0 %v3001
        %6365 = vmatpush1.msra.mxu0 %v3000
        %6366 = vmatprep.subr.mxu0 %v3009
        %6367 = vmatpush1.msra.mxu0 %v3008
        %6368 = vmatprep.subr.mxu0 %v3017
        %6369 = vmatpush1.msra.mxu0 %v3016
        %6370 = vmatprep.subr.mxu0 %v3025
        %6371 = vmatpush1.msra.mxu0 %v3024
        %6372 = vmatprep.subr.mxu0 %v3033
        %6373 = vmatpush1.msra.mxu0 %v3032
        %6374 = vmatprep.subr.mxu0 %v3041
        %6375 = vmatpush1.msra.mxu0 %v3040
        %6376 = vmatprep.subr.mxu0 %v3049
        %6377 = vmatpush1.msra.mxu0 %v3048
        %6378 = vmatprep.subr.mxu0 %v3057
        %6379 = vmatpush1.msra.mxu0 %v3056
        %6380 = vmatprep.subr.mxu0 %v3065
        %6381 = vmatpush1.msra.mxu0 %v3064
        %6382 = vmatprep.subr.mxu0 %v3073
        %6383 = vmatpush1.msra.mxu0 %v3072
        %6384 = vmatprep.subr.mxu0 %v3081
        %6385 = vmatpush1.msra.mxu0 %v3080
        %6386 = vmatprep.subr.mxu0 %v3089
        %6387 = vmatpush1.msra.mxu0 %v3088
        %6388 = vmatprep.subr.mxu0 %v3097
        %6389 = vmatpush1.msra.mxu0 %v3096
        %6390 = vmatprep.subr.mxu0 %v3105
        %6391 = vmatpush1.msra.mxu0 %v3104
        %6392 = vmatprep.subr.mxu0 %v3113
        %6393 = vmatpush1.msra.mxu0 %v3112
        %6394 = vmatprep.subr.mxu0 %v3121
        %6395 = vmatpush1.msra.mxu0 %v3120
        %6396 = vmatprep.subr.mxu0 %v3129
        %6397 = vmatpush1.msra.mxu0 %v3128
        %6398 = vmatprep.subr.mxu0 %v3137
        %6399 = vmatpush1.msra.mxu0 %v3136
        %6400 = vmatprep.subr.mxu0 %v3145
        %6401 = vmatpush1.msra.mxu0 %v3144
        %6402 = vmatprep.subr.mxu0 %v3153
        %6403 = vmatpush1.msra.mxu0 %v3152
        %6404 = vmatprep.subr.mxu0 %v3161
        %6405 = vmatpush1.msra.mxu0 %v3160
        %6406 = vmatprep.subr.mxu0 %v3169
        %6407 = vmatpush1.msra.mxu0 %v3168
        %6408 = vmatprep.mubr.f32.mxu0 %v3268
        %6409 = vmatmul.mubr.f32.gmra.mrb[0].mxu0 %v3267
        %v6410 = vpop.f32.mrb[0].mxu0
        %v6411 = vadd.f32 %v6340, %v6410
        %v6412 = vpop.f32.mrb[0].mxu0
        %v6413 = vadd.f32 %v6342, %v6412
        %6414 = vdwg.mxu0
        %v6423 = vcombine.low %v4068, %v4070
        %v6424 = vcombine.low %v4849, %v4851
        %v6426 = vunpack.c.l.s4 1983009808
        %v6427 = vunpack.c.0.s8 %v6426
        %v6428 = vlaneseq
        %v6429 = vshrl.u32 %v6428, 7
        %v6430 = vsub.s32 %v6427, %v6429
        %v6431 = vrot.slane %v6423, %v6430
        %v6433 = vunpack.c.l.s4 1983009808
        %v6434 = vunpack.c.0.s8 %v6433
        %v6435 = vlaneseq
        %v6436 = vshrl.u32 %v6435, 7
        %v6437 = vsub.s32 %v6434, %v6436
        %v6438 = vrot.slane %v6424, %v6437
        %v6439 = vcombine.low %v6431, %v6438
        %v6440 = vcombine.low %v5630, %v5632
        %v6441 = vcombine.low %v6411, %v6413
        %v6443 = vunpack.c.l.s4 1983009808
        %v6444 = vunpack.c.0.s8 %v6443
        %v6445 = vlaneseq
        %v6446 = vshrl.u32 %v6445, 7
        %v6447 = vsub.s32 %v6444, %v6446
        %v6448 = vrot.slane %v6440, %v6447
        %v6450 = vunpack.c.l.s4 1983009808
        %v6451 = vunpack.c.0.s8 %v6450
        %v6452 = vlaneseq
        %v6453 = vshrl.u32 %v6452, 7
        %v6454 = vsub.s32 %v6451, %v6453
        %v6455 = vrot.slane %v6441, %v6454
        %v6456 = vcombine.low %v6448, %v6455
        %v6459 = vadd.f32 %v342, %v6439
        %v6460 = vadd.f32 %v343, %v6456
        %6461 = vst [vmem:[#allocation2] sm:$0xff] %v6459
        %6462 = vst [vmem:[#allocation2 + $0x8] sm:$0xff] %v6460
        %p6463 = scmp.eq.s32.totalorder %s31, 2
        // Predicated region
        $region49: #{person_pair_forward.3} parent=35 // pred_check
          %p6464 = pneg %p6463
        $region50: #{person_pair_forward.3} parent=35 // pred_check_branch
          %6466 = sbr.rel (%p6464) target = $region52
        $region51: #{person_pair_forward.3} parent=35 // pred_region
          %v6467 = vld [vmem:[#allocation2] sm:$0xff]
          %v6468 = vld [vmem:[#allocation2 + $0x8] sm:$0xff]
          %v6469 = vld [vmem:[%s280] sm:$0xff]
          %v6471 = vlaneseq
          %v6472 = vshrl.u32 %v6471, 7
          %v6473 = vsub.s32 0, %v6472
          %v6474 = vrot.slane %v6469, %v6473
          %v6475 = vlaneseq
          %v6476 = vshrl.u32 %v6475, 7
          %v6477 = vsub.s32 1, %v6476
          %v6478 = vrot.slane %v6469, %v6477
          %v6479 = vlaneseq
          %v6480 = vshrl.u32 %v6479, 7
          %v6481 = vsub.s32 2, %v6480
          %v6482 = vrot.slane %v6469, %v6481
          %v6483 = vlaneseq
          %v6484 = vshrl.u32 %v6483, 7
          %v6485 = vsub.s32 3, %v6484
          %v6486 = vrot.slane %v6469, %v6485
          %v6487 = vlaneseq
          %v6488 = vshrl.u32 %v6487, 7
          %v6489 = vsub.s32 4, %v6488
          %v6490 = vrot.slane %v6469, %v6489
          %v6491 = vlaneseq
          %v6492 = vshrl.u32 %v6491, 7
          %v6493 = vsub.s32 5, %v6492
          %v6494 = vrot.slane %v6469, %v6493
          %v6495 = vlaneseq
          %v6496 = vshrl.u32 %v6495, 7
          %v6497 = vsub.s32 6, %v6496
          %v6498 = vrot.slane %v6469, %v6497
          %v6499 = vlaneseq
          %v6500 = vshrl.u32 %v6499, 7
          %v6501 = vsub.s32 7, %v6500
          %v6502 = vrot.slane %v6469, %v6501
          %v6503 = vcombine.low %v6474, %v6478
          %v6504 = vcombine.low %v6482, %v6486
          %v6506 = vunpack.c.l.s4 1983009808
          %v6507 = vunpack.c.0.s8 %v6506
          %v6508 = vlaneseq
          %v6509 = vshrl.u32 %v6508, 7
          %v6510 = vsub.s32 %v6507, %v6509
          %v6511 = vrot.slane %v6503, %v6510
          %v6513 = vunpack.c.l.s4 1983009808
          %v6514 = vunpack.c.0.s8 %v6513
          %v6515 = vlaneseq
          %v6516 = vshrl.u32 %v6515, 7
          %v6517 = vsub.s32 %v6514, %v6516
          %v6518 = vrot.slane %v6504, %v6517
          %v6519 = vcombine.low %v6511, %v6518
          %v6520 = vcombine.low %v6490, %v6494
          %v6521 = vcombine.low %v6498, %v6502
          %v6523 = vunpack.c.l.s4 1983009808
          %v6524 = vunpack.c.0.s8 %v6523
          %v6525 = vlaneseq
          %v6526 = vshrl.u32 %v6525, 7
          %v6527 = vsub.s32 %v6524, %v6526
          %v6528 = vrot.slane %v6520, %v6527
          %v6530 = vunpack.c.l.s4 1983009808
          %v6531 = vunpack.c.0.s8 %v6530
          %v6532 = vlaneseq
          %v6533 = vshrl.u32 %v6532, 7
          %v6534 = vsub.s32 %v6531, %v6533
          %v6535 = vrot.slane %v6521, %v6534
          %v6536 = vcombine.low %v6528, %v6535
          %v6539 = vadd.f32 %v6467, %v6519
          %v6540 = vadd.f32 %v6468, %v6536
          %6541 = vst [vmem:[%s314] sm:$0xff] %v6539
          %6542 = vst [vmem:[%s314 + $0x8] sm:$0xff] %v6540
          %v6543 = vmax.f32 %v6539, 0.0
          %v6544 = vmax.f32 %v6540, 0.0
          %v6545 = vld [vmem:[%s328] sm:$0xff]
          %v6546 = vld [vmem:[%s328 + $0x8] sm:$0xff]
          %v6547 = vld [vmem:[%s328 + $0x10] sm:$0xff]
          %v6548 = vld [vmem:[%s328 + $0x18] sm:$0xff]
          %v6549 = vld [vmem:[%s328 + $0x20] sm:$0xff]
          %v6550 = vld [vmem:[%s328 + $0x28] sm:$0xff]
          %v6551 = vld [vmem:[%s328 + $0x30] sm:$0xff]
          %v6552 = vld [vmem:[%s328 + $0x38] sm:$0xff]
          %v6553 = vld [vmem:[%s328 + $0x40] sm:$0xff]
          %v6554 = vld [vmem:[%s328 + $0x48] sm:$0xff]
          %v6555 = vld [vmem:[%s328 + $0x50] sm:$0xff]
          %v6556 = vld [vmem:[%s328 + $0x58] sm:$0xff]
          %v6557 = vld [vmem:[%s328 + $0x60] sm:$0xff]
          %v6558 = vld [vmem:[%s328 + $0x68] sm:$0xff]
          %v6559 = vld [vmem:[%s328 + $0x70] sm:$0xff]
          %v6560 = vld [vmem:[%s328 + $0x78] sm:$0xff]
          %v6561 = vld [vmem:[%s328 + $0x80] sm:$0xff]
          %v6562 = vld [vmem:[%s328 + $0x88] sm:$0xff]
          %v6563 = vld [vmem:[%s328 + $0x90] sm:$0xff]
          %v6564 = vld [vmem:[%s328 + $0x98] sm:$0xff]
          %v6565 = vld [vmem:[%s328 + $0xa0] sm:$0xff]
          %v6566 = vld [vmem:[%s328 + $0xa8] sm:$0xff]
          %v6567 = vld [vmem:[%s328 + $0xb0] sm:$0xff]
          %v6568 = vld [vmem:[%s328 + $0xb8] sm:$0xff]
          %v6569 = vld [vmem:[%s328 + $0xc0] sm:$0xff]
          %v6570 = vld [vmem:[%s328 + $0xc8] sm:$0xff]
          %v6571 = vld [vmem:[%s328 + $0xd0] sm:$0xff]
          %v6572 = vld [vmem:[%s328 + $0xd8] sm:$0xff]
          %v6573 = vld [vmem:[%s328 + $0xe0] sm:$0xff]
          %v6574 = vld [vmem:[%s328 + $0xe8] sm:$0xff]
          %v6575 = vld [vmem:[%s328 + $0xf0] sm:$0xff]
          %v6576 = vld [vmem:[%s328 + $0xf8] sm:$0xff]
          %v6577 = vld [vmem:[%s328 + $0x100] sm:$0xff]
          %v6578 = vld [vmem:[%s328 + $0x108] sm:$0xff]
          %v6579 = vld [vmem:[%s328 + $0x110] sm:$0xff]
          %v6580 = vld [vmem:[%s328 + $0x118] sm:$0xff]
          %v6581 = vld [vmem:[%s328 + $0x120] sm:$0xff]
          %v6582 = vld [vmem:[%s328 + $0x128] sm:$0xff]
          %v6583 = vld [vmem:[%s328 + $0x130] sm:$0xff]
          %v6584 = vld [vmem:[%s328 + $0x138] sm:$0xff]
          %v6585 = vld [vmem:[%s328 + $0x140] sm:$0xff]
          %v6586 = vld [vmem:[%s328 + $0x148] sm:$0xff]
          %v6587 = vld [vmem:[%s328 + $0x150] sm:$0xff]
          %v6588 = vld [vmem:[%s328 + $0x158] sm:$0xff]
          %v6589 = vld [vmem:[%s328 + $0x160] sm:$0xff]
          %v6590 = vld [vmem:[%s328 + $0x168] sm:$0xff]
          %v6591 = vld [vmem:[%s328 + $0x170] sm:$0xff]
          %v6592 = vld [vmem:[%s328 + $0x178] sm:$0xff]
          %v6593 = vld [vmem:[%s328 + $0x180] sm:$0xff]
          %v6594 = vld [vmem:[%s328 + $0x188] sm:$0xff]
          %v6595 = vld [vmem:[%s328 + $0x190] sm:$0xff]
          %v6596 = vld [vmem:[%s328 + $0x198] sm:$0xff]
          %v6597 = vld [vmem:[%s328 + $0x1a0] sm:$0xff]
          %v6598 = vld [vmem:[%s328 + $0x1a8] sm:$0xff]
          %v6599 = vld [vmem:[%s328 + $0x1b0] sm:$0xff]
          %v6600 = vld [vmem:[%s328 + $0x1b8] sm:$0xff]
          %v6601 = vld [vmem:[%s328 + $0x1c0] sm:$0xff]
          %v6602 = vld [vmem:[%s328 + $0x1c8] sm:$0xff]
          %v6603 = vld [vmem:[%s328 + $0x1d0] sm:$0xff]
          %v6604 = vld [vmem:[%s328 + $0x1d8] sm:$0xff]
          %v6605 = vld [vmem:[%s328 + $0x1e0] sm:$0xff]
          %v6606 = vld [vmem:[%s328 + $0x1e8] sm:$0xff]
          %v6607 = vld [vmem:[%s328 + $0x1f0] sm:$0xff]
          %v6608 = vld [vmem:[%s328 + $0x1f8] sm:$0xff]
          %v6609 = vld [vmem:[%s328 + $0x200] sm:$0xff]
          %v6610 = vld [vmem:[%s328 + $0x208] sm:$0xff]
          %v6611 = vld [vmem:[%s328 + $0x210] sm:$0xff]
          %v6612 = vld [vmem:[%s328 + $0x218] sm:$0xff]
          %v6613 = vld [vmem:[%s328 + $0x220] sm:$0xff]
          %v6614 = vld [vmem:[%s328 + $0x228] sm:$0xff]
          %v6615 = vld [vmem:[%s328 + $0x230] sm:$0xff]
          %v6616 = vld [vmem:[%s328 + $0x238] sm:$0xff]
          %v6617 = vld [vmem:[%s328 + $0x240] sm:$0xff]
          %v6618 = vld [vmem:[%s328 + $0x248] sm:$0xff]
          %v6619 = vld [vmem:[%s328 + $0x250] sm:$0xff]
          %v6620 = vld [vmem:[%s328 + $0x258] sm:$0xff]
          %v6621 = vld [vmem:[%s328 + $0x260] sm:$0xff]
          %v6622 = vld [vmem:[%s328 + $0x268] sm:$0xff]
          %v6623 = vld [vmem:[%s328 + $0x270] sm:$0xff]
          %v6624 = vld [vmem:[%s328 + $0x278] sm:$0xff]
          %v6625 = vld [vmem:[%s328 + $0x280] sm:$0xff]
          %v6626 = vld [vmem:[%s328 + $0x288] sm:$0xff]
          %v6627 = vld [vmem:[%s328 + $0x290] sm:$0xff]
          %v6628 = vld [vmem:[%s328 + $0x298] sm:$0xff]
          %v6629 = vld [vmem:[%s328 + $0x2a0] sm:$0xff]
          %v6630 = vld [vmem:[%s328 + $0x2a8] sm:$0xff]
          %v6631 = vld [vmem:[%s328 + $0x2b0] sm:$0xff]
          %v6632 = vld [vmem:[%s328 + $0x2b8] sm:$0xff]
          %v6633 = vld [vmem:[%s328 + $0x2c0] sm:$0xff]
          %v6634 = vld [vmem:[%s328 + $0x2c8] sm:$0xff]
          %v6635 = vld [vmem:[%s328 + $0x2d0] sm:$0xff]
          %v6636 = vld [vmem:[%s328 + $0x2d8] sm:$0xff]
          %v6637 = vld [vmem:[%s328 + $0x2e0] sm:$0xff]
          %v6638 = vld [vmem:[%s328 + $0x2e8] sm:$0xff]
          %v6639 = vld [vmem:[%s328 + $0x2f0] sm:$0xff]
          %v6640 = vld [vmem:[%s328 + $0x2f8] sm:$0xff]
          %v6641 = vld [vmem:[%s328 + $0x300] sm:$0xff]
          %v6642 = vld [vmem:[%s328 + $0x308] sm:$0xff]
          %v6643 = vld [vmem:[%s328 + $0x310] sm:$0xff]
          %v6644 = vld [vmem:[%s328 + $0x318] sm:$0xff]
          %v6645 = vld [vmem:[%s328 + $0x320] sm:$0xff]
          %v6646 = vld [vmem:[%s328 + $0x328] sm:$0xff]
          %v6647 = vld [vmem:[%s328 + $0x330] sm:$0xff]
          %v6648 = vld [vmem:[%s328 + $0x338] sm:$0xff]
          %v6649 = vld [vmem:[%s328 + $0x340] sm:$0xff]
          %v6650 = vld [vmem:[%s328 + $0x348] sm:$0xff]
          %v6651 = vld [vmem:[%s328 + $0x350] sm:$0xff]
          %v6652 = vld [vmem:[%s328 + $0x358] sm:$0xff]
          %v6653 = vld [vmem:[%s328 + $0x360] sm:$0xff]
          %v6654 = vld [vmem:[%s328 + $0x368] sm:$0xff]
          %v6655 = vld [vmem:[%s328 + $0x370] sm:$0xff]
          %v6656 = vld [vmem:[%s328 + $0x378] sm:$0xff]
          %v6657 = vld [vmem:[%s328 + $0x380] sm:$0xff]
          %v6658 = vld [vmem:[%s328 + $0x388] sm:$0xff]
          %v6659 = vld [vmem:[%s328 + $0x390] sm:$0xff]
          %v6660 = vld [vmem:[%s328 + $0x398] sm:$0xff]
          %v6661 = vld [vmem:[%s328 + $0x3a0] sm:$0xff]
          %v6662 = vld [vmem:[%s328 + $0x3a8] sm:$0xff]
          %v6663 = vld [vmem:[%s328 + $0x3b0] sm:$0xff]
          %v6664 = vld [vmem:[%s328 + $0x3b8] sm:$0xff]
          %v6665 = vld [vmem:[%s328 + $0x3c0] sm:$0xff]
          %v6666 = vld [vmem:[%s328 + $0x3c8] sm:$0xff]
          %v6667 = vld [vmem:[%s328 + $0x3d0] sm:$0xff]
          %v6668 = vld [vmem:[%s328 + $0x3d8] sm:$0xff]
          %v6669 = vld [vmem:[%s328 + $0x3e0] sm:$0xff]
          %v6670 = vld [vmem:[%s328 + $0x3e8] sm:$0xff]
          %v6671 = vld [vmem:[%s328 + $0x3f0] sm:$0xff]
          %v6672 = vld [vmem:[%s328 + $0x3f8] sm:$0xff]
          %v6675 = vcombine.high %v6543, %v6543
          %v6677 = vunpack.c.l.s4 1983009808
          %v6678 = vunpack.c.0.s8 %v6677
          %v6679 = vlaneseq
          %v6680 = vshrl.u32 %v6679, 7
          %v6681 = vsub.s32 %v6678, %v6680
          %v6682 = vrot.slane %v6543, %v6681
          %v6684 = vunpack.c.l.s4 1983009808
          %v6685 = vunpack.c.0.s8 %v6684
          %v6686 = vlaneseq
          %v6687 = vshrl.u32 %v6686, 7
          %v6688 = vsub.s32 %v6685, %v6687
          %v6689 = vrot.slane %v6675, %v6688
          %v6690 = vcombine.high %v6682, %v6682
          %v6691 = vcombine.high %v6689, %v6689
          %v6692 = vcombine.high %v6544, %v6544
          %v6694 = vunpack.c.l.s4 1983009808
          %v6695 = vunpack.c.0.s8 %v6694
          %v6696 = vlaneseq
          %v6697 = vshrl.u32 %v6696, 7
          %v6698 = vsub.s32 %v6695, %v6697
          %v6699 = vrot.slane %v6544, %v6698
          %v6701 = vunpack.c.l.s4 1983009808
          %v6702 = vunpack.c.0.s8 %v6701
          %v6703 = vlaneseq
          %v6704 = vshrl.u32 %v6703, 7
          %v6705 = vsub.s32 %v6702, %v6704
          %v6706 = vrot.slane %v6692, %v6705
          %v6707 = vcombine.high %v6699, %v6699
          %v6708 = vcombine.high %v6706, %v6706
          %6717 = vmatprep.subr.mxu0 0.0
          %6718 = vmatpush1.msra.mxu0 %v6545
          %6719 = vmatprep.subr.mxu0 0.0
          %6720 = vmatpush1.msra.mxu0 %v6546
          %6721 = vmatprep.subr.mxu0 0.0
          %6722 = vmatpush1.msra.mxu0 %v6547
          %6723 = vmatprep.subr.mxu0 0.0
          %6724 = vmatpush1.msra.mxu0 %v6548
          %6725 = vmatprep.subr.mxu0 0.0
          %6726 = vmatpush1.msra.mxu0 %v6549
          %6727 = vmatprep.subr.mxu0 0.0
          %6728 = vmatpush1.msra.mxu0 %v6550
          %6729 = vmatprep.subr.mxu0 0.0
          %6730 = vmatpush1.msra.mxu0 %v6551
          %6731 = vmatprep.subr.mxu0 0.0
          %6732 = vmatpush1.msra.mxu0 %v6552
          %6733 = vmatprep.subr.mxu0 0.0
          %6734 = vmatpush1.msra.mxu0 %v6553
          %6735 = vmatprep.subr.mxu0 0.0
          %6736 = vmatpush1.msra.mxu0 %v6554
          %6737 = vmatprep.subr.mxu0 0.0
          %6738 = vmatpush1.msra.mxu0 %v6555
          %6739 = vmatprep.subr.mxu0 0.0
          %6740 = vmatpush1.msra.mxu0 %v6556
          %6741 = vmatprep.subr.mxu0 0.0
          %6742 = vmatpush1.msra.mxu0 %v6557
          %6743 = vmatprep.subr.mxu0 0.0
          %6744 = vmatpush1.msra.mxu0 %v6558
          %6745 = vmatprep.subr.mxu0 0.0
          %6746 = vmatpush1.msra.mxu0 %v6559
          %6747 = vmatprep.subr.mxu0 0.0
          %6748 = vmatpush1.msra.mxu0 %v6560
          %6749 = vmatprep.subr.mxu0 0.0
          %6750 = vmatpush1.msra.mxu0 %v6561
          %6751 = vmatprep.subr.mxu0 0.0
          %6752 = vmatpush1.msra.mxu0 %v6562
          %6753 = vmatprep.subr.mxu0 0.0
          %6754 = vmatpush1.msra.mxu0 %v6563
          %6755 = vmatprep.subr.mxu0 0.0
          %6756 = vmatpush1.msra.mxu0 %v6564
          %6757 = vmatprep.subr.mxu0 0.0
          %6758 = vmatpush1.msra.mxu0 %v6565
          %6759 = vmatprep.subr.mxu0 0.0
          %6760 = vmatpush1.msra.mxu0 %v6566
          %6761 = vmatprep.subr.mxu0 0.0
          %6762 = vmatpush1.msra.mxu0 %v6567
          %6763 = vmatprep.subr.mxu0 0.0
          %6764 = vmatpush1.msra.mxu0 %v6568
          %6765 = vmatprep.subr.mxu0 0.0
          %6766 = vmatpush1.msra.mxu0 %v6569
          %6767 = vmatprep.subr.mxu0 0.0
          %6768 = vmatpush1.msra.mxu0 %v6570
          %6769 = vmatprep.subr.mxu0 0.0
          %6770 = vmatpush1.msra.mxu0 %v6571
          %6771 = vmatprep.subr.mxu0 0.0
          %6772 = vmatpush1.msra.mxu0 %v6572
          %6773 = vmatprep.subr.mxu0 0.0
          %6774 = vmatpush1.msra.mxu0 %v6573
          %6775 = vmatprep.subr.mxu0 0.0
          %6776 = vmatpush1.msra.mxu0 %v6574
          %6777 = vmatprep.subr.mxu0 0.0
          %6778 = vmatpush1.msra.mxu0 %v6575
          %6779 = vmatprep.subr.mxu0 0.0
          %6780 = vmatpush1.msra.mxu0 %v6576
          %6781 = vmatprep.mubr.f32.mxu0 %v6690
          %6782 = vmatmul.mubr.f32.gmra.mrb[0].mxu0 %v6682
          %v6783 = vpop.f32.mrb[0].mxu0
          %v6784 = vadd.f32 0.0, %v6783
          %v6785 = vpop.f32.mrb[0].mxu0
          %6786 = vdwg.mxu0
          %6787 = vmatprep.subr.mxu0 0.0
          %6788 = vmatpush1.msra.mxu0 %v6577
          %6789 = vmatprep.subr.mxu0 0.0
          %6790 = vmatpush1.msra.mxu0 %v6578
          %6791 = vmatprep.subr.mxu0 0.0
          %6792 = vmatpush1.msra.mxu0 %v6579
          %6793 = vmatprep.subr.mxu0 0.0
          %6794 = vmatpush1.msra.mxu0 %v6580
          %6795 = vmatprep.subr.mxu0 0.0
          %6796 = vmatpush1.msra.mxu0 %v6581
          %6797 = vmatprep.subr.mxu0 0.0
          %6798 = vmatpush1.msra.mxu0 %v6582
          %6799 = vmatprep.subr.mxu0 0.0
          %6800 = vmatpush1.msra.mxu0 %v6583
          %6801 = vmatprep.subr.mxu0 0.0
          %6802 = vmatpush1.msra.mxu0 %v6584
          %6803 = vmatprep.subr.mxu0 0.0
          %6804 = vmatpush1.msra.mxu0 %v6585
          %6805 = vmatprep.subr.mxu0 0.0
          %6806 = vmatpush1.msra.mxu0 %v6586
          %6807 = vmatprep.subr.mxu0 0.0
          %6808 = vmatpush1.msra.mxu0 %v6587
          %6809 = vmatprep.subr.mxu0 0.0
          %6810 = vmatpush1.msra.mxu0 %v6588
          %6811 = vmatprep.subr.mxu0 0.0
          %6812 = vmatpush1.msra.mxu0 %v6589
          %6813 = vmatprep.subr.mxu0 0.0
          %6814 = vmatpush1.msra.mxu0 %v6590
          %6815 = vmatprep.subr.mxu0 0.0
          %6816 = vmatpush1.msra.mxu0 %v6591
          %6817 = vmatprep.subr.mxu0 0.0
          %6818 = vmatpush1.msra.mxu0 %v6592
          %6819 = vmatprep.subr.mxu0 0.0
          %6820 = vmatpush1.msra.mxu0 %v6593
          %6821 = vmatprep.subr.mxu0 0.0
          %6822 = vmatpush1.msra.mxu0 %v6594
          %6823 = vmatprep.subr.mxu0 0.0
          %6824 = vmatpush1.msra.mxu0 %v6595
          %6825 = vmatprep.subr.mxu0 0.0
          %6826 = vmatpush1.msra.mxu0 %v6596
          %6827 = vmatprep.subr.mxu0 0.0
          %6828 = vmatpush1.msra.mxu0 %v6597
          %6829 = vmatprep.subr.mxu0 0.0
          %6830 = vmatpush1.msra.mxu0 %v6598
          %6831 = vmatprep.subr.mxu0 0.0
          %6832 = vmatpush1.msra.mxu0 %v6599
          %6833 = vmatprep.subr.mxu0 0.0
          %6834 = vmatpush1.msra.mxu0 %v6600
          %6835 = vmatprep.subr.mxu0 0.0
          %6836 = vmatpush1.msra.mxu0 %v6601
          %6837 = vmatprep.subr.mxu0 0.0
          %6838 = vmatpush1.msra.mxu0 %v6602
          %6839 = vmatprep.subr.mxu0 0.0
          %6840 = vmatpush1.msra.mxu0 %v6603
          %6841 = vmatprep.subr.mxu0 0.0
          %6842 = vmatpush1.msra.mxu0 %v6604
          %6843 = vmatprep.subr.mxu0 0.0
          %6844 = vmatpush1.msra.mxu0 %v6605
          %6845 = vmatprep.subr.mxu0 0.0
          %6846 = vmatpush1.msra.mxu0 %v6606
          %6847 = vmatprep.subr.mxu0 0.0
          %6848 = vmatpush1.msra.mxu0 %v6607
          %6849 = vmatprep.subr.mxu0 0.0
          %6850 = vmatpush1.msra.mxu0 %v6608
          %6851 = vmatprep.mubr.f32.mxu0 %v6691
          %6852 = vmatmul.mubr.f32.gmra.mrb[0].mxu0 %v6689
          %v6853 = vpop.f32.mrb[0].mxu0
          %v6854 = vadd.f32 %v6784, %v6853
          %v6855 = vpop.f32.mrb[0].mxu0
          %6856 = vdwg.mxu0
          %6857 = vmatprep.subr.mxu0 0.0
          %6858 = vmatpush1.msra.mxu0 %v6609
          %6859 = vmatprep.subr.mxu0 0.0
          %6860 = vmatpush1.msra.mxu0 %v6610
          %6861 = vmatprep.subr.mxu0 0.0
          %6862 = vmatpush1.msra.mxu0 %v6611
          %6863 = vmatprep.subr.mxu0 0.0
          %6864 = vmatpush1.msra.mxu0 %v6612
          %6865 = vmatprep.subr.mxu0 0.0
          %6866 = vmatpush1.msra.mxu0 %v6613
          %6867 = vmatprep.subr.mxu0 0.0
          %6868 = vmatpush1.msra.mxu0 %v6614
          %6869 = vmatprep.subr.mxu0 0.0
          %6870 = vmatpush1.msra.mxu0 %v6615
          %6871 = vmatprep.subr.mxu0 0.0
          %6872 = vmatpush1.msra.mxu0 %v6616
          %6873 = vmatprep.subr.mxu0 0.0
          %6874 = vmatpush1.msra.mxu0 %v6617
          %6875 = vmatprep.subr.mxu0 0.0
          %6876 = vmatpush1.msra.mxu0 %v6618
          %6877 = vmatprep.subr.mxu0 0.0
          %6878 = vmatpush1.msra.mxu0 %v6619
          %6879 = vmatprep.subr.mxu0 0.0
          %6880 = vmatpush1.msra.mxu0 %v6620
          %6881 = vmatprep.subr.mxu0 0.0
          %6882 = vmatpush1.msra.mxu0 %v6621
          %6883 = vmatprep.subr.mxu0 0.0
          %6884 = vmatpush1.msra.mxu0 %v6622
          %6885 = vmatprep.subr.mxu0 0.0
          %6886 = vmatpush1.msra.mxu0 %v6623
          %6887 = vmatprep.subr.mxu0 0.0
          %6888 = vmatpush1.msra.mxu0 %v6624
          %6889 = vmatprep.subr.mxu0 0.0
          %6890 = vmatpush1.msra.mxu0 %v6625
          %6891 = vmatprep.subr.mxu0 0.0
          %6892 = vmatpush1.msra.mxu0 %v6626
          %6893 = vmatprep.subr.mxu0 0.0
          %6894 = vmatpush1.msra.mxu0 %v6627
          %6895 = vmatprep.subr.mxu0 0.0
          %6896 = vmatpush1.msra.mxu0 %v6628
          %6897 = vmatprep.subr.mxu0 0.0
          %6898 = vmatpush1.msra.mxu0 %v6629
          %6899 = vmatprep.subr.mxu0 0.0
          %6900 = vmatpush1.msra.mxu0 %v6630
          %6901 = vmatprep.subr.mxu0 0.0
          %6902 = vmatpush1.msra.mxu0 %v6631
          %6903 = vmatprep.subr.mxu0 0.0
          %6904 = vmatpush1.msra.mxu0 %v6632
          %6905 = vmatprep.subr.mxu0 0.0
          %6906 = vmatpush1.msra.mxu0 %v6633
          %6907 = vmatprep.subr.mxu0 0.0
          %6908 = vmatpush1.msra.mxu0 %v6634
          %6909 = vmatprep.subr.mxu0 0.0
          %6910 = vmatpush1.msra.mxu0 %v6635
          %6911 = vmatprep.subr.mxu0 0.0
          %6912 = vmatpush1.msra.mxu0 %v6636
          %6913 = vmatprep.subr.mxu0 0.0
          %6914 = vmatpush1.msra.mxu0 %v6637
          %6915 = vmatprep.subr.mxu0 0.0
          %6916 = vmatpush1.msra.mxu0 %v6638
          %6917 = vmatprep.subr.mxu0 0.0
          %6918 = vmatpush1.msra.mxu0 %v6639
          %6919 = vmatprep.subr.mxu0 0.0
          %6920 = vmatpush1.msra.mxu0 %v6640
          %6921 = vmatprep.mubr.f32.mxu0 %v6707
          %6922 = vmatmul.mubr.f32.gmra.mrb[0].mxu0 %v6699
          %v6923 = vpop.f32.mrb[0].mxu0
          %v6924 = vadd.f32 %v6854, %v6923
          %v6925 = vpop.f32.mrb[0].mxu0
          %6926 = vdwg.mxu0
          %6927 = vmatprep.subr.mxu0 0.0
          %6928 = vmatpush1.msra.mxu0 %v6641
          %6929 = vmatprep.subr.mxu0 0.0
          %6930 = vmatpush1.msra.mxu0 %v6642
          %6931 = vmatprep.subr.mxu0 0.0
          %6932 = vmatpush1.msra.mxu0 %v6643
          %6933 = vmatprep.subr.mxu0 0.0
          %6934 = vmatpush1.msra.mxu0 %v6644
          %6935 = vmatprep.subr.mxu0 0.0
          %6936 = vmatpush1.msra.mxu0 %v6645
          %6937 = vmatprep.subr.mxu0 0.0
          %6938 = vmatpush1.msra.mxu0 %v6646
          %6939 = vmatprep.subr.mxu0 0.0
          %6940 = vmatpush1.msra.mxu0 %v6647
          %6941 = vmatprep.subr.mxu0 0.0
          %6942 = vmatpush1.msra.mxu0 %v6648
          %6943 = vmatprep.subr.mxu0 0.0
          %6944 = vmatpush1.msra.mxu0 %v6649
          %6945 = vmatprep.subr.mxu0 0.0
          %6946 = vmatpush1.msra.mxu0 %v6650
          %6947 = vmatprep.subr.mxu0 0.0
          %6948 = vmatpush1.msra.mxu0 %v6651
          %6949 = vmatprep.subr.mxu0 0.0
          %6950 = vmatpush1.msra.mxu0 %v6652
          %6951 = vmatprep.subr.mxu0 0.0
          %6952 = vmatpush1.msra.mxu0 %v6653
          %6953 = vmatprep.subr.mxu0 0.0
          %6954 = vmatpush1.msra.mxu0 %v6654
          %6955 = vmatprep.subr.mxu0 0.0
          %6956 = vmatpush1.msra.mxu0 %v6655
          %6957 = vmatprep.subr.mxu0 0.0
          %6958 = vmatpush1.msra.mxu0 %v6656
          %6959 = vmatprep.subr.mxu0 0.0
          %6960 = vmatpush1.msra.mxu0 %v6657
          %6961 = vmatprep.subr.mxu0 0.0
          %6962 = vmatpush1.msra.mxu0 %v6658
          %6963 = vmatprep.subr.mxu0 0.0
          %6964 = vmatpush1.msra.mxu0 %v6659
          %6965 = vmatprep.subr.mxu0 0.0
          %6966 = vmatpush1.msra.mxu0 %v6660
          %6967 = vmatprep.subr.mxu0 0.0
          %6968 = vmatpush1.msra.mxu0 %v6661
          %6969 = vmatprep.subr.mxu0 0.0
          %6970 = vmatpush1.msra.mxu0 %v6662
          %6971 = vmatprep.subr.mxu0 0.0
          %6972 = vmatpush1.msra.mxu0 %v6663
          %6973 = vmatprep.subr.mxu0 0.0
          %6974 = vmatpush1.msra.mxu0 %v6664
          %6975 = vmatprep.subr.mxu0 0.0
          %6976 = vmatpush1.msra.mxu0 %v6665
          %6977 = vmatprep.subr.mxu0 0.0
          %6978 = vmatpush1.msra.mxu0 %v6666
          %6979 = vmatprep.subr.mxu0 0.0
          %6980 = vmatpush1.msra.mxu0 %v6667
          %6981 = vmatprep.subr.mxu0 0.0
          %6982 = vmatpush1.msra.mxu0 %v6668
          %6983 = vmatprep.subr.mxu0 0.0
          %6984 = vmatpush1.msra.mxu0 %v6669
          %6985 = vmatprep.subr.mxu0 0.0
          %6986 = vmatpush1.msra.mxu0 %v6670
          %6987 = vmatprep.subr.mxu0 0.0
          %6988 = vmatpush1.msra.mxu0 %v6671
          %6989 = vmatprep.subr.mxu0 0.0
          %6990 = vmatpush1.msra.mxu0 %v6672
          %6991 = vmatprep.mubr.f32.mxu0 %v6708
          %6992 = vmatmul.mubr.f32.gmra.mrb[0].mxu0 %v6706
          %v6993 = vpop.f32.mrb[0].mxu0
          %v6994 = vadd.f32 %v6924, %v6993
          %v6995 = vpop.f32.mrb[0].mxu0
          %6996 = vdwg.mxu0
          %vm6997 = vcmask 17408
          %6998 = vst.msk [vmem:[%s334] sm:$0x3] %vm6997, %v6994
        $region52: #{person_pair_forward.3} parent=35 // pred_fallthru
          _
        %s6999 = sand.u32 %s147, 1
        %s7000 = scalar_lea.sflag [#allocation5], %s6999
        %s7001 = sand.u32 %s147, 1
        %s7002 = smul.addr %s7001, 16
        %s7003 = scalar_lea.vmem [#allocation8], %s7002
        %p7004 = scmp.lt.s32.totalorder %s30, 3
        %s7005 = scalar_select %p7004, %s30, 3
        %s7006 = smul.addr %s7005, 2
        %s7007 = scalar_lea.vmem %s5, %s7006
        // Predicated region
        $region53: #{person_pair_forward.3} parent=35 // pred_check
          %p7008 = pneg %p157
        $region54: #{person_pair_forward.3} parent=35 // pred_check_branch
          %7010 = sbr.rel (%p7008) target = $region56
        $region55: #{person_pair_forward.3} parent=35 // pred_region
          %s7011 = smul.u32 8, %s30
          %s7013 = ssub.s32 256, 256
          %7014 = vsyncadd %s7000, %s7013
          %s7015 = smul.addr %s7011, 32
          %s7016 = scalar_lea.hbm %s4, %s7015
          %s7018 = sshll.u32 %s7003, 4
          %s7019 = int_to_ptr.vmem [resolvable:$true] %s7018
          %7021 = dma.vmem_to_hbm [thread:$0]  %s7019, 256, %s7016, %s7000
        $region56: #{person_pair_forward.3} parent=35 // pred_fallthru
          _
        // Predicated region
        $region57: #{person_pair_forward.3} parent=35 // pred_check
          %p7022 = pneg %p183
        $region58: #{person_pair_forward.3} parent=35 // pred_check_branch
          %7024 = sbr.rel (%p7022) target = $region60
        $region59: #{person_pair_forward.3} parent=35 // pred_region
          _
        $region60: #{person_pair_forward.3} parent=35 // pred_fallthru
          _
      $region36: #{person_pair_forward.3} parent=5 // pred_fallthru
        _
      %p7025 = scmp.le.s32.totalorder 2, %s21
      // Predicated region
      $region61: #{person_pair_forward.3} parent=5 // pred_check
        %p7026 = pneg %p7025
      $region62: #{person_pair_forward.3} parent=5 // pred_check_branch
        %7028 = sbr.rel (%p7026) target = $region64
      $region63: #{person_pair_forward.3} parent=5 // pred_region
        %s7029 = ssub.s32 %s21, 2
        // Predicated region
        $region65: #{person_pair_forward.3} parent=63 // pred_check
          %p7030 = pneg %p163
        $region66: #{person_pair_forward.3} parent=63 // pred_check_branch
          %7032 = sbr.rel (%p7030) target = $region68
        $region67: #{person_pair_forward.3} parent=63 // pred_region
          %s7033 = sand.u32 %s148, 1
          %s7034 = scalar_lea.sflag [#allocation5], %s7033
          %s7035 = sand.u32 %s148, 1
          %s7036 = smul.addr %s7035, 16
          %s7037 = scalar_lea.vmem [#allocation8], %s7036
          %7038 = dma.done %s7034, 256
        $region68: #{person_pair_forward.3} parent=63 // pred_fallthru
          _
        // Predicated region
        $region69: #{person_pair_forward.3} parent=63 // pred_check
          %p7039 = pneg %p189
        $region70: #{person_pair_forward.3} parent=63 // pred_check_branch
          %7041 = sbr.rel (%p7039) target = $region72
        $region71: #{person_pair_forward.3} parent=63 // pred_region
          %p7042 = scmp.lt.s32.totalorder %s32, 3
          %s7043 = scalar_select %p7042, %s32, 3
          %s7044 = smul.addr %s7043, 2
          %s7045 = scalar_lea.vmem %s5, %s7044
        $region72: #{person_pair_forward.3} parent=63 // pred_fallthru
          _
      $region64: #{person_pair_forward.3} parent=5 // pred_fallthru
        _
    $region6: #{person_pair_forward.3} parent=1 // loop_footer
      %s25 = sadd.s32 1, %s21
    $region7: #{person_pair_forward.3} parent=1 // loop_footer_branch
      %20 = sbr.rel target = $region3
    $region8: #{person_pair_forward.3} parent=1 // loop_exit
      _
    %7046 = vsyncpa [#allocation4], 1
    %s7047 = scalar_lea.sflag [#allocation4], 1
    %7048 = vsyncpa %s7047, 1
    %7049 = vsyncpa [#allocation7], 1
    %s7050 = scalar_lea.sflag [#allocation7], 1
    %7051 = vsyncpa %s7050, 1
    %7052 = vsyncpa [#allocation5], 1
    %s7053 = scalar_lea.sflag [#allocation5], 1
    %7054 = vsyncpa %s7053, 1

</llo_original>
